<compile_context>
chip_gen: v7x
topology: tpu7x:2x2x1
jax: 0.10.0
libtpu: 0.0.40
codegen_flags: <defaults>
</compile_context>

<pallas_src>
import functools

import jax
import jax.numpy as jnp
from jax.experimental import pallas as pl
from jax.experimental.pallas import tpu as pltpu


# ------------------------------------------------------------------ utilities
def _round_up(x, m):
    return (x + m - 1) // m * m


# ------------------------------------------------------------- Pallas kernel
def _grouped_matmul_kernel(x_ref, w_ref, b_ref, o_ref, acc_ref, *, act):
    """One (tm, tk) @ (tk, tn) step of a grouped matmul with fused epilogue.

    Grid = (G, Mt, Nt, Kt), K innermost. acc is zeroed at k==0 and the
    bias + activation epilogue runs at the last k step.
    """
    @pl.when(pl.program_id(3) == 0)
    def _():
        acc_ref[...] = jnp.zeros_like(acc_ref)

    acc_ref[...] += jnp.dot(x_ref[...], w_ref[...],
                            preferred_element_type=jnp.float32)

    @pl.when(pl.program_id(3) == pl.num_programs(3) - 1)
    def _():
        y = acc_ref[...] + b_ref[...]          # (tm, tn) + (1, tn)
        if act == "lrelu":
            y = jnp.where(y >= 0.0, y, 0.2 * y)
        elif act == "relu":
            y = jnp.maximum(y, 0.0)
        elif act == "tanh_half":               # Tanh followed by /2 + 0.5
            y = jnp.tanh(y) * 0.5 + 0.5
        o_ref[...] = y.astype(o_ref.dtype)


def grouped_matmul_bias_act(cols, wm, bias, act="none"):
    """(G, M, K) bf16 @ (G, K, N) bf16 + bias -> (G, M, N) f32, fused act."""
    G, M, K = cols.shape
    _, _, N = wm.shape

    # --- tile selection: avoid padding K/N whenever they already divide ---
    tm = min(256, _round_up(M, 16))
    Mp = _round_up(M, tm)

    if N <= 256:
        tn, Np = N, N
    elif N % 256 == 0:
        tn, Np = 256, N
    elif N % 128 == 0:
        tn, Np = 128, N
    else:
        tn, Np = 128, _round_up(N, 128)

    if K <= 1024:
        tk, Kp = K, K
    else:
        tk = next((t for t in (1024, 512, 256, 128) if K % t == 0), 512)
        Kp = _round_up(K, tk)

    # --- ragged-edge padding only (no full zero-fill copies) ---
    if Mp != M or Kp != K:
        cols = jnp.pad(cols, ((0, 0), (0, Mp - M), (0, Kp - K)))
    if Kp != K or Np != N:
        wm = jnp.pad(wm, ((0, 0), (0, Kp - K), (0, Np - N)))
    b = bias.astype(jnp.float32).reshape(1, N)
    if Np != N:
        b = jnp.pad(b, ((0, 0), (0, Np - N)))

    grid = (G, Mp // tm, Np // tn, Kp // tk)
    out = pl.pallas_call(
        functools.partial(_grouped_matmul_kernel, act=act),
        out_shape=jax.ShapeDtypeStruct((G, Mp, Np), jnp.float32),
        grid_spec=pltpu.PrefetchScalarGridSpec(
            num_scalar_prefetch=0,
            grid=grid,
            in_specs=[
                pl.BlockSpec((None, tm, tk), lambda g, i, j, k: (g, i, k)),
                pl.BlockSpec((None, tk, tn), lambda g, i, j, k: (g, k, j)),
                pl.BlockSpec((1, tn), lambda g, i, j, k: (0, j)),
            ],
            out_specs=pl.BlockSpec((None, tm, tn), lambda g, i, j, k: (g, i, j)),
            scratch_shapes=[pltpu.VMEM((tm, tn), jnp.float32)],
        ),
        compiler_params=pltpu.CompilerParams(
            dimension_semantics=("parallel", "parallel", "parallel",
                                 "arbitrary")),
    )(cols, wm, b)

    if Mp != M or Np != N:
        out = out[:, :M, :N]
    return out


# --------------------------------------------------------- weight conversion
def _conv_weight_to_matmul(w):
    """PyTorch Conv2d weight (Cout, Cin, 4, 4) -> (1, 16*Cin, Cout).
    Row ordering (di, dj, cin) matches the im2col column ordering."""
    Cout, Cin = w.shape[0], w.shape[1]
    return w.transpose(2, 3, 1, 0).reshape(1, 16 * Cin, Cout)


def _convT_weight_to_matmul(w):
    """PyTorch ConvTranspose2d weight (Cin, Cout, 4, 4) -> (4, 4*Cin, Cout).

    Subpixel decomposition of ConvT(k=4, s=2, p=1): output pixel
    (2m+ry, 2n+rx) only touches the 2x2 input window starting at
    (m+ry-1, n+rx-1) with kernel taps ky = 3 - ry - 2a, kx = 3 - rx - 2b.
    """
    Cin, Cout = w.shape[0], w.shape[1]
    groups = []
    for ry in range(2):
        for rx in range(2):
            taps = [w[:, :, 3 - ry - 2 * a, 3 - rx - 2 * b]     # (Cin, Cout)
                    for a in range(2) for b in range(2)]
            groups.append(jnp.stack(taps, axis=0).reshape(4 * Cin, Cout))
    return jnp.stack(groups, axis=0)                            # (4, 4*Cin, Cout)


# ----------------------------------------------------------------- conv glue
def conv2d_s2(x, wm, bias, act="none"):
    """PyTorch Conv2d(kernel=4, stride=2, padding=1) on NHWC input.
    wm: (1, 16*Cin, Cout) bf16 (matmul layout)."""
    N, H, W, C = x.shape
    Ho, Wo = H // 2, W // 2
    xp = jnp.pad(x.astype(jnp.bfloat16), ((0, 0), (1, 1), (1, 1), (0, 0)))
    patches = []
    for di in range(4):
        for dj in range(4):
            patches.append(xp[:, di:di + 2 * Ho:2, dj:dj + 2 * Wo:2, :])
    cols = jnp.concatenate(patches, axis=-1)            # (N, Ho, Wo, 16*C)
    cols = cols.reshape(1, N * Ho * Wo, 16 * C)
    out = grouped_matmul_bias_act(cols, wm, bias, act)  # (1, M, Cout)
    return out[0].reshape(N, Ho, Wo, wm.shape[-1])


def conv_transpose2d_s2(x, wm, bias, act="none"):
    """PyTorch ConvTranspose2d(kernel=4, stride=2, padding=1) on NHWC input
    via the 4-subpixel parity decomposition (no zero-stuffed FLOPs).
    wm: (4, 4*Cin, Cout) bf16 (per-parity matmul layout)."""
    N, H, W, C = x.shape
    Cout = wm.shape[-1]
    xp = jnp.pad(x.astype(jnp.bfloat16), ((0, 0), (1, 1), (1, 1), (0, 0)))
    groups = []
    for ry in range(2):
        for rx in range(2):
            pats = []
            for a in range(2):
                for b in range(2):
                    pats.append(xp[:, ry + a:ry + a + H, rx + b:rx + b + W, :])
            cols = jnp.concatenate(pats, axis=-1)       # (N, H, W, 4*C)
            groups.append(cols.reshape(N * H * W, 4 * C))
    cols = jnp.stack(groups, axis=0)                    # (4, N*H*W, 4*C)
    out = grouped_matmul_bias_act(cols, wm, bias, act)  # (4, N*H*W, Cout)
    # interleave parities: group g = ry*2 + rx -> output (2m+ry, 2n+rx)
    out = out.reshape(2, 2, N, H, W, Cout).transpose(2, 3, 0, 4, 1, 5)
    return out.reshape(N, 2 * H, 2 * W, Cout)


# -------------------------------------------------------------- norm / activ
def batchnorm_nhwc(x, gamma, beta, eps=1e-5):
    """PyTorch BatchNorm2d in (default) train mode: biased batch statistics.
    Operates on lane-dense NHWC; gamma/beta broadcast over the channel axis."""
    mean = jnp.mean(x, axis=(0, 1, 2), keepdims=True)
    var = jnp.mean(jnp.square(x - mean), axis=(0, 1, 2), keepdims=True)
    return (x - mean) * jax.lax.rsqrt(var + eps) * gamma + beta


def leaky_relu(x, slope=0.2):
    return jnp.where(x >= 0.0, x, slope * x)


# -------------------------------------------------------- UNet parameter init
def build_block(key, outer_nc, inner_nc, input_nc=None, submodule=None,
                outermost=False, innermost=False):
    """Mirror of UnetSkipConnectionBlock.__init__ (norm = BatchNorm2d =>
    use_bias=False on all convs except the outermost up-conv)."""
    if input_nc is None:
        input_nc = outer_nc
    k0, k1, k2 = jax.random.split(key, 3)
    p = {"outermost": outermost, "innermost": innermost, "submodule": submodule}

    w_down = 0.02 * jax.random.normal(k0, (inner_nc, input_nc, 4, 4),
                                      jnp.float32)
    p["down_wm"] = _conv_weight_to_matmul(w_down).astype(jnp.bfloat16)
    p["down_b"] = jnp.zeros((inner_nc,), jnp.float32)     # bias=False
    if not (outermost or innermost):
        p["down_gamma"] = jnp.ones((inner_nc,), jnp.float32)
        p["down_beta"] = jnp.zeros((inner_nc,), jnp.float32)

    up_in = inner_nc if innermost else inner_nc * 2
    w_up = 0.02 * jax.random.normal(k1, (up_in, outer_nc, 4, 4), jnp.float32)
    p["up_wm"] = _convT_weight_to_matmul(w_up).astype(jnp.bfloat16)
    p["up_b"] = (0.02 * jax.random.normal(k2, (outer_nc,), jnp.float32)
                 if outermost else jnp.zeros((outer_nc,), jnp.float32))
    if not outermost:
        p["up_gamma"] = jnp.ones((outer_nc,), jnp.float32)
        p["up_beta"] = jnp.zeros((outer_nc,), jnp.float32)
    return p


def build_generator(key, input_nc=3, output_nc=3, num_downs=5, ngf=8):
    """Mirror of Albedo_UnetGenerator.__init__ (innermost -> outermost)."""
    keys = list(jax.random.split(key, num_downs))
    it = iter(keys)
    block = build_block(next(it), ngf * 8, ngf * 8, innermost=True)
    for _ in range(num_downs - 5):
        block = build_block(next(it), ngf * 8, ngf * 8, submodule=block)
    block = build_block(next(it), ngf * 4, ngf * 8, submodule=block)
    block = build_block(next(it), ngf * 2, ngf * 4, submodule=block)
    block = build_block(next(it), ngf, ngf * 2, submodule=block)
    block = build_block(next(it), output_nc, ngf, input_nc=input_nc,
                        submodule=block, outermost=True)
    return block


# ---------------------------------------------------------------- forward
def block_forward(p, x):
    """x is NHWC. Epilogue activations are fused into the Pallas matmul where
    the conv output feeds the activation directly (no BatchNorm in between)."""
    if p["outermost"]:
        h = conv2d_s2(x, p["down_wm"], p["down_b"], act="none")  # [downconv]
        h = block_forward(p["submodule"], h)
        h = jnp.maximum(h, 0.0)                                  # uprelu
        # upconv (+bias) + Tanh + (/2 + 0.5) fused in the matmul epilogue
        return conv_transpose2d_s2(h, p["up_wm"], p["up_b"], act="tanh_half")
    elif p["innermost"]:
        h = leaky_relu(x)                                        # downrelu
        # downconv + fused uprelu (ReLU) in the matmul epilogue
        h = conv2d_s2(h, p["down_wm"], p["down_b"], act="relu")
        h = conv_transpose2d_s2(h, p["up_wm"], p["up_b"], act="none")
        h = batchnorm_nhwc(h, p["up_gamma"], p["up_beta"])       # upnorm
        return jnp.concatenate([x, h], axis=-1)                  # skip (channels)
    else:
        h = leaky_relu(x)                                        # downrelu
        h = conv2d_s2(h, p["down_wm"], p["down_b"], act="none")  # downconv
        h = batchnorm_nhwc(h, p["down_gamma"], p["down_beta"])   # downnorm
        h = block_forward(p["submodule"], h)
        h = jnp.maximum(h, 0.0)                                  # uprelu
        h = conv_transpose2d_s2(h, p["up_wm"], p["up_b"], act="none")
        h = batchnorm_nhwc(h, p["up_gamma"], p["up_beta"])       # upnorm
        return jnp.concatenate([x, h], axis=-1)                  # skip (channels)


def albedo_unet_forward(params, x_nchw):
    """Albedo_UnetGenerator.forward: albedo = model(input) / 2 + 0.5.
    The /2 + 0.5 is already fused into the outermost 'tanh_half' epilogue."""
    x = jnp.transpose(x_nchw, (0, 2, 3, 1))     # NCHW -> NHWC (once)
    y = block_forward(params, x)
    return jnp.transpose(y, (0, 3, 1, 2))       # NHWC -> NCHW (once)


# ------------------------------------------------------------------- main
if __name__ == "__main__":
    key = jax.random.PRNGKey(0)
    kp, kx = jax.random.split(key)

    # Small but architecture-consistent config: num_downs=5 requires spatial
    # size 2**5 = 32 so the bottleneck reaches 1x1 (the default num_downs=8
    # would require 256x256 input).
    num_downs = 5
    ngf = 8
    input_nc = 3
    output_nc = 3
    H = 2 ** num_downs  # 32

    params = build_generator(kp, input_nc=input_nc, output_nc=output_nc,
                             num_downs=num_downs, ngf=ngf)
    x = jax.random.normal(kx, (2, input_nc, H, H), jnp.float32)

    fwd = jax.jit(lambda inp: albedo_unet_forward(params, inp))
    out = jax.block_until_ready(fwd(x))

    assert out.shape == (2, output_nc, H, H), out.shape
    assert bool(jnp.all(jnp.isfinite(out)))
    assert bool(jnp.all((out >= 0.0) & (out <= 1.0)))   # tanh/2 + 0.5 range
    print("KERNEL_OK")
</pallas_src>

<mosaic_0001>
module attributes {stable_mosaic.version = 11 : i64} {
  func.func @_grouped_matmul_kernel(%arg0: i32, %arg1: i32, %arg2: i32, %arg3: i32, %arg4: memref<1x256x48xbf16, #tpu.memory_space<vmem>>, %arg5: memref<1x48x8xbf16, #tpu.memory_space<vmem>>, %arg6: memref<1x8xf32, #tpu.memory_space<vmem>>, %arg7: memref<1x256x8xf32, #tpu.memory_space<vmem>>, %arg8: memref<256x8xf32, #tpu.memory_space<vmem>>) attributes {dimension_semantics = [#tpu.dimension_semantics<parallel>, #tpu.dimension_semantics<parallel>, #tpu.dimension_semantics<parallel>, #tpu.dimension_semantics<arbitrary>], iteration_bounds = array<i64: 1, 2, 1, 1>, scalar_prefetch = 0 : i64, scratch_operands = 1 : i64, tpu.core_type = #tpu.core_type<tc>, window_params = [{transform_indices = @transform_0, window_bounds = array<i64: 1, 256, 48>}, {transform_indices = @transform_1, window_bounds = array<i64: 1, 48, 8>}, {transform_indices = @transform_2, window_bounds = array<i64: 1, 8>}, {transform_indices = @transform_3, window_bounds = array<i64: 1, 256, 8>}]} {
    %c0_i32 = arith.constant 0 : i32
    %0 = arith.cmpi eq, %arg3, %c0_i32 : i32
    %1 = arith.extui %0 : i1 to i32
    %c0_i32_0 = arith.constant 0 : i32
    %2 = arith.cmpi ne, %1, %c0_i32_0 : i32
    scf.if %2 {
      %cst_12 = arith.constant 0.000000e+00 : f32
      %14 = vector.broadcast %cst_12 : f32 to vector<256x8xf32>
      %c0_13 = arith.constant 0 : index
      %c0_14 = arith.constant 0 : index
      %15 = vector.load %arg8[%c0_13, %c0_14] : memref<256x8xf32, #tpu.memory_space<vmem>>, vector<256x8xf32>
      tpu.vector_store %arg8[%c0_13, %c0_14], %14 {strides = array<i32>} : memref<256x8xf32, #tpu.memory_space<vmem>>, vector<256x8xf32>,
    } else {
    }
    %c0 = arith.constant 0 : index
    %c0_1 = arith.constant 0 : index
    %3 = vector.load %arg8[%c0, %c0_1] : memref<256x8xf32, #tpu.memory_space<vmem>>, vector<256x8xf32>
    %c0_2 = arith.constant 0 : index
    %c0_3 = arith.constant 0 : index
    %c0_4 = arith.constant 0 : index
    %4 = vector.load %arg4[%c0_2, %c0_3, %c0_4] : memref<1x256x48xbf16, #tpu.memory_space<vmem>>, vector<1x256x48xbf16>
    %5 = vector.shape_cast %4 : vector<1x256x48xbf16> to vector<256x48xbf16>
    %c0_5 = arith.constant 0 : index
    %c0_6 = arith.constant 0 : index
    %c0_7 = arith.constant 0 : index
    %6 = vector.load %arg5[%c0_5, %c0_6, %c0_7] : memref<1x48x8xbf16, #tpu.memory_space<vmem>>, vector<1x48x8xbf16>
    %7 = vector.shape_cast %6 : vector<1x48x8xbf16> to vector<48x8xbf16>
    %cst = arith.constant dense<0.000000e+00> : vector<256x8xf32>
    %8 = tpu.matmul %5, %7, %cst {dimension_numbers = #tpu.dot_dimension_numbers<[1], [0], [0], [1], [0, 0, 1, 1], [], []>} : vector<256x48xbf16>, vector<48x8xbf16>, vector<256x8xf32> -> vector<256x8xf32>
    %9 = arith.addf %3, %8 : vector<256x8xf32>
    %c0_8 = arith.constant 0 : index
    %c0_9 = arith.constant 0 : index
    %10 = vector.load %arg8[%c0_8, %c0_9] : memref<256x8xf32, #tpu.memory_space<vmem>>, vector<256x8xf32>
    tpu.vector_store %arg8[%c0_8, %c0_9], %9 {strides = array<i32>} : memref<256x8xf32, #tpu.memory_space<vmem>>, vector<256x8xf32>,
    %c0_i32_10 = arith.constant 0 : i32
    %11 = arith.cmpi eq, %arg3, %c0_i32_10 : i32
    %12 = arith.extui %11 : i1 to i32
    %c0_i32_11 = arith.constant 0 : i32
    %13 = arith.cmpi ne, %12, %c0_i32_11 : i32
    scf.if %13 {
      %c0_12 = arith.constant 0 : index
      %c0_13 = arith.constant 0 : index
      %14 = vector.load %arg8[%c0_12, %c0_13] : memref<256x8xf32, #tpu.memory_space<vmem>>, vector<256x8xf32>
      %c0_14 = arith.constant 0 : index
      %c0_15 = arith.constant 0 : index
      %15 = vector.load %arg6[%c0_14, %c0_15] : memref<1x8xf32, #tpu.memory_space<vmem>>, vector<1x8xf32>
      %16 = vector.broadcast %15 : vector<1x8xf32> to vector<256x8xf32>
      %17 = arith.addf %14, %16 : vector<256x8xf32>
      %c0_16 = arith.constant 0 : index
      %c0_17 = arith.constant 0 : index
      %c0_18 = arith.constant 0 : index
      %18 = vector.load %arg7[%c0_16, %c0_17, %c0_18] : memref<1x256x8xf32, #tpu.memory_space<vmem>>, vector<1x256x8xf32>
      %19 = vector.shape_cast %18 : vector<1x256x8xf32> to vector<256x8xf32>
      %20 = vector.shape_cast %17 : vector<256x8xf32> to vector<1x256x8xf32>
      tpu.vector_store %arg7[%c0_16, %c0_17, %c0_18], %20 {strides = array<i32>} : memref<1x256x8xf32, #tpu.memory_space<vmem>>, vector<1x256x8xf32>,
    } else {
    }
    return
  }
  func.func @transform_0(%arg0: i32, %arg1: i32, %arg2: i32, %arg3: i32) -> (i32, i32, i32) {
    %c0_i32 = arith.constant 0 : i32
    return %arg0, %arg1, %arg3 : i32, i32, i32
  }
  func.func @transform_1(%arg0: i32, %arg1: i32, %arg2: i32, %arg3: i32) -> (i32, i32, i32) {
    %c0_i32 = arith.constant 0 : i32
    return %arg0, %arg3, %arg2 : i32, i32, i32
  }
  func.func @transform_2(%arg0: i32, %arg1: i32, %arg2: i32, %arg3: i32) -> (i32, i32) {
    %c0_i32 = arith.constant 0 : i32
    %c0_i32_0 = arith.constant 0 : i32
    return %c0_i32, %arg2 : i32, i32
  }
  func.func @transform_3(%arg0: i32, %arg1: i32, %arg2: i32, %arg3: i32) -> (i32, i32, i32) {
    %c0_i32 = arith.constant 0 : i32
    return %arg0, %arg1, %arg2 : i32, i32, i32
  }
}

module attributes {stable_mosaic.version = 11 : i64} {
  func.func @_grouped_matmul_kernel(%arg0: i32, %arg1: i32, %arg2: i32, %arg3: i32, %arg4: memref<1x128x128xbf16, #tpu.memory_space<vmem>>, %arg5: memref<1x128x16xbf16, #tpu.memory_space<vmem>>, %arg6: memref<1x16xf32, #tpu.memory_space<vmem>>, %arg7: memref<1x128x16xf32, #tpu.memory_space<vmem>>, %arg8: memref<128x16xf32, #tpu.memory_space<vmem>>) attributes {dimension_semantics = [#tpu.dimension_semantics<parallel>, #tpu.dimension_semantics<parallel>, #tpu.dimension_semantics<parallel>, #tpu.dimension_semantics<arbitrary>], iteration_bounds = array<i64: 1, 1, 1, 1>, scalar_prefetch = 0 : i64, scratch_operands = 1 : i64, tpu.core_type = #tpu.core_type<tc>, window_params = [{transform_indices = @transform_0, window_bounds = array<i64: 1, 128, 128>}, {transform_indices = @transform_1, window_bounds = array<i64: 1, 128, 16>}, {transform_indices = @transform_2, window_bounds = array<i64: 1, 16>}, {transform_indices = @transform_3, window_bounds = array<i64: 1, 128, 16>}]} {
    %c0_i32 = arith.constant 0 : i32
    %0 = arith.cmpi eq, %arg3, %c0_i32 : i32
    %1 = arith.extui %0 : i1 to i32
    %c0_i32_0 = arith.constant 0 : i32
    %2 = arith.cmpi ne, %1, %c0_i32_0 : i32
    scf.if %2 {
      %cst_12 = arith.constant 0.000000e+00 : f32
      %14 = vector.broadcast %cst_12 : f32 to vector<128x16xf32>
      %c0_13 = arith.constant 0 : index
      %c0_14 = arith.constant 0 : index
      %15 = vector.load %arg8[%c0_13, %c0_14] : memref<128x16xf32, #tpu.memory_space<vmem>>, vector<128x16xf32>
      tpu.vector_store %arg8[%c0_13, %c0_14], %14 {strides = array<i32>} : memref<128x16xf32, #tpu.memory_space<vmem>>, vector<128x16xf32>,
    } else {
    }
    %c0 = arith.constant 0 : index
    %c0_1 = arith.constant 0 : index
    %3 = vector.load %arg8[%c0, %c0_1] : memref<128x16xf32, #tpu.memory_space<vmem>>, vector<128x16xf32>
    %c0_2 = arith.constant 0 : index
    %c0_3 = arith.constant 0 : index
    %c0_4 = arith.constant 0 : index
    %4 = vector.load %arg4[%c0_2, %c0_3, %c0_4] : memref<1x128x128xbf16, #tpu.memory_space<vmem>>, vector<1x128x128xbf16>
    %5 = vector.shape_cast %4 : vector<1x128x128xbf16> to vector<128x128xbf16>
    %c0_5 = arith.constant 0 : index
    %c0_6 = arith.constant 0 : index
    %c0_7 = arith.constant 0 : index
    %6 = vector.load %arg5[%c0_5, %c0_6, %c0_7] : memref<1x128x16xbf16, #tpu.memory_space<vmem>>, vector<1x128x16xbf16>
    %7 = vector.shape_cast %6 : vector<1x128x16xbf16> to vector<128x16xbf16>
    %cst = arith.constant dense<0.000000e+00> : vector<128x16xf32>
    %8 = tpu.matmul %5, %7, %cst {dimension_numbers = #tpu.dot_dimension_numbers<[1], [0], [0], [1], [0, 0, 1, 1], [], []>} : vector<128x128xbf16>, vector<128x16xbf16>, vector<128x16xf32> -> vector<128x16xf32>
    %9 = arith.addf %3, %8 : vector<128x16xf32>
    %c0_8 = arith.constant 0 : index
    %c0_9 = arith.constant 0 : index
    %10 = vector.load %arg8[%c0_8, %c0_9] : memref<128x16xf32, #tpu.memory_space<vmem>>, vector<128x16xf32>
    tpu.vector_store %arg8[%c0_8, %c0_9], %9 {strides = array<i32>} : memref<128x16xf32, #tpu.memory_space<vmem>>, vector<128x16xf32>,
    %c0_i32_10 = arith.constant 0 : i32
    %11 = arith.cmpi eq, %arg3, %c0_i32_10 : i32
    %12 = arith.extui %11 : i1 to i32
    %c0_i32_11 = arith.constant 0 : i32
    %13 = arith.cmpi ne, %12, %c0_i32_11 : i32
    scf.if %13 {
      %c0_12 = arith.constant 0 : index
      %c0_13 = arith.constant 0 : index
      %14 = vector.load %arg8[%c0_12, %c0_13] : memref<128x16xf32, #tpu.memory_space<vmem>>, vector<128x16xf32>
      %c0_14 = arith.constant 0 : index
      %c0_15 = arith.constant 0 : index
      %15 = vector.load %arg6[%c0_14, %c0_15] : memref<1x16xf32, #tpu.memory_space<vmem>>, vector<1x16xf32>
      %16 = vector.broadcast %15 : vector<1x16xf32> to vector<128x16xf32>
      %17 = arith.addf %14, %16 : vector<128x16xf32>
      %c0_16 = arith.constant 0 : index
      %c0_17 = arith.constant 0 : index
      %c0_18 = arith.constant 0 : index
      %18 = vector.load %arg7[%c0_16, %c0_17, %c0_18] : memref<1x128x16xf32, #tpu.memory_space<vmem>>, vector<1x128x16xf32>
      %19 = vector.shape_cast %18 : vector<1x128x16xf32> to vector<128x16xf32>
      %20 = vector.shape_cast %17 : vector<128x16xf32> to vector<1x128x16xf32>
      tpu.vector_store %arg7[%c0_16, %c0_17, %c0_18], %20 {strides = array<i32>} : memref<1x128x16xf32, #tpu.memory_space<vmem>>, vector<1x128x16xf32>,
    } else {
    }
    return
  }
  func.func @transform_0(%arg0: i32, %arg1: i32, %arg2: i32, %arg3: i32) -> (i32, i32, i32) {
    %c0_i32 = arith.constant 0 : i32
    return %arg0, %arg1, %arg3 : i32, i32, i32
  }
  func.func @transform_1(%arg0: i32, %arg1: i32, %arg2: i32, %arg3: i32) -> (i32, i32, i32) {
    %c0_i32 = arith.constant 0 : i32
    return %arg0, %arg3, %arg2 : i32, i32, i32
  }
  func.func @transform_2(%arg0: i32, %arg1: i32, %arg2: i32, %arg3: i32) -> (i32, i32) {
    %c0_i32 = arith.constant 0 : i32
    %c0_i32_0 = arith.constant 0 : i32
    return %c0_i32, %arg2 : i32, i32
  }
  func.func @transform_3(%arg0: i32, %arg1: i32, %arg2: i32, %arg3: i32) -> (i32, i32, i32) {
    %c0_i32 = arith.constant 0 : i32
    return %arg0, %arg1, %arg2 : i32, i32, i32
  }
}

module attributes {stable_mosaic.version = 11 : i64} {
  func.func @_grouped_matmul_kernel(%arg0: i32, %arg1: i32, %arg2: i32, %arg3: i32, %arg4: memref<1x32x256xbf16, #tpu.memory_space<vmem>>, %arg5: memref<1x256x32xbf16, #tpu.memory_space<vmem>>, %arg6: memref<1x32xf32, #tpu.memory_space<vmem>>, %arg7: memref<1x32x32xf32, #tpu.memory_space<vmem>>, %arg8: memref<32x32xf32, #tpu.memory_space<vmem>>) attributes {dimension_semantics = [#tpu.dimension_semantics<parallel>, #tpu.dimension_semantics<parallel>, #tpu.dimension_semantics<parallel>, #tpu.dimension_semantics<arbitrary>], iteration_bounds = array<i64: 1, 1, 1, 1>, scalar_prefetch = 0 : i64, scratch_operands = 1 : i64, tpu.core_type = #tpu.core_type<tc>, window_params = [{transform_indices = @transform_0, window_bounds = array<i64: 1, 32, 256>}, {transform_indices = @transform_1, window_bounds = array<i64: 1, 256, 32>}, {transform_indices = @transform_2, window_bounds = array<i64: 1, 32>}, {transform_indices = @transform_3, window_bounds = array<i64: 1, 32, 32>}]} {
    %c0_i32 = arith.constant 0 : i32
    %0 = arith.cmpi eq, %arg3, %c0_i32 : i32
    %1 = arith.extui %0 : i1 to i32
    %c0_i32_0 = arith.constant 0 : i32
    %2 = arith.cmpi ne, %1, %c0_i32_0 : i32
    scf.if %2 {
      %cst_12 = arith.constant 0.000000e+00 : f32
      %14 = vector.broadcast %cst_12 : f32 to vector<32x32xf32>
      %c0_13 = arith.constant 0 : index
      %c0_14 = arith.constant 0 : index
      %15 = vector.load %arg8[%c0_13, %c0_14] : memref<32x32xf32, #tpu.memory_space<vmem>>, vector<32x32xf32>
      tpu.vector_store %arg8[%c0_13, %c0_14], %14 {strides = array<i32>} : memref<32x32xf32, #tpu.memory_space<vmem>>, vector<32x32xf32>,
    } else {
    }
    %c0 = arith.constant 0 : index
    %c0_1 = arith.constant 0 : index
    %3 = vector.load %arg8[%c0, %c0_1] : memref<32x32xf32, #tpu.memory_space<vmem>>, vector<32x32xf32>
    %c0_2 = arith.constant 0 : index
    %c0_3 = arith.constant 0 : index
    %c0_4 = arith.constant 0 : index
    %4 = vector.load %arg4[%c0_2, %c0_3, %c0_4] : memref<1x32x256xbf16, #tpu.memory_space<vmem>>, vector<1x32x256xbf16>
    %5 = vector.shape_cast %4 : vector<1x32x256xbf16> to vector<32x256xbf16>
    %c0_5 = arith.constant 0 : index
    %c0_6 = arith.constant 0 : index
    %c0_7 = arith.constant 0 : index
    %6 = vector.load %arg5[%c0_5, %c0_6, %c0_7] : memref<1x256x32xbf16, #tpu.memory_space<vmem>>, vector<1x256x32xbf16>
    %7 = vector.shape_cast %6 : vector<1x256x32xbf16> to vector<256x32xbf16>
    %cst = arith.constant dense<0.000000e+00> : vector<32x32xf32>
    %8 = tpu.matmul %5, %7, %cst {dimension_numbers = #tpu.dot_dimension_numbers<[1], [0], [0], [1], [0, 0, 1, 1], [], []>} : vector<32x256xbf16>, vector<256x32xbf16>, vector<32x32xf32> -> vector<32x32xf32>
    %9 = arith.addf %3, %8 : vector<32x32xf32>
    %c0_8 = arith.constant 0 : index
    %c0_9 = arith.constant 0 : index
    %10 = vector.load %arg8[%c0_8, %c0_9] : memref<32x32xf32, #tpu.memory_space<vmem>>, vector<32x32xf32>
    tpu.vector_store %arg8[%c0_8, %c0_9], %9 {strides = array<i32>} : memref<32x32xf32, #tpu.memory_space<vmem>>, vector<32x32xf32>,
    %c0_i32_10 = arith.constant 0 : i32
    %11 = arith.cmpi eq, %arg3, %c0_i32_10 : i32
    %12 = arith.extui %11 : i1 to i32
    %c0_i32_11 = arith.constant 0 : i32
    %13 = arith.cmpi ne, %12, %c0_i32_11 : i32
    scf.if %13 {
      %c0_12 = arith.constant 0 : index
      %c0_13 = arith.constant 0 : index
      %14 = vector.load %arg8[%c0_12, %c0_13] : memref<32x32xf32, #tpu.memory_space<vmem>>, vector<32x32xf32>
      %c0_14 = arith.constant 0 : index
      %c0_15 = arith.constant 0 : index
      %15 = vector.load %arg6[%c0_14, %c0_15] : memref<1x32xf32, #tpu.memory_space<vmem>>, vector<1x32xf32>
      %16 = vector.broadcast %15 : vector<1x32xf32> to vector<32x32xf32>
      %17 = arith.addf %14, %16 : vector<32x32xf32>
      %c0_16 = arith.constant 0 : index
      %c0_17 = arith.constant 0 : index
      %c0_18 = arith.constant 0 : index
      %18 = vector.load %arg7[%c0_16, %c0_17, %c0_18] : memref<1x32x32xf32, #tpu.memory_space<vmem>>, vector<1x32x32xf32>
      %19 = vector.shape_cast %18 : vector<1x32x32xf32> to vector<32x32xf32>
      %20 = vector.shape_cast %17 : vector<32x32xf32> to vector<1x32x32xf32>
      tpu.vector_store %arg7[%c0_16, %c0_17, %c0_18], %20 {strides = array<i32>} : memref<1x32x32xf32, #tpu.memory_space<vmem>>, vector<1x32x32xf32>,
    } else {
    }
    return
  }
  func.func @transform_0(%arg0: i32, %arg1: i32, %arg2: i32, %arg3: i32) -> (i32, i32, i32) {
    %c0_i32 = arith.constant 0 : i32
    return %arg0, %arg1, %arg3 : i32, i32, i32
  }
  func.func @transform_1(%arg0: i32, %arg1: i32, %arg2: i32, %arg3: i32) -> (i32, i32, i32) {
    %c0_i32 = arith.constant 0 : i32
    return %arg0, %arg3, %arg2 : i32, i32, i32
  }
  func.func @transform_2(%arg0: i32, %arg1: i32, %arg2: i32, %arg3: i32) -> (i32, i32) {
    %c0_i32 = arith.constant 0 : i32
    %c0_i32_0 = arith.constant 0 : i32
    return %c0_i32, %arg2 : i32, i32
  }
  func.func @transform_3(%arg0: i32, %arg1: i32, %arg2: i32, %arg3: i32) -> (i32, i32, i32) {
    %c0_i32 = arith.constant 0 : i32
    return %arg0, %arg1, %arg2 : i32, i32, i32
  }
}

module attributes {stable_mosaic.version = 11 : i64} {
  func.func @_grouped_matmul_kernel(%arg0: i32, %arg1: i32, %arg2: i32, %arg3: i32, %arg4: memref<1x16x512xbf16, #tpu.memory_space<vmem>>, %arg5: memref<1x512x64xbf16, #tpu.memory_space<vmem>>, %arg6: memref<1x64xf32, #tpu.memory_space<vmem>>, %arg7: memref<1x16x64xf32, #tpu.memory_space<vmem>>, %arg8: memref<16x64xf32, #tpu.memory_space<vmem>>) attributes {dimension_semantics = [#tpu.dimension_semantics<parallel>, #tpu.dimension_semantics<parallel>, #tpu.dimension_semantics<parallel>, #tpu.dimension_semantics<arbitrary>], iteration_bounds = array<i64: 1, 1, 1, 1>, scalar_prefetch = 0 : i64, scratch_operands = 1 : i64, tpu.core_type = #tpu.core_type<tc>, window_params = [{transform_indices = @transform_0, window_bounds = array<i64: 1, 16, 512>}, {transform_indices = @transform_1, window_bounds = array<i64: 1, 512, 64>}, {transform_indices = @transform_2, window_bounds = array<i64: 1, 64>}, {transform_indices = @transform_3, window_bounds = array<i64: 1, 16, 64>}]} {
    %c0_i32 = arith.constant 0 : i32
    %0 = arith.cmpi eq, %arg3, %c0_i32 : i32
    %1 = arith.extui %0 : i1 to i32
    %c0_i32_0 = arith.constant 0 : i32
    %2 = arith.cmpi ne, %1, %c0_i32_0 : i32
    scf.if %2 {
      %cst_12 = arith.constant 0.000000e+00 : f32
      %14 = vector.broadcast %cst_12 : f32 to vector<16x64xf32>
      %c0_13 = arith.constant 0 : index
      %c0_14 = arith.constant 0 : index
      %15 = vector.load %arg8[%c0_13, %c0_14] : memref<16x64xf32, #tpu.memory_space<vmem>>, vector<16x64xf32>
      tpu.vector_store %arg8[%c0_13, %c0_14], %14 {strides = array<i32>} : memref<16x64xf32, #tpu.memory_space<vmem>>, vector<16x64xf32>,
    } else {
    }
    %c0 = arith.constant 0 : index
    %c0_1 = arith.constant 0 : index
    %3 = vector.load %arg8[%c0, %c0_1] : memref<16x64xf32, #tpu.memory_space<vmem>>, vector<16x64xf32>
    %c0_2 = arith.constant 0 : index
    %c0_3 = arith.constant 0 : index
    %c0_4 = arith.constant 0 : index
    %4 = vector.load %arg4[%c0_2, %c0_3, %c0_4] : memref<1x16x512xbf16, #tpu.memory_space<vmem>>, vector<1x16x512xbf16>
    %5 = vector.shape_cast %4 : vector<1x16x512xbf16> to vector<16x512xbf16>
    %c0_5 = arith.constant 0 : index
    %c0_6 = arith.constant 0 : index
    %c0_7 = arith.constant 0 : index
    %6 = vector.load %arg5[%c0_5, %c0_6, %c0_7] : memref<1x512x64xbf16, #tpu.memory_space<vmem>>, vector<1x512x64xbf16>
    %7 = vector.shape_cast %6 : vector<1x512x64xbf16> to vector<512x64xbf16>
    %cst = arith.constant dense<0.000000e+00> : vector<16x64xf32>
    %8 = tpu.matmul %5, %7, %cst {dimension_numbers = #tpu.dot_dimension_numbers<[1], [0], [0], [1], [0, 0, 1, 1], [], []>} : vector<16x512xbf16>, vector<512x64xbf16>, vector<16x64xf32> -> vector<16x64xf32>
    %9 = arith.addf %3, %8 : vector<16x64xf32>
    %c0_8 = arith.constant 0 : index
    %c0_9 = arith.constant 0 : index
    %10 = vector.load %arg8[%c0_8, %c0_9] : memref<16x64xf32, #tpu.memory_space<vmem>>, vector<16x64xf32>
    tpu.vector_store %arg8[%c0_8, %c0_9], %9 {strides = array<i32>} : memref<16x64xf32, #tpu.memory_space<vmem>>, vector<16x64xf32>,
    %c0_i32_10 = arith.constant 0 : i32
    %11 = arith.cmpi eq, %arg3, %c0_i32_10 : i32
    %12 = arith.extui %11 : i1 to i32
    %c0_i32_11 = arith.constant 0 : i32
    %13 = arith.cmpi ne, %12, %c0_i32_11 : i32
    scf.if %13 {
      %c0_12 = arith.constant 0 : index
      %c0_13 = arith.constant 0 : index
      %14 = vector.load %arg8[%c0_12, %c0_13] : memref<16x64xf32, #tpu.memory_space<vmem>>, vector<16x64xf32>
      %c0_14 = arith.constant 0 : index
      %c0_15 = arith.constant 0 : index
      %15 = vector.load %arg6[%c0_14, %c0_15] : memref<1x64xf32, #tpu.memory_space<vmem>>, vector<1x64xf32>
      %16 = vector.broadcast %15 : vector<1x64xf32> to vector<16x64xf32>
      %17 = arith.addf %14, %16 : vector<16x64xf32>
      %c0_16 = arith.constant 0 : index
      %c0_17 = arith.constant 0 : index
      %c0_18 = arith.constant 0 : index
      %18 = vector.load %arg7[%c0_16, %c0_17, %c0_18] : memref<1x16x64xf32, #tpu.memory_space<vmem>>, vector<1x16x64xf32>
      %19 = vector.shape_cast %18 : vector<1x16x64xf32> to vector<16x64xf32>
      %20 = vector.shape_cast %17 : vector<16x64xf32> to vector<1x16x64xf32>
      tpu.vector_store %arg7[%c0_16, %c0_17, %c0_18], %20 {strides = array<i32>} : memref<1x16x64xf32, #tpu.memory_space<vmem>>, vector<1x16x64xf32>,
    } else {
    }
    return
  }
  func.func @transform_0(%arg0: i32, %arg1: i32, %arg2: i32, %arg3: i32) -> (i32, i32, i32) {
    %c0_i32 = arith.constant 0 : i32
    return %arg0, %arg1, %arg3 : i32, i32, i32
  }
  func.func @transform_1(%arg0: i32, %arg1: i32, %arg2: i32, %arg3: i32) -> (i32, i32, i32) {
    %c0_i32 = arith.constant 0 : i32
    return %arg0, %arg3, %arg2 : i32, i32, i32
  }
  func.func @transform_2(%arg0: i32, %arg1: i32, %arg2: i32, %arg3: i32) -> (i32, i32) {
    %c0_i32 = arith.constant 0 : i32
    %c0_i32_0 = arith.constant 0 : i32
    return %c0_i32, %arg2 : i32, i32
  }
  func.func @transform_3(%arg0: i32, %arg1: i32, %arg2: i32, %arg3: i32) -> (i32, i32, i32) {
    %c0_i32 = arith.constant 0 : i32
    return %arg0, %arg1, %arg2 : i32, i32, i32
  }
}

module attributes {stable_mosaic.version = 11 : i64} {
  func.func @_grouped_matmul_kernel(%arg0: i32, %arg1: i32, %arg2: i32, %arg3: i32, %arg4: memref<1x16x1024xbf16, #tpu.memory_space<vmem>>, %arg5: memref<1x1024x64xbf16, #tpu.memory_space<vmem>>, %arg6: memref<1x64xf32, #tpu.memory_space<vmem>>, %arg7: memref<1x16x64xf32, #tpu.memory_space<vmem>>, %arg8: memref<16x64xf32, #tpu.memory_space<vmem>>) attributes {dimension_semantics = [#tpu.dimension_semantics<parallel>, #tpu.dimension_semantics<parallel>, #tpu.dimension_semantics<parallel>, #tpu.dimension_semantics<arbitrary>], iteration_bounds = array<i64: 1, 1, 1, 1>, scalar_prefetch = 0 : i64, scratch_operands = 1 : i64, tpu.core_type = #tpu.core_type<tc>, window_params = [{transform_indices = @transform_0, window_bounds = array<i64: 1, 16, 1024>}, {transform_indices = @transform_1, window_bounds = array<i64: 1, 1024, 64>}, {transform_indices = @transform_2, window_bounds = array<i64: 1, 64>}, {transform_indices = @transform_3, window_bounds = array<i64: 1, 16, 64>}]} {
    %c0_i32 = arith.constant 0 : i32
    %0 = arith.cmpi eq, %arg3, %c0_i32 : i32
    %1 = arith.extui %0 : i1 to i32
    %c0_i32_0 = arith.constant 0 : i32
    %2 = arith.cmpi ne, %1, %c0_i32_0 : i32
    scf.if %2 {
      %cst_12 = arith.constant 0.000000e+00 : f32
      %14 = vector.broadcast %cst_12 : f32 to vector<16x64xf32>
      %c0_13 = arith.constant 0 : index
      %c0_14 = arith.constant 0 : index
      %15 = vector.load %arg8[%c0_13, %c0_14] : memref<16x64xf32, #tpu.memory_space<vmem>>, vector<16x64xf32>
      tpu.vector_store %arg8[%c0_13, %c0_14], %14 {strides = array<i32>} : memref<16x64xf32, #tpu.memory_space<vmem>>, vector<16x64xf32>,
    } else {
    }
    %c0 = arith.constant 0 : index
    %c0_1 = arith.constant 0 : index
    %3 = vector.load %arg8[%c0, %c0_1] : memref<16x64xf32, #tpu.memory_space<vmem>>, vector<16x64xf32>
    %c0_2 = arith.constant 0 : index
    %c0_3 = arith.constant 0 : index
    %c0_4 = arith.constant 0 : index
    %4 = vector.load %arg4[%c0_2, %c0_3, %c0_4] : memref<1x16x1024xbf16, #tpu.memory_space<vmem>>, vector<1x16x1024xbf16>
    %5 = vector.shape_cast %4 : vector<1x16x1024xbf16> to vector<16x1024xbf16>
    %c0_5 = arith.constant 0 : index
    %c0_6 = arith.constant 0 : index
    %c0_7 = arith.constant 0 : index
    %6 = vector.load %arg5[%c0_5, %c0_6, %c0_7] : memref<1x1024x64xbf16, #tpu.memory_space<vmem>>, vector<1x1024x64xbf16>
    %7 = vector.shape_cast %6 : vector<1x1024x64xbf16> to vector<1024x64xbf16>
    %cst = arith.constant dense<0.000000e+00> : vector<16x64xf32>
    %8 = tpu.matmul %5, %7, %cst {dimension_numbers = #tpu.dot_dimension_numbers<[1], [0], [0], [1], [0, 0, 1, 1], [], []>} : vector<16x1024xbf16>, vector<1024x64xbf16>, vector<16x64xf32> -> vector<16x64xf32>
    %9 = arith.addf %3, %8 : vector<16x64xf32>
    %c0_8 = arith.constant 0 : index
    %c0_9 = arith.constant 0 : index
    %10 = vector.load %arg8[%c0_8, %c0_9] : memref<16x64xf32, #tpu.memory_space<vmem>>, vector<16x64xf32>
    tpu.vector_store %arg8[%c0_8, %c0_9], %9 {strides = array<i32>} : memref<16x64xf32, #tpu.memory_space<vmem>>, vector<16x64xf32>,
    %c0_i32_10 = arith.constant 0 : i32
    %11 = arith.cmpi eq, %arg3, %c0_i32_10 : i32
    %12 = arith.extui %11 : i1 to i32
    %c0_i32_11 = arith.constant 0 : i32
    %13 = arith.cmpi ne, %12, %c0_i32_11 : i32
    scf.if %13 {
      %c0_12 = arith.constant 0 : index
      %c0_13 = arith.constant 0 : index
      %14 = vector.load %arg8[%c0_12, %c0_13] : memref<16x64xf32, #tpu.memory_space<vmem>>, vector<16x64xf32>
      %c0_14 = arith.constant 0 : index
      %c0_15 = arith.constant 0 : index
      %15 = vector.load %arg6[%c0_14, %c0_15] : memref<1x64xf32, #tpu.memory_space<vmem>>, vector<1x64xf32>
      %16 = vector.broadcast %15 : vector<1x64xf32> to vector<16x64xf32>
      %17 = arith.addf %14, %16 : vector<16x64xf32>
      %cst_16 = arith.constant 0.000000e+00 : f32
      %18 = vector.broadcast %cst_16 : f32 to vector<16x64xf32>
      %19 = arith.maximumf %17, %18 : vector<16x64xf32>
      %c0_17 = arith.constant 0 : index
      %c0_18 = arith.constant 0 : index
      %c0_19 = arith.constant 0 : index
      %20 = vector.load %arg7[%c0_17, %c0_18, %c0_19] : memref<1x16x64xf32, #tpu.memory_space<vmem>>, vector<1x16x64xf32>
      %21 = vector.shape_cast %20 : vector<1x16x64xf32> to vector<16x64xf32>
      %22 = vector.shape_cast %19 : vector<16x64xf32> to vector<1x16x64xf32>
      tpu.vector_store %arg7[%c0_17, %c0_18, %c0_19], %22 {strides = array<i32>} : memref<1x16x64xf32, #tpu.memory_space<vmem>>, vector<1x16x64xf32>,
    } else {
    }
    return
  }
  func.func @transform_0(%arg0: i32, %arg1: i32, %arg2: i32, %arg3: i32) -> (i32, i32, i32) {
    %c0_i32 = arith.constant 0 : i32
    return %arg0, %arg1, %arg3 : i32, i32, i32
  }
  func.func @transform_1(%arg0: i32, %arg1: i32, %arg2: i32, %arg3: i32) -> (i32, i32, i32) {
    %c0_i32 = arith.constant 0 : i32
    return %arg0, %arg3, %arg2 : i32, i32, i32
  }
  func.func @transform_2(%arg0: i32, %arg1: i32, %arg2: i32, %arg3: i32) -> (i32, i32) {
    %c0_i32 = arith.constant 0 : i32
    %c0_i32_0 = arith.constant 0 : i32
    return %c0_i32, %arg2 : i32, i32
  }
  func.func @transform_3(%arg0: i32, %arg1: i32, %arg2: i32, %arg3: i32) -> (i32, i32, i32) {
    %c0_i32 = arith.constant 0 : i32
    return %arg0, %arg1, %arg2 : i32, i32, i32
  }
}

module attributes {stable_mosaic.version = 11 : i64} {
  func.func @_grouped_matmul_kernel(%arg0: i32, %arg1: i32, %arg2: i32, %arg3: i32, %arg4: memref<1x16x256xbf16, #tpu.memory_space<vmem>>, %arg5: memref<1x256x64xbf16, #tpu.memory_space<vmem>>, %arg6: memref<1x64xf32, #tpu.memory_space<vmem>>, %arg7: memref<1x16x64xf32, #tpu.memory_space<vmem>>, %arg8: memref<16x64xf32, #tpu.memory_space<vmem>>) attributes {dimension_semantics = [#tpu.dimension_semantics<parallel>, #tpu.dimension_semantics<parallel>, #tpu.dimension_semantics<parallel>, #tpu.dimension_semantics<arbitrary>], iteration_bounds = array<i64: 4, 1, 1, 1>, scalar_prefetch = 0 : i64, scratch_operands = 1 : i64, tpu.core_type = #tpu.core_type<tc>, window_params = [{transform_indices = @transform_0, window_bounds = array<i64: 1, 16, 256>}, {transform_indices = @transform_1, window_bounds = array<i64: 1, 256, 64>}, {transform_indices = @transform_2, window_bounds = array<i64: 1, 64>}, {transform_indices = @transform_3, window_bounds = array<i64: 1, 16, 64>}]} {
    %c0_i32 = arith.constant 0 : i32
    %0 = arith.cmpi eq, %arg3, %c0_i32 : i32
    %1 = arith.extui %0 : i1 to i32
    %c0_i32_0 = arith.constant 0 : i32
    %2 = arith.cmpi ne, %1, %c0_i32_0 : i32
    scf.if %2 {
      %cst_12 = arith.constant 0.000000e+00 : f32
      %14 = vector.broadcast %cst_12 : f32 to vector<16x64xf32>
      %c0_13 = arith.constant 0 : index
      %c0_14 = arith.constant 0 : index
      %15 = vector.load %arg8[%c0_13, %c0_14] : memref<16x64xf32, #tpu.memory_space<vmem>>, vector<16x64xf32>
      tpu.vector_store %arg8[%c0_13, %c0_14], %14 {strides = array<i32>} : memref<16x64xf32, #tpu.memory_space<vmem>>, vector<16x64xf32>,
    } else {
    }
    %c0 = arith.constant 0 : index
    %c0_1 = arith.constant 0 : index
    %3 = vector.load %arg8[%c0, %c0_1] : memref<16x64xf32, #tpu.memory_space<vmem>>, vector<16x64xf32>
    %c0_2 = arith.constant 0 : index
    %c0_3 = arith.constant 0 : index
    %c0_4 = arith.constant 0 : index
    %4 = vector.load %arg4[%c0_2, %c0_3, %c0_4] : memref<1x16x256xbf16, #tpu.memory_space<vmem>>, vector<1x16x256xbf16>
    %5 = vector.shape_cast %4 : vector<1x16x256xbf16> to vector<16x256xbf16>
    %c0_5 = arith.constant 0 : index
    %c0_6 = arith.constant 0 : index
    %c0_7 = arith.constant 0 : index
    %6 = vector.load %arg5[%c0_5, %c0_6, %c0_7] : memref<1x256x64xbf16, #tpu.memory_space<vmem>>, vector<1x256x64xbf16>
    %7 = vector.shape_cast %6 : vector<1x256x64xbf16> to vector<256x64xbf16>
    %cst = arith.constant dense<0.000000e+00> : vector<16x64xf32>
    %8 = tpu.matmul %5, %7, %cst {dimension_numbers = #tpu.dot_dimension_numbers<[1], [0], [0], [1], [0, 0, 1, 1], [], []>} : vector<16x256xbf16>, vector<256x64xbf16>, vector<16x64xf32> -> vector<16x64xf32>
    %9 = arith.addf %3, %8 : vector<16x64xf32>
    %c0_8 = arith.constant 0 : index
    %c0_9 = arith.constant 0 : index
    %10 = vector.load %arg8[%c0_8, %c0_9] : memref<16x64xf32, #tpu.memory_space<vmem>>, vector<16x64xf32>
    tpu.vector_store %arg8[%c0_8, %c0_9], %9 {strides = array<i32>} : memref<16x64xf32, #tpu.memory_space<vmem>>, vector<16x64xf32>,
    %c0_i32_10 = arith.constant 0 : i32
    %11 = arith.cmpi eq, %arg3, %c0_i32_10 : i32
    %12 = arith.extui %11 : i1 to i32
    %c0_i32_11 = arith.constant 0 : i32
    %13 = arith.cmpi ne, %12, %c0_i32_11 : i32
    scf.if %13 {
      %c0_12 = arith.constant 0 : index
      %c0_13 = arith.constant 0 : index
      %14 = vector.load %arg8[%c0_12, %c0_13] : memref<16x64xf32, #tpu.memory_space<vmem>>, vector<16x64xf32>
      %c0_14 = arith.constant 0 : index
      %c0_15 = arith.constant 0 : index
      %15 = vector.load %arg6[%c0_14, %c0_15] : memref<1x64xf32, #tpu.memory_space<vmem>>, vector<1x64xf32>
      %16 = vector.broadcast %15 : vector<1x64xf32> to vector<16x64xf32>
      %17 = arith.addf %14, %16 : vector<16x64xf32>
      %c0_16 = arith.constant 0 : index
      %c0_17 = arith.constant 0 : index
      %c0_18 = arith.constant 0 : index
      %18 = vector.load %arg7[%c0_16, %c0_17, %c0_18] : memref<1x16x64xf32, #tpu.memory_space<vmem>>, vector<1x16x64xf32>
      %19 = vector.shape_cast %18 : vector<1x16x64xf32> to vector<16x64xf32>
      %20 = vector.shape_cast %17 : vector<16x64xf32> to vector<1x16x64xf32>
      tpu.vector_store %arg7[%c0_16, %c0_17, %c0_18], %20 {strides = array<i32>} : memref<1x16x64xf32, #tpu.memory_space<vmem>>, vector<1x16x64xf32>,
    } else {
    }
    return
  }
  func.func @transform_0(%arg0: i32, %arg1: i32, %arg2: i32, %arg3: i32) -> (i32, i32, i32) {
    %c0_i32 = arith.constant 0 : i32
    return %arg0, %arg1, %arg3 : i32, i32, i32
  }
  func.func @transform_1(%arg0: i32, %arg1: i32, %arg2: i32, %arg3: i32) -> (i32, i32, i32) {
    %c0_i32 = arith.constant 0 : i32
    return %arg0, %arg3, %arg2 : i32, i32, i32
  }
  func.func @transform_2(%arg0: i32, %arg1: i32, %arg2: i32, %arg3: i32) -> (i32, i32) {
    %c0_i32 = arith.constant 0 : i32
    %c0_i32_0 = arith.constant 0 : i32
    return %c0_i32, %arg2 : i32, i32
  }
  func.func @transform_3(%arg0: i32, %arg1: i32, %arg2: i32, %arg3: i32) -> (i32, i32, i32) {
    %c0_i32 = arith.constant 0 : i32
    return %arg0, %arg1, %arg2 : i32, i32, i32
  }
}

module attributes {stable_mosaic.version = 11 : i64} {
  func.func @_grouped_matmul_kernel(%arg0: i32, %arg1: i32, %arg2: i32, %arg3: i32, %arg4: memref<1x16x512xbf16, #tpu.memory_space<vmem>>, %arg5: memref<1x512x32xbf16, #tpu.memory_space<vmem>>, %arg6: memref<1x32xf32, #tpu.memory_space<vmem>>, %arg7: memref<1x16x32xf32, #tpu.memory_space<vmem>>, %arg8: memref<16x32xf32, #tpu.memory_space<vmem>>) attributes {dimension_semantics = [#tpu.dimension_semantics<parallel>, #tpu.dimension_semantics<parallel>, #tpu.dimension_semantics<parallel>, #tpu.dimension_semantics<arbitrary>], iteration_bounds = array<i64: 4, 1, 1, 1>, scalar_prefetch = 0 : i64, scratch_operands = 1 : i64, tpu.core_type = #tpu.core_type<tc>, window_params = [{transform_indices = @transform_0, window_bounds = array<i64: 1, 16, 512>}, {transform_indices = @transform_1, window_bounds = array<i64: 1, 512, 32>}, {transform_indices = @transform_2, window_bounds = array<i64: 1, 32>}, {transform_indices = @transform_3, window_bounds = array<i64: 1, 16, 32>}]} {
    %c0_i32 = arith.constant 0 : i32
    %0 = arith.cmpi eq, %arg3, %c0_i32 : i32
    %1 = arith.extui %0 : i1 to i32
    %c0_i32_0 = arith.constant 0 : i32
    %2 = arith.cmpi ne, %1, %c0_i32_0 : i32
    scf.if %2 {
      %cst_12 = arith.constant 0.000000e+00 : f32
      %14 = vector.broadcast %cst_12 : f32 to vector<16x32xf32>
      %c0_13 = arith.constant 0 : index
      %c0_14 = arith.constant 0 : index
      %15 = vector.load %arg8[%c0_13, %c0_14] : memref<16x32xf32, #tpu.memory_space<vmem>>, vector<16x32xf32>
      tpu.vector_store %arg8[%c0_13, %c0_14], %14 {strides = array<i32>} : memref<16x32xf32, #tpu.memory_space<vmem>>, vector<16x32xf32>,
    } else {
    }
    %c0 = arith.constant 0 : index
    %c0_1 = arith.constant 0 : index
    %3 = vector.load %arg8[%c0, %c0_1] : memref<16x32xf32, #tpu.memory_space<vmem>>, vector<16x32xf32>
    %c0_2 = arith.constant 0 : index
    %c0_3 = arith.constant 0 : index
    %c0_4 = arith.constant 0 : index
    %4 = vector.load %arg4[%c0_2, %c0_3, %c0_4] : memref<1x16x512xbf16, #tpu.memory_space<vmem>>, vector<1x16x512xbf16>
    %5 = vector.shape_cast %4 : vector<1x16x512xbf16> to vector<16x512xbf16>
    %c0_5 = arith.constant 0 : index
    %c0_6 = arith.constant 0 : index
    %c0_7 = arith.constant 0 : index
    %6 = vector.load %arg5[%c0_5, %c0_6, %c0_7] : memref<1x512x32xbf16, #tpu.memory_space<vmem>>, vector<1x512x32xbf16>
    %7 = vector.shape_cast %6 : vector<1x512x32xbf16> to vector<512x32xbf16>
    %cst = arith.constant dense<0.000000e+00> : vector<16x32xf32>
    %8 = tpu.matmul %5, %7, %cst {dimension_numbers = #tpu.dot_dimension_numbers<[1], [0], [0], [1], [0, 0, 1, 1], [], []>} : vector<16x512xbf16>, vector<512x32xbf16>, vector<16x32xf32> -> vector<16x32xf32>
    %9 = arith.addf %3, %8 : vector<16x32xf32>
    %c0_8 = arith.constant 0 : index
    %c0_9 = arith.constant 0 : index
    %10 = vector.load %arg8[%c0_8, %c0_9] : memref<16x32xf32, #tpu.memory_space<vmem>>, vector<16x32xf32>
    tpu.vector_store %arg8[%c0_8, %c0_9], %9 {strides = array<i32>} : memref<16x32xf32, #tpu.memory_space<vmem>>, vector<16x32xf32>,
    %c0_i32_10 = arith.constant 0 : i32
    %11 = arith.cmpi eq, %arg3, %c0_i32_10 : i32
    %12 = arith.extui %11 : i1 to i32
    %c0_i32_11 = arith.constant 0 : i32
    %13 = arith.cmpi ne, %12, %c0_i32_11 : i32
    scf.if %13 {
      %c0_12 = arith.constant 0 : index
      %c0_13 = arith.constant 0 : index
      %14 = vector.load %arg8[%c0_12, %c0_13] : memref<16x32xf32, #tpu.memory_space<vmem>>, vector<16x32xf32>
      %c0_14 = arith.constant 0 : index
      %c0_15 = arith.constant 0 : index
      %15 = vector.load %arg6[%c0_14, %c0_15] : memref<1x32xf32, #tpu.memory_space<vmem>>, vector<1x32xf32>
      %16 = vector.broadcast %15 : vector<1x32xf32> to vector<16x32xf32>
      %17 = arith.addf %14, %16 : vector<16x32xf32>
      %c0_16 = arith.constant 0 : index
      %c0_17 = arith.constant 0 : index
      %c0_18 = arith.constant 0 : index
      %18 = vector.load %arg7[%c0_16, %c0_17, %c0_18] : memref<1x16x32xf32, #tpu.memory_space<vmem>>, vector<1x16x32xf32>
      %19 = vector.shape_cast %18 : vector<1x16x32xf32> to vector<16x32xf32>
      %20 = vector.shape_cast %17 : vector<16x32xf32> to vector<1x16x32xf32>
      tpu.vector_store %arg7[%c0_16, %c0_17, %c0_18], %20 {strides = array<i32>} : memref<1x16x32xf32, #tpu.memory_space<vmem>>, vector<1x16x32xf32>,
    } else {
    }
    return
  }
  func.func @transform_0(%arg0: i32, %arg1: i32, %arg2: i32, %arg3: i32) -> (i32, i32, i32) {
    %c0_i32 = arith.constant 0 : i32
    return %arg0, %arg1, %arg3 : i32, i32, i32
  }
  func.func @transform_1(%arg0: i32, %arg1: i32, %arg2: i32, %arg3: i32) -> (i32, i32, i32) {
    %c0_i32 = arith.constant 0 : i32
    return %arg0, %arg3, %arg2 : i32, i32, i32
  }
  func.func @transform_2(%arg0: i32, %arg1: i32, %arg2: i32, %arg3: i32) -> (i32, i32) {
    %c0_i32 = arith.constant 0 : i32
    %c0_i32_0 = arith.constant 0 : i32
    return %c0_i32, %arg2 : i32, i32
  }
  func.func @transform_3(%arg0: i32, %arg1: i32, %arg2: i32, %arg3: i32) -> (i32, i32, i32) {
    %c0_i32 = arith.constant 0 : i32
    return %arg0, %arg1, %arg2 : i32, i32, i32
  }
}

module attributes {stable_mosaic.version = 11 : i64} {
  func.func @_grouped_matmul_kernel(%arg0: i32, %arg1: i32, %arg2: i32, %arg3: i32, %arg4: memref<1x32x256xbf16, #tpu.memory_space<vmem>>, %arg5: memref<1x256x16xbf16, #tpu.memory_space<vmem>>, %arg6: memref<1x16xf32, #tpu.memory_space<vmem>>, %arg7: memref<1x32x16xf32, #tpu.memory_space<vmem>>, %arg8: memref<32x16xf32, #tpu.memory_space<vmem>>) attributes {dimension_semantics = [#tpu.dimension_semantics<parallel>, #tpu.dimension_semantics<parallel>, #tpu.dimension_semantics<parallel>, #tpu.dimension_semantics<arbitrary>], iteration_bounds = array<i64: 4, 1, 1, 1>, scalar_prefetch = 0 : i64, scratch_operands = 1 : i64, tpu.core_type = #tpu.core_type<tc>, window_params = [{transform_indices = @transform_0, window_bounds = array<i64: 1, 32, 256>}, {transform_indices = @transform_1, window_bounds = array<i64: 1, 256, 16>}, {transform_indices = @transform_2, window_bounds = array<i64: 1, 16>}, {transform_indices = @transform_3, window_bounds = array<i64: 1, 32, 16>}]} {
    %c0_i32 = arith.constant 0 : i32
    %0 = arith.cmpi eq, %arg3, %c0_i32 : i32
    %1 = arith.extui %0 : i1 to i32
    %c0_i32_0 = arith.constant 0 : i32
    %2 = arith.cmpi ne, %1, %c0_i32_0 : i32
    scf.if %2 {
      %cst_12 = arith.constant 0.000000e+00 : f32
      %14 = vector.broadcast %cst_12 : f32 to vector<32x16xf32>
      %c0_13 = arith.constant 0 : index
      %c0_14 = arith.constant 0 : index
      %15 = vector.load %arg8[%c0_13, %c0_14] : memref<32x16xf32, #tpu.memory_space<vmem>>, vector<32x16xf32>
      tpu.vector_store %arg8[%c0_13, %c0_14], %14 {strides = array<i32>} : memref<32x16xf32, #tpu.memory_space<vmem>>, vector<32x16xf32>,
    } else {
    }
    %c0 = arith.constant 0 : index
    %c0_1 = arith.constant 0 : index
    %3 = vector.load %arg8[%c0, %c0_1] : memref<32x16xf32, #tpu.memory_space<vmem>>, vector<32x16xf32>
    %c0_2 = arith.constant 0 : index
    %c0_3 = arith.constant 0 : index
    %c0_4 = arith.constant 0 : index
    %4 = vector.load %arg4[%c0_2, %c0_3, %c0_4] : memref<1x32x256xbf16, #tpu.memory_space<vmem>>, vector<1x32x256xbf16>
    %5 = vector.shape_cast %4 : vector<1x32x256xbf16> to vector<32x256xbf16>
    %c0_5 = arith.constant 0 : index
    %c0_6 = arith.constant 0 : index
    %c0_7 = arith.constant 0 : index
    %6 = vector.load %arg5[%c0_5, %c0_6, %c0_7] : memref<1x256x16xbf16, #tpu.memory_space<vmem>>, vector<1x256x16xbf16>
    %7 = vector.shape_cast %6 : vector<1x256x16xbf16> to vector<256x16xbf16>
    %cst = arith.constant dense<0.000000e+00> : vector<32x16xf32>
    %8 = tpu.matmul %5, %7, %cst {dimension_numbers = #tpu.dot_dimension_numbers<[1], [0], [0], [1], [0, 0, 1, 1], [], []>} : vector<32x256xbf16>, vector<256x16xbf16>, vector<32x16xf32> -> vector<32x16xf32>
    %9 = arith.addf %3, %8 : vector<32x16xf32>
    %c0_8 = arith.constant 0 : index
    %c0_9 = arith.constant 0 : index
    %10 = vector.load %arg8[%c0_8, %c0_9] : memref<32x16xf32, #tpu.memory_space<vmem>>, vector<32x16xf32>
    tpu.vector_store %arg8[%c0_8, %c0_9], %9 {strides = array<i32>} : memref<32x16xf32, #tpu.memory_space<vmem>>, vector<32x16xf32>,
    %c0_i32_10 = arith.constant 0 : i32
    %11 = arith.cmpi eq, %arg3, %c0_i32_10 : i32
    %12 = arith.extui %11 : i1 to i32
    %c0_i32_11 = arith.constant 0 : i32
    %13 = arith.cmpi ne, %12, %c0_i32_11 : i32
    scf.if %13 {
      %c0_12 = arith.constant 0 : index
      %c0_13 = arith.constant 0 : index
      %14 = vector.load %arg8[%c0_12, %c0_13] : memref<32x16xf32, #tpu.memory_space<vmem>>, vector<32x16xf32>
      %c0_14 = arith.constant 0 : index
      %c0_15 = arith.constant 0 : index
      %15 = vector.load %arg6[%c0_14, %c0_15] : memref<1x16xf32, #tpu.memory_space<vmem>>, vector<1x16xf32>
      %16 = vector.broadcast %15 : vector<1x16xf32> to vector<32x16xf32>
      %17 = arith.addf %14, %16 : vector<32x16xf32>
      %c0_16 = arith.constant 0 : index
      %c0_17 = arith.constant 0 : index
      %c0_18 = arith.constant 0 : index
      %18 = vector.load %arg7[%c0_16, %c0_17, %c0_18] : memref<1x32x16xf32, #tpu.memory_space<vmem>>, vector<1x32x16xf32>
      %19 = vector.shape_cast %18 : vector<1x32x16xf32> to vector<32x16xf32>
      %20 = vector.shape_cast %17 : vector<32x16xf32> to vector<1x32x16xf32>
      tpu.vector_store %arg7[%c0_16, %c0_17, %c0_18], %20 {strides = array<i32>} : memref<1x32x16xf32, #tpu.memory_space<vmem>>, vector<1x32x16xf32>,
    } else {
    }
    return
  }
  func.func @transform_0(%arg0: i32, %arg1: i32, %arg2: i32, %arg3: i32) -> (i32, i32, i32) {
    %c0_i32 = arith.constant 0 : i32
    return %arg0, %arg1, %arg3 : i32, i32, i32
  }
  func.func @transform_1(%arg0: i32, %arg1: i32, %arg2: i32, %arg3: i32) -> (i32, i32, i32) {
    %c0_i32 = arith.constant 0 : i32
    return %arg0, %arg3, %arg2 : i32, i32, i32
  }
  func.func @transform_2(%arg0: i32, %arg1: i32, %arg2: i32, %arg3: i32) -> (i32, i32) {
    %c0_i32 = arith.constant 0 : i32
    %c0_i32_0 = arith.constant 0 : i32
    return %c0_i32, %arg2 : i32, i32
  }
  func.func @transform_3(%arg0: i32, %arg1: i32, %arg2: i32, %arg3: i32) -> (i32, i32, i32) {
    %c0_i32 = arith.constant 0 : i32
    return %arg0, %arg1, %arg2 : i32, i32, i32
  }
}

module attributes {stable_mosaic.version = 11 : i64} {
  func.func @_grouped_matmul_kernel(%arg0: i32, %arg1: i32, %arg2: i32, %arg3: i32, %arg4: memref<1x128x128xbf16, #tpu.memory_space<vmem>>, %arg5: memref<1x128x8xbf16, #tpu.memory_space<vmem>>, %arg6: memref<1x8xf32, #tpu.memory_space<vmem>>, %arg7: memref<1x128x8xf32, #tpu.memory_space<vmem>>, %arg8: memref<128x8xf32, #tpu.memory_space<vmem>>) attributes {dimension_semantics = [#tpu.dimension_semantics<parallel>, #tpu.dimension_semantics<parallel>, #tpu.dimension_semantics<parallel>, #tpu.dimension_semantics<arbitrary>], iteration_bounds = array<i64: 4, 1, 1, 1>, scalar_prefetch = 0 : i64, scratch_operands = 1 : i64, tpu.core_type = #tpu.core_type<tc>, window_params = [{transform_indices = @transform_0, window_bounds = array<i64: 1, 128, 128>}, {transform_indices = @transform_1, window_bounds = array<i64: 1, 128, 8>}, {transform_indices = @transform_2, window_bounds = array<i64: 1, 8>}, {transform_indices = @transform_3, window_bounds = array<i64: 1, 128, 8>}]} {
    %c0_i32 = arith.constant 0 : i32
    %0 = arith.cmpi eq, %arg3, %c0_i32 : i32
    %1 = arith.extui %0 : i1 to i32
    %c0_i32_0 = arith.constant 0 : i32
    %2 = arith.cmpi ne, %1, %c0_i32_0 : i32
    scf.if %2 {
      %cst_12 = arith.constant 0.000000e+00 : f32
      %14 = vector.broadcast %cst_12 : f32 to vector<128x8xf32>
      %c0_13 = arith.constant 0 : index
      %c0_14 = arith.constant 0 : index
      %15 = vector.load %arg8[%c0_13, %c0_14] : memref<128x8xf32, #tpu.memory_space<vmem>>, vector<128x8xf32>
      tpu.vector_store %arg8[%c0_13, %c0_14], %14 {strides = array<i32>} : memref<128x8xf32, #tpu.memory_space<vmem>>, vector<128x8xf32>,
    } else {
    }
    %c0 = arith.constant 0 : index
    %c0_1 = arith.constant 0 : index
    %3 = vector.load %arg8[%c0, %c0_1] : memref<128x8xf32, #tpu.memory_space<vmem>>, vector<128x8xf32>
    %c0_2 = arith.constant 0 : index
    %c0_3 = arith.constant 0 : index
    %c0_4 = arith.constant 0 : index
    %4 = vector.load %arg4[%c0_2, %c0_3, %c0_4] : memref<1x128x128xbf16, #tpu.memory_space<vmem>>, vector<1x128x128xbf16>
    %5 = vector.shape_cast %4 : vector<1x128x128xbf16> to vector<128x128xbf16>
    %c0_5 = arith.constant 0 : index
    %c0_6 = arith.constant 0 : index
    %c0_7 = arith.constant 0 : index
    %6 = vector.load %arg5[%c0_5, %c0_6, %c0_7] : memref<1x128x8xbf16, #tpu.memory_space<vmem>>, vector<1x128x8xbf16>
    %7 = vector.shape_cast %6 : vector<1x128x8xbf16> to vector<128x8xbf16>
    %cst = arith.constant dense<0.000000e+00> : vector<128x8xf32>
    %8 = tpu.matmul %5, %7, %cst {dimension_numbers = #tpu.dot_dimension_numbers<[1], [0], [0], [1], [0, 0, 1, 1], [], []>} : vector<128x128xbf16>, vector<128x8xbf16>, vector<128x8xf32> -> vector<128x8xf32>
    %9 = arith.addf %3, %8 : vector<128x8xf32>
    %c0_8 = arith.constant 0 : index
    %c0_9 = arith.constant 0 : index
    %10 = vector.load %arg8[%c0_8, %c0_9] : memref<128x8xf32, #tpu.memory_space<vmem>>, vector<128x8xf32>
    tpu.vector_store %arg8[%c0_8, %c0_9], %9 {strides = array<i32>} : memref<128x8xf32, #tpu.memory_space<vmem>>, vector<128x8xf32>,
    %c0_i32_10 = arith.constant 0 : i32
    %11 = arith.cmpi eq, %arg3, %c0_i32_10 : i32
    %12 = arith.extui %11 : i1 to i32
    %c0_i32_11 = arith.constant 0 : i32
    %13 = arith.cmpi ne, %12, %c0_i32_11 : i32
    scf.if %13 {
      %c0_12 = arith.constant 0 : index
      %c0_13 = arith.constant 0 : index
      %14 = vector.load %arg8[%c0_12, %c0_13] : memref<128x8xf32, #tpu.memory_space<vmem>>, vector<128x8xf32>
      %c0_14 = arith.constant 0 : index
      %c0_15 = arith.constant 0 : index
      %15 = vector.load %arg6[%c0_14, %c0_15] : memref<1x8xf32, #tpu.memory_space<vmem>>, vector<1x8xf32>
      %16 = vector.broadcast %15 : vector<1x8xf32> to vector<128x8xf32>
      %17 = arith.addf %14, %16 : vector<128x8xf32>
      %c0_16 = arith.constant 0 : index
      %c0_17 = arith.constant 0 : index
      %c0_18 = arith.constant 0 : index
      %18 = vector.load %arg7[%c0_16, %c0_17, %c0_18] : memref<1x128x8xf32, #tpu.memory_space<vmem>>, vector<1x128x8xf32>
      %19 = vector.shape_cast %18 : vector<1x128x8xf32> to vector<128x8xf32>
      %20 = vector.shape_cast %17 : vector<128x8xf32> to vector<1x128x8xf32>
      tpu.vector_store %arg7[%c0_16, %c0_17, %c0_18], %20 {strides = array<i32>} : memref<1x128x8xf32, #tpu.memory_space<vmem>>, vector<1x128x8xf32>,
    } else {
    }
    return
  }
  func.func @transform_0(%arg0: i32, %arg1: i32, %arg2: i32, %arg3: i32) -> (i32, i32, i32) {
    %c0_i32 = arith.constant 0 : i32
    return %arg0, %arg1, %arg3 : i32, i32, i32
  }
  func.func @transform_1(%arg0: i32, %arg1: i32, %arg2: i32, %arg3: i32) -> (i32, i32, i32) {
    %c0_i32 = arith.constant 0 : i32
    return %arg0, %arg3, %arg2 : i32, i32, i32
  }
  func.func @transform_2(%arg0: i32, %arg1: i32, %arg2: i32, %arg3: i32) -> (i32, i32) {
    %c0_i32 = arith.constant 0 : i32
    %c0_i32_0 = arith.constant 0 : i32
    return %c0_i32, %arg2 : i32, i32
  }
  func.func @transform_3(%arg0: i32, %arg1: i32, %arg2: i32, %arg3: i32) -> (i32, i32, i32) {
    %c0_i32 = arith.constant 0 : i32
    return %arg0, %arg1, %arg2 : i32, i32, i32
  }
}

module attributes {stable_mosaic.version = 11 : i64} {
  func.func @_grouped_matmul_kernel(%arg0: i32, %arg1: i32, %arg2: i32, %arg3: i32, %arg4: memref<1x256x64xbf16, #tpu.memory_space<vmem>>, %arg5: memref<1x64x3xbf16, #tpu.memory_space<vmem>>, %arg6: memref<1x3xf32, #tpu.memory_space<vmem>>, %arg7: memref<1x256x3xf32, #tpu.memory_space<vmem>>, %arg8: memref<256x3xf32, #tpu.memory_space<vmem>>) attributes {dimension_semantics = [#tpu.dimension_semantics<parallel>, #tpu.dimension_semantics<parallel>, #tpu.dimension_semantics<parallel>, #tpu.dimension_semantics<arbitrary>], iteration_bounds = array<i64: 4, 2, 1, 1>, scalar_prefetch = 0 : i64, scratch_operands = 1 : i64, tpu.core_type = #tpu.core_type<tc>, window_params = [{transform_indices = @transform_0, window_bounds = array<i64: 1, 256, 64>}, {transform_indices = @transform_1, window_bounds = array<i64: 1, 64, 3>}, {transform_indices = @transform_2, window_bounds = array<i64: 1, 3>}, {transform_indices = @transform_3, window_bounds = array<i64: 1, 256, 3>}]} {
    %c0_i32 = arith.constant 0 : i32
    %0 = arith.cmpi eq, %arg3, %c0_i32 : i32
    %1 = arith.extui %0 : i1 to i32
    %c0_i32_0 = arith.constant 0 : i32
    %2 = arith.cmpi ne, %1, %c0_i32_0 : i32
    scf.if %2 {
      %cst_12 = arith.constant 0.000000e+00 : f32
      %14 = vector.broadcast %cst_12 : f32 to vector<256x3xf32>
      %c0_13 = arith.constant 0 : index
      %c0_14 = arith.constant 0 : index
      %15 = vector.load %arg8[%c0_13, %c0_14] : memref<256x3xf32, #tpu.memory_space<vmem>>, vector<256x3xf32>
      tpu.vector_store %arg8[%c0_13, %c0_14], %14 {strides = array<i32>} : memref<256x3xf32, #tpu.memory_space<vmem>>, vector<256x3xf32>,
    } else {
    }
    %c0 = arith.constant 0 : index
    %c0_1 = arith.constant 0 : index
    %3 = vector.load %arg8[%c0, %c0_1] : memref<256x3xf32, #tpu.memory_space<vmem>>, vector<256x3xf32>
    %c0_2 = arith.constant 0 : index
    %c0_3 = arith.constant 0 : index
    %c0_4 = arith.constant 0 : index
    %4 = vector.load %arg4[%c0_2, %c0_3, %c0_4] : memref<1x256x64xbf16, #tpu.memory_space<vmem>>, vector<1x256x64xbf16>
    %5 = vector.shape_cast %4 : vector<1x256x64xbf16> to vector<256x64xbf16>
    %c0_5 = arith.constant 0 : index
    %c0_6 = arith.constant 0 : index
    %c0_7 = arith.constant 0 : index
    %6 = vector.load %arg5[%c0_5, %c0_6, %c0_7] : memref<1x64x3xbf16, #tpu.memory_space<vmem>>, vector<1x64x3xbf16>
    %7 = vector.shape_cast %6 : vector<1x64x3xbf16> to vector<64x3xbf16>
    %cst = arith.constant dense<0.000000e+00> : vector<256x3xf32>
    %8 = tpu.matmul %5, %7, %cst {dimension_numbers = #tpu.dot_dimension_numbers<[1], [0], [0], [1], [0, 0, 1, 1], [], []>} : vector<256x64xbf16>, vector<64x3xbf16>, vector<256x3xf32> -> vector<256x3xf32>
    %9 = arith.addf %3, %8 : vector<256x3xf32>
    %c0_8 = arith.constant 0 : index
    %c0_9 = arith.constant 0 : index
    %10 = vector.load %arg8[%c0_8, %c0_9] : memref<256x3xf32, #tpu.memory_space<vmem>>, vector<256x3xf32>
    tpu.vector_store %arg8[%c0_8, %c0_9], %9 {strides = array<i32>} : memref<256x3xf32, #tpu.memory_space<vmem>>, vector<256x3xf32>,
    %c0_i32_10 = arith.constant 0 : i32
    %11 = arith.cmpi eq, %arg3, %c0_i32_10 : i32
    %12 = arith.extui %11 : i1 to i32
    %c0_i32_11 = arith.constant 0 : i32
    %13 = arith.cmpi ne, %12, %c0_i32_11 : i32
    scf.if %13 {
      %c0_12 = arith.constant 0 : index
      %c0_13 = arith.constant 0 : index
      %14 = vector.load %arg8[%c0_12, %c0_13] : memref<256x3xf32, #tpu.memory_space<vmem>>, vector<256x3xf32>
      %c0_14 = arith.constant 0 : index
      %c0_15 = arith.constant 0 : index
      %15 = vector.load %arg6[%c0_14, %c0_15] : memref<1x3xf32, #tpu.memory_space<vmem>>, vector<1x3xf32>
      %16 = vector.broadcast %15 : vector<1x3xf32> to vector<256x3xf32>
      %17 = arith.addf %14, %16 : vector<256x3xf32>
      %18 = math.tanh %17 : vector<256x3xf32>
      %cst_16 = arith.constant 5.000000e-01 : f32
      %19 = vector.broadcast %cst_16 : f32 to vector<256x3xf32>
      %20 = arith.mulf %18, %19 : vector<256x3xf32>
      %cst_17 = arith.constant 5.000000e-01 : f32
      %21 = vector.broadcast %cst_17 : f32 to vector<256x3xf32>
      %22 = arith.addf %20, %21 : vector<256x3xf32>
      %c0_18 = arith.constant 0 : index
      %c0_19 = arith.constant 0 : index
      %c0_20 = arith.constant 0 : index
      %23 = vector.load %arg7[%c0_18, %c0_19, %c0_20] : memref<1x256x3xf32, #tpu.memory_space<vmem>>, vector<1x256x3xf32>
      %24 = vector.shape_cast %23 : vector<1x256x3xf32> to vector<256x3xf32>
      %25 = vector.shape_cast %22 : vector<256x3xf32> to vector<1x256x3xf32>
      tpu.vector_store %arg7[%c0_18, %c0_19, %c0_20], %25 {strides = array<i32>} : memref<1x256x3xf32, #tpu.memory_space<vmem>>, vector<1x256x3xf32>,
    } else {
    }
    return
  }
  func.func @transform_0(%arg0: i32, %arg1: i32, %arg2: i32, %arg3: i32) -> (i32, i32, i32) {
    %c0_i32 = arith.constant 0 : i32
    return %arg0, %arg1, %arg3 : i32, i32, i32
  }
  func.func @transform_1(%arg0: i32, %arg1: i32, %arg2: i32, %arg3: i32) -> (i32, i32, i32) {
    %c0_i32 = arith.constant 0 : i32
    return %arg0, %arg3, %arg2 : i32, i32, i32
  }
  func.func @transform_2(%arg0: i32, %arg1: i32, %arg2: i32, %arg3: i32) -> (i32, i32) {
    %c0_i32 = arith.constant 0 : i32
    %c0_i32_0 = arith.constant 0 : i32
    return %c0_i32, %arg2 : i32, i32
  }
  func.func @transform_3(%arg0: i32, %arg1: i32, %arg2: i32, %arg3: i32) -> (i32, i32, i32) {
    %c0_i32 = arith.constant 0 : i32
    return %arg0, %arg1, %arg2 : i32, i32, i32
  }
}

</mosaic_0001>

<llo_original>
// kernel: _lambda_.10
$region0: #{_lambda_.10}
  #allocation0 [shape = 'u32[]', space=smem, size = 0x4, offset = 0x4, fixed_abs, tag = 'smem constant byte address 0x4 - core index']
  #allocation1 [shape = 'u32[144,128]{1,0:T(1,128)}', space=vmem, size = 0x12000, scoped, tag = 'internal scratch']
  #allocation2 [shape = 'f32[256,8]{1,0:T(8,128)}', space=vmem, size = 0x20000, scoped, tag = 'scratch operand']
  %s0 = inlined_call_operand.vmem [shape: bf16[1,512,48], index: 0, kind: input, shape index: {}]
  %s1 = inlined_call_operand.vmem [shape: bf16[1,48,8], index: 1, kind: input, shape index: {}]
  %s2 = inlined_call_operand.vmem [shape: f32[1,8], index: 2, kind: input, shape index: {}]
  %s3 = inlined_call_operand.vmem [shape: f32[1,512,8], index: 3, kind: output, shape index: {}]
  %s4 = sld [smem:[#allocation0]]
  $region53: #{_lambda_.10} parent=0
    _
  %s6 = ssub.s32 1, %s4
  %s7 = scalar_select 0, %s6, %s4
  loop: start=0, step=1, limit=4
  $region2: #{_lambda_.10} parent=0 // loop_pre_header
    _
  $region3: #{_lambda_.10} parent=0 // loop_header
    %s9 = sphi 0, %s13
    %p10 = scmp.ge.s32.totalorder %s9, 4
    %s16 = sphi 0, %s42
    %s17 = sphi 0, %s38
    %s18 = sphi 0, %s34
    %s19 = sphi 0, %s30
    %s20 = sphi 0, %s16
    %s21 = sphi 0, %s17
    %s22 = sphi 0, %s18
    %s23 = sphi 0, %s19
    %s24 = sphi 0, %s20
    %s25 = sphi 0, %s21
    %s26 = sphi 0, %s22
    %s27 = sphi 0, %s23
    %s49 = sphi 0, %s51
    %s52 = sphi 0, %s49
    %s53 = sphi 0, %s52
    %s69 = sphi 0, %s53
    %s79 = sphi 0, %s81
    %s82 = sphi 0, %s79
    %s83 = sphi 0, %s82
    %s99 = sphi 0, %s83
    %s105 = sphi 0, %s107
    %s108 = sphi 0, %s105
    %s109 = sphi 0, %s108
    %s125 = sphi 0, %s109
    %s135 = sphi 0, %s137
    %s138 = sphi 0, %s135
    %s139 = sphi 0, %s138
    %s155 = sphi 0, %s139
  $region4: #{_lambda_.10} parent=0 // loop_header_branch
    %12 = sbr.rel (%p10) target = $region8
  $region5: #{_lambda_.10} parent=0 // loop_body
    %s14 = ssub.s32 %s9, 1
    %s15 = ssub.s32 %s9, 2
    %s28 = sadd.s32 1, %s19
    %p29 = scmp.ge.s32.totalorder %s28, 1
    %s30 = scalar_select %p29, 0, %s28
    %s31 = sadd.s32 1, %s18
    %s32 = scalar_select %p29, %s31, %s18
    %p33 = scmp.ge.s32.totalorder %s32, 1
    %s34 = scalar_select %p33, 0, %s32
    %s35 = sadd.s32 1, %s17
    %s36 = scalar_select %p33, %s35, %s17
    %p37 = scmp.ge.s32.totalorder %s36, 2
    %s38 = scalar_select %p37, 0, %s36
    %s39 = sadd.s32 1, %s16
    %s40 = scalar_select %p37, %s39, %s16
    %p41 = scmp.ge.s32.totalorder %s40, 1
    %s42 = scalar_select %p41, 0, %s40
    %s43 = ssub.s32 %s16, %s42
    %s44 = ssub.s32 %s17, %s38
    %s45 = sor.u32 %s43, %s44
    %s46 = ssub.s32 %s19, %s30
    %s47 = sor.u32 %s45, %s46
    %p48 = scmp.eq.s32.totalorder %s47, 0
    %s50 = sadd.s32 %s49, 1
    %s51 = scalar_select %p48, %s49, %s50
    %p54 = pneg %p48
    %p55 = scmp.eq.s32.totalorder %s9, 1
    %p56 = por %p54, %p55
    %p57 = scmp.ne.s32.totalorder %s49, %s52
    %p58 = scmp.eq.s32.totalorder %s9, 0
    %p59 = por %p57, %p58
    %p60 = scmp.ne.s32.totalorder %s49, %s52
    %p61 = scmp.eq.s32.totalorder %s14, 1
    %p62 = por %p60, %p61
    %p63 = scmp.ne.s32.totalorder %s52, %s53
    %p64 = scmp.eq.s32.totalorder %s14, 0
    %p65 = por %p63, %p64
    %p66 = scmp.ne.s32.totalorder %s52, %s53
    %p67 = scmp.eq.s32.totalorder %s15, 1
    %p68 = por %p66, %p67
    %p70 = scmp.ne.s32.totalorder %s53, %s69
    %p71 = scmp.eq.s32.totalorder %s15, 0
    %p72 = por %p70, %p71
    %s73 = ssub.s32 %s16, %s42
    %s74 = ssub.s32 %s19, %s30
    %s75 = sor.u32 %s73, %s74
    %s76 = ssub.s32 %s18, %s34
    %s77 = sor.u32 %s75, %s76
    %p78 = scmp.eq.s32.totalorder %s77, 0
    %s80 = sadd.s32 %s79, 1
    %s81 = scalar_select %p78, %s79, %s80
    %p84 = pneg %p78
    %p85 = scmp.eq.s32.totalorder %s9, 1
    %p86 = por %p84, %p85
    %p87 = scmp.ne.s32.totalorder %s79, %s82
    %p88 = scmp.eq.s32.totalorder %s9, 0
    %p89 = por %p87, %p88
    %p90 = scmp.ne.s32.totalorder %s79, %s82
    %p91 = scmp.eq.s32.totalorder %s14, 1
    %p92 = por %p90, %p91
    %p93 = scmp.ne.s32.totalorder %s82, %s83
    %p94 = scmp.eq.s32.totalorder %s14, 0
    %p95 = por %p93, %p94
    %p96 = scmp.ne.s32.totalorder %s82, %s83
    %p97 = scmp.eq.s32.totalorder %s15, 1
    %p98 = por %p96, %p97
    %p100 = scmp.ne.s32.totalorder %s83, %s99
    %p101 = scmp.eq.s32.totalorder %s15, 0
    %p102 = por %p100, %p101
    %s103 = ssub.s32 %s18, %s34
    %p104 = scmp.eq.s32.totalorder %s103, 0
    %s106 = sadd.s32 %s105, 1
    %s107 = scalar_select %p104, %s105, %s106
    %p110 = pneg %p104
    %p111 = scmp.eq.s32.totalorder %s9, 1
    %p112 = por %p110, %p111
    %p113 = scmp.ne.s32.totalorder %s105, %s108
    %p114 = scmp.eq.s32.totalorder %s9, 0
    %p115 = por %p113, %p114
    %p116 = scmp.ne.s32.totalorder %s105, %s108
    %p117 = scmp.eq.s32.totalorder %s14, 1
    %p118 = por %p116, %p117
    %p119 = scmp.ne.s32.totalorder %s108, %s109
    %p120 = scmp.eq.s32.totalorder %s14, 0
    %p121 = por %p119, %p120
    %p122 = scmp.ne.s32.totalorder %s108, %s109
    %p123 = scmp.eq.s32.totalorder %s15, 1
    %p124 = por %p122, %p123
    %p126 = scmp.ne.s32.totalorder %s109, %s125
    %p127 = scmp.eq.s32.totalorder %s15, 0
    %p128 = por %p126, %p127
    %s129 = ssub.s32 %s16, %s42
    %s130 = ssub.s32 %s17, %s38
    %s131 = sor.u32 %s129, %s130
    %s132 = ssub.s32 %s18, %s34
    %s133 = sor.u32 %s131, %s132
    %p134 = scmp.eq.s32.totalorder %s133, 0
    %s136 = sadd.s32 %s135, 1
    %s137 = scalar_select %p134, %s135, %s136
    %p140 = pneg %p134
    %p141 = scmp.eq.s32.totalorder %s9, 1
    %p142 = por %p140, %p141
    %p143 = scmp.ne.s32.totalorder %s135, %s138
    %p144 = scmp.eq.s32.totalorder %s9, 0
    %p145 = por %p143, %p144
    %p146 = scmp.ne.s32.totalorder %s135, %s138
    %p147 = scmp.eq.s32.totalorder %s14, 1
    %p148 = por %p146, %p147
    %p149 = scmp.ne.s32.totalorder %s138, %s139
    %p150 = scmp.eq.s32.totalorder %s14, 0
    %p151 = por %p149, %p150
    %p152 = scmp.ne.s32.totalorder %s138, %s139
    %p153 = scmp.eq.s32.totalorder %s15, 1
    %p154 = por %p152, %p153
    %p156 = scmp.ne.s32.totalorder %s139, %s155
    %p157 = scmp.eq.s32.totalorder %s15, 0
    %p158 = por %p156, %p157
    %p159 = scmp.le.s32.totalorder 1, %s9
    %p160 = scmp.lt.s32.totalorder %s9, 3
    %p161 = pnand %p159, %p160
    %p162 = pneg %p161
    // Predicated region
    $region9: #{_lambda_.10} parent=5 // pred_check
      _
    $region10: #{_lambda_.10} parent=5 // pred_check_branch
      %164 = sbr.rel (%p161) target = $region12
    $region11: #{_lambda_.10} parent=5 // pred_region
      %s165 = ssub.s32 %s9, 1
      // Predicated region
      $region13: #{_lambda_.10} parent=11 // pred_check
        %p166 = pneg %p95
      $region14: #{_lambda_.10} parent=11 // pred_check_branch
        %168 = sbr.rel (%p166) target = $region16
      $region15: #{_lambda_.10} parent=11 // pred_region
        %s169 = smul.u32 6, %s23
        %p170 = scmp.lt.s32.totalorder %s20, 0
        %s171 = scalar_select %p170, %s20, 0
        %p172 = scmp.lt.s32.totalorder %s169, 5
        %s173 = scalar_select %p172, %s169, 5
        %p174 = scmp.lt.s32.totalorder %s22, 0
        %s175 = scalar_select %p174, %s22, 0
        %s176 = sadd.s32 %s175, %s173
        %s177 = smul.addr %s171, 6
        %s178 = sadd.s32 %s176, %s177
        %s179 = smul.addr %s178, 4
        %s180 = scalar_lea.vmem %s1, %s179
        %s181 = smul.u32 6, %s23
      $region16: #{_lambda_.10} parent=11 // pred_fallthru
        _
      // Predicated region
      $region17: #{_lambda_.10} parent=11 // pred_check
        %p182 = pneg %p121
      $region18: #{_lambda_.10} parent=11 // pred_check_branch
        %184 = sbr.rel (%p182) target = $region20
      $region19: #{_lambda_.10} parent=11 // pred_region
        %p185 = scmp.lt.s32.totalorder %s22, 0
        %s186 = scalar_select %p185, %s22, 0
        %s187 = scalar_lea.vmem %s2, %s186
      $region20: #{_lambda_.10} parent=11 // pred_fallthru
        _
    $region12: #{_lambda_.10} parent=5 // pred_fallthru
      _
    %p188 = scmp.lt.s32.totalorder %s9, 2
    // Predicated region
    $region21: #{_lambda_.10} parent=5 // pred_check
      %p189 = pneg %p188
    $region22: #{_lambda_.10} parent=5 // pred_check_branch
      %191 = sbr.rel (%p189) target = $region24
    $region23: #{_lambda_.10} parent=5 // pred_region
      // Predicated region
      $region25: #{_lambda_.10} parent=23 // pred_check
        %p192 = pneg %p59
      $region26: #{_lambda_.10} parent=23 // pred_check_branch
        %194 = sbr.rel (%p192) target = $region28
      $region27: #{_lambda_.10} parent=23 // pred_region
        %s195 = smul.u32 32, %s17
        %p196 = scmp.lt.s32.totalorder %s16, 0
        %s197 = scalar_select %p196, %s16, 0
        %p198 = scmp.lt.s32.totalorder %s195, 63
        %s199 = scalar_select %p198, %s195, 63
        %p200 = scmp.lt.s32.totalorder %s19, 0
        %s201 = scalar_select %p200, %s19, 0
        %s202 = sadd.s32 %s201, %s199
        %s203 = smul.addr %s197, 64
        %s204 = sadd.s32 %s202, %s203
        %s205 = smul.addr %s204, 4
        %s206 = scalar_lea.vmem %s0, %s205
        %s207 = smul.u32 32, %s17
      $region28: #{_lambda_.10} parent=23 // pred_fallthru
        _
    $region24: #{_lambda_.10} parent=5 // pred_fallthru
      _
    %p208 = scmp.le.s32.totalorder 1, %s9
    %p209 = scmp.lt.s32.totalorder %s9, 3
    %p210 = pnand %p208, %p209
    %p211 = pneg %p210
    // Predicated region
    $region29: #{_lambda_.10} parent=5 // pred_check
      _
    $region30: #{_lambda_.10} parent=5 // pred_check_branch
      %213 = sbr.rel (%p210) target = $region32
    $region31: #{_lambda_.10} parent=5 // pred_region
      %s214 = ssub.s32 %s9, 1
      %s215 = smul.u32 32, %s21
      %p216 = scmp.lt.s32.totalorder %s20, 0
      %s217 = scalar_select %p216, %s20, 0
      %p218 = scmp.lt.s32.totalorder %s215, 63
      %s219 = scalar_select %p218, %s215, 63
      %p220 = scmp.lt.s32.totalorder %s23, 0
      %s221 = scalar_select %p220, %s23, 0
      %s222 = sadd.s32 %s221, %s219
      %s223 = smul.addr %s217, 64
      %s224 = sadd.s32 %s222, %s223
      %s225 = smul.addr %s224, 4
      %s226 = scalar_lea.vmem %s0, %s225
      %p227 = pneg %p65
      %p228 = pneg %p62
      %s229 = smul.u32 6, %s23
      %p230 = scmp.lt.s32.totalorder %s20, 0
      %s231 = scalar_select %p230, %s20, 0
      %p232 = scmp.lt.s32.totalorder %s229, 5
      %s233 = scalar_select %p232, %s229, 5
      %p234 = scmp.lt.s32.totalorder %s22, 0
      %s235 = scalar_select %p234, %s22, 0
      %s236 = sadd.s32 %s235, %s233
      %s237 = smul.addr %s231, 6
      %s238 = sadd.s32 %s236, %s237
      %s239 = smul.addr %s238, 4
      %s240 = scalar_lea.vmem %s1, %s239
      %p241 = pneg %p95
      %p242 = pneg %p92
      %p243 = scmp.lt.s32.totalorder %s22, 0
      %s244 = scalar_select %p243, %s22, 0
      %s245 = scalar_lea.vmem %s2, %s244
      %p246 = pneg %p121
      %p247 = pneg %p118
      %p248 = pneg %p151
      %p249 = pneg %p148
      %s250 = smul.u32 32, %s21
      %p251 = scmp.lt.s32.totalorder %s20, 0
      %s252 = scalar_select %p251, %s20, 0
      %p253 = scmp.lt.s32.totalorder %s250, 63
      %s254 = scalar_select %p253, %s250, 63
      %p255 = scmp.lt.s32.totalorder %s22, 0
      %s256 = scalar_select %p255, %s22, 0
      %s257 = sadd.s32 %s256, %s254
      %s258 = smul.addr %s252, 64
      %s259 = sadd.s32 %s257, %s258
      %s260 = smul.addr %s259, 8
      %s261 = scalar_lea.vmem %s3, %s260
      %s262 = smul.u32 32, %s21
      %p263 = scmp.lt.s32.totalorder %s20, 0
      %s264 = scalar_select %p263, %s20, 0
      %p265 = scmp.lt.s32.totalorder %s262, 63
      %s266 = scalar_select %p265, %s262, 63
      %p267 = scmp.lt.s32.totalorder %s23, 0
      %s268 = scalar_select %p267, %s23, 0
      %s269 = sadd.s32 %s268, %s266
      %s270 = smul.addr %s264, 64
      %s271 = sadd.s32 %s269, %s270
      %s272 = smul.addr %s271, 4
      %s273 = scalar_lea.vmem %s0, %s272
      %s274 = smul.u32 32, %s21
      %s275 = smul.u32 6, %s23
      %p276 = scmp.lt.s32.totalorder %s20, 0
      %s277 = scalar_select %p276, %s20, 0
      %p278 = scmp.lt.s32.totalorder %s275, 5
      %s279 = scalar_select %p278, %s275, 5
      %p280 = scmp.lt.s32.totalorder %s22, 0
      %s281 = scalar_select %p280, %s22, 0
      %s282 = sadd.s32 %s281, %s279
      %s283 = smul.addr %s277, 6
      %s284 = sadd.s32 %s282, %s283
      %s285 = smul.addr %s284, 4
      %s286 = scalar_lea.vmem %s1, %s285
      %s287 = smul.u32 6, %s23
      %p288 = scmp.lt.s32.totalorder %s22, 0
      %s289 = scalar_select %p288, %s22, 0
      %s290 = scalar_lea.vmem %s2, %s289
      %s291 = smul.u32 32, %s21
      %p292 = scmp.lt.s32.totalorder %s20, 0
      %s293 = scalar_select %p292, %s20, 0
      %p294 = scmp.lt.s32.totalorder %s291, 63
      %s295 = scalar_select %p294, %s291, 63
      %p296 = scmp.lt.s32.totalorder %s22, 0
      %s297 = scalar_select %p296, %s22, 0
      %s298 = sadd.s32 %s297, %s295
      %s299 = smul.addr %s293, 64
      %s300 = sadd.s32 %s298, %s299
      %s301 = smul.addr %s300, 8
      %s302 = scalar_lea.vmem %s3, %s301
      %s303 = smul.u32 32, %s21
      %p305 = scmp.eq.s32.totalorder %s23, 0
      // Predicated region
      $region33: #{_lambda_.10} parent=31 // pred_check
        %p306 = pneg %p305
      $region34: #{_lambda_.10} parent=31 // pred_check_branch
        %308 = sbr.rel (%p306) target = $region36
      $region35: #{_lambda_.10} parent=31 // pred_region
        %vm309 = vcmask 64512
        %310 = vst.msk [vmem:[#allocation2] sm:$0xff] %vm309, 0.0
        %311 = vst.msk [vmem:[#allocation2 + $0x8] sm:$0xff] %vm309, 0.0
        %312 = vst.msk [vmem:[#allocation2 + $0x10] sm:$0xff] %vm309, 0.0
        %313 = vst.msk [vmem:[#allocation2 + $0x18] sm:$0xff] %vm309, 0.0
        %314 = vst.msk [vmem:[#allocation2 + $0x20] sm:$0xff] %vm309, 0.0
        %315 = vst.msk [vmem:[#allocation2 + $0x28] sm:$0xff] %vm309, 0.0
        %316 = vst.msk [vmem:[#allocation2 + $0x30] sm:$0xff] %vm309, 0.0
        %317 = vst.msk [vmem:[#allocation2 + $0x38] sm:$0xff] %vm309, 0.0
        %318 = vst.msk [vmem:[#allocation2 + $0x40] sm:$0xff] %vm309, 0.0
        %319 = vst.msk [vmem:[#allocation2 + $0x48] sm:$0xff] %vm309, 0.0
        %320 = vst.msk [vmem:[#allocation2 + $0x50] sm:$0xff] %vm309, 0.0
        %321 = vst.msk [vmem:[#allocation2 + $0x58] sm:$0xff] %vm309, 0.0
        %322 = vst.msk [vmem:[#allocation2 + $0x60] sm:$0xff] %vm309, 0.0
        %323 = vst.msk [vmem:[#allocation2 + $0x68] sm:$0xff] %vm309, 0.0
        %324 = vst.msk [vmem:[#allocation2 + $0x70] sm:$0xff] %vm309, 0.0
        %325 = vst.msk [vmem:[#allocation2 + $0x78] sm:$0xff] %vm309, 0.0
        %326 = vst.msk [vmem:[#allocation2 + $0x80] sm:$0xff] %vm309, 0.0
        %327 = vst.msk [vmem:[#allocation2 + $0x88] sm:$0xff] %vm309, 0.0
        %328 = vst.msk [vmem:[#allocation2 + $0x90] sm:$0xff] %vm309, 0.0
        %329 = vst.msk [vmem:[#allocation2 + $0x98] sm:$0xff] %vm309, 0.0
        %330 = vst.msk [vmem:[#allocation2 + $0xa0] sm:$0xff] %vm309, 0.0
        %331 = vst.msk [vmem:[#allocation2 + $0xa8] sm:$0xff] %vm309, 0.0
        %332 = vst.msk [vmem:[#allocation2 + $0xb0] sm:$0xff] %vm309, 0.0
        %333 = vst.msk [vmem:[#allocation2 + $0xb8] sm:$0xff] %vm309, 0.0
        %334 = vst.msk [vmem:[#allocation2 + $0xc0] sm:$0xff] %vm309, 0.0
        %335 = vst.msk [vmem:[#allocation2 + $0xc8] sm:$0xff] %vm309, 0.0
        %336 = vst.msk [vmem:[#allocation2 + $0xd0] sm:$0xff] %vm309, 0.0
        %337 = vst.msk [vmem:[#allocation2 + $0xd8] sm:$0xff] %vm309, 0.0
        %338 = vst.msk [vmem:[#allocation2 + $0xe0] sm:$0xff] %vm309, 0.0
        %339 = vst.msk [vmem:[#allocation2 + $0xe8] sm:$0xff] %vm309, 0.0
        %340 = vst.msk [vmem:[#allocation2 + $0xf0] sm:$0xff] %vm309, 0.0
        %341 = vst.msk [vmem:[#allocation2 + $0xf8] sm:$0xff] %vm309, 0.0
      $region36: #{_lambda_.10} parent=31 // pred_fallthru
        _
      %v342 = vld [vmem:[#allocation2] sm:$0xff]
      %v343 = vld [vmem:[#allocation2 + $0x8] sm:$0xff]
      %v344 = vld [vmem:[#allocation2 + $0x10] sm:$0xff]
      %v345 = vld [vmem:[#allocation2 + $0x18] sm:$0xff]
      %v346 = vld [vmem:[#allocation2 + $0x20] sm:$0xff]
      %v347 = vld [vmem:[#allocation2 + $0x28] sm:$0xff]
      %v348 = vld [vmem:[#allocation2 + $0x30] sm:$0xff]
      %v349 = vld [vmem:[#allocation2 + $0x38] sm:$0xff]
      %v350 = vld [vmem:[#allocation2 + $0x40] sm:$0xff]
      %v351 = vld [vmem:[#allocation2 + $0x48] sm:$0xff]
      %v352 = vld [vmem:[#allocation2 + $0x50] sm:$0xff]
      %v353 = vld [vmem:[#allocation2 + $0x58] sm:$0xff]
      %v354 = vld [vmem:[#allocation2 + $0x60] sm:$0xff]
      %v355 = vld [vmem:[#allocation2 + $0x68] sm:$0xff]
      %v356 = vld [vmem:[#allocation2 + $0x70] sm:$0xff]
      %v357 = vld [vmem:[#allocation2 + $0x78] sm:$0xff]
      %v358 = vld [vmem:[#allocation2 + $0x80] sm:$0xff]
      %v359 = vld [vmem:[#allocation2 + $0x88] sm:$0xff]
      %v360 = vld [vmem:[#allocation2 + $0x90] sm:$0xff]
      %v361 = vld [vmem:[#allocation2 + $0x98] sm:$0xff]
      %v362 = vld [vmem:[#allocation2 + $0xa0] sm:$0xff]
      %v363 = vld [vmem:[#allocation2 + $0xa8] sm:$0xff]
      %v364 = vld [vmem:[#allocation2 + $0xb0] sm:$0xff]
      %v365 = vld [vmem:[#allocation2 + $0xb8] sm:$0xff]
      %v366 = vld [vmem:[#allocation2 + $0xc0] sm:$0xff]
      %v367 = vld [vmem:[#allocation2 + $0xc8] sm:$0xff]
      %v368 = vld [vmem:[#allocation2 + $0xd0] sm:$0xff]
      %v369 = vld [vmem:[#allocation2 + $0xd8] sm:$0xff]
      %v370 = vld [vmem:[#allocation2 + $0xe0] sm:$0xff]
      %v371 = vld [vmem:[#allocation2 + $0xe8] sm:$0xff]
      %v372 = vld [vmem:[#allocation2 + $0xf0] sm:$0xff]
      %v373 = vld [vmem:[#allocation2 + $0xf8] sm:$0xff]
      %v374 = vld [vmem:[%s273] sm:$0xf]
      %v375 = vld [vmem:[%s273 + $0x4] sm:$0xf]
      %v376 = vld [vmem:[%s273 + $0x8] sm:$0xf]
      %v377 = vld [vmem:[%s273 + $0xc] sm:$0xf]
      %v378 = vld [vmem:[%s273 + $0x10] sm:$0xf]
      %v379 = vld [vmem:[%s273 + $0x14] sm:$0xf]
      %v380 = vld [vmem:[%s273 + $0x18] sm:$0xf]
      %v381 = vld [vmem:[%s273 + $0x1c] sm:$0xf]
      %v382 = vld [vmem:[%s273 + $0x20] sm:$0xf]
      %v383 = vld [vmem:[%s273 + $0x24] sm:$0xf]
      %v384 = vld [vmem:[%s273 + $0x28] sm:$0xf]
      %v385 = vld [vmem:[%s273 + $0x2c] sm:$0xf]
      %v386 = vld [vmem:[%s273 + $0x30] sm:$0xf]
      %v387 = vld [vmem:[%s273 + $0x34] sm:$0xf]
      %v388 = vld [vmem:[%s273 + $0x38] sm:$0xf]
      %v389 = vld [vmem:[%s273 + $0x3c] sm:$0xf]
      %v390 = vld [vmem:[%s273 + $0x40] sm:$0xf]
      %v391 = vld [vmem:[%s273 + $0x44] sm:$0xf]
      %v392 = vld [vmem:[%s273 + $0x48] sm:$0xf]
      %v393 = vld [vmem:[%s273 + $0x4c] sm:$0xf]
      %v394 = vld [vmem:[%s273 + $0x50] sm:$0xf]
      %v395 = vld [vmem:[%s273 + $0x54] sm:$0xf]
      %v396 = vld [vmem:[%s273 + $0x58] sm:$0xf]
      %v397 = vld [vmem:[%s273 + $0x5c] sm:$0xf]
      %v398 = vld [vmem:[%s273 + $0x60] sm:$0xf]
      %v399 = vld [vmem:[%s273 + $0x64] sm:$0xf]
      %v400 = vld [vmem:[%s273 + $0x68] sm:$0xf]
      %v401 = vld [vmem:[%s273 + $0x6c] sm:$0xf]
      %v402 = vld [vmem:[%s273 + $0x70] sm:$0xf]
      %v403 = vld [vmem:[%s273 + $0x74] sm:$0xf]
      %v404 = vld [vmem:[%s273 + $0x78] sm:$0xf]
      %v405 = vld [vmem:[%s273 + $0x7c] sm:$0xf]
      %v406 = vld [vmem:[%s286] sm:$0xf]
      %v407 = vld [vmem:[%s286 + $0x4] sm:$0xf]
      %v408 = vld [vmem:[%s286 + $0x8] sm:$0xf]
      %v409 = vld [vmem:[%s286 + $0xc] sm:$0xf]
      %v410 = vld [vmem:[%s286 + $0x10] sm:$0xf]
      %v411 = vld [vmem:[%s286 + $0x14] sm:$0xf]
      %v444 = vunpack.c.l.b16 %v374
      %v445 = vunpack.c.l.b16 %v375
      %v446 = vunpack.c.l.b16 %v376
      %v447 = vunpack.c.l.b16 %v377
      %v448 = vunpack.c.l.b16 %v378
      %v449 = vunpack.c.l.b16 %v379
      %v450 = vunpack.c.l.b16 %v380
      %v451 = vunpack.c.l.b16 %v381
      %v452 = vunpack.c.l.b16 %v382
      %v453 = vunpack.c.l.b16 %v383
      %v454 = vunpack.c.l.b16 %v384
      %v455 = vunpack.c.l.b16 %v385
      %v456 = vunpack.c.l.b16 %v386
      %v457 = vunpack.c.l.b16 %v387
      %v458 = vunpack.c.l.b16 %v388
      %v459 = vunpack.c.l.b16 %v389
      %v460 = vunpack.c.l.b16 %v390
      %v461 = vunpack.c.l.b16 %v391
      %v462 = vunpack.c.l.b16 %v392
      %v463 = vunpack.c.l.b16 %v393
      %v464 = vunpack.c.l.b16 %v394
      %v465 = vunpack.c.l.b16 %v395
      %v466 = vunpack.c.l.b16 %v396
      %v467 = vunpack.c.l.b16 %v397
      %v468 = vunpack.c.l.b16 %v398
      %v469 = vunpack.c.l.b16 %v399
      %v470 = vunpack.c.l.b16 %v400
      %v471 = vunpack.c.l.b16 %v401
      %v472 = vunpack.c.l.b16 %v402
      %v473 = vunpack.c.l.b16 %v403
      %v474 = vunpack.c.l.b16 %v404
      %v475 = vunpack.c.l.b16 %v405
      %v476 = vpack.c.b16 %v445, %v444
      %v477 = vpack.c.b16 %v447, %v446
      %v478 = vpack.c.b16 %v449, %v448
      %v479 = vpack.c.b16 %v451, %v450
      %v480 = vpack.c.b16 %v453, %v452
      %v481 = vpack.c.b16 %v455, %v454
      %v482 = vpack.c.b16 %v457, %v456
      %v483 = vpack.c.b16 %v459, %v458
      %v484 = vpack.c.b16 %v461, %v460
      %v485 = vpack.c.b16 %v463, %v462
      %v486 = vpack.c.b16 %v465, %v464
      %v487 = vpack.c.b16 %v467, %v466
      %v488 = vpack.c.b16 %v469, %v468
      %v489 = vpack.c.b16 %v471, %v470
      %v490 = vpack.c.b16 %v473, %v472
      %v491 = vpack.c.b16 %v475, %v474
      %v498 = vunpack.c.l.b16 %v406
      %v499 = vunpack.c.l.b16 %v407
      %v500 = vunpack.c.l.b16 %v408
      %v501 = vunpack.c.l.b16 %v409
      %v502 = vunpack.c.l.b16 %v410
      %v503 = vunpack.c.l.b16 %v411
      %v504 = vpack.c.b16 %v499, %v498
      %v505 = vpack.c.b16 %v501, %v500
      %v506 = vpack.c.b16 %v503, %v502
      %vm510 = vcmask 392192
      %v512 = vsel %vm510, %v476, 0
      %v515 = vsel %vm510, %v477, 0
      %v518 = vsel %vm510, %v478, 0
      %v521 = vsel %vm510, %v479, 0
      %v524 = vsel %vm510, %v480, 0
      %v527 = vsel %vm510, %v481, 0
      %v530 = vsel %vm510, %v482, 0
      %v533 = vsel %vm510, %v483, 0
      %v536 = vsel %vm510, %v484, 0
      %v539 = vsel %vm510, %v485, 0
      %v542 = vsel %vm510, %v486, 0
      %v545 = vsel %vm510, %v487, 0
      %v548 = vsel %vm510, %v488, 0
      %v551 = vsel %vm510, %v489, 0
      %v554 = vsel %vm510, %v490, 0
      %v557 = vsel %vm510, %v491, 0
      %559 = vmatprep.subr.bf16.mxu0 0
      %560 = vmatpush1.bf16.msra.mxu0 %v504
      %561 = vmatprep.subr.bf16.mxu0 0
      %562 = vmatpush1.bf16.msra.mxu0 %v505
      %563 = vmatprep.subr.bf16.mxu0 0
      %564 = vmatpush1.bf16.msra.mxu0 %v506
      %565 = vmatprep.subr.bf16.mxu0 0
      %566 = vmatpush1.bf16.msra.mxu0 0
      %567 = vmatprep.subr.bf16.mxu0 0
      %568 = vmatpush1.bf16.msra.mxu0 0
      %569 = vmatprep.subr.bf16.mxu0 0
      %570 = vmatpush1.bf16.msra.mxu0 0
      %571 = vmatprep.subr.bf16.mxu0 0
      %572 = vmatpush1.bf16.msra.mxu0 0
      %573 = vmatprep.subr.bf16.mxu0 0
      %574 = vmatpush1.bf16.msra.mxu0 0
      %575 = vmatprep.subr.bf16.mxu0 0
      %576 = vmatpush1.bf16.msra.mxu0 0
      %577 = vmatprep.subr.bf16.mxu0 0
      %578 = vmatpush1.bf16.msra.mxu0 0
      %579 = vmatprep.subr.bf16.mxu0 0
      %580 = vmatpush1.bf16.msra.mxu0 0
      %581 = vmatprep.subr.bf16.mxu0 0
      %582 = vmatpush1.bf16.msra.mxu0 0
      %583 = vmatprep.subr.bf16.mxu0 0
      %584 = vmatpush1.bf16.msra.mxu0 0
      %585 = vmatprep.subr.bf16.mxu0 0
      %586 = vmatpush1.bf16.msra.mxu0 0
      %587 = vmatprep.subr.bf16.mxu0 0
      %588 = vmatpush1.bf16.msra.mxu0 0
      %589 = vmatprep.subr.bf16.mxu0 0
      %590 = vmatpush1.bf16.msra.mxu0 0
      %591 = vmatprep.mubr.bf16.mxu0 0
      %592 = vmatmul.mubr.bf16.gmra.mrb[0].mxu0 %v512
      %v593 = vpop.f32.mrb[0].mxu0
      %v594 = vadd.f32 0.0, %v593
      %v595 = vpop.f32.mrb[0].mxu0
      %v596 = vpop.f32.mrb[0].mxu0
      %v597 = vadd.f32 0.0, %v596
      %v598 = vpop.f32.mrb[0].mxu0
      %599 = vmatprep.mubr.bf16.mxu0 0
      %600 = vmatmul.mubr.bf16.gmra.mrb[0].mxu0 %v515
      %v601 = vpop.f32.mrb[0].mxu0
      %v602 = vadd.f32 0.0, %v601
      %v603 = vpop.f32.mrb[0].mxu0
      %v604 = vpop.f32.mrb[0].mxu0
      %v605 = vadd.f32 0.0, %v604
      %v606 = vpop.f32.mrb[0].mxu0
      %607 = vmatprep.mubr.bf16.mxu0 0
      %608 = vmatmul.mubr.bf16.gmra.mrb[0].mxu0 %v518
      %v609 = vpop.f32.mrb[0].mxu0
      %v610 = vadd.f32 0.0, %v609
      %v611 = vpop.f32.mrb[0].mxu0
      %v612 = vpop.f32.mrb[0].mxu0
      %v613 = vadd.f32 0.0, %v612
      %v614 = vpop.f32.mrb[0].mxu0
      %615 = vmatprep.mubr.bf16.mxu0 0
      %616 = vmatmul.mubr.bf16.gmra.mrb[0].mxu0 %v521
      %v617 = vpop.f32.mrb[0].mxu0
      %v618 = vadd.f32 0.0, %v617
      %v619 = vpop.f32.mrb[0].mxu0
      %v620 = vpop.f32.mrb[0].mxu0
      %v621 = vadd.f32 0.0, %v620
      %v622 = vpop.f32.mrb[0].mxu0
      %623 = vmatprep.mubr.bf16.mxu0 0
      %624 = vmatmul.mubr.bf16.gmra.mrb[0].mxu0 %v524
      %v625 = vpop.f32.mrb[0].mxu0
      %v626 = vadd.f32 0.0, %v625
      %v627 = vpop.f32.mrb[0].mxu0
      %v628 = vpop.f32.mrb[0].mxu0
      %v629 = vadd.f32 0.0, %v628
      %v630 = vpop.f32.mrb[0].mxu0
      %631 = vmatprep.mubr.bf16.mxu0 0
      %632 = vmatmul.mubr.bf16.gmra.mrb[0].mxu0 %v527
      %v633 = vpop.f32.mrb[0].mxu0
      %v634 = vadd.f32 0.0, %v633
      %v635 = vpop.f32.mrb[0].mxu0
      %v636 = vpop.f32.mrb[0].mxu0
      %v637 = vadd.f32 0.0, %v636
      %v638 = vpop.f32.mrb[0].mxu0
      %639 = vmatprep.mubr.bf16.mxu0 0
      %640 = vmatmul.mubr.bf16.gmra.mrb[0].mxu0 %v530
      %v641 = vpop.f32.mrb[0].mxu0
      %v642 = vadd.f32 0.0, %v641
      %v643 = vpop.f32.mrb[0].mxu0
      %v644 = vpop.f32.mrb[0].mxu0
      %v645 = vadd.f32 0.0, %v644
      %v646 = vpop.f32.mrb[0].mxu0
      %647 = vmatprep.mubr.bf16.mxu0 0
      %648 = vmatmul.mubr.bf16.gmra.mrb[0].mxu0 %v533
      %v649 = vpop.f32.mrb[0].mxu0
      %v650 = vadd.f32 0.0, %v649
      %v651 = vpop.f32.mrb[0].mxu0
      %v652 = vpop.f32.mrb[0].mxu0
      %v653 = vadd.f32 0.0, %v652
      %v654 = vpop.f32.mrb[0].mxu0
      %655 = vmatprep.mubr.bf16.mxu0 0
      %656 = vmatmul.mubr.bf16.gmra.mrb[0].mxu0 %v536
      %v657 = vpop.f32.mrb[0].mxu0
      %v658 = vadd.f32 0.0, %v657
      %v659 = vpop.f32.mrb[0].mxu0
      %v660 = vpop.f32.mrb[0].mxu0
      %v661 = vadd.f32 0.0, %v660
      %v662 = vpop.f32.mrb[0].mxu0
      %663 = vmatprep.mubr.bf16.mxu0 0
      %664 = vmatmul.mubr.bf16.gmra.mrb[0].mxu0 %v539
      %v665 = vpop.f32.mrb[0].mxu0
      %v666 = vadd.f32 0.0, %v665
      %v667 = vpop.f32.mrb[0].mxu0
      %v668 = vpop.f32.mrb[0].mxu0
      %v669 = vadd.f32 0.0, %v668
      %v670 = vpop.f32.mrb[0].mxu0
      %671 = vmatprep.mubr.bf16.mxu0 0
      %672 = vmatmul.mubr.bf16.gmra.mrb[0].mxu0 %v542
      %v673 = vpop.f32.mrb[0].mxu0
      %v674 = vadd.f32 0.0, %v673
      %v675 = vpop.f32.mrb[0].mxu0
      %v676 = vpop.f32.mrb[0].mxu0
      %v677 = vadd.f32 0.0, %v676
      %v678 = vpop.f32.mrb[0].mxu0
      %679 = vmatprep.mubr.bf16.mxu0 0
      %680 = vmatmul.mubr.bf16.gmra.mrb[0].mxu0 %v545
      %v681 = vpop.f32.mrb[0].mxu0
      %v682 = vadd.f32 0.0, %v681
      %v683 = vpop.f32.mrb[0].mxu0
      %v684 = vpop.f32.mrb[0].mxu0
      %v685 = vadd.f32 0.0, %v684
      %v686 = vpop.f32.mrb[0].mxu0
      %687 = vmatprep.mubr.bf16.mxu0 0
      %688 = vmatmul.mubr.bf16.gmra.mrb[0].mxu0 %v548
      %v689 = vpop.f32.mrb[0].mxu0
      %v690 = vadd.f32 0.0, %v689
      %v691 = vpop.f32.mrb[0].mxu0
      %v692 = vpop.f32.mrb[0].mxu0
      %v693 = vadd.f32 0.0, %v692
      %v694 = vpop.f32.mrb[0].mxu0
      %695 = vmatprep.mubr.bf16.mxu0 0
      %696 = vmatmul.mubr.bf16.gmra.mrb[0].mxu0 %v551
      %v697 = vpop.f32.mrb[0].mxu0
      %v698 = vadd.f32 0.0, %v697
      %v699 = vpop.f32.mrb[0].mxu0
      %v700 = vpop.f32.mrb[0].mxu0
      %v701 = vadd.f32 0.0, %v700
      %v702 = vpop.f32.mrb[0].mxu0
      %703 = vmatprep.mubr.bf16.mxu0 0
      %704 = vmatmul.mubr.bf16.gmra.mrb[0].mxu0 %v554
      %v705 = vpop.f32.mrb[0].mxu0
      %v706 = vadd.f32 0.0, %v705
      %v707 = vpop.f32.mrb[0].mxu0
      %v708 = vpop.f32.mrb[0].mxu0
      %v709 = vadd.f32 0.0, %v708
      %v710 = vpop.f32.mrb[0].mxu0
      %711 = vmatprep.mubr.bf16.mxu0 0
      %712 = vmatmul.mubr.bf16.gmra.mrb[0].mxu0 %v557
      %v713 = vpop.f32.mrb[0].mxu0
      %v714 = vadd.f32 0.0, %v713
      %v715 = vpop.f32.mrb[0].mxu0
      %v716 = vpop.f32.mrb[0].mxu0
      %v717 = vadd.f32 0.0, %v716
      %v718 = vpop.f32.mrb[0].mxu0
      %719 = vdwg.mxu0
      %v720 = vadd.f32 %v342, %v594
      %v721 = vadd.f32 %v343, %v597
      %v722 = vadd.f32 %v344, %v602
      %v723 = vadd.f32 %v345, %v605
      %v724 = vadd.f32 %v346, %v610
      %v725 = vadd.f32 %v347, %v613
      %v726 = vadd.f32 %v348, %v618
      %v727 = vadd.f32 %v349, %v621
      %v728 = vadd.f32 %v350, %v626
      %v729 = vadd.f32 %v351, %v629
      %v730 = vadd.f32 %v352, %v634
      %v731 = vadd.f32 %v353, %v637
      %v732 = vadd.f32 %v354, %v642
      %v733 = vadd.f32 %v355, %v645
      %v734 = vadd.f32 %v356, %v650
      %v735 = vadd.f32 %v357, %v653
      %v736 = vadd.f32 %v358, %v658
      %v737 = vadd.f32 %v359, %v661
      %v738 = vadd.f32 %v360, %v666
      %v739 = vadd.f32 %v361, %v669
      %v740 = vadd.f32 %v362, %v674
      %v741 = vadd.f32 %v363, %v677
      %v742 = vadd.f32 %v364, %v682
      %v743 = vadd.f32 %v365, %v685
      %v744 = vadd.f32 %v366, %v690
      %v745 = vadd.f32 %v367, %v693
      %v746 = vadd.f32 %v368, %v698
      %v747 = vadd.f32 %v369, %v701
      %v748 = vadd.f32 %v370, %v706
      %v749 = vadd.f32 %v371, %v709
      %v750 = vadd.f32 %v372, %v714
      %v751 = vadd.f32 %v373, %v717
      %vm752 = vcmask 64512
      %753 = vst.msk [vmem:[#allocation2] sm:$0xff] %vm752, %v720
      %754 = vst.msk [vmem:[#allocation2 + $0x8] sm:$0xff] %vm752, %v721
      %755 = vst.msk [vmem:[#allocation2 + $0x10] sm:$0xff] %vm752, %v722
      %756 = vst.msk [vmem:[#allocation2 + $0x18] sm:$0xff] %vm752, %v723
      %757 = vst.msk [vmem:[#allocation2 + $0x20] sm:$0xff] %vm752, %v724
      %758 = vst.msk [vmem:[#allocation2 + $0x28] sm:$0xff] %vm752, %v725
      %759 = vst.msk [vmem:[#allocation2 + $0x30] sm:$0xff] %vm752, %v726
      %760 = vst.msk [vmem:[#allocation2 + $0x38] sm:$0xff] %vm752, %v727
      %761 = vst.msk [vmem:[#allocation2 + $0x40] sm:$0xff] %vm752, %v728
      %762 = vst.msk [vmem:[#allocation2 + $0x48] sm:$0xff] %vm752, %v729
      %763 = vst.msk [vmem:[#allocation2 + $0x50] sm:$0xff] %vm752, %v730
      %764 = vst.msk [vmem:[#allocation2 + $0x58] sm:$0xff] %vm752, %v731
      %765 = vst.msk [vmem:[#allocation2 + $0x60] sm:$0xff] %vm752, %v732
      %766 = vst.msk [vmem:[#allocation2 + $0x68] sm:$0xff] %vm752, %v733
      %767 = vst.msk [vmem:[#allocation2 + $0x70] sm:$0xff] %vm752, %v734
      %768 = vst.msk [vmem:[#allocation2 + $0x78] sm:$0xff] %vm752, %v735
      %769 = vst.msk [vmem:[#allocation2 + $0x80] sm:$0xff] %vm752, %v736
      %770 = vst.msk [vmem:[#allocation2 + $0x88] sm:$0xff] %vm752, %v737
      %771 = vst.msk [vmem:[#allocation2 + $0x90] sm:$0xff] %vm752, %v738
      %772 = vst.msk [vmem:[#allocation2 + $0x98] sm:$0xff] %vm752, %v739
      %773 = vst.msk [vmem:[#allocation2 + $0xa0] sm:$0xff] %vm752, %v740
      %774 = vst.msk [vmem:[#allocation2 + $0xa8] sm:$0xff] %vm752, %v741
      %775 = vst.msk [vmem:[#allocation2 + $0xb0] sm:$0xff] %vm752, %v742
      %776 = vst.msk [vmem:[#allocation2 + $0xb8] sm:$0xff] %vm752, %v743
      %777 = vst.msk [vmem:[#allocation2 + $0xc0] sm:$0xff] %vm752, %v744
      %778 = vst.msk [vmem:[#allocation2 + $0xc8] sm:$0xff] %vm752, %v745
      %779 = vst.msk [vmem:[#allocation2 + $0xd0] sm:$0xff] %vm752, %v746
      %780 = vst.msk [vmem:[#allocation2 + $0xd8] sm:$0xff] %vm752, %v747
      %781 = vst.msk [vmem:[#allocation2 + $0xe0] sm:$0xff] %vm752, %v748
      %782 = vst.msk [vmem:[#allocation2 + $0xe8] sm:$0xff] %vm752, %v749
      %783 = vst.msk [vmem:[#allocation2 + $0xf0] sm:$0xff] %vm752, %v750
      %784 = vst.msk [vmem:[#allocation2 + $0xf8] sm:$0xff] %vm752, %v751
      // Predicated region
      $region37: #{_lambda_.10} parent=31 // pred_check
        %p785 = pneg %p305
      $region38: #{_lambda_.10} parent=31 // pred_check_branch
        %787 = sbr.rel (%p785) target = $region40
      $region39: #{_lambda_.10} parent=31 // pred_region
        %v788 = vld [vmem:[#allocation2] sm:$0xff]
        %v789 = vld [vmem:[#allocation2 + $0x8] sm:$0xff]
        %v790 = vld [vmem:[#allocation2 + $0x10] sm:$0xff]
        %v791 = vld [vmem:[#allocation2 + $0x18] sm:$0xff]
        %v792 = vld [vmem:[#allocation2 + $0x20] sm:$0xff]
        %v793 = vld [vmem:[#allocation2 + $0x28] sm:$0xff]
        %v794 = vld [vmem:[#allocation2 + $0x30] sm:$0xff]
        %v795 = vld [vmem:[#allocation2 + $0x38] sm:$0xff]
        %v796 = vld [vmem:[#allocation2 + $0x40] sm:$0xff]
        %v797 = vld [vmem:[#allocation2 + $0x48] sm:$0xff]
        %v798 = vld [vmem:[#allocation2 + $0x50] sm:$0xff]
        %v799 = vld [vmem:[#allocation2 + $0x58] sm:$0xff]
        %v800 = vld [vmem:[#allocation2 + $0x60] sm:$0xff]
        %v801 = vld [vmem:[#allocation2 + $0x68] sm:$0xff]
        %v802 = vld [vmem:[#allocation2 + $0x70] sm:$0xff]
        %v803 = vld [vmem:[#allocation2 + $0x78] sm:$0xff]
        %v804 = vld [vmem:[#allocation2 + $0x80] sm:$0xff]
        %v805 = vld [vmem:[#allocation2 + $0x88] sm:$0xff]
        %v806 = vld [vmem:[#allocation2 + $0x90] sm:$0xff]
        %v807 = vld [vmem:[#allocation2 + $0x98] sm:$0xff]
        %v808 = vld [vmem:[#allocation2 + $0xa0] sm:$0xff]
        %v809 = vld [vmem:[#allocation2 + $0xa8] sm:$0xff]
        %v810 = vld [vmem:[#allocation2 + $0xb0] sm:$0xff]
        %v811 = vld [vmem:[#allocation2 + $0xb8] sm:$0xff]
        %v812 = vld [vmem:[#allocation2 + $0xc0] sm:$0xff]
        %v813 = vld [vmem:[#allocation2 + $0xc8] sm:$0xff]
        %v814 = vld [vmem:[#allocation2 + $0xd0] sm:$0xff]
        %v815 = vld [vmem:[#allocation2 + $0xd8] sm:$0xff]
        %v816 = vld [vmem:[#allocation2 + $0xe0] sm:$0xff]
        %v817 = vld [vmem:[#allocation2 + $0xe8] sm:$0xff]
        %v818 = vld [vmem:[#allocation2 + $0xf0] sm:$0xff]
        %v819 = vld [vmem:[#allocation2 + $0xf8] sm:$0xff]
        %v820 = vld [vmem:[%s290] sm:$0x1]
        %v822 = vlaneseq
        %v823 = vshrl.u32 %v822, 7
        %v824 = vsub.s32 0, %v823
        %v825 = vrot.slane %v820, %v824
        %v827 = vadd.f32 %v788, %v825
        %v828 = vadd.f32 %v789, %v825
        %v829 = vadd.f32 %v790, %v825
        %v830 = vadd.f32 %v791, %v825
        %v831 = vadd.f32 %v792, %v825
        %v832 = vadd.f32 %v793, %v825
        %v833 = vadd.f32 %v794, %v825
        %v834 = vadd.f32 %v795, %v825
        %v835 = vadd.f32 %v796, %v825
        %v836 = vadd.f32 %v797, %v825
        %v837 = vadd.f32 %v798, %v825
        %v838 = vadd.f32 %v799, %v825
        %v839 = vadd.f32 %v800, %v825
        %v840 = vadd.f32 %v801, %v825
        %v841 = vadd.f32 %v802, %v825
        %v842 = vadd.f32 %v803, %v825
        %v843 = vadd.f32 %v804, %v825
        %v844 = vadd.f32 %v805, %v825
        %v845 = vadd.f32 %v806, %v825
        %v846 = vadd.f32 %v807, %v825
        %v847 = vadd.f32 %v808, %v825
        %v848 = vadd.f32 %v809, %v825
        %v849 = vadd.f32 %v810, %v825
        %v850 = vadd.f32 %v811, %v825
        %v851 = vadd.f32 %v812, %v825
        %v852 = vadd.f32 %v813, %v825
        %v853 = vadd.f32 %v814, %v825
        %v854 = vadd.f32 %v815, %v825
        %v855 = vadd.f32 %v816, %v825
        %v856 = vadd.f32 %v817, %v825
        %v857 = vadd.f32 %v818, %v825
        %v858 = vadd.f32 %v819, %v825
        %859 = vst.msk [vmem:[%s302] sm:$0xff] %vm752, %v827
        %860 = vst.msk [vmem:[%s302 + $0x8] sm:$0xff] %vm752, %v828
        %861 = vst.msk [vmem:[%s302 + $0x10] sm:$0xff] %vm752, %v829
        %862 = vst.msk [vmem:[%s302 + $0x18] sm:$0xff] %vm752, %v830
        %863 = vst.msk [vmem:[%s302 + $0x20] sm:$0xff] %vm752, %v831
        %864 = vst.msk [vmem:[%s302 + $0x28] sm:$0xff] %vm752, %v832
        %865 = vst.msk [vmem:[%s302 + $0x30] sm:$0xff] %vm752, %v833
        %866 = vst.msk [vmem:[%s302 + $0x38] sm:$0xff] %vm752, %v834
        %867 = vst.msk [vmem:[%s302 + $0x40] sm:$0xff] %vm752, %v835
        %868 = vst.msk [vmem:[%s302 + $0x48] sm:$0xff] %vm752, %v836
        %869 = vst.msk [vmem:[%s302 + $0x50] sm:$0xff] %vm752, %v837
        %870 = vst.msk [vmem:[%s302 + $0x58] sm:$0xff] %vm752, %v838
        %871 = vst.msk [vmem:[%s302 + $0x60] sm:$0xff] %vm752, %v839
        %872 = vst.msk [vmem:[%s302 + $0x68] sm:$0xff] %vm752, %v840
        %873 = vst.msk [vmem:[%s302 + $0x70] sm:$0xff] %vm752, %v841
        %874 = vst.msk [vmem:[%s302 + $0x78] sm:$0xff] %vm752, %v842
        %875 = vst.msk [vmem:[%s302 + $0x80] sm:$0xff] %vm752, %v843
        %876 = vst.msk [vmem:[%s302 + $0x88] sm:$0xff] %vm752, %v844
        %877 = vst.msk [vmem:[%s302 + $0x90] sm:$0xff] %vm752, %v845
        %878 = vst.msk [vmem:[%s302 + $0x98] sm:$0xff] %vm752, %v846
        %879 = vst.msk [vmem:[%s302 + $0xa0] sm:$0xff] %vm752, %v847
        %880 = vst.msk [vmem:[%s302 + $0xa8] sm:$0xff] %vm752, %v848
        %881 = vst.msk [vmem:[%s302 + $0xb0] sm:$0xff] %vm752, %v849
        %882 = vst.msk [vmem:[%s302 + $0xb8] sm:$0xff] %vm752, %v850
        %883 = vst.msk [vmem:[%s302 + $0xc0] sm:$0xff] %vm752, %v851
        %884 = vst.msk [vmem:[%s302 + $0xc8] sm:$0xff] %vm752, %v852
        %885 = vst.msk [vmem:[%s302 + $0xd0] sm:$0xff] %vm752, %v853
        %886 = vst.msk [vmem:[%s302 + $0xd8] sm:$0xff] %vm752, %v854
        %887 = vst.msk [vmem:[%s302 + $0xe0] sm:$0xff] %vm752, %v855
        %888 = vst.msk [vmem:[%s302 + $0xe8] sm:$0xff] %vm752, %v856
        %889 = vst.msk [vmem:[%s302 + $0xf0] sm:$0xff] %vm752, %v857
        %890 = vst.msk [vmem:[%s302 + $0xf8] sm:$0xff] %vm752, %v858
      $region40: #{_lambda_.10} parent=31 // pred_fallthru
        _
      %s891 = smul.u32 32, %s21
      %p892 = scmp.lt.s32.totalorder %s20, 0
      %s893 = scalar_select %p892, %s20, 0
      %p894 = scmp.lt.s32.totalorder %s891, 63
      %s895 = scalar_select %p894, %s891, 63
      %p896 = scmp.lt.s32.totalorder %s22, 0
      %s897 = scalar_select %p896, %s22, 0
      %s898 = sadd.s32 %s897, %s895
      %s899 = smul.addr %s893, 64
      %s900 = sadd.s32 %s898, %s899
      %s901 = smul.addr %s900, 8
      %s902 = scalar_lea.vmem %s3, %s901
      // Predicated region
      $region41: #{_lambda_.10} parent=31 // pred_check
        %p903 = pneg %p148
      $region42: #{_lambda_.10} parent=31 // pred_check_branch
        %905 = sbr.rel (%p903) target = $region44
      $region43: #{_lambda_.10} parent=31 // pred_region
        %s906 = smul.u32 32, %s21
      $region44: #{_lambda_.10} parent=31 // pred_fallthru
        _
    $region32: #{_lambda_.10} parent=5 // pred_fallthru
      _
    %p907 = scmp.le.s32.totalorder 2, %s9
    // Predicated region
    $region45: #{_lambda_.10} parent=5 // pred_check
      %p908 = pneg %p907
    $region46: #{_lambda_.10} parent=5 // pred_check_branch
      %910 = sbr.rel (%p908) target = $region48
    $region47: #{_lambda_.10} parent=5 // pred_region
      %s911 = ssub.s32 %s9, 2
      // Predicated region
      $region49: #{_lambda_.10} parent=47 // pred_check
        %p912 = pneg %p154
      $region50: #{_lambda_.10} parent=47 // pred_check_branch
        %914 = sbr.rel (%p912) target = $region52
      $region51: #{_lambda_.10} parent=47 // pred_region
        %s915 = smul.u32 32, %s25
        %p916 = scmp.lt.s32.totalorder %s24, 0
        %s917 = scalar_select %p916, %s24, 0
        %p918 = scmp.lt.s32.totalorder %s915, 63
        %s919 = scalar_select %p918, %s915, 63
        %p920 = scmp.lt.s32.totalorder %s26, 0
        %s921 = scalar_select %p920, %s26, 0
        %s922 = sadd.s32 %s921, %s919
        %s923 = smul.addr %s917, 64
        %s924 = sadd.s32 %s922, %s923
        %s925 = smul.addr %s924, 8
        %s926 = scalar_lea.vmem %s3, %s925
      $region52: #{_lambda_.10} parent=47 // pred_fallthru
        _
    $region48: #{_lambda_.10} parent=5 // pred_fallthru
      _
  $region6: #{_lambda_.10} parent=0 // loop_footer
    %s13 = sadd.s32 1, %s9
  $region7: #{_lambda_.10} parent=0 // loop_footer_branch
    %8 = sbr.rel target = $region3
  $region8: #{_lambda_.10} parent=0 // loop_exit
    _

// kernel: _lambda_.11
$region0: #{_lambda_.11}
  #allocation0 [shape = 'u32[]', space=smem, size = 0x4, offset = 0x4, fixed_abs, tag = 'smem constant byte address 0x4 - core index']
  #allocation1 [shape = 'u32[144,128]{1,0:T(1,128)}', space=vmem, size = 0x12000, scoped, tag = 'internal scratch']
  #allocation2 [shape = 'f32[128,16]{1,0:T(8,128)}', space=vmem, size = 0x10000, scoped, tag = 'scratch operand']
  %s0 = inlined_call_operand.vmem [shape: bf16[1,128,128], index: 0, kind: input, shape index: {}]
  %s1 = inlined_call_operand.vmem [shape: bf16[1,128,16], index: 1, kind: input, shape index: {}]
  %s2 = inlined_call_operand.vmem [shape: f32[1,16], index: 2, kind: input, shape index: {}]
  %s3 = inlined_call_operand.vmem [shape: f32[1,128,16], index: 3, kind: output, shape index: {}]
  %s4 = sld [smem:[#allocation0]]
  $region30: #{_lambda_.11} parent=0
    _
  %s6 = ssub.s32 1, %s4
  %s7 = scalar_select 0, %s6, %s4
  // Predicated region
  $region2: #{_lambda_.11} parent=0 // pred_check
    _
  $region3: #{_lambda_.11} parent=0 // pred_check_branch
    %9 = sbr.rel (0) target = $region5
  $region4: #{_lambda_.11} parent=0 // pred_region
    _
  $region5: #{_lambda_.11} parent=0 // pred_fallthru
    _
  // Predicated region
  $region6: #{_lambda_.11} parent=0 // pred_check
    _
  $region7: #{_lambda_.11} parent=0 // pred_check_branch
    %11 = sbr.rel (0) target = $region9
  $region8: #{_lambda_.11} parent=0 // pred_region
    _
  $region9: #{_lambda_.11} parent=0 // pred_fallthru
    _
  // Predicated region
  $region10: #{_lambda_.11} parent=0 // pred_check
    _
  $region11: #{_lambda_.11} parent=0 // pred_check_branch
    %13 = sbr.rel (0) target = $region13
  $region12: #{_lambda_.11} parent=0 // pred_region
    _
  $region13: #{_lambda_.11} parent=0 // pred_fallthru
    _
  %p15 = scmp.eq.s32.totalorder 0, 0
  // Predicated region
  $region14: #{_lambda_.11} parent=0 // pred_check
    %p16 = pneg %p15
  $region15: #{_lambda_.11} parent=0 // pred_check_branch
    %18 = sbr.rel (%p16) target = $region17
  $region16: #{_lambda_.11} parent=0 // pred_region
    %vm19 = vcmask 130048
    %20 = vst.msk [vmem:[#allocation2] sm:$0xff] %vm19, 0.0
    %21 = vst.msk [vmem:[#allocation2 + $0x8] sm:$0xff] %vm19, 0.0
    %22 = vst.msk [vmem:[#allocation2 + $0x10] sm:$0xff] %vm19, 0.0
    %23 = vst.msk [vmem:[#allocation2 + $0x18] sm:$0xff] %vm19, 0.0
    %24 = vst.msk [vmem:[#allocation2 + $0x20] sm:$0xff] %vm19, 0.0
    %25 = vst.msk [vmem:[#allocation2 + $0x28] sm:$0xff] %vm19, 0.0
    %26 = vst.msk [vmem:[#allocation2 + $0x30] sm:$0xff] %vm19, 0.0
    %27 = vst.msk [vmem:[#allocation2 + $0x38] sm:$0xff] %vm19, 0.0
    %28 = vst.msk [vmem:[#allocation2 + $0x40] sm:$0xff] %vm19, 0.0
    %29 = vst.msk [vmem:[#allocation2 + $0x48] sm:$0xff] %vm19, 0.0
    %30 = vst.msk [vmem:[#allocation2 + $0x50] sm:$0xff] %vm19, 0.0
    %31 = vst.msk [vmem:[#allocation2 + $0x58] sm:$0xff] %vm19, 0.0
    %32 = vst.msk [vmem:[#allocation2 + $0x60] sm:$0xff] %vm19, 0.0
    %33 = vst.msk [vmem:[#allocation2 + $0x68] sm:$0xff] %vm19, 0.0
    %34 = vst.msk [vmem:[#allocation2 + $0x70] sm:$0xff] %vm19, 0.0
    %35 = vst.msk [vmem:[#allocation2 + $0x78] sm:$0xff] %vm19, 0.0
  $region17: #{_lambda_.11} parent=0 // pred_fallthru
    _
  %v36 = vld [vmem:[#allocation2] sm:$0xff]
  %v37 = vld [vmem:[#allocation2 + $0x8] sm:$0xff]
  %v38 = vld [vmem:[#allocation2 + $0x10] sm:$0xff]
  %v39 = vld [vmem:[#allocation2 + $0x18] sm:$0xff]
  %v40 = vld [vmem:[#allocation2 + $0x20] sm:$0xff]
  %v41 = vld [vmem:[#allocation2 + $0x28] sm:$0xff]
  %v42 = vld [vmem:[#allocation2 + $0x30] sm:$0xff]
  %v43 = vld [vmem:[#allocation2 + $0x38] sm:$0xff]
  %v44 = vld [vmem:[#allocation2 + $0x40] sm:$0xff]
  %v45 = vld [vmem:[#allocation2 + $0x48] sm:$0xff]
  %v46 = vld [vmem:[#allocation2 + $0x50] sm:$0xff]
  %v47 = vld [vmem:[#allocation2 + $0x58] sm:$0xff]
  %v48 = vld [vmem:[#allocation2 + $0x60] sm:$0xff]
  %v49 = vld [vmem:[#allocation2 + $0x68] sm:$0xff]
  %v50 = vld [vmem:[#allocation2 + $0x70] sm:$0xff]
  %v51 = vld [vmem:[#allocation2 + $0x78] sm:$0xff]
  %v52 = vld [vmem:[%s0] sm:$0xf]
  %v53 = vld [vmem:[%s0 + $0x4] sm:$0xf]
  %v54 = vld [vmem:[%s0 + $0x8] sm:$0xf]
  %v55 = vld [vmem:[%s0 + $0xc] sm:$0xf]
  %v56 = vld [vmem:[%s0 + $0x10] sm:$0xf]
  %v57 = vld [vmem:[%s0 + $0x14] sm:$0xf]
  %v58 = vld [vmem:[%s0 + $0x18] sm:$0xf]
  %v59 = vld [vmem:[%s0 + $0x1c] sm:$0xf]
  %v60 = vld [vmem:[%s0 + $0x20] sm:$0xf]
  %v61 = vld [vmem:[%s0 + $0x24] sm:$0xf]
  %v62 = vld [vmem:[%s0 + $0x28] sm:$0xf]
  %v63 = vld [vmem:[%s0 + $0x2c] sm:$0xf]
  %v64 = vld [vmem:[%s0 + $0x30] sm:$0xf]
  %v65 = vld [vmem:[%s0 + $0x34] sm:$0xf]
  %v66 = vld [vmem:[%s0 + $0x38] sm:$0xf]
  %v67 = vld [vmem:[%s0 + $0x3c] sm:$0xf]
  %v68 = vld [vmem:[%s1] sm:$0xf]
  %v69 = vld [vmem:[%s1 + $0x4] sm:$0xf]
  %v70 = vld [vmem:[%s1 + $0x8] sm:$0xf]
  %v71 = vld [vmem:[%s1 + $0xc] sm:$0xf]
  %v72 = vld [vmem:[%s1 + $0x10] sm:$0xf]
  %v73 = vld [vmem:[%s1 + $0x14] sm:$0xf]
  %v74 = vld [vmem:[%s1 + $0x18] sm:$0xf]
  %v75 = vld [vmem:[%s1 + $0x1c] sm:$0xf]
  %v76 = vld [vmem:[%s1 + $0x20] sm:$0xf]
  %v77 = vld [vmem:[%s1 + $0x24] sm:$0xf]
  %v78 = vld [vmem:[%s1 + $0x28] sm:$0xf]
  %v79 = vld [vmem:[%s1 + $0x2c] sm:$0xf]
  %v80 = vld [vmem:[%s1 + $0x30] sm:$0xf]
  %v81 = vld [vmem:[%s1 + $0x34] sm:$0xf]
  %v82 = vld [vmem:[%s1 + $0x38] sm:$0xf]
  %v83 = vld [vmem:[%s1 + $0x3c] sm:$0xf]
  %v100 = vunpack.c.l.b16 %v52
  %v101 = vunpack.c.l.b16 %v53
  %v102 = vunpack.c.l.b16 %v54
  %v103 = vunpack.c.l.b16 %v55
  %v104 = vunpack.c.l.b16 %v56
  %v105 = vunpack.c.l.b16 %v57
  %v106 = vunpack.c.l.b16 %v58
  %v107 = vunpack.c.l.b16 %v59
  %v108 = vunpack.c.l.b16 %v60
  %v109 = vunpack.c.l.b16 %v61
  %v110 = vunpack.c.l.b16 %v62
  %v111 = vunpack.c.l.b16 %v63
  %v112 = vunpack.c.l.b16 %v64
  %v113 = vunpack.c.l.b16 %v65
  %v114 = vunpack.c.l.b16 %v66
  %v115 = vunpack.c.l.b16 %v67
  %v116 = vpack.c.b16 %v101, %v100
  %v117 = vpack.c.b16 %v103, %v102
  %v118 = vpack.c.b16 %v105, %v104
  %v119 = vpack.c.b16 %v107, %v106
  %v120 = vpack.c.b16 %v109, %v108
  %v121 = vpack.c.b16 %v111, %v110
  %v122 = vpack.c.b16 %v113, %v112
  %v123 = vpack.c.b16 %v115, %v114
  %v148 = vunpack.c.l.b16 %v68
  %v149 = vunpack.c.l.b16 %v69
  %v150 = vunpack.c.l.b16 %v70
  %v151 = vunpack.c.l.b16 %v71
  %v152 = vunpack.c.l.b16 %v72
  %v153 = vunpack.c.l.b16 %v73
  %v154 = vunpack.c.l.b16 %v74
  %v155 = vunpack.c.l.b16 %v75
  %v156 = vunpack.c.l.b16 %v76
  %v157 = vunpack.c.l.b16 %v77
  %v158 = vunpack.c.l.b16 %v78
  %v159 = vunpack.c.l.b16 %v79
  %v160 = vunpack.c.l.b16 %v80
  %v161 = vunpack.c.l.b16 %v81
  %v162 = vunpack.c.l.b16 %v82
  %v163 = vunpack.c.l.b16 %v83
  %v164 = vpack.c.b16 %v149, %v148
  %v165 = vpack.c.b16 %v151, %v150
  %v166 = vpack.c.b16 %v153, %v152
  %v167 = vpack.c.b16 %v155, %v154
  %v168 = vpack.c.b16 %v157, %v156
  %v169 = vpack.c.b16 %v159, %v158
  %v170 = vpack.c.b16 %v161, %v160
  %v171 = vpack.c.b16 %v163, %v162
  %180 = vmatprep.subr.bf16.mxu0 0
  %181 = vmatpush1.bf16.msra.mxu0 %v164
  %182 = vmatprep.subr.bf16.mxu0 0
  %183 = vmatpush1.bf16.msra.mxu0 %v165
  %184 = vmatprep.subr.bf16.mxu0 0
  %185 = vmatpush1.bf16.msra.mxu0 %v166
  %186 = vmatprep.subr.bf16.mxu0 0
  %187 = vmatpush1.bf16.msra.mxu0 %v167
  %188 = vmatprep.subr.bf16.mxu0 0
  %189 = vmatpush1.bf16.msra.mxu0 %v168
  %190 = vmatprep.subr.bf16.mxu0 0
  %191 = vmatpush1.bf16.msra.mxu0 %v169
  %192 = vmatprep.subr.bf16.mxu0 0
  %193 = vmatpush1.bf16.msra.mxu0 %v170
  %194 = vmatprep.subr.bf16.mxu0 0
  %195 = vmatpush1.bf16.msra.mxu0 %v171
  %196 = vmatprep.subr.bf16.mxu0 0
  %197 = vmatpush1.bf16.msra.mxu0 0
  %198 = vmatprep.subr.bf16.mxu0 0
  %199 = vmatpush1.bf16.msra.mxu0 0
  %200 = vmatprep.subr.bf16.mxu0 0
  %201 = vmatpush1.bf16.msra.mxu0 0
  %202 = vmatprep.subr.bf16.mxu0 0
  %203 = vmatpush1.bf16.msra.mxu0 0
  %204 = vmatprep.subr.bf16.mxu0 0
  %205 = vmatpush1.bf16.msra.mxu0 0
  %206 = vmatprep.subr.bf16.mxu0 0
  %207 = vmatpush1.bf16.msra.mxu0 0
  %208 = vmatprep.subr.bf16.mxu0 0
  %209 = vmatpush1.bf16.msra.mxu0 0
  %210 = vmatprep.subr.bf16.mxu0 0
  %211 = vmatpush1.bf16.msra.mxu0 0
  %212 = vmatprep.mubr.bf16.mxu0 0
  %213 = vmatmul.mubr.bf16.gmra.mrb[0].mxu0 %v116
  %v214 = vpop.f32.mrb[0].mxu0
  %v215 = vadd.f32 0.0, %v214
  %v216 = vpop.f32.mrb[0].mxu0
  %v217 = vpop.f32.mrb[0].mxu0
  %v218 = vadd.f32 0.0, %v217
  %v219 = vpop.f32.mrb[0].mxu0
  %220 = vmatprep.mubr.bf16.mxu0 0
  %221 = vmatmul.mubr.bf16.gmra.mrb[0].mxu0 %v117
  %v222 = vpop.f32.mrb[0].mxu0
  %v223 = vadd.f32 0.0, %v222
  %v224 = vpop.f32.mrb[0].mxu0
  %v225 = vpop.f32.mrb[0].mxu0
  %v226 = vadd.f32 0.0, %v225
  %v227 = vpop.f32.mrb[0].mxu0
  %228 = vmatprep.mubr.bf16.mxu0 0
  %229 = vmatmul.mubr.bf16.gmra.mrb[0].mxu0 %v118
  %v230 = vpop.f32.mrb[0].mxu0
  %v231 = vadd.f32 0.0, %v230
  %v232 = vpop.f32.mrb[0].mxu0
  %v233 = vpop.f32.mrb[0].mxu0
  %v234 = vadd.f32 0.0, %v233
  %v235 = vpop.f32.mrb[0].mxu0
  %236 = vmatprep.mubr.bf16.mxu0 0
  %237 = vmatmul.mubr.bf16.gmra.mrb[0].mxu0 %v119
  %v238 = vpop.f32.mrb[0].mxu0
  %v239 = vadd.f32 0.0, %v238
  %v240 = vpop.f32.mrb[0].mxu0
  %v241 = vpop.f32.mrb[0].mxu0
  %v242 = vadd.f32 0.0, %v241
  %v243 = vpop.f32.mrb[0].mxu0
  %244 = vmatprep.mubr.bf16.mxu0 0
  %245 = vmatmul.mubr.bf16.gmra.mrb[0].mxu0 %v120
  %v246 = vpop.f32.mrb[0].mxu0
  %v247 = vadd.f32 0.0, %v246
  %v248 = vpop.f32.mrb[0].mxu0
  %v249 = vpop.f32.mrb[0].mxu0
  %v250 = vadd.f32 0.0, %v249
  %v251 = vpop.f32.mrb[0].mxu0
  %252 = vmatprep.mubr.bf16.mxu0 0
  %253 = vmatmul.mubr.bf16.gmra.mrb[0].mxu0 %v121
  %v254 = vpop.f32.mrb[0].mxu0
  %v255 = vadd.f32 0.0, %v254
  %v256 = vpop.f32.mrb[0].mxu0
  %v257 = vpop.f32.mrb[0].mxu0
  %v258 = vadd.f32 0.0, %v257
  %v259 = vpop.f32.mrb[0].mxu0
  %260 = vmatprep.mubr.bf16.mxu0 0
  %261 = vmatmul.mubr.bf16.gmra.mrb[0].mxu0 %v122
  %v262 = vpop.f32.mrb[0].mxu0
  %v263 = vadd.f32 0.0, %v262
  %v264 = vpop.f32.mrb[0].mxu0
  %v265 = vpop.f32.mrb[0].mxu0
  %v266 = vadd.f32 0.0, %v265
  %v267 = vpop.f32.mrb[0].mxu0
  %268 = vmatprep.mubr.bf16.mxu0 0
  %269 = vmatmul.mubr.bf16.gmra.mrb[0].mxu0 %v123
  %v270 = vpop.f32.mrb[0].mxu0
  %v271 = vadd.f32 0.0, %v270
  %v272 = vpop.f32.mrb[0].mxu0
  %v273 = vpop.f32.mrb[0].mxu0
  %v274 = vadd.f32 0.0, %v273
  %v275 = vpop.f32.mrb[0].mxu0
  %276 = vdwg.mxu0
  %v277 = vadd.f32 %v36, %v215
  %v278 = vadd.f32 %v37, %v218
  %v279 = vadd.f32 %v38, %v223
  %v280 = vadd.f32 %v39, %v226
  %v281 = vadd.f32 %v40, %v231
  %v282 = vadd.f32 %v41, %v234
  %v283 = vadd.f32 %v42, %v239
  %v284 = vadd.f32 %v43, %v242
  %v285 = vadd.f32 %v44, %v247
  %v286 = vadd.f32 %v45, %v250
  %v287 = vadd.f32 %v46, %v255
  %v288 = vadd.f32 %v47, %v258
  %v289 = vadd.f32 %v48, %v263
  %v290 = vadd.f32 %v49, %v266
  %v291 = vadd.f32 %v50, %v271
  %v292 = vadd.f32 %v51, %v274
  %vm293 = vcmask 130048
  %294 = vst.msk [vmem:[#allocation2] sm:$0xff] %vm293, %v277
  %295 = vst.msk [vmem:[#allocation2 + $0x8] sm:$0xff] %vm293, %v278
  %296 = vst.msk [vmem:[#allocation2 + $0x10] sm:$0xff] %vm293, %v279
  %297 = vst.msk [vmem:[#allocation2 + $0x18] sm:$0xff] %vm293, %v280
  %298 = vst.msk [vmem:[#allocation2 + $0x20] sm:$0xff] %vm293, %v281
  %299 = vst.msk [vmem:[#allocation2 + $0x28] sm:$0xff] %vm293, %v282
  %300 = vst.msk [vmem:[#allocation2 + $0x30] sm:$0xff] %vm293, %v283
  %301 = vst.msk [vmem:[#allocation2 + $0x38] sm:$0xff] %vm293, %v284
  %302 = vst.msk [vmem:[#allocation2 + $0x40] sm:$0xff] %vm293, %v285
  %303 = vst.msk [vmem:[#allocation2 + $0x48] sm:$0xff] %vm293, %v286
  %304 = vst.msk [vmem:[#allocation2 + $0x50] sm:$0xff] %vm293, %v287
  %305 = vst.msk [vmem:[#allocation2 + $0x58] sm:$0xff] %vm293, %v288
  %306 = vst.msk [vmem:[#allocation2 + $0x60] sm:$0xff] %vm293, %v289
  %307 = vst.msk [vmem:[#allocation2 + $0x68] sm:$0xff] %vm293, %v290
  %308 = vst.msk [vmem:[#allocation2 + $0x70] sm:$0xff] %vm293, %v291
  %309 = vst.msk [vmem:[#allocation2 + $0x78] sm:$0xff] %vm293, %v292
  // Predicated region
  $region18: #{_lambda_.11} parent=0 // pred_check
    %p310 = pneg %p15
  $region19: #{_lambda_.11} parent=0 // pred_check_branch
    %312 = sbr.rel (%p310) target = $region21
  $region20: #{_lambda_.11} parent=0 // pred_region
    %v313 = vld [vmem:[#allocation2] sm:$0xff]
    %v314 = vld [vmem:[#allocation2 + $0x8] sm:$0xff]
    %v315 = vld [vmem:[#allocation2 + $0x10] sm:$0xff]
    %v316 = vld [vmem:[#allocation2 + $0x18] sm:$0xff]
    %v317 = vld [vmem:[#allocation2 + $0x20] sm:$0xff]
    %v318 = vld [vmem:[#allocation2 + $0x28] sm:$0xff]
    %v319 = vld [vmem:[#allocation2 + $0x30] sm:$0xff]
    %v320 = vld [vmem:[#allocation2 + $0x38] sm:$0xff]
    %v321 = vld [vmem:[#allocation2 + $0x40] sm:$0xff]
    %v322 = vld [vmem:[#allocation2 + $0x48] sm:$0xff]
    %v323 = vld [vmem:[#allocation2 + $0x50] sm:$0xff]
    %v324 = vld [vmem:[#allocation2 + $0x58] sm:$0xff]
    %v325 = vld [vmem:[#allocation2 + $0x60] sm:$0xff]
    %v326 = vld [vmem:[#allocation2 + $0x68] sm:$0xff]
    %v327 = vld [vmem:[#allocation2 + $0x70] sm:$0xff]
    %v328 = vld [vmem:[#allocation2 + $0x78] sm:$0xff]
    %v329 = vld [vmem:[%s2] sm:$0x1]
    %v331 = vlaneseq
    %v332 = vshrl.u32 %v331, 7
    %v333 = vsub.s32 0, %v332
    %v334 = vrot.slane %v329, %v333
    %v336 = vadd.f32 %v313, %v334
    %v337 = vadd.f32 %v314, %v334
    %v338 = vadd.f32 %v315, %v334
    %v339 = vadd.f32 %v316, %v334
    %v340 = vadd.f32 %v317, %v334
    %v341 = vadd.f32 %v318, %v334
    %v342 = vadd.f32 %v319, %v334
    %v343 = vadd.f32 %v320, %v334
    %v344 = vadd.f32 %v321, %v334
    %v345 = vadd.f32 %v322, %v334
    %v346 = vadd.f32 %v323, %v334
    %v347 = vadd.f32 %v324, %v334
    %v348 = vadd.f32 %v325, %v334
    %v349 = vadd.f32 %v326, %v334
    %v350 = vadd.f32 %v327, %v334
    %v351 = vadd.f32 %v328, %v334
    %352 = vst.msk [vmem:[%s3] sm:$0xff] %vm293, %v336
    %353 = vst.msk [vmem:[%s3 + $0x8] sm:$0xff] %vm293, %v337
    %354 = vst.msk [vmem:[%s3 + $0x10] sm:$0xff] %vm293, %v338
    %355 = vst.msk [vmem:[%s3 + $0x18] sm:$0xff] %vm293, %v339
    %356 = vst.msk [vmem:[%s3 + $0x20] sm:$0xff] %vm293, %v340
    %357 = vst.msk [vmem:[%s3 + $0x28] sm:$0xff] %vm293, %v341
    %358 = vst.msk [vmem:[%s3 + $0x30] sm:$0xff] %vm293, %v342
    %359 = vst.msk [vmem:[%s3 + $0x38] sm:$0xff] %vm293, %v343
    %360 = vst.msk [vmem:[%s3 + $0x40] sm:$0xff] %vm293, %v344
    %361 = vst.msk [vmem:[%s3 + $0x48] sm:$0xff] %vm293, %v345
    %362 = vst.msk [vmem:[%s3 + $0x50] sm:$0xff] %vm293, %v346
    %363 = vst.msk [vmem:[%s3 + $0x58] sm:$0xff] %vm293, %v347
    %364 = vst.msk [vmem:[%s3 + $0x60] sm:$0xff] %vm293, %v348
    %365 = vst.msk [vmem:[%s3 + $0x68] sm:$0xff] %vm293, %v349
    %366 = vst.msk [vmem:[%s3 + $0x70] sm:$0xff] %vm293, %v350
    %367 = vst.msk [vmem:[%s3 + $0x78] sm:$0xff] %vm293, %v351
  $region21: #{_lambda_.11} parent=0 // pred_fallthru
    _
  // Predicated region
  $region22: #{_lambda_.11} parent=0 // pred_check
    _
  $region23: #{_lambda_.11} parent=0 // pred_check_branch
    %369 = sbr.rel (0) target = $region25
  $region24: #{_lambda_.11} parent=0 // pred_region
    _
  $region25: #{_lambda_.11} parent=0 // pred_fallthru
    _
  // Predicated region
  $region26: #{_lambda_.11} parent=0 // pred_check
    _
  $region27: #{_lambda_.11} parent=0 // pred_check_branch
    %371 = sbr.rel (0) target = $region29
  $region28: #{_lambda_.11} parent=0 // pred_region
    _
  $region29: #{_lambda_.11} parent=0 // pred_fallthru
    _

// kernel: _lambda_.12
$region0: #{_lambda_.12}
  #allocation0 [shape = 'u32[]', space=smem, size = 0x4, offset = 0x4, fixed_abs, tag = 'smem constant byte address 0x4 - core index']
  #allocation1 [shape = 'u32[144,128]{1,0:T(1,128)}', space=vmem, size = 0x12000, scoped, tag = 'internal scratch']
  #allocation2 [shape = 'f32[32,32]{1,0:T(8,128)}', space=vmem, size = 0x4000, scoped, tag = 'scratch operand']
  %s0 = inlined_call_operand.vmem [shape: bf16[1,32,256], index: 0, kind: input, shape index: {}]
  %s1 = inlined_call_operand.vmem [shape: bf16[1,256,32], index: 1, kind: input, shape index: {}]
  %s2 = inlined_call_operand.vmem [shape: f32[1,32], index: 2, kind: input, shape index: {}]
  %s3 = inlined_call_operand.vmem [shape: f32[1,32,32], index: 3, kind: output, shape index: {}]
  %s4 = sld [smem:[#allocation0]]
  $region30: #{_lambda_.12} parent=0
    _
  %s6 = ssub.s32 1, %s4
  %s7 = scalar_select 0, %s6, %s4
  // Predicated region
  $region2: #{_lambda_.12} parent=0 // pred_check
    _
  $region3: #{_lambda_.12} parent=0 // pred_check_branch
    %9 = sbr.rel (0) target = $region5
  $region4: #{_lambda_.12} parent=0 // pred_region
    _
  $region5: #{_lambda_.12} parent=0 // pred_fallthru
    _
  // Predicated region
  $region6: #{_lambda_.12} parent=0 // pred_check
    _
  $region7: #{_lambda_.12} parent=0 // pred_check_branch
    %11 = sbr.rel (0) target = $region9
  $region8: #{_lambda_.12} parent=0 // pred_region
    _
  $region9: #{_lambda_.12} parent=0 // pred_fallthru
    _
  // Predicated region
  $region10: #{_lambda_.12} parent=0 // pred_check
    _
  $region11: #{_lambda_.12} parent=0 // pred_check_branch
    %13 = sbr.rel (0) target = $region13
  $region12: #{_lambda_.12} parent=0 // pred_region
    _
  $region13: #{_lambda_.12} parent=0 // pred_fallthru
    _
  %p15 = scmp.eq.s32.totalorder 0, 0
  // Predicated region
  $region14: #{_lambda_.12} parent=0 // pred_check
    %p16 = pneg %p15
  $region15: #{_lambda_.12} parent=0 // pred_check_branch
    %18 = sbr.rel (%p16) target = $region17
  $region16: #{_lambda_.12} parent=0 // pred_region
    %vm19 = vcmask 261120
    %20 = vst.msk [vmem:[#allocation2] sm:$0xff] %vm19, 0.0
    %21 = vst.msk [vmem:[#allocation2 + $0x8] sm:$0xff] %vm19, 0.0
    %22 = vst.msk [vmem:[#allocation2 + $0x10] sm:$0xff] %vm19, 0.0
    %23 = vst.msk [vmem:[#allocation2 + $0x18] sm:$0xff] %vm19, 0.0
  $region17: #{_lambda_.12} parent=0 // pred_fallthru
    _
  %v24 = vld [vmem:[#allocation2] sm:$0xff]
  %v25 = vld [vmem:[#allocation2 + $0x8] sm:$0xff]
  %v26 = vld [vmem:[#allocation2 + $0x10] sm:$0xff]
  %v27 = vld [vmem:[#allocation2 + $0x18] sm:$0xff]
  %v28 = vld [vmem:[%s0] sm:$0xff]
  %v29 = vld [vmem:[%s0 + $0x8] sm:$0xff]
  %v30 = vld [vmem:[%s0 + $0x10] sm:$0xff]
  %v31 = vld [vmem:[%s0 + $0x18] sm:$0xff]
  %v32 = vld [vmem:[%s1] sm:$0xf]
  %v33 = vld [vmem:[%s1 + $0x4] sm:$0xf]
  %v34 = vld [vmem:[%s1 + $0x8] sm:$0xf]
  %v35 = vld [vmem:[%s1 + $0xc] sm:$0xf]
  %v36 = vld [vmem:[%s1 + $0x10] sm:$0xf]
  %v37 = vld [vmem:[%s1 + $0x14] sm:$0xf]
  %v38 = vld [vmem:[%s1 + $0x18] sm:$0xf]
  %v39 = vld [vmem:[%s1 + $0x1c] sm:$0xf]
  %v40 = vld [vmem:[%s1 + $0x20] sm:$0xf]
  %v41 = vld [vmem:[%s1 + $0x24] sm:$0xf]
  %v42 = vld [vmem:[%s1 + $0x28] sm:$0xf]
  %v43 = vld [vmem:[%s1 + $0x2c] sm:$0xf]
  %v44 = vld [vmem:[%s1 + $0x30] sm:$0xf]
  %v45 = vld [vmem:[%s1 + $0x34] sm:$0xf]
  %v46 = vld [vmem:[%s1 + $0x38] sm:$0xf]
  %v47 = vld [vmem:[%s1 + $0x3c] sm:$0xf]
  %v48 = vld [vmem:[%s1 + $0x40] sm:$0xf]
  %v49 = vld [vmem:[%s1 + $0x44] sm:$0xf]
  %v50 = vld [vmem:[%s1 + $0x48] sm:$0xf]
  %v51 = vld [vmem:[%s1 + $0x4c] sm:$0xf]
  %v52 = vld [vmem:[%s1 + $0x50] sm:$0xf]
  %v53 = vld [vmem:[%s1 + $0x54] sm:$0xf]
  %v54 = vld [vmem:[%s1 + $0x58] sm:$0xf]
  %v55 = vld [vmem:[%s1 + $0x5c] sm:$0xf]
  %v56 = vld [vmem:[%s1 + $0x60] sm:$0xf]
  %v57 = vld [vmem:[%s1 + $0x64] sm:$0xf]
  %v58 = vld [vmem:[%s1 + $0x68] sm:$0xf]
  %v59 = vld [vmem:[%s1 + $0x6c] sm:$0xf]
  %v60 = vld [vmem:[%s1 + $0x70] sm:$0xf]
  %v61 = vld [vmem:[%s1 + $0x74] sm:$0xf]
  %v62 = vld [vmem:[%s1 + $0x78] sm:$0xf]
  %v63 = vld [vmem:[%s1 + $0x7c] sm:$0xf]
  %v68 = vunpack.c.l.b16 %v28
  %v69 = vunpack.c.h.b16 %v28
  %v70 = vunpack.c.l.b16 %v29
  %v71 = vunpack.c.h.b16 %v29
  %v72 = vunpack.c.l.b16 %v30
  %v73 = vunpack.c.h.b16 %v30
  %v74 = vunpack.c.l.b16 %v31
  %v75 = vunpack.c.h.b16 %v31
  %v76 = vpack.c.b16 %v70, %v68
  %v77 = vpack.c.b16 %v71, %v69
  %v78 = vpack.c.b16 %v74, %v72
  %v79 = vpack.c.b16 %v75, %v73
  %v116 = vunpack.c.l.b16 %v32
  %v117 = vunpack.c.l.b16 %v33
  %v118 = vunpack.c.l.b16 %v34
  %v119 = vunpack.c.l.b16 %v35
  %v120 = vunpack.c.l.b16 %v36
  %v121 = vunpack.c.l.b16 %v37
  %v122 = vunpack.c.l.b16 %v38
  %v123 = vunpack.c.l.b16 %v39
  %v124 = vunpack.c.l.b16 %v40
  %v125 = vunpack.c.l.b16 %v41
  %v126 = vunpack.c.l.b16 %v42
  %v127 = vunpack.c.l.b16 %v43
  %v128 = vunpack.c.l.b16 %v44
  %v129 = vunpack.c.l.b16 %v45
  %v130 = vunpack.c.l.b16 %v46
  %v131 = vunpack.c.l.b16 %v47
  %v132 = vunpack.c.l.b16 %v48
  %v133 = vunpack.c.l.b16 %v49
  %v134 = vunpack.c.l.b16 %v50
  %v135 = vunpack.c.l.b16 %v51
  %v136 = vunpack.c.l.b16 %v52
  %v137 = vunpack.c.l.b16 %v53
  %v138 = vunpack.c.l.b16 %v54
  %v139 = vunpack.c.l.b16 %v55
  %v140 = vunpack.c.l.b16 %v56
  %v141 = vunpack.c.l.b16 %v57
  %v142 = vunpack.c.l.b16 %v58
  %v143 = vunpack.c.l.b16 %v59
  %v144 = vunpack.c.l.b16 %v60
  %v145 = vunpack.c.l.b16 %v61
  %v146 = vunpack.c.l.b16 %v62
  %v147 = vunpack.c.l.b16 %v63
  %v148 = vpack.c.b16 %v117, %v116
  %v149 = vpack.c.b16 %v119, %v118
  %v150 = vpack.c.b16 %v121, %v120
  %v151 = vpack.c.b16 %v123, %v122
  %v152 = vpack.c.b16 %v125, %v124
  %v153 = vpack.c.b16 %v127, %v126
  %v154 = vpack.c.b16 %v129, %v128
  %v155 = vpack.c.b16 %v131, %v130
  %v156 = vpack.c.b16 %v133, %v132
  %v157 = vpack.c.b16 %v135, %v134
  %v158 = vpack.c.b16 %v137, %v136
  %v159 = vpack.c.b16 %v139, %v138
  %v160 = vpack.c.b16 %v141, %v140
  %v161 = vpack.c.b16 %v143, %v142
  %v162 = vpack.c.b16 %v145, %v144
  %v163 = vpack.c.b16 %v147, %v146
  %180 = vmatprep.subr.bf16.mxu0 0
  %181 = vmatpush1.bf16.msra.mxu0 %v148
  %182 = vmatprep.subr.bf16.mxu0 0
  %183 = vmatpush1.bf16.msra.mxu0 %v149
  %184 = vmatprep.subr.bf16.mxu0 0
  %185 = vmatpush1.bf16.msra.mxu0 %v150
  %186 = vmatprep.subr.bf16.mxu0 0
  %187 = vmatpush1.bf16.msra.mxu0 %v151
  %188 = vmatprep.subr.bf16.mxu0 0
  %189 = vmatpush1.bf16.msra.mxu0 %v152
  %190 = vmatprep.subr.bf16.mxu0 0
  %191 = vmatpush1.bf16.msra.mxu0 %v153
  %192 = vmatprep.subr.bf16.mxu0 0
  %193 = vmatpush1.bf16.msra.mxu0 %v154
  %194 = vmatprep.subr.bf16.mxu0 0
  %195 = vmatpush1.bf16.msra.mxu0 %v155
  %196 = vmatprep.subr.bf16.mxu0 0
  %197 = vmatpush1.bf16.msra.mxu0 %v156
  %198 = vmatprep.subr.bf16.mxu0 0
  %199 = vmatpush1.bf16.msra.mxu0 %v157
  %200 = vmatprep.subr.bf16.mxu0 0
  %201 = vmatpush1.bf16.msra.mxu0 %v158
  %202 = vmatprep.subr.bf16.mxu0 0
  %203 = vmatpush1.bf16.msra.mxu0 %v159
  %204 = vmatprep.subr.bf16.mxu0 0
  %205 = vmatpush1.bf16.msra.mxu0 %v160
  %206 = vmatprep.subr.bf16.mxu0 0
  %207 = vmatpush1.bf16.msra.mxu0 %v161
  %208 = vmatprep.subr.bf16.mxu0 0
  %209 = vmatpush1.bf16.msra.mxu0 %v162
  %210 = vmatprep.subr.bf16.mxu0 0
  %211 = vmatpush1.bf16.msra.mxu0 %v163
  %212 = vmatprep.mubr.bf16.mxu0 %v77
  %213 = vmatmul.mubr.bf16.gmra.mrb[0].mxu0 %v76
  %v214 = vpop.f32.mrb[0].mxu0
  %v215 = vadd.f32 0.0, %v214
  %v216 = vpop.f32.mrb[0].mxu0
  %v217 = vpop.f32.mrb[0].mxu0
  %v218 = vadd.f32 0.0, %v217
  %v219 = vpop.f32.mrb[0].mxu0
  %220 = vmatprep.mubr.bf16.mxu0 %v79
  %221 = vmatmul.mubr.bf16.gmra.mrb[0].mxu0 %v78
  %v222 = vpop.f32.mrb[0].mxu0
  %v223 = vadd.f32 0.0, %v222
  %v224 = vpop.f32.mrb[0].mxu0
  %v225 = vpop.f32.mrb[0].mxu0
  %v226 = vadd.f32 0.0, %v225
  %v227 = vpop.f32.mrb[0].mxu0
  %228 = vdwg.mxu0
  %v229 = vadd.f32 %v24, %v215
  %v230 = vadd.f32 %v25, %v218
  %v231 = vadd.f32 %v26, %v223
  %v232 = vadd.f32 %v27, %v226
  %vm233 = vcmask 261120
  %234 = vst.msk [vmem:[#allocation2] sm:$0xff] %vm233, %v229
  %235 = vst.msk [vmem:[#allocation2 + $0x8] sm:$0xff] %vm233, %v230
  %236 = vst.msk [vmem:[#allocation2 + $0x10] sm:$0xff] %vm233, %v231
  %237 = vst.msk [vmem:[#allocation2 + $0x18] sm:$0xff] %vm233, %v232
  // Predicated region
  $region18: #{_lambda_.12} parent=0 // pred_check
    %p238 = pneg %p15
  $region19: #{_lambda_.12} parent=0 // pred_check_branch
    %240 = sbr.rel (%p238) target = $region21
  $region20: #{_lambda_.12} parent=0 // pred_region
    %v241 = vld [vmem:[#allocation2] sm:$0xff]
    %v242 = vld [vmem:[#allocation2 + $0x8] sm:$0xff]
    %v243 = vld [vmem:[#allocation2 + $0x10] sm:$0xff]
    %v244 = vld [vmem:[#allocation2 + $0x18] sm:$0xff]
    %v245 = vld [vmem:[%s2] sm:$0x1]
    %v247 = vlaneseq
    %v248 = vshrl.u32 %v247, 7
    %v249 = vsub.s32 0, %v248
    %v250 = vrot.slane %v245, %v249
    %v252 = vadd.f32 %v241, %v250
    %v253 = vadd.f32 %v242, %v250
    %v254 = vadd.f32 %v243, %v250
    %v255 = vadd.f32 %v244, %v250
    %256 = vst.msk [vmem:[%s3] sm:$0xff] %vm233, %v252
    %257 = vst.msk [vmem:[%s3 + $0x8] sm:$0xff] %vm233, %v253
    %258 = vst.msk [vmem:[%s3 + $0x10] sm:$0xff] %vm233, %v254
    %259 = vst.msk [vmem:[%s3 + $0x18] sm:$0xff] %vm233, %v255
  $region21: #{_lambda_.12} parent=0 // pred_fallthru
    _
  // Predicated region
  $region22: #{_lambda_.12} parent=0 // pred_check
    _
  $region23: #{_lambda_.12} parent=0 // pred_check_branch
    %261 = sbr.rel (0) target = $region25
  $region24: #{_lambda_.12} parent=0 // pred_region
    _
  $region25: #{_lambda_.12} parent=0 // pred_fallthru
    _
  // Predicated region
  $region26: #{_lambda_.12} parent=0 // pred_check
    _
  $region27: #{_lambda_.12} parent=0 // pred_check_branch
    %263 = sbr.rel (0) target = $region29
  $region28: #{_lambda_.12} parent=0 // pred_region
    _
  $region29: #{_lambda_.12} parent=0 // pred_fallthru
    _

// kernel: _lambda_.13
$region0: #{_lambda_.13}
  #allocation0 [shape = 'u32[]', space=smem, size = 0x4, offset = 0x4, fixed_abs, tag = 'smem constant byte address 0x4 - core index']
  #allocation1 [shape = 'u32[144,128]{1,0:T(1,128)}', space=vmem, size = 0x12000, scoped, tag = 'internal scratch']
  #allocation2 [shape = 'f32[16,64]{1,0:T(8,128)}', space=vmem, size = 0x2000, scoped, tag = 'scratch operand']
  %s0 = inlined_call_operand.vmem [shape: bf16[1,16,512], index: 0, kind: input, shape index: {}]
  %s1 = inlined_call_operand.vmem [shape: bf16[1,512,64], index: 1, kind: input, shape index: {}]
  %s2 = inlined_call_operand.vmem [shape: f32[1,64], index: 2, kind: input, shape index: {}]
  %s3 = inlined_call_operand.vmem [shape: f32[1,16,64], index: 3, kind: output, shape index: {}]
  %s4 = sld [smem:[#allocation0]]
  $region30: #{_lambda_.13} parent=0
    _
  %s6 = ssub.s32 1, %s4
  %s7 = scalar_select 0, %s6, %s4
  // Predicated region
  $region2: #{_lambda_.13} parent=0 // pred_check
    _
  $region3: #{_lambda_.13} parent=0 // pred_check_branch
    %9 = sbr.rel (0) target = $region5
  $region4: #{_lambda_.13} parent=0 // pred_region
    _
  $region5: #{_lambda_.13} parent=0 // pred_fallthru
    _
  // Predicated region
  $region6: #{_lambda_.13} parent=0 // pred_check
    _
  $region7: #{_lambda_.13} parent=0 // pred_check_branch
    %11 = sbr.rel (0) target = $region9
  $region8: #{_lambda_.13} parent=0 // pred_region
    _
  $region9: #{_lambda_.13} parent=0 // pred_fallthru
    _
  // Predicated region
  $region10: #{_lambda_.13} parent=0 // pred_check
    _
  $region11: #{_lambda_.13} parent=0 // pred_check_branch
    %13 = sbr.rel (0) target = $region13
  $region12: #{_lambda_.13} parent=0 // pred_region
    _
  $region13: #{_lambda_.13} parent=0 // pred_fallthru
    _
  %p15 = scmp.eq.s32.totalorder 0, 0
  // Predicated region
  $region14: #{_lambda_.13} parent=0 // pred_check
    %p16 = pneg %p15
  $region15: #{_lambda_.13} parent=0 // pred_check_branch
    %18 = sbr.rel (%p16) target = $region17
  $region16: #{_lambda_.13} parent=0 // pred_region
    %vm19 = vcmask 523264
    %20 = vst.msk [vmem:[#allocation2] sm:$0xff] %vm19, 0.0
    %21 = vst.msk [vmem:[#allocation2 + $0x8] sm:$0xff] %vm19, 0.0
  $region17: #{_lambda_.13} parent=0 // pred_fallthru
    _
  %v22 = vld [vmem:[#allocation2] sm:$0xff]
  %v23 = vld [vmem:[#allocation2 + $0x8] sm:$0xff]
  %v24 = vld [vmem:[%s0] sm:$0xff]
  %v25 = vld [vmem:[%s0 + $0x8] sm:$0xff]
  %v26 = vld [vmem:[%s0 + $0x10] sm:$0xff]
  %v27 = vld [vmem:[%s0 + $0x18] sm:$0xff]
  %v28 = vld [vmem:[%s1] sm:$0xf]
  %v29 = vld [vmem:[%s1 + $0x4] sm:$0xf]
  %v30 = vld [vmem:[%s1 + $0x8] sm:$0xf]
  %v31 = vld [vmem:[%s1 + $0xc] sm:$0xf]
  %v32 = vld [vmem:[%s1 + $0x10] sm:$0xf]
  %v33 = vld [vmem:[%s1 + $0x14] sm:$0xf]
  %v34 = vld [vmem:[%s1 + $0x18] sm:$0xf]
  %v35 = vld [vmem:[%s1 + $0x1c] sm:$0xf]
  %v36 = vld [vmem:[%s1 + $0x20] sm:$0xf]
  %v37 = vld [vmem:[%s1 + $0x24] sm:$0xf]
  %v38 = vld [vmem:[%s1 + $0x28] sm:$0xf]
  %v39 = vld [vmem:[%s1 + $0x2c] sm:$0xf]
  %v40 = vld [vmem:[%s1 + $0x30] sm:$0xf]
  %v41 = vld [vmem:[%s1 + $0x34] sm:$0xf]
  %v42 = vld [vmem:[%s1 + $0x38] sm:$0xf]
  %v43 = vld [vmem:[%s1 + $0x3c] sm:$0xf]
  %v44 = vld [vmem:[%s1 + $0x40] sm:$0xf]
  %v45 = vld [vmem:[%s1 + $0x44] sm:$0xf]
  %v46 = vld [vmem:[%s1 + $0x48] sm:$0xf]
  %v47 = vld [vmem:[%s1 + $0x4c] sm:$0xf]
  %v48 = vld [vmem:[%s1 + $0x50] sm:$0xf]
  %v49 = vld [vmem:[%s1 + $0x54] sm:$0xf]
  %v50 = vld [vmem:[%s1 + $0x58] sm:$0xf]
  %v51 = vld [vmem:[%s1 + $0x5c] sm:$0xf]
  %v52 = vld [vmem:[%s1 + $0x60] sm:$0xf]
  %v53 = vld [vmem:[%s1 + $0x64] sm:$0xf]
  %v54 = vld [vmem:[%s1 + $0x68] sm:$0xf]
  %v55 = vld [vmem:[%s1 + $0x6c] sm:$0xf]
  %v56 = vld [vmem:[%s1 + $0x70] sm:$0xf]
  %v57 = vld [vmem:[%s1 + $0x74] sm:$0xf]
  %v58 = vld [vmem:[%s1 + $0x78] sm:$0xf]
  %v59 = vld [vmem:[%s1 + $0x7c] sm:$0xf]
  %v60 = vld [vmem:[%s1 + $0x80] sm:$0xf]
  %v61 = vld [vmem:[%s1 + $0x84] sm:$0xf]
  %v62 = vld [vmem:[%s1 + $0x88] sm:$0xf]
  %v63 = vld [vmem:[%s1 + $0x8c] sm:$0xf]
  %v64 = vld [vmem:[%s1 + $0x90] sm:$0xf]
  %v65 = vld [vmem:[%s1 + $0x94] sm:$0xf]
  %v66 = vld [vmem:[%s1 + $0x98] sm:$0xf]
  %v67 = vld [vmem:[%s1 + $0x9c] sm:$0xf]
  %v68 = vld [vmem:[%s1 + $0xa0] sm:$0xf]
  %v69 = vld [vmem:[%s1 + $0xa4] sm:$0xf]
  %v70 = vld [vmem:[%s1 + $0xa8] sm:$0xf]
  %v71 = vld [vmem:[%s1 + $0xac] sm:$0xf]
  %v72 = vld [vmem:[%s1 + $0xb0] sm:$0xf]
  %v73 = vld [vmem:[%s1 + $0xb4] sm:$0xf]
  %v74 = vld [vmem:[%s1 + $0xb8] sm:$0xf]
  %v75 = vld [vmem:[%s1 + $0xbc] sm:$0xf]
  %v76 = vld [vmem:[%s1 + $0xc0] sm:$0xf]
  %v77 = vld [vmem:[%s1 + $0xc4] sm:$0xf]
  %v78 = vld [vmem:[%s1 + $0xc8] sm:$0xf]
  %v79 = vld [vmem:[%s1 + $0xcc] sm:$0xf]
  %v80 = vld [vmem:[%s1 + $0xd0] sm:$0xf]
  %v81 = vld [vmem:[%s1 + $0xd4] sm:$0xf]
  %v82 = vld [vmem:[%s1 + $0xd8] sm:$0xf]
  %v83 = vld [vmem:[%s1 + $0xdc] sm:$0xf]
  %v84 = vld [vmem:[%s1 + $0xe0] sm:$0xf]
  %v85 = vld [vmem:[%s1 + $0xe4] sm:$0xf]
  %v86 = vld [vmem:[%s1 + $0xe8] sm:$0xf]
  %v87 = vld [vmem:[%s1 + $0xec] sm:$0xf]
  %v88 = vld [vmem:[%s1 + $0xf0] sm:$0xf]
  %v89 = vld [vmem:[%s1 + $0xf4] sm:$0xf]
  %v90 = vld [vmem:[%s1 + $0xf8] sm:$0xf]
  %v91 = vld [vmem:[%s1 + $0xfc] sm:$0xf]
  %v96 = vunpack.c.l.b16 %v24
  %v97 = vunpack.c.h.b16 %v24
  %v98 = vunpack.c.l.b16 %v25
  %v99 = vunpack.c.h.b16 %v25
  %v100 = vunpack.c.l.b16 %v26
  %v101 = vunpack.c.h.b16 %v26
  %v102 = vunpack.c.l.b16 %v27
  %v103 = vunpack.c.h.b16 %v27
  %v104 = vpack.c.b16 %v100, %v96
  %v105 = vpack.c.b16 %v101, %v97
  %v106 = vpack.c.b16 %v102, %v98
  %v107 = vpack.c.b16 %v103, %v99
  %v176 = vunpack.c.l.b16 %v28
  %v177 = vunpack.c.l.b16 %v29
  %v178 = vunpack.c.l.b16 %v30
  %v179 = vunpack.c.l.b16 %v31
  %v180 = vunpack.c.l.b16 %v32
  %v181 = vunpack.c.l.b16 %v33
  %v182 = vunpack.c.l.b16 %v34
  %v183 = vunpack.c.l.b16 %v35
  %v184 = vunpack.c.l.b16 %v36
  %v185 = vunpack.c.l.b16 %v37
  %v186 = vunpack.c.l.b16 %v38
  %v187 = vunpack.c.l.b16 %v39
  %v188 = vunpack.c.l.b16 %v40
  %v189 = vunpack.c.l.b16 %v41
  %v190 = vunpack.c.l.b16 %v42
  %v191 = vunpack.c.l.b16 %v43
  %v192 = vunpack.c.l.b16 %v44
  %v193 = vunpack.c.l.b16 %v45
  %v194 = vunpack.c.l.b16 %v46
  %v195 = vunpack.c.l.b16 %v47
  %v196 = vunpack.c.l.b16 %v48
  %v197 = vunpack.c.l.b16 %v49
  %v198 = vunpack.c.l.b16 %v50
  %v199 = vunpack.c.l.b16 %v51
  %v200 = vunpack.c.l.b16 %v52
  %v201 = vunpack.c.l.b16 %v53
  %v202 = vunpack.c.l.b16 %v54
  %v203 = vunpack.c.l.b16 %v55
  %v204 = vunpack.c.l.b16 %v56
  %v205 = vunpack.c.l.b16 %v57
  %v206 = vunpack.c.l.b16 %v58
  %v207 = vunpack.c.l.b16 %v59
  %v208 = vunpack.c.l.b16 %v60
  %v209 = vunpack.c.l.b16 %v61
  %v210 = vunpack.c.l.b16 %v62
  %v211 = vunpack.c.l.b16 %v63
  %v212 = vunpack.c.l.b16 %v64
  %v213 = vunpack.c.l.b16 %v65
  %v214 = vunpack.c.l.b16 %v66
  %v215 = vunpack.c.l.b16 %v67
  %v216 = vunpack.c.l.b16 %v68
  %v217 = vunpack.c.l.b16 %v69
  %v218 = vunpack.c.l.b16 %v70
  %v219 = vunpack.c.l.b16 %v71
  %v220 = vunpack.c.l.b16 %v72
  %v221 = vunpack.c.l.b16 %v73
  %v222 = vunpack.c.l.b16 %v74
  %v223 = vunpack.c.l.b16 %v75
  %v224 = vunpack.c.l.b16 %v76
  %v225 = vunpack.c.l.b16 %v77
  %v226 = vunpack.c.l.b16 %v78
  %v227 = vunpack.c.l.b16 %v79
  %v228 = vunpack.c.l.b16 %v80
  %v229 = vunpack.c.l.b16 %v81
  %v230 = vunpack.c.l.b16 %v82
  %v231 = vunpack.c.l.b16 %v83
  %v232 = vunpack.c.l.b16 %v84
  %v233 = vunpack.c.l.b16 %v85
  %v234 = vunpack.c.l.b16 %v86
  %v235 = vunpack.c.l.b16 %v87
  %v236 = vunpack.c.l.b16 %v88
  %v237 = vunpack.c.l.b16 %v89
  %v238 = vunpack.c.l.b16 %v90
  %v239 = vunpack.c.l.b16 %v91
  %v240 = vpack.c.b16 %v177, %v176
  %v241 = vpack.c.b16 %v179, %v178
  %v242 = vpack.c.b16 %v181, %v180
  %v243 = vpack.c.b16 %v183, %v182
  %v244 = vpack.c.b16 %v185, %v184
  %v245 = vpack.c.b16 %v187, %v186
  %v246 = vpack.c.b16 %v189, %v188
  %v247 = vpack.c.b16 %v191, %v190
  %v248 = vpack.c.b16 %v193, %v192
  %v249 = vpack.c.b16 %v195, %v194
  %v250 = vpack.c.b16 %v197, %v196
  %v251 = vpack.c.b16 %v199, %v198
  %v252 = vpack.c.b16 %v201, %v200
  %v253 = vpack.c.b16 %v203, %v202
  %v254 = vpack.c.b16 %v205, %v204
  %v255 = vpack.c.b16 %v207, %v206
  %v256 = vpack.c.b16 %v209, %v208
  %v257 = vpack.c.b16 %v211, %v210
  %v258 = vpack.c.b16 %v213, %v212
  %v259 = vpack.c.b16 %v215, %v214
  %v260 = vpack.c.b16 %v217, %v216
  %v261 = vpack.c.b16 %v219, %v218
  %v262 = vpack.c.b16 %v221, %v220
  %v263 = vpack.c.b16 %v223, %v222
  %v264 = vpack.c.b16 %v225, %v224
  %v265 = vpack.c.b16 %v227, %v226
  %v266 = vpack.c.b16 %v229, %v228
  %v267 = vpack.c.b16 %v231, %v230
  %v268 = vpack.c.b16 %v233, %v232
  %v269 = vpack.c.b16 %v235, %v234
  %v270 = vpack.c.b16 %v237, %v236
  %v271 = vpack.c.b16 %v239, %v238
  %304 = vmatprep.subr.bf16.mxu0 0
  %305 = vmatpush1.bf16.msra.mxu0 %v240
  %306 = vmatprep.subr.bf16.mxu0 0
  %307 = vmatpush1.bf16.msra.mxu0 %v241
  %308 = vmatprep.subr.bf16.mxu0 0
  %309 = vmatpush1.bf16.msra.mxu0 %v242
  %310 = vmatprep.subr.bf16.mxu0 0
  %311 = vmatpush1.bf16.msra.mxu0 %v243
  %312 = vmatprep.subr.bf16.mxu0 0
  %313 = vmatpush1.bf16.msra.mxu0 %v244
  %314 = vmatprep.subr.bf16.mxu0 0
  %315 = vmatpush1.bf16.msra.mxu0 %v245
  %316 = vmatprep.subr.bf16.mxu0 0
  %317 = vmatpush1.bf16.msra.mxu0 %v246
  %318 = vmatprep.subr.bf16.mxu0 0
  %319 = vmatpush1.bf16.msra.mxu0 %v247
  %320 = vmatprep.subr.bf16.mxu0 0
  %321 = vmatpush1.bf16.msra.mxu0 %v248
  %322 = vmatprep.subr.bf16.mxu0 0
  %323 = vmatpush1.bf16.msra.mxu0 %v249
  %324 = vmatprep.subr.bf16.mxu0 0
  %325 = vmatpush1.bf16.msra.mxu0 %v250
  %326 = vmatprep.subr.bf16.mxu0 0
  %327 = vmatpush1.bf16.msra.mxu0 %v251
  %328 = vmatprep.subr.bf16.mxu0 0
  %329 = vmatpush1.bf16.msra.mxu0 %v252
  %330 = vmatprep.subr.bf16.mxu0 0
  %331 = vmatpush1.bf16.msra.mxu0 %v253
  %332 = vmatprep.subr.bf16.mxu0 0
  %333 = vmatpush1.bf16.msra.mxu0 %v254
  %334 = vmatprep.subr.bf16.mxu0 0
  %335 = vmatpush1.bf16.msra.mxu0 %v255
  %336 = vmatprep.mubr.bf16.mxu0 %v105
  %337 = vmatmul.mubr.bf16.gmra.mrb[0].mxu0 %v104
  %v338 = vpop.f32.mrb[0].mxu0
  %v339 = vadd.f32 0.0, %v338
  %v340 = vpop.f32.mrb[0].mxu0
  %v341 = vpop.f32.mrb[0].mxu0
  %v342 = vadd.f32 0.0, %v341
  %v343 = vpop.f32.mrb[0].mxu0
  %344 = vdwg.mxu0
  %345 = vmatprep.subr.bf16.mxu0 0
  %346 = vmatpush1.bf16.msra.mxu0 %v256
  %347 = vmatprep.subr.bf16.mxu0 0
  %348 = vmatpush1.bf16.msra.mxu0 %v257
  %349 = vmatprep.subr.bf16.mxu0 0
  %350 = vmatpush1.bf16.msra.mxu0 %v258
  %351 = vmatprep.subr.bf16.mxu0 0
  %352 = vmatpush1.bf16.msra.mxu0 %v259
  %353 = vmatprep.subr.bf16.mxu0 0
  %354 = vmatpush1.bf16.msra.mxu0 %v260
  %355 = vmatprep.subr.bf16.mxu0 0
  %356 = vmatpush1.bf16.msra.mxu0 %v261
  %357 = vmatprep.subr.bf16.mxu0 0
  %358 = vmatpush1.bf16.msra.mxu0 %v262
  %359 = vmatprep.subr.bf16.mxu0 0
  %360 = vmatpush1.bf16.msra.mxu0 %v263
  %361 = vmatprep.subr.bf16.mxu0 0
  %362 = vmatpush1.bf16.msra.mxu0 %v264
  %363 = vmatprep.subr.bf16.mxu0 0
  %364 = vmatpush1.bf16.msra.mxu0 %v265
  %365 = vmatprep.subr.bf16.mxu0 0
  %366 = vmatpush1.bf16.msra.mxu0 %v266
  %367 = vmatprep.subr.bf16.mxu0 0
  %368 = vmatpush1.bf16.msra.mxu0 %v267
  %369 = vmatprep.subr.bf16.mxu0 0
  %370 = vmatpush1.bf16.msra.mxu0 %v268
  %371 = vmatprep.subr.bf16.mxu0 0
  %372 = vmatpush1.bf16.msra.mxu0 %v269
  %373 = vmatprep.subr.bf16.mxu0 0
  %374 = vmatpush1.bf16.msra.mxu0 %v270
  %375 = vmatprep.subr.bf16.mxu0 0
  %376 = vmatpush1.bf16.msra.mxu0 %v271
  %377 = vmatprep.mubr.bf16.mxu0 %v107
  %378 = vmatmul.mubr.bf16.gmra.mrb[0].mxu0 %v106
  %v379 = vpop.f32.mrb[0].mxu0
  %v380 = vadd.f32 %v339, %v379
  %v381 = vpop.f32.mrb[0].mxu0
  %v382 = vpop.f32.mrb[0].mxu0
  %v383 = vadd.f32 %v342, %v382
  %v384 = vpop.f32.mrb[0].mxu0
  %385 = vdwg.mxu0
  %v386 = vadd.f32 %v22, %v380
  %v387 = vadd.f32 %v23, %v383
  %vm388 = vcmask 523264
  %389 = vst.msk [vmem:[#allocation2] sm:$0xff] %vm388, %v386
  %390 = vst.msk [vmem:[#allocation2 + $0x8] sm:$0xff] %vm388, %v387
  // Predicated region
  $region18: #{_lambda_.13} parent=0 // pred_check
    %p391 = pneg %p15
  $region19: #{_lambda_.13} parent=0 // pred_check_branch
    %393 = sbr.rel (%p391) target = $region21
  $region20: #{_lambda_.13} parent=0 // pred_region
    %v394 = vld [vmem:[#allocation2] sm:$0xff]
    %v395 = vld [vmem:[#allocation2 + $0x8] sm:$0xff]
    %v396 = vld [vmem:[%s2] sm:$0x1]
    %v398 = vlaneseq
    %v399 = vshrl.u32 %v398, 7
    %v400 = vsub.s32 0, %v399
    %v401 = vrot.slane %v396, %v400
    %v403 = vadd.f32 %v394, %v401
    %v404 = vadd.f32 %v395, %v401
    %405 = vst.msk [vmem:[%s3] sm:$0xff] %vm388, %v403
    %406 = vst.msk [vmem:[%s3 + $0x8] sm:$0xff] %vm388, %v404
  $region21: #{_lambda_.13} parent=0 // pred_fallthru
    _
  // Predicated region
  $region22: #{_lambda_.13} parent=0 // pred_check
    _
  $region23: #{_lambda_.13} parent=0 // pred_check_branch
    %408 = sbr.rel (0) target = $region25
  $region24: #{_lambda_.13} parent=0 // pred_region
    _
  $region25: #{_lambda_.13} parent=0 // pred_fallthru
    _
  // Predicated region
  $region26: #{_lambda_.13} parent=0 // pred_check
    _
  $region27: #{_lambda_.13} parent=0 // pred_check_branch
    %410 = sbr.rel (0) target = $region29
  $region28: #{_lambda_.13} parent=0 // pred_region
    _
  $region29: #{_lambda_.13} parent=0 // pred_fallthru
    _

// kernel: _lambda_.15
$region0: #{_lambda_.15}
  #allocation0 [shape = 'u32[]', space=smem, size = 0x4, offset = 0x4, fixed_abs, tag = 'smem constant byte address 0x4 - core index']
  #allocation1 [shape = 'u32[144,128]{1,0:T(1,128)}', space=vmem, size = 0x12000, scoped, tag = 'internal scratch']
  #allocation2 [shape = 'f32[16,64]{1,0:T(8,128)}', space=vmem, size = 0x2000, scoped, tag = 'scratch operand']
  %s0 = inlined_call_operand.vmem [shape: bf16[4,16,256], index: 0, kind: input, shape index: {}]
  %s1 = inlined_call_operand.vmem [shape: bf16[4,256,64], index: 1, kind: input, shape index: {}]
  %s2 = inlined_call_operand.vmem [shape: f32[1,64], index: 2, kind: input, shape index: {}]
  %s3 = inlined_call_operand.vmem [shape: f32[4,16,64], index: 3, kind: output, shape index: {}]
  %s4 = sld [smem:[#allocation0]]
  $region53: #{_lambda_.15} parent=0
    _
  %s6 = ssub.s32 1, %s4
  %s7 = scalar_select 0, %s6, %s4
  loop: start=0, step=1, limit=6
  $region2: #{_lambda_.15} parent=0 // loop_pre_header
    _
  $region3: #{_lambda_.15} parent=0 // loop_header
    %s9 = sphi 0, %s13
    %p10 = scmp.ge.s32.totalorder %s9, 6
    %s16 = sphi 0, %s42
    %s17 = sphi 0, %s38
    %s18 = sphi 0, %s34
    %s19 = sphi 0, %s30
    %s20 = sphi 0, %s16
    %s21 = sphi 0, %s17
    %s22 = sphi 0, %s18
    %s23 = sphi 0, %s19
    %s24 = sphi 0, %s20
    %s25 = sphi 0, %s21
    %s26 = sphi 0, %s22
    %s27 = sphi 0, %s23
    %s49 = sphi 0, %s51
    %s52 = sphi 0, %s49
    %s53 = sphi 0, %s52
    %s69 = sphi 0, %s53
    %s79 = sphi 0, %s81
    %s82 = sphi 0, %s79
    %s83 = sphi 0, %s82
    %s99 = sphi 0, %s83
    %s105 = sphi 0, %s107
    %s108 = sphi 0, %s105
    %s109 = sphi 0, %s108
    %s125 = sphi 0, %s109
    %s135 = sphi 0, %s137
    %s138 = sphi 0, %s135
    %s139 = sphi 0, %s138
    %s155 = sphi 0, %s139
  $region4: #{_lambda_.15} parent=0 // loop_header_branch
    %12 = sbr.rel (%p10) target = $region8
  $region5: #{_lambda_.15} parent=0 // loop_body
    %s14 = ssub.s32 %s9, 1
    %s15 = ssub.s32 %s9, 2
    %s28 = sadd.s32 1, %s19
    %p29 = scmp.ge.s32.totalorder %s28, 1
    %s30 = scalar_select %p29, 0, %s28
    %s31 = sadd.s32 1, %s18
    %s32 = scalar_select %p29, %s31, %s18
    %p33 = scmp.ge.s32.totalorder %s32, 1
    %s34 = scalar_select %p33, 0, %s32
    %s35 = sadd.s32 1, %s17
    %s36 = scalar_select %p33, %s35, %s17
    %p37 = scmp.ge.s32.totalorder %s36, 1
    %s38 = scalar_select %p37, 0, %s36
    %s39 = sadd.s32 1, %s16
    %s40 = scalar_select %p37, %s39, %s16
    %p41 = scmp.ge.s32.totalorder %s40, 4
    %s42 = scalar_select %p41, 0, %s40
    %s43 = ssub.s32 %s16, %s42
    %s44 = ssub.s32 %s17, %s38
    %s45 = sor.u32 %s43, %s44
    %s46 = ssub.s32 %s19, %s30
    %s47 = sor.u32 %s45, %s46
    %p48 = scmp.eq.s32.totalorder %s47, 0
    %s50 = sadd.s32 %s49, 1
    %s51 = scalar_select %p48, %s49, %s50
    %p54 = pneg %p48
    %p55 = scmp.eq.s32.totalorder %s9, 3
    %p56 = por %p54, %p55
    %p57 = scmp.ne.s32.totalorder %s49, %s52
    %p58 = scmp.eq.s32.totalorder %s9, 0
    %p59 = por %p57, %p58
    %p60 = scmp.ne.s32.totalorder %s49, %s52
    %p61 = scmp.eq.s32.totalorder %s14, 3
    %p62 = por %p60, %p61
    %p63 = scmp.ne.s32.totalorder %s52, %s53
    %p64 = scmp.eq.s32.totalorder %s14, 0
    %p65 = por %p63, %p64
    %p66 = scmp.ne.s32.totalorder %s52, %s53
    %p67 = scmp.eq.s32.totalorder %s15, 3
    %p68 = por %p66, %p67
    %p70 = scmp.ne.s32.totalorder %s53, %s69
    %p71 = scmp.eq.s32.totalorder %s15, 0
    %p72 = por %p70, %p71
    %s73 = ssub.s32 %s16, %s42
    %s74 = ssub.s32 %s19, %s30
    %s75 = sor.u32 %s73, %s74
    %s76 = ssub.s32 %s18, %s34
    %s77 = sor.u32 %s75, %s76
    %p78 = scmp.eq.s32.totalorder %s77, 0
    %s80 = sadd.s32 %s79, 1
    %s81 = scalar_select %p78, %s79, %s80
    %p84 = pneg %p78
    %p85 = scmp.eq.s32.totalorder %s9, 3
    %p86 = por %p84, %p85
    %p87 = scmp.ne.s32.totalorder %s79, %s82
    %p88 = scmp.eq.s32.totalorder %s9, 0
    %p89 = por %p87, %p88
    %p90 = scmp.ne.s32.totalorder %s79, %s82
    %p91 = scmp.eq.s32.totalorder %s14, 3
    %p92 = por %p90, %p91
    %p93 = scmp.ne.s32.totalorder %s82, %s83
    %p94 = scmp.eq.s32.totalorder %s14, 0
    %p95 = por %p93, %p94
    %p96 = scmp.ne.s32.totalorder %s82, %s83
    %p97 = scmp.eq.s32.totalorder %s15, 3
    %p98 = por %p96, %p97
    %p100 = scmp.ne.s32.totalorder %s83, %s99
    %p101 = scmp.eq.s32.totalorder %s15, 0
    %p102 = por %p100, %p101
    %s103 = ssub.s32 %s18, %s34
    %p104 = scmp.eq.s32.totalorder %s103, 0
    %s106 = sadd.s32 %s105, 1
    %s107 = scalar_select %p104, %s105, %s106
    %p110 = pneg %p104
    %p111 = scmp.eq.s32.totalorder %s9, 3
    %p112 = por %p110, %p111
    %p113 = scmp.ne.s32.totalorder %s105, %s108
    %p114 = scmp.eq.s32.totalorder %s9, 0
    %p115 = por %p113, %p114
    %p116 = scmp.ne.s32.totalorder %s105, %s108
    %p117 = scmp.eq.s32.totalorder %s14, 3
    %p118 = por %p116, %p117
    %p119 = scmp.ne.s32.totalorder %s108, %s109
    %p120 = scmp.eq.s32.totalorder %s14, 0
    %p121 = por %p119, %p120
    %p122 = scmp.ne.s32.totalorder %s108, %s109
    %p123 = scmp.eq.s32.totalorder %s15, 3
    %p124 = por %p122, %p123
    %p126 = scmp.ne.s32.totalorder %s109, %s125
    %p127 = scmp.eq.s32.totalorder %s15, 0
    %p128 = por %p126, %p127
    %s129 = ssub.s32 %s16, %s42
    %s130 = ssub.s32 %s17, %s38
    %s131 = sor.u32 %s129, %s130
    %s132 = ssub.s32 %s18, %s34
    %s133 = sor.u32 %s131, %s132
    %p134 = scmp.eq.s32.totalorder %s133, 0
    %s136 = sadd.s32 %s135, 1
    %s137 = scalar_select %p134, %s135, %s136
    %p140 = pneg %p134
    %p141 = scmp.eq.s32.totalorder %s9, 3
    %p142 = por %p140, %p141
    %p143 = scmp.ne.s32.totalorder %s135, %s138
    %p144 = scmp.eq.s32.totalorder %s9, 0
    %p145 = por %p143, %p144
    %p146 = scmp.ne.s32.totalorder %s135, %s138
    %p147 = scmp.eq.s32.totalorder %s14, 3
    %p148 = por %p146, %p147
    %p149 = scmp.ne.s32.totalorder %s138, %s139
    %p150 = scmp.eq.s32.totalorder %s14, 0
    %p151 = por %p149, %p150
    %p152 = scmp.ne.s32.totalorder %s138, %s139
    %p153 = scmp.eq.s32.totalorder %s15, 3
    %p154 = por %p152, %p153
    %p156 = scmp.ne.s32.totalorder %s139, %s155
    %p157 = scmp.eq.s32.totalorder %s15, 0
    %p158 = por %p156, %p157
    %p159 = scmp.le.s32.totalorder 1, %s9
    %p160 = scmp.lt.s32.totalorder %s9, 5
    %p161 = pnand %p159, %p160
    %p162 = pneg %p161
    // Predicated region
    $region9: #{_lambda_.15} parent=5 // pred_check
      _
    $region10: #{_lambda_.15} parent=5 // pred_check_branch
      %164 = sbr.rel (%p161) target = $region12
    $region11: #{_lambda_.15} parent=5 // pred_region
      %s165 = ssub.s32 %s9, 1
      // Predicated region
      $region13: #{_lambda_.15} parent=11 // pred_check
        %p166 = pneg %p121
      $region14: #{_lambda_.15} parent=11 // pred_check_branch
        %168 = sbr.rel (%p166) target = $region16
      $region15: #{_lambda_.15} parent=11 // pred_region
        %p169 = scmp.lt.s32.totalorder %s22, 0
        %s170 = scalar_select %p169, %s22, 0
        %s171 = scalar_lea.vmem %s2, %s170
      $region16: #{_lambda_.15} parent=11 // pred_fallthru
        _
    $region12: #{_lambda_.15} parent=5 // pred_fallthru
      _
    %p172 = scmp.lt.s32.totalorder %s9, 4
    // Predicated region
    $region17: #{_lambda_.15} parent=5 // pred_check
      %p173 = pneg %p172
    $region18: #{_lambda_.15} parent=5 // pred_check_branch
      %175 = sbr.rel (%p173) target = $region20
    $region19: #{_lambda_.15} parent=5 // pred_region
      // Predicated region
      $region21: #{_lambda_.15} parent=19 // pred_check
        %p176 = pneg %p59
      $region22: #{_lambda_.15} parent=19 // pred_check_branch
        %178 = sbr.rel (%p176) target = $region24
      $region23: #{_lambda_.15} parent=19 // pred_region
        %s179 = smul.u32 2, %s17
        %s180 = smul.u32 2, %s19
        %p181 = scmp.lt.s32.totalorder %s16, 3
        %s182 = scalar_select %p181, %s16, 3
        %p183 = scmp.lt.s32.totalorder %s179, 1
        %s184 = scalar_select %p183, %s179, 1
        %p185 = scmp.lt.s32.totalorder %s180, 1
        %s186 = scalar_select %p185, %s180, 1
        %s187 = smul.addr %s184, 2
        %s188 = sadd.s32 %s186, %s187
        %s189 = smul.addr %s182, 4
        %s190 = sadd.s32 %s188, %s189
        %s191 = smul.addr %s190, 4
        %s192 = scalar_lea.vmem %s0, %s191
        %s193 = smul.u32 2, %s17
        %s194 = smul.u32 2, %s19
      $region24: #{_lambda_.15} parent=19 // pred_fallthru
        _
      // Predicated region
      $region25: #{_lambda_.15} parent=19 // pred_check
        %p195 = pneg %p89
      $region26: #{_lambda_.15} parent=19 // pred_check_branch
        %197 = sbr.rel (%p195) target = $region28
      $region27: #{_lambda_.15} parent=19 // pred_region
        %s198 = smul.u32 32, %s19
        %p199 = scmp.lt.s32.totalorder %s16, 3
        %s200 = scalar_select %p199, %s16, 3
        %p201 = scmp.lt.s32.totalorder %s198, 31
        %s202 = scalar_select %p201, %s198, 31
        %p203 = scmp.lt.s32.totalorder %s18, 0
        %s204 = scalar_select %p203, %s18, 0
        %s205 = sadd.s32 %s204, %s202
        %s206 = smul.addr %s200, 32
        %s207 = sadd.s32 %s205, %s206
        %s208 = smul.addr %s207, 4
        %s209 = scalar_lea.vmem %s1, %s208
        %s210 = smul.u32 32, %s19
      $region28: #{_lambda_.15} parent=19 // pred_fallthru
        _
    $region20: #{_lambda_.15} parent=5 // pred_fallthru
      _
    %p211 = scmp.le.s32.totalorder 1, %s9
    %p212 = scmp.lt.s32.totalorder %s9, 5
    %p213 = pnand %p211, %p212
    %p214 = pneg %p213
    // Predicated region
    $region29: #{_lambda_.15} parent=5 // pred_check
      _
    $region30: #{_lambda_.15} parent=5 // pred_check_branch
      %216 = sbr.rel (%p213) target = $region32
    $region31: #{_lambda_.15} parent=5 // pred_region
      %s217 = ssub.s32 %s9, 1
      %s218 = smul.u32 2, %s21
      %s219 = smul.u32 2, %s23
      %p220 = scmp.lt.s32.totalorder %s20, 3
      %s221 = scalar_select %p220, %s20, 3
      %p222 = scmp.lt.s32.totalorder %s218, 1
      %s223 = scalar_select %p222, %s218, 1
      %p224 = scmp.lt.s32.totalorder %s219, 1
      %s225 = scalar_select %p224, %s219, 1
      %s226 = smul.addr %s223, 2
      %s227 = sadd.s32 %s225, %s226
      %s228 = smul.addr %s221, 4
      %s229 = sadd.s32 %s227, %s228
      %s230 = smul.addr %s229, 4
      %s231 = scalar_lea.vmem %s0, %s230
      %p232 = pneg %p65
      %p233 = pneg %p62
      %s234 = smul.u32 32, %s23
      %p235 = scmp.lt.s32.totalorder %s20, 3
      %s236 = scalar_select %p235, %s20, 3
      %p237 = scmp.lt.s32.totalorder %s234, 31
      %s238 = scalar_select %p237, %s234, 31
      %p239 = scmp.lt.s32.totalorder %s22, 0
      %s240 = scalar_select %p239, %s22, 0
      %s241 = sadd.s32 %s240, %s238
      %s242 = smul.addr %s236, 32
      %s243 = sadd.s32 %s241, %s242
      %s244 = smul.addr %s243, 4
      %s245 = scalar_lea.vmem %s1, %s244
      %p246 = pneg %p95
      %p247 = pneg %p92
      %p248 = scmp.lt.s32.totalorder %s22, 0
      %s249 = scalar_select %p248, %s22, 0
      %s250 = scalar_lea.vmem %s2, %s249
      %p251 = pneg %p121
      %p252 = pneg %p118
      %p253 = pneg %p151
      %p254 = pneg %p148
      %s255 = smul.u32 2, %s21
      %p256 = scmp.lt.s32.totalorder %s20, 3
      %s257 = scalar_select %p256, %s20, 3
      %p258 = scmp.lt.s32.totalorder %s255, 1
      %s259 = scalar_select %p258, %s255, 1
      %p260 = scmp.lt.s32.totalorder %s22, 0
      %s261 = scalar_select %p260, %s22, 0
      %s262 = sadd.s32 %s261, %s259
      %s263 = smul.addr %s257, 2
      %s264 = sadd.s32 %s262, %s263
      %s265 = smul.addr %s264, 8
      %s266 = scalar_lea.vmem %s3, %s265
      %s267 = smul.u32 2, %s21
      %s268 = smul.u32 2, %s23
      %p269 = scmp.lt.s32.totalorder %s20, 3
      %s270 = scalar_select %p269, %s20, 3
      %p271 = scmp.lt.s32.totalorder %s267, 1
      %s272 = scalar_select %p271, %s267, 1
      %p273 = scmp.lt.s32.totalorder %s268, 1
      %s274 = scalar_select %p273, %s268, 1
      %s275 = smul.addr %s272, 2
      %s276 = sadd.s32 %s274, %s275
      %s277 = smul.addr %s270, 4
      %s278 = sadd.s32 %s276, %s277
      %s279 = smul.addr %s278, 4
      %s280 = scalar_lea.vmem %s0, %s279
      %s281 = smul.u32 2, %s21
      %s282 = smul.u32 2, %s23
      %s283 = smul.u32 32, %s23
      %p284 = scmp.lt.s32.totalorder %s20, 3
      %s285 = scalar_select %p284, %s20, 3
      %p286 = scmp.lt.s32.totalorder %s283, 31
      %s287 = scalar_select %p286, %s283, 31
      %p288 = scmp.lt.s32.totalorder %s22, 0
      %s289 = scalar_select %p288, %s22, 0
      %s290 = sadd.s32 %s289, %s287
      %s291 = smul.addr %s285, 32
      %s292 = sadd.s32 %s290, %s291
      %s293 = smul.addr %s292, 4
      %s294 = scalar_lea.vmem %s1, %s293
      %s295 = smul.u32 32, %s23
      %p296 = scmp.lt.s32.totalorder %s22, 0
      %s297 = scalar_select %p296, %s22, 0
      %s298 = scalar_lea.vmem %s2, %s297
      %s299 = smul.u32 2, %s21
      %p300 = scmp.lt.s32.totalorder %s20, 3
      %s301 = scalar_select %p300, %s20, 3
      %p302 = scmp.lt.s32.totalorder %s299, 1
      %s303 = scalar_select %p302, %s299, 1
      %p304 = scmp.lt.s32.totalorder %s22, 0
      %s305 = scalar_select %p304, %s22, 0
      %s306 = sadd.s32 %s305, %s303
      %s307 = smul.addr %s301, 2
      %s308 = sadd.s32 %s306, %s307
      %s309 = smul.addr %s308, 8
      %s310 = scalar_lea.vmem %s3, %s309
      %s311 = smul.u32 2, %s21
      %p313 = scmp.eq.s32.totalorder %s23, 0
      // Predicated region
      $region33: #{_lambda_.15} parent=31 // pred_check
        %p314 = pneg %p313
      $region34: #{_lambda_.15} parent=31 // pred_check_branch
        %316 = sbr.rel (%p314) target = $region36
      $region35: #{_lambda_.15} parent=31 // pred_region
        %vm317 = vcmask 523264
        %318 = vst.msk [vmem:[#allocation2] sm:$0xff] %vm317, 0.0
        %319 = vst.msk [vmem:[#allocation2 + $0x8] sm:$0xff] %vm317, 0.0
      $region36: #{_lambda_.15} parent=31 // pred_fallthru
        _
      %v320 = vld [vmem:[#allocation2] sm:$0xff]
      %v321 = vld [vmem:[#allocation2 + $0x8] sm:$0xff]
      %v322 = vld [vmem:[%s280] sm:$0xff]
      %v323 = vld [vmem:[%s280 + $0x8] sm:$0xff]
      %v324 = vld [vmem:[%s294] sm:$0xf]
      %v325 = vld [vmem:[%s294 + $0x4] sm:$0xf]
      %v326 = vld [vmem:[%s294 + $0x8] sm:$0xf]
      %v327 = vld [vmem:[%s294 + $0xc] sm:$0xf]
      %v328 = vld [vmem:[%s294 + $0x10] sm:$0xf]
      %v329 = vld [vmem:[%s294 + $0x14] sm:$0xf]
      %v330 = vld [vmem:[%s294 + $0x18] sm:$0xf]
      %v331 = vld [vmem:[%s294 + $0x1c] sm:$0xf]
      %v332 = vld [vmem:[%s294 + $0x20] sm:$0xf]
      %v333 = vld [vmem:[%s294 + $0x24] sm:$0xf]
      %v334 = vld [vmem:[%s294 + $0x28] sm:$0xf]
      %v335 = vld [vmem:[%s294 + $0x2c] sm:$0xf]
      %v336 = vld [vmem:[%s294 + $0x30] sm:$0xf]
      %v337 = vld [vmem:[%s294 + $0x34] sm:$0xf]
      %v338 = vld [vmem:[%s294 + $0x38] sm:$0xf]
      %v339 = vld [vmem:[%s294 + $0x3c] sm:$0xf]
      %v340 = vld [vmem:[%s294 + $0x40] sm:$0xf]
      %v341 = vld [vmem:[%s294 + $0x44] sm:$0xf]
      %v342 = vld [vmem:[%s294 + $0x48] sm:$0xf]
      %v343 = vld [vmem:[%s294 + $0x4c] sm:$0xf]
      %v344 = vld [vmem:[%s294 + $0x50] sm:$0xf]
      %v345 = vld [vmem:[%s294 + $0x54] sm:$0xf]
      %v346 = vld [vmem:[%s294 + $0x58] sm:$0xf]
      %v347 = vld [vmem:[%s294 + $0x5c] sm:$0xf]
      %v348 = vld [vmem:[%s294 + $0x60] sm:$0xf]
      %v349 = vld [vmem:[%s294 + $0x64] sm:$0xf]
      %v350 = vld [vmem:[%s294 + $0x68] sm:$0xf]
      %v351 = vld [vmem:[%s294 + $0x6c] sm:$0xf]
      %v352 = vld [vmem:[%s294 + $0x70] sm:$0xf]
      %v353 = vld [vmem:[%s294 + $0x74] sm:$0xf]
      %v354 = vld [vmem:[%s294 + $0x78] sm:$0xf]
      %v355 = vld [vmem:[%s294 + $0x7c] sm:$0xf]
      %v358 = vunpack.c.l.b16 %v322
      %v359 = vunpack.c.h.b16 %v322
      %v360 = vunpack.c.l.b16 %v323
      %v361 = vunpack.c.h.b16 %v323
      %v362 = vpack.c.b16 %v360, %v358
      %v363 = vpack.c.b16 %v361, %v359
      %v398 = vunpack.c.l.b16 %v324
      %v399 = vunpack.c.l.b16 %v325
      %v400 = vunpack.c.l.b16 %v326
      %v401 = vunpack.c.l.b16 %v327
      %v402 = vunpack.c.l.b16 %v328
      %v403 = vunpack.c.l.b16 %v329
      %v404 = vunpack.c.l.b16 %v330
      %v405 = vunpack.c.l.b16 %v331
      %v406 = vunpack.c.l.b16 %v332
      %v407 = vunpack.c.l.b16 %v333
      %v408 = vunpack.c.l.b16 %v334
      %v409 = vunpack.c.l.b16 %v335
      %v410 = vunpack.c.l.b16 %v336
      %v411 = vunpack.c.l.b16 %v337
      %v412 = vunpack.c.l.b16 %v338
      %v413 = vunpack.c.l.b16 %v339
      %v414 = vunpack.c.l.b16 %v340
      %v415 = vunpack.c.l.b16 %v341
      %v416 = vunpack.c.l.b16 %v342
      %v417 = vunpack.c.l.b16 %v343
      %v418 = vunpack.c.l.b16 %v344
      %v419 = vunpack.c.l.b16 %v345
      %v420 = vunpack.c.l.b16 %v346
      %v421 = vunpack.c.l.b16 %v347
      %v422 = vunpack.c.l.b16 %v348
      %v423 = vunpack.c.l.b16 %v349
      %v424 = vunpack.c.l.b16 %v350
      %v425 = vunpack.c.l.b16 %v351
      %v426 = vunpack.c.l.b16 %v352
      %v427 = vunpack.c.l.b16 %v353
      %v428 = vunpack.c.l.b16 %v354
      %v429 = vunpack.c.l.b16 %v355
      %v430 = vpack.c.b16 %v399, %v398
      %v431 = vpack.c.b16 %v401, %v400
      %v432 = vpack.c.b16 %v403, %v402
      %v433 = vpack.c.b16 %v405, %v404
      %v434 = vpack.c.b16 %v407, %v406
      %v435 = vpack.c.b16 %v409, %v408
      %v436 = vpack.c.b16 %v411, %v410
      %v437 = vpack.c.b16 %v413, %v412
      %v438 = vpack.c.b16 %v415, %v414
      %v439 = vpack.c.b16 %v417, %v416
      %v440 = vpack.c.b16 %v419, %v418
      %v441 = vpack.c.b16 %v421, %v420
      %v442 = vpack.c.b16 %v423, %v422
      %v443 = vpack.c.b16 %v425, %v424
      %v444 = vpack.c.b16 %v427, %v426
      %v445 = vpack.c.b16 %v429, %v428
      %462 = vmatprep.subr.bf16.mxu0 0
      %463 = vmatpush1.bf16.msra.mxu0 %v430
      %464 = vmatprep.subr.bf16.mxu0 0
      %465 = vmatpush1.bf16.msra.mxu0 %v431
      %466 = vmatprep.subr.bf16.mxu0 0
      %467 = vmatpush1.bf16.msra.mxu0 %v432
      %468 = vmatprep.subr.bf16.mxu0 0
      %469 = vmatpush1.bf16.msra.mxu0 %v433
      %470 = vmatprep.subr.bf16.mxu0 0
      %471 = vmatpush1.bf16.msra.mxu0 %v434
      %472 = vmatprep.subr.bf16.mxu0 0
      %473 = vmatpush1.bf16.msra.mxu0 %v435
      %474 = vmatprep.subr.bf16.mxu0 0
      %475 = vmatpush1.bf16.msra.mxu0 %v436
      %476 = vmatprep.subr.bf16.mxu0 0
      %477 = vmatpush1.bf16.msra.mxu0 %v437
      %478 = vmatprep.subr.bf16.mxu0 0
      %479 = vmatpush1.bf16.msra.mxu0 %v438
      %480 = vmatprep.subr.bf16.mxu0 0
      %481 = vmatpush1.bf16.msra.mxu0 %v439
      %482 = vmatprep.subr.bf16.mxu0 0
      %483 = vmatpush1.bf16.msra.mxu0 %v440
      %484 = vmatprep.subr.bf16.mxu0 0
      %485 = vmatpush1.bf16.msra.mxu0 %v441
      %486 = vmatprep.subr.bf16.mxu0 0
      %487 = vmatpush1.bf16.msra.mxu0 %v442
      %488 = vmatprep.subr.bf16.mxu0 0
      %489 = vmatpush1.bf16.msra.mxu0 %v443
      %490 = vmatprep.subr.bf16.mxu0 0
      %491 = vmatpush1.bf16.msra.mxu0 %v444
      %492 = vmatprep.subr.bf16.mxu0 0
      %493 = vmatpush1.bf16.msra.mxu0 %v445
      %494 = vmatprep.mubr.bf16.mxu0 %v363
      %495 = vmatmul.mubr.bf16.gmra.mrb[0].mxu0 %v362
      %v496 = vpop.f32.mrb[0].mxu0
      %v497 = vadd.f32 0.0, %v496
      %v498 = vpop.f32.mrb[0].mxu0
      %v499 = vpop.f32.mrb[0].mxu0
      %v500 = vadd.f32 0.0, %v499
      %v501 = vpop.f32.mrb[0].mxu0
      %502 = vdwg.mxu0
      %v503 = vadd.f32 %v320, %v497
      %v504 = vadd.f32 %v321, %v500
      %vm505 = vcmask 523264
      %506 = vst.msk [vmem:[#allocation2] sm:$0xff] %vm505, %v503
      %507 = vst.msk [vmem:[#allocation2 + $0x8] sm:$0xff] %vm505, %v504
      // Predicated region
      $region37: #{_lambda_.15} parent=31 // pred_check
        %p508 = pneg %p313
      $region38: #{_lambda_.15} parent=31 // pred_check_branch
        %510 = sbr.rel (%p508) target = $region40
      $region39: #{_lambda_.15} parent=31 // pred_region
        %v511 = vld [vmem:[#allocation2] sm:$0xff]
        %v512 = vld [vmem:[#allocation2 + $0x8] sm:$0xff]
        %v513 = vld [vmem:[%s298] sm:$0x1]
        %v515 = vlaneseq
        %v516 = vshrl.u32 %v515, 7
        %v517 = vsub.s32 0, %v516
        %v518 = vrot.slane %v513, %v517
        %v520 = vadd.f32 %v511, %v518
        %v521 = vadd.f32 %v512, %v518
        %522 = vst.msk [vmem:[%s310] sm:$0xff] %vm505, %v520
        %523 = vst.msk [vmem:[%s310 + $0x8] sm:$0xff] %vm505, %v521
      $region40: #{_lambda_.15} parent=31 // pred_fallthru
        _
      %s524 = smul.u32 2, %s21
      %p525 = scmp.lt.s32.totalorder %s20, 3
      %s526 = scalar_select %p525, %s20, 3
      %p527 = scmp.lt.s32.totalorder %s524, 1
      %s528 = scalar_select %p527, %s524, 1
      %p529 = scmp.lt.s32.totalorder %s22, 0
      %s530 = scalar_select %p529, %s22, 0
      %s531 = sadd.s32 %s530, %s528
      %s532 = smul.addr %s526, 2
      %s533 = sadd.s32 %s531, %s532
      %s534 = smul.addr %s533, 8
      %s535 = scalar_lea.vmem %s3, %s534
      // Predicated region
      $region41: #{_lambda_.15} parent=31 // pred_check
        %p536 = pneg %p148
      $region42: #{_lambda_.15} parent=31 // pred_check_branch
        %538 = sbr.rel (%p536) target = $region44
      $region43: #{_lambda_.15} parent=31 // pred_region
        %s539 = smul.u32 2, %s21
      $region44: #{_lambda_.15} parent=31 // pred_fallthru
        _
    $region32: #{_lambda_.15} parent=5 // pred_fallthru
      _
    %p540 = scmp.le.s32.totalorder 2, %s9
    // Predicated region
    $region45: #{_lambda_.15} parent=5 // pred_check
      %p541 = pneg %p540
    $region46: #{_lambda_.15} parent=5 // pred_check_branch
      %543 = sbr.rel (%p541) target = $region48
    $region47: #{_lambda_.15} parent=5 // pred_region
      %s544 = ssub.s32 %s9, 2
      // Predicated region
      $region49: #{_lambda_.15} parent=47 // pred_check
        %p545 = pneg %p154
      $region50: #{_lambda_.15} parent=47 // pred_check_branch
        %547 = sbr.rel (%p545) target = $region52
      $region51: #{_lambda_.15} parent=47 // pred_region
        %s548 = smul.u32 2, %s25
        %p549 = scmp.lt.s32.totalorder %s24, 3
        %s550 = scalar_select %p549, %s24, 3
        %p551 = scmp.lt.s32.totalorder %s548, 1
        %s552 = scalar_select %p551, %s548, 1
        %p553 = scmp.lt.s32.totalorder %s26, 0
        %s554 = scalar_select %p553, %s26, 0
        %s555 = sadd.s32 %s554, %s552
        %s556 = smul.addr %s550, 2
        %s557 = sadd.s32 %s555, %s556
        %s558 = smul.addr %s557, 8
        %s559 = scalar_lea.vmem %s3, %s558
      $region52: #{_lambda_.15} parent=47 // pred_fallthru
        _
    $region48: #{_lambda_.15} parent=5 // pred_fallthru
      _
  $region6: #{_lambda_.15} parent=0 // loop_footer
    %s13 = sadd.s32 1, %s9
  $region7: #{_lambda_.15} parent=0 // loop_footer_branch
    %8 = sbr.rel target = $region3
  $region8: #{_lambda_.15} parent=0 // loop_exit
    _

// kernel: _lambda_.14
$region0: #{_lambda_.14}
  #allocation0 [shape = 'u32[]', space=smem, size = 0x4, offset = 0x4, fixed_abs, tag = 'smem constant byte address 0x4 - core index']
  #allocation1 [shape = 'u32[144,128]{1,0:T(1,128)}', space=vmem, size = 0x12000, scoped, tag = 'internal scratch']
  #allocation2 [shape = 'f32[16,64]{1,0:T(8,128)}', space=vmem, size = 0x2000, scoped, tag = 'scratch operand']
  %s0 = inlined_call_operand.vmem [shape: bf16[1,16,1024], index: 0, kind: input, shape index: {}]
  %s1 = inlined_call_operand.vmem [shape: bf16[1,1024,64], index: 1, kind: input, shape index: {}]
  %s2 = inlined_call_operand.vmem [shape: f32[1,64], index: 2, kind: input, shape index: {}]
  %s3 = inlined_call_operand.vmem [shape: f32[1,16,64], index: 3, kind: output, shape index: {}]
  %s4 = sld [smem:[#allocation0]]
  $region30: #{_lambda_.14} parent=0
    _
  %s6 = ssub.s32 1, %s4
  %s7 = scalar_select 0, %s6, %s4
  // Predicated region
  $region2: #{_lambda_.14} parent=0 // pred_check
    _
  $region3: #{_lambda_.14} parent=0 // pred_check_branch
    %9 = sbr.rel (0) target = $region5
  $region4: #{_lambda_.14} parent=0 // pred_region
    _
  $region5: #{_lambda_.14} parent=0 // pred_fallthru
    _
  // Predicated region
  $region6: #{_lambda_.14} parent=0 // pred_check
    _
  $region7: #{_lambda_.14} parent=0 // pred_check_branch
    %11 = sbr.rel (0) target = $region9
  $region8: #{_lambda_.14} parent=0 // pred_region
    _
  $region9: #{_lambda_.14} parent=0 // pred_fallthru
    _
  // Predicated region
  $region10: #{_lambda_.14} parent=0 // pred_check
    _
  $region11: #{_lambda_.14} parent=0 // pred_check_branch
    %13 = sbr.rel (0) target = $region13
  $region12: #{_lambda_.14} parent=0 // pred_region
    _
  $region13: #{_lambda_.14} parent=0 // pred_fallthru
    _
  %p15 = scmp.eq.s32.totalorder 0, 0
  // Predicated region
  $region14: #{_lambda_.14} parent=0 // pred_check
    %p16 = pneg %p15
  $region15: #{_lambda_.14} parent=0 // pred_check_branch
    %18 = sbr.rel (%p16) target = $region17
  $region16: #{_lambda_.14} parent=0 // pred_region
    %vm19 = vcmask 523264
    %20 = vst.msk [vmem:[#allocation2] sm:$0xff] %vm19, 0.0
    %21 = vst.msk [vmem:[#allocation2 + $0x8] sm:$0xff] %vm19, 0.0
  $region17: #{_lambda_.14} parent=0 // pred_fallthru
    _
  %v22 = vld [vmem:[#allocation2] sm:$0xff]
  %v23 = vld [vmem:[#allocation2 + $0x8] sm:$0xff]
  %v24 = vld [vmem:[%s0] sm:$0xff]
  %v25 = vld [vmem:[%s0 + $0x8] sm:$0xff]
  %v26 = vld [vmem:[%s0 + $0x10] sm:$0xff]
  %v27 = vld [vmem:[%s0 + $0x18] sm:$0xff]
  %v28 = vld [vmem:[%s0 + $0x20] sm:$0xff]
  %v29 = vld [vmem:[%s0 + $0x28] sm:$0xff]
  %v30 = vld [vmem:[%s0 + $0x30] sm:$0xff]
  %v31 = vld [vmem:[%s0 + $0x38] sm:$0xff]
  %v32 = vld [vmem:[%s1] sm:$0xf]
  %v33 = vld [vmem:[%s1 + $0x4] sm:$0xf]
  %v34 = vld [vmem:[%s1 + $0x8] sm:$0xf]
  %v35 = vld [vmem:[%s1 + $0xc] sm:$0xf]
  %v36 = vld [vmem:[%s1 + $0x10] sm:$0xf]
  %v37 = vld [vmem:[%s1 + $0x14] sm:$0xf]
  %v38 = vld [vmem:[%s1 + $0x18] sm:$0xf]
  %v39 = vld [vmem:[%s1 + $0x1c] sm:$0xf]
  %v40 = vld [vmem:[%s1 + $0x20] sm:$0xf]
  %v41 = vld [vmem:[%s1 + $0x24] sm:$0xf]
  %v42 = vld [vmem:[%s1 + $0x28] sm:$0xf]
  %v43 = vld [vmem:[%s1 + $0x2c] sm:$0xf]
  %v44 = vld [vmem:[%s1 + $0x30] sm:$0xf]
  %v45 = vld [vmem:[%s1 + $0x34] sm:$0xf]
  %v46 = vld [vmem:[%s1 + $0x38] sm:$0xf]
  %v47 = vld [vmem:[%s1 + $0x3c] sm:$0xf]
  %v48 = vld [vmem:[%s1 + $0x40] sm:$0xf]
  %v49 = vld [vmem:[%s1 + $0x44] sm:$0xf]
  %v50 = vld [vmem:[%s1 + $0x48] sm:$0xf]
  %v51 = vld [vmem:[%s1 + $0x4c] sm:$0xf]
  %v52 = vld [vmem:[%s1 + $0x50] sm:$0xf]
  %v53 = vld [vmem:[%s1 + $0x54] sm:$0xf]
  %v54 = vld [vmem:[%s1 + $0x58] sm:$0xf]
  %v55 = vld [vmem:[%s1 + $0x5c] sm:$0xf]
  %v56 = vld [vmem:[%s1 + $0x60] sm:$0xf]
  %v57 = vld [vmem:[%s1 + $0x64] sm:$0xf]
  %v58 = vld [vmem:[%s1 + $0x68] sm:$0xf]
  %v59 = vld [vmem:[%s1 + $0x6c] sm:$0xf]
  %v60 = vld [vmem:[%s1 + $0x70] sm:$0xf]
  %v61 = vld [vmem:[%s1 + $0x74] sm:$0xf]
  %v62 = vld [vmem:[%s1 + $0x78] sm:$0xf]
  %v63 = vld [vmem:[%s1 + $0x7c] sm:$0xf]
  %v64 = vld [vmem:[%s1 + $0x80] sm:$0xf]
  %v65 = vld [vmem:[%s1 + $0x84] sm:$0xf]
  %v66 = vld [vmem:[%s1 + $0x88] sm:$0xf]
  %v67 = vld [vmem:[%s1 + $0x8c] sm:$0xf]
  %v68 = vld [vmem:[%s1 + $0x90] sm:$0xf]
  %v69 = vld [vmem:[%s1 + $0x94] sm:$0xf]
  %v70 = vld [vmem:[%s1 + $0x98] sm:$0xf]
  %v71 = vld [vmem:[%s1 + $0x9c] sm:$0xf]
  %v72 = vld [vmem:[%s1 + $0xa0] sm:$0xf]
  %v73 = vld [vmem:[%s1 + $0xa4] sm:$0xf]
  %v74 = vld [vmem:[%s1 + $0xa8] sm:$0xf]
  %v75 = vld [vmem:[%s1 + $0xac] sm:$0xf]
  %v76 = vld [vmem:[%s1 + $0xb0] sm:$0xf]
  %v77 = vld [vmem:[%s1 + $0xb4] sm:$0xf]
  %v78 = vld [vmem:[%s1 + $0xb8] sm:$0xf]
  %v79 = vld [vmem:[%s1 + $0xbc] sm:$0xf]
  %v80 = vld [vmem:[%s1 + $0xc0] sm:$0xf]
  %v81 = vld [vmem:[%s1 + $0xc4] sm:$0xf]
  %v82 = vld [vmem:[%s1 + $0xc8] sm:$0xf]
  %v83 = vld [vmem:[%s1 + $0xcc] sm:$0xf]
  %v84 = vld [vmem:[%s1 + $0xd0] sm:$0xf]
  %v85 = vld [vmem:[%s1 + $0xd4] sm:$0xf]
  %v86 = vld [vmem:[%s1 + $0xd8] sm:$0xf]
  %v87 = vld [vmem:[%s1 + $0xdc] sm:$0xf]
  %v88 = vld [vmem:[%s1 + $0xe0] sm:$0xf]
  %v89 = vld [vmem:[%s1 + $0xe4] sm:$0xf]
  %v90 = vld [vmem:[%s1 + $0xe8] sm:$0xf]
  %v91 = vld [vmem:[%s1 + $0xec] sm:$0xf]
  %v92 = vld [vmem:[%s1 + $0xf0] sm:$0xf]
  %v93 = vld [vmem:[%s1 + $0xf4] sm:$0xf]
  %v94 = vld [vmem:[%s1 + $0xf8] sm:$0xf]
  %v95 = vld [vmem:[%s1 + $0xfc] sm:$0xf]
  %v96 = vld [vmem:[%s1 + $0x100] sm:$0xf]
  %v97 = vld [vmem:[%s1 + $0x104] sm:$0xf]
  %v98 = vld [vmem:[%s1 + $0x108] sm:$0xf]
  %v99 = vld [vmem:[%s1 + $0x10c] sm:$0xf]
  %v100 = vld [vmem:[%s1 + $0x110] sm:$0xf]
  %v101 = vld [vmem:[%s1 + $0x114] sm:$0xf]
  %v102 = vld [vmem:[%s1 + $0x118] sm:$0xf]
  %v103 = vld [vmem:[%s1 + $0x11c] sm:$0xf]
  %v104 = vld [vmem:[%s1 + $0x120] sm:$0xf]
  %v105 = vld [vmem:[%s1 + $0x124] sm:$0xf]
  %v106 = vld [vmem:[%s1 + $0x128] sm:$0xf]
  %v107 = vld [vmem:[%s1 + $0x12c] sm:$0xf]
  %v108 = vld [vmem:[%s1 + $0x130] sm:$0xf]
  %v109 = vld [vmem:[%s1 + $0x134] sm:$0xf]
  %v110 = vld [vmem:[%s1 + $0x138] sm:$0xf]
  %v111 = vld [vmem:[%s1 + $0x13c] sm:$0xf]
  %v112 = vld [vmem:[%s1 + $0x140] sm:$0xf]
  %v113 = vld [vmem:[%s1 + $0x144] sm:$0xf]
  %v114 = vld [vmem:[%s1 + $0x148] sm:$0xf]
  %v115 = vld [vmem:[%s1 + $0x14c] sm:$0xf]
  %v116 = vld [vmem:[%s1 + $0x150] sm:$0xf]
  %v117 = vld [vmem:[%s1 + $0x154] sm:$0xf]
  %v118 = vld [vmem:[%s1 + $0x158] sm:$0xf]
  %v119 = vld [vmem:[%s1 + $0x15c] sm:$0xf]
  %v120 = vld [vmem:[%s1 + $0x160] sm:$0xf]
  %v121 = vld [vmem:[%s1 + $0x164] sm:$0xf]
  %v122 = vld [vmem:[%s1 + $0x168] sm:$0xf]
  %v123 = vld [vmem:[%s1 + $0x16c] sm:$0xf]
  %v124 = vld [vmem:[%s1 + $0x170] sm:$0xf]
  %v125 = vld [vmem:[%s1 + $0x174] sm:$0xf]
  %v126 = vld [vmem:[%s1 + $0x178] sm:$0xf]
  %v127 = vld [vmem:[%s1 + $0x17c] sm:$0xf]
  %v128 = vld [vmem:[%s1 + $0x180] sm:$0xf]
  %v129 = vld [vmem:[%s1 + $0x184] sm:$0xf]
  %v130 = vld [vmem:[%s1 + $0x188] sm:$0xf]
  %v131 = vld [vmem:[%s1 + $0x18c] sm:$0xf]
  %v132 = vld [vmem:[%s1 + $0x190] sm:$0xf]
  %v133 = vld [vmem:[%s1 + $0x194] sm:$0xf]
  %v134 = vld [vmem:[%s1 + $0x198] sm:$0xf]
  %v135 = vld [vmem:[%s1 + $0x19c] sm:$0xf]
  %v136 = vld [vmem:[%s1 + $0x1a0] sm:$0xf]
  %v137 = vld [vmem:[%s1 + $0x1a4] sm:$0xf]
  %v138 = vld [vmem:[%s1 + $0x1a8] sm:$0xf]
  %v139 = vld [vmem:[%s1 + $0x1ac] sm:$0xf]
  %v140 = vld [vmem:[%s1 + $0x1b0] sm:$0xf]
  %v141 = vld [vmem:[%s1 + $0x1b4] sm:$0xf]
  %v142 = vld [vmem:[%s1 + $0x1b8] sm:$0xf]
  %v143 = vld [vmem:[%s1 + $0x1bc] sm:$0xf]
  %v144 = vld [vmem:[%s1 + $0x1c0] sm:$0xf]
  %v145 = vld [vmem:[%s1 + $0x1c4] sm:$0xf]
  %v146 = vld [vmem:[%s1 + $0x1c8] sm:$0xf]
  %v147 = vld [vmem:[%s1 + $0x1cc] sm:$0xf]
  %v148 = vld [vmem:[%s1 + $0x1d0] sm:$0xf]
  %v149 = vld [vmem:[%s1 + $0x1d4] sm:$0xf]
  %v150 = vld [vmem:[%s1 + $0x1d8] sm:$0xf]
  %v151 = vld [vmem:[%s1 + $0x1dc] sm:$0xf]
  %v152 = vld [vmem:[%s1 + $0x1e0] sm:$0xf]
  %v153 = vld [vmem:[%s1 + $0x1e4] sm:$0xf]
  %v154 = vld [vmem:[%s1 + $0x1e8] sm:$0xf]
  %v155 = vld [vmem:[%s1 + $0x1ec] sm:$0xf]
  %v156 = vld [vmem:[%s1 + $0x1f0] sm:$0xf]
  %v157 = vld [vmem:[%s1 + $0x1f4] sm:$0xf]
  %v158 = vld [vmem:[%s1 + $0x1f8] sm:$0xf]
  %v159 = vld [vmem:[%s1 + $0x1fc] sm:$0xf]
  %v168 = vunpack.c.l.b16 %v24
  %v169 = vunpack.c.h.b16 %v24
  %v170 = vunpack.c.l.b16 %v25
  %v171 = vunpack.c.h.b16 %v25
  %v172 = vunpack.c.l.b16 %v26
  %v173 = vunpack.c.h.b16 %v26
  %v174 = vunpack.c.l.b16 %v27
  %v175 = vunpack.c.h.b16 %v27
  %v176 = vunpack.c.l.b16 %v28
  %v177 = vunpack.c.h.b16 %v28
  %v178 = vunpack.c.l.b16 %v29
  %v179 = vunpack.c.h.b16 %v29
  %v180 = vunpack.c.l.b16 %v30
  %v181 = vunpack.c.h.b16 %v30
  %v182 = vunpack.c.l.b16 %v31
  %v183 = vunpack.c.h.b16 %v31
  %v184 = vpack.c.b16 %v176, %v168
  %v185 = vpack.c.b16 %v177, %v169
  %v186 = vpack.c.b16 %v178, %v170
  %v187 = vpack.c.b16 %v179, %v171
  %v188 = vpack.c.b16 %v180, %v172
  %v189 = vpack.c.b16 %v181, %v173
  %v190 = vpack.c.b16 %v182, %v174
  %v191 = vpack.c.b16 %v183, %v175
  %v328 = vunpack.c.l.b16 %v32
  %v329 = vunpack.c.l.b16 %v33
  %v330 = vunpack.c.l.b16 %v34
  %v331 = vunpack.c.l.b16 %v35
  %v332 = vunpack.c.l.b16 %v36
  %v333 = vunpack.c.l.b16 %v37
  %v334 = vunpack.c.l.b16 %v38
  %v335 = vunpack.c.l.b16 %v39
  %v336 = vunpack.c.l.b16 %v40
  %v337 = vunpack.c.l.b16 %v41
  %v338 = vunpack.c.l.b16 %v42
  %v339 = vunpack.c.l.b16 %v43
  %v340 = vunpack.c.l.b16 %v44
  %v341 = vunpack.c.l.b16 %v45
  %v342 = vunpack.c.l.b16 %v46
  %v343 = vunpack.c.l.b16 %v47
  %v344 = vunpack.c.l.b16 %v48
  %v345 = vunpack.c.l.b16 %v49
  %v346 = vunpack.c.l.b16 %v50
  %v347 = vunpack.c.l.b16 %v51
  %v348 = vunpack.c.l.b16 %v52
  %v349 = vunpack.c.l.b16 %v53
  %v350 = vunpack.c.l.b16 %v54
  %v351 = vunpack.c.l.b16 %v55
  %v352 = vunpack.c.l.b16 %v56
  %v353 = vunpack.c.l.b16 %v57
  %v354 = vunpack.c.l.b16 %v58
  %v355 = vunpack.c.l.b16 %v59
  %v356 = vunpack.c.l.b16 %v60
  %v357 = vunpack.c.l.b16 %v61
  %v358 = vunpack.c.l.b16 %v62
  %v359 = vunpack.c.l.b16 %v63
  %v360 = vunpack.c.l.b16 %v64
  %v361 = vunpack.c.l.b16 %v65
  %v362 = vunpack.c.l.b16 %v66
  %v363 = vunpack.c.l.b16 %v67
  %v364 = vunpack.c.l.b16 %v68
  %v365 = vunpack.c.l.b16 %v69
  %v366 = vunpack.c.l.b16 %v70
  %v367 = vunpack.c.l.b16 %v71
  %v368 = vunpack.c.l.b16 %v72
  %v369 = vunpack.c.l.b16 %v73
  %v370 = vunpack.c.l.b16 %v74
  %v371 = vunpack.c.l.b16 %v75
  %v372 = vunpack.c.l.b16 %v76
  %v373 = vunpack.c.l.b16 %v77
  %v374 = vunpack.c.l.b16 %v78
  %v375 = vunpack.c.l.b16 %v79
  %v376 = vunpack.c.l.b16 %v80
  %v377 = vunpack.c.l.b16 %v81
  %v378 = vunpack.c.l.b16 %v82
  %v379 = vunpack.c.l.b16 %v83
  %v380 = vunpack.c.l.b16 %v84
  %v381 = vunpack.c.l.b16 %v85
  %v382 = vunpack.c.l.b16 %v86
  %v383 = vunpack.c.l.b16 %v87
  %v384 = vunpack.c.l.b16 %v88
  %v385 = vunpack.c.l.b16 %v89
  %v386 = vunpack.c.l.b16 %v90
  %v387 = vunpack.c.l.b16 %v91
  %v388 = vunpack.c.l.b16 %v92
  %v389 = vunpack.c.l.b16 %v93
  %v390 = vunpack.c.l.b16 %v94
  %v391 = vunpack.c.l.b16 %v95
  %v392 = vunpack.c.l.b16 %v96
  %v393 = vunpack.c.l.b16 %v97
  %v394 = vunpack.c.l.b16 %v98
  %v395 = vunpack.c.l.b16 %v99
  %v396 = vunpack.c.l.b16 %v100
  %v397 = vunpack.c.l.b16 %v101
  %v398 = vunpack.c.l.b16 %v102
  %v399 = vunpack.c.l.b16 %v103
  %v400 = vunpack.c.l.b16 %v104
  %v401 = vunpack.c.l.b16 %v105
  %v402 = vunpack.c.l.b16 %v106
  %v403 = vunpack.c.l.b16 %v107
  %v404 = vunpack.c.l.b16 %v108
  %v405 = vunpack.c.l.b16 %v109
  %v406 = vunpack.c.l.b16 %v110
  %v407 = vunpack.c.l.b16 %v111
  %v408 = vunpack.c.l.b16 %v112
  %v409 = vunpack.c.l.b16 %v113
  %v410 = vunpack.c.l.b16 %v114
  %v411 = vunpack.c.l.b16 %v115
  %v412 = vunpack.c.l.b16 %v116
  %v413 = vunpack.c.l.b16 %v117
  %v414 = vunpack.c.l.b16 %v118
  %v415 = vunpack.c.l.b16 %v119
  %v416 = vunpack.c.l.b16 %v120
  %v417 = vunpack.c.l.b16 %v121
  %v418 = vunpack.c.l.b16 %v122
  %v419 = vunpack.c.l.b16 %v123
  %v420 = vunpack.c.l.b16 %v124
  %v421 = vunpack.c.l.b16 %v125
  %v422 = vunpack.c.l.b16 %v126
  %v423 = vunpack.c.l.b16 %v127
  %v424 = vunpack.c.l.b16 %v128
  %v425 = vunpack.c.l.b16 %v129
  %v426 = vunpack.c.l.b16 %v130
  %v427 = vunpack.c.l.b16 %v131
  %v428 = vunpack.c.l.b16 %v132
  %v429 = vunpack.c.l.b16 %v133
  %v430 = vunpack.c.l.b16 %v134
  %v431 = vunpack.c.l.b16 %v135
  %v432 = vunpack.c.l.b16 %v136
  %v433 = vunpack.c.l.b16 %v137
  %v434 = vunpack.c.l.b16 %v138
  %v435 = vunpack.c.l.b16 %v139
  %v436 = vunpack.c.l.b16 %v140
  %v437 = vunpack.c.l.b16 %v141
  %v438 = vunpack.c.l.b16 %v142
  %v439 = vunpack.c.l.b16 %v143
  %v440 = vunpack.c.l.b16 %v144
  %v441 = vunpack.c.l.b16 %v145
  %v442 = vunpack.c.l.b16 %v146
  %v443 = vunpack.c.l.b16 %v147
  %v444 = vunpack.c.l.b16 %v148
  %v445 = vunpack.c.l.b16 %v149
  %v446 = vunpack.c.l.b16 %v150
  %v447 = vunpack.c.l.b16 %v151
  %v448 = vunpack.c.l.b16 %v152
  %v449 = vunpack.c.l.b16 %v153
  %v450 = vunpack.c.l.b16 %v154
  %v451 = vunpack.c.l.b16 %v155
  %v452 = vunpack.c.l.b16 %v156
  %v453 = vunpack.c.l.b16 %v157
  %v454 = vunpack.c.l.b16 %v158
  %v455 = vunpack.c.l.b16 %v159
  %v456 = vpack.c.b16 %v329, %v328
  %v457 = vpack.c.b16 %v331, %v330
  %v458 = vpack.c.b16 %v333, %v332
  %v459 = vpack.c.b16 %v335, %v334
  %v460 = vpack.c.b16 %v337, %v336
  %v461 = vpack.c.b16 %v339, %v338
  %v462 = vpack.c.b16 %v341, %v340
  %v463 = vpack.c.b16 %v343, %v342
  %v464 = vpack.c.b16 %v345, %v344
  %v465 = vpack.c.b16 %v347, %v346
  %v466 = vpack.c.b16 %v349, %v348
  %v467 = vpack.c.b16 %v351, %v350
  %v468 = vpack.c.b16 %v353, %v352
  %v469 = vpack.c.b16 %v355, %v354
  %v470 = vpack.c.b16 %v357, %v356
  %v471 = vpack.c.b16 %v359, %v358
  %v472 = vpack.c.b16 %v361, %v360
  %v473 = vpack.c.b16 %v363, %v362
  %v474 = vpack.c.b16 %v365, %v364
  %v475 = vpack.c.b16 %v367, %v366
  %v476 = vpack.c.b16 %v369, %v368
  %v477 = vpack.c.b16 %v371, %v370
  %v478 = vpack.c.b16 %v373, %v372
  %v479 = vpack.c.b16 %v375, %v374
  %v480 = vpack.c.b16 %v377, %v376
  %v481 = vpack.c.b16 %v379, %v378
  %v482 = vpack.c.b16 %v381, %v380
  %v483 = vpack.c.b16 %v383, %v382
  %v484 = vpack.c.b16 %v385, %v384
  %v485 = vpack.c.b16 %v387, %v386
  %v486 = vpack.c.b16 %v389, %v388
  %v487 = vpack.c.b16 %v391, %v390
  %v488 = vpack.c.b16 %v393, %v392
  %v489 = vpack.c.b16 %v395, %v394
  %v490 = vpack.c.b16 %v397, %v396
  %v491 = vpack.c.b16 %v399, %v398
  %v492 = vpack.c.b16 %v401, %v400
  %v493 = vpack.c.b16 %v403, %v402
  %v494 = vpack.c.b16 %v405, %v404
  %v495 = vpack.c.b16 %v407, %v406
  %v496 = vpack.c.b16 %v409, %v408
  %v497 = vpack.c.b16 %v411, %v410
  %v498 = vpack.c.b16 %v413, %v412
  %v499 = vpack.c.b16 %v415, %v414
  %v500 = vpack.c.b16 %v417, %v416
  %v501 = vpack.c.b16 %v419, %v418
  %v502 = vpack.c.b16 %v421, %v420
  %v503 = vpack.c.b16 %v423, %v422
  %v504 = vpack.c.b16 %v425, %v424
  %v505 = vpack.c.b16 %v427, %v426
  %v506 = vpack.c.b16 %v429, %v428
  %v507 = vpack.c.b16 %v431, %v430
  %v508 = vpack.c.b16 %v433, %v432
  %v509 = vpack.c.b16 %v435, %v434
  %v510 = vpack.c.b16 %v437, %v436
  %v511 = vpack.c.b16 %v439, %v438
  %v512 = vpack.c.b16 %v441, %v440
  %v513 = vpack.c.b16 %v443, %v442
  %v514 = vpack.c.b16 %v445, %v444
  %v515 = vpack.c.b16 %v447, %v446
  %v516 = vpack.c.b16 %v449, %v448
  %v517 = vpack.c.b16 %v451, %v450
  %v518 = vpack.c.b16 %v453, %v452
  %v519 = vpack.c.b16 %v455, %v454
  %584 = vmatprep.subr.bf16.mxu0 0
  %585 = vmatpush1.bf16.msra.mxu0 %v456
  %586 = vmatprep.subr.bf16.mxu0 0
  %587 = vmatpush1.bf16.msra.mxu0 %v457
  %588 = vmatprep.subr.bf16.mxu0 0
  %589 = vmatpush1.bf16.msra.mxu0 %v458
  %590 = vmatprep.subr.bf16.mxu0 0
  %591 = vmatpush1.bf16.msra.mxu0 %v459
  %592 = vmatprep.subr.bf16.mxu0 0
  %593 = vmatpush1.bf16.msra.mxu0 %v460
  %594 = vmatprep.subr.bf16.mxu0 0
  %595 = vmatpush1.bf16.msra.mxu0 %v461
  %596 = vmatprep.subr.bf16.mxu0 0
  %597 = vmatpush1.bf16.msra.mxu0 %v462
  %598 = vmatprep.subr.bf16.mxu0 0
  %599 = vmatpush1.bf16.msra.mxu0 %v463
  %600 = vmatprep.subr.bf16.mxu0 0
  %601 = vmatpush1.bf16.msra.mxu0 %v464
  %602 = vmatprep.subr.bf16.mxu0 0
  %603 = vmatpush1.bf16.msra.mxu0 %v465
  %604 = vmatprep.subr.bf16.mxu0 0
  %605 = vmatpush1.bf16.msra.mxu0 %v466
  %606 = vmatprep.subr.bf16.mxu0 0
  %607 = vmatpush1.bf16.msra.mxu0 %v467
  %608 = vmatprep.subr.bf16.mxu0 0
  %609 = vmatpush1.bf16.msra.mxu0 %v468
  %610 = vmatprep.subr.bf16.mxu0 0
  %611 = vmatpush1.bf16.msra.mxu0 %v469
  %612 = vmatprep.subr.bf16.mxu0 0
  %613 = vmatpush1.bf16.msra.mxu0 %v470
  %614 = vmatprep.subr.bf16.mxu0 0
  %615 = vmatpush1.bf16.msra.mxu0 %v471
  %616 = vmatprep.mubr.bf16.mxu0 %v185
  %617 = vmatmul.mubr.bf16.gmra.mrb[0].mxu0 %v184
  %v618 = vpop.f32.mrb[0].mxu0
  %v619 = vadd.f32 0.0, %v618
  %v620 = vpop.f32.mrb[0].mxu0
  %v621 = vpop.f32.mrb[0].mxu0
  %v622 = vadd.f32 0.0, %v621
  %v623 = vpop.f32.mrb[0].mxu0
  %624 = vdwg.mxu0
  %625 = vmatprep.subr.bf16.mxu0 0
  %626 = vmatpush1.bf16.msra.mxu0 %v472
  %627 = vmatprep.subr.bf16.mxu0 0
  %628 = vmatpush1.bf16.msra.mxu0 %v473
  %629 = vmatprep.subr.bf16.mxu0 0
  %630 = vmatpush1.bf16.msra.mxu0 %v474
  %631 = vmatprep.subr.bf16.mxu0 0
  %632 = vmatpush1.bf16.msra.mxu0 %v475
  %633 = vmatprep.subr.bf16.mxu0 0
  %634 = vmatpush1.bf16.msra.mxu0 %v476
  %635 = vmatprep.subr.bf16.mxu0 0
  %636 = vmatpush1.bf16.msra.mxu0 %v477
  %637 = vmatprep.subr.bf16.mxu0 0
  %638 = vmatpush1.bf16.msra.mxu0 %v478
  %639 = vmatprep.subr.bf16.mxu0 0
  %640 = vmatpush1.bf16.msra.mxu0 %v479
  %641 = vmatprep.subr.bf16.mxu0 0
  %642 = vmatpush1.bf16.msra.mxu0 %v480
  %643 = vmatprep.subr.bf16.mxu0 0
  %644 = vmatpush1.bf16.msra.mxu0 %v481
  %645 = vmatprep.subr.bf16.mxu0 0
  %646 = vmatpush1.bf16.msra.mxu0 %v482
  %647 = vmatprep.subr.bf16.mxu0 0
  %648 = vmatpush1.bf16.msra.mxu0 %v483
  %649 = vmatprep.subr.bf16.mxu0 0
  %650 = vmatpush1.bf16.msra.mxu0 %v484
  %651 = vmatprep.subr.bf16.mxu0 0
  %652 = vmatpush1.bf16.msra.mxu0 %v485
  %653 = vmatprep.subr.bf16.mxu0 0
  %654 = vmatpush1.bf16.msra.mxu0 %v486
  %655 = vmatprep.subr.bf16.mxu0 0
  %656 = vmatpush1.bf16.msra.mxu0 %v487
  %657 = vmatprep.mubr.bf16.mxu0 %v187
  %658 = vmatmul.mubr.bf16.gmra.mrb[0].mxu0 %v186
  %v659 = vpop.f32.mrb[0].mxu0
  %v660 = vadd.f32 %v619, %v659
  %v661 = vpop.f32.mrb[0].mxu0
  %v662 = vpop.f32.mrb[0].mxu0
  %v663 = vadd.f32 %v622, %v662
  %v664 = vpop.f32.mrb[0].mxu0
  %665 = vdwg.mxu0
  %666 = vmatprep.subr.bf16.mxu0 0
  %667 = vmatpush1.bf16.msra.mxu0 %v488
  %668 = vmatprep.subr.bf16.mxu0 0
  %669 = vmatpush1.bf16.msra.mxu0 %v489
  %670 = vmatprep.subr.bf16.mxu0 0
  %671 = vmatpush1.bf16.msra.mxu0 %v490
  %672 = vmatprep.subr.bf16.mxu0 0
  %673 = vmatpush1.bf16.msra.mxu0 %v491
  %674 = vmatprep.subr.bf16.mxu0 0
  %675 = vmatpush1.bf16.msra.mxu0 %v492
  %676 = vmatprep.subr.bf16.mxu0 0
  %677 = vmatpush1.bf16.msra.mxu0 %v493
  %678 = vmatprep.subr.bf16.mxu0 0
  %679 = vmatpush1.bf16.msra.mxu0 %v494
  %680 = vmatprep.subr.bf16.mxu0 0
  %681 = vmatpush1.bf16.msra.mxu0 %v495
  %682 = vmatprep.subr.bf16.mxu0 0
  %683 = vmatpush1.bf16.msra.mxu0 %v496
  %684 = vmatprep.subr.bf16.mxu0 0
  %685 = vmatpush1.bf16.msra.mxu0 %v497
  %686 = vmatprep.subr.bf16.mxu0 0
  %687 = vmatpush1.bf16.msra.mxu0 %v498
  %688 = vmatprep.subr.bf16.mxu0 0
  %689 = vmatpush1.bf16.msra.mxu0 %v499
  %690 = vmatprep.subr.bf16.mxu0 0
  %691 = vmatpush1.bf16.msra.mxu0 %v500
  %692 = vmatprep.subr.bf16.mxu0 0
  %693 = vmatpush1.bf16.msra.mxu0 %v501
  %694 = vmatprep.subr.bf16.mxu0 0
  %695 = vmatpush1.bf16.msra.mxu0 %v502
  %696 = vmatprep.subr.bf16.mxu0 0
  %697 = vmatpush1.bf16.msra.mxu0 %v503
  %698 = vmatprep.mubr.bf16.mxu0 %v189
  %699 = vmatmul.mubr.bf16.gmra.mrb[0].mxu0 %v188
  %v700 = vpop.f32.mrb[0].mxu0
  %v701 = vadd.f32 %v660, %v700
  %v702 = vpop.f32.mrb[0].mxu0
  %v703 = vpop.f32.mrb[0].mxu0
  %v704 = vadd.f32 %v663, %v703
  %v705 = vpop.f32.mrb[0].mxu0
  %706 = vdwg.mxu0
  %707 = vmatprep.subr.bf16.mxu0 0
  %708 = vmatpush1.bf16.msra.mxu0 %v504
  %709 = vmatprep.subr.bf16.mxu0 0
  %710 = vmatpush1.bf16.msra.mxu0 %v505
  %711 = vmatprep.subr.bf16.mxu0 0
  %712 = vmatpush1.bf16.msra.mxu0 %v506
  %713 = vmatprep.subr.bf16.mxu0 0
  %714 = vmatpush1.bf16.msra.mxu0 %v507
  %715 = vmatprep.subr.bf16.mxu0 0
  %716 = vmatpush1.bf16.msra.mxu0 %v508
  %717 = vmatprep.subr.bf16.mxu0 0
  %718 = vmatpush1.bf16.msra.mxu0 %v509
  %719 = vmatprep.subr.bf16.mxu0 0
  %720 = vmatpush1.bf16.msra.mxu0 %v510
  %721 = vmatprep.subr.bf16.mxu0 0
  %722 = vmatpush1.bf16.msra.mxu0 %v511
  %723 = vmatprep.subr.bf16.mxu0 0
  %724 = vmatpush1.bf16.msra.mxu0 %v512
  %725 = vmatprep.subr.bf16.mxu0 0
  %726 = vmatpush1.bf16.msra.mxu0 %v513
  %727 = vmatprep.subr.bf16.mxu0 0
  %728 = vmatpush1.bf16.msra.mxu0 %v514
  %729 = vmatprep.subr.bf16.mxu0 0
  %730 = vmatpush1.bf16.msra.mxu0 %v515
  %731 = vmatprep.subr.bf16.mxu0 0
  %732 = vmatpush1.bf16.msra.mxu0 %v516
  %733 = vmatprep.subr.bf16.mxu0 0
  %734 = vmatpush1.bf16.msra.mxu0 %v517
  %735 = vmatprep.subr.bf16.mxu0 0
  %736 = vmatpush1.bf16.msra.mxu0 %v518
  %737 = vmatprep.subr.bf16.mxu0 0
  %738 = vmatpush1.bf16.msra.mxu0 %v519
  %739 = vmatprep.mubr.bf16.mxu0 %v191
  %740 = vmatmul.mubr.bf16.gmra.mrb[0].mxu0 %v190
  %v741 = vpop.f32.mrb[0].mxu0
  %v742 = vadd.f32 %v701, %v741
  %v743 = vpop.f32.mrb[0].mxu0
  %v744 = vpop.f32.mrb[0].mxu0
  %v745 = vadd.f32 %v704, %v744
  %v746 = vpop.f32.mrb[0].mxu0
  %747 = vdwg.mxu0
  %v748 = vadd.f32 %v22, %v742
  %v749 = vadd.f32 %v23, %v745
  %vm750 = vcmask 523264
  %751 = vst.msk [vmem:[#allocation2] sm:$0xff] %vm750, %v748
  %752 = vst.msk [vmem:[#allocation2 + $0x8] sm:$0xff] %vm750, %v749
  // Predicated region
  $region18: #{_lambda_.14} parent=0 // pred_check
    %p753 = pneg %p15
  $region19: #{_lambda_.14} parent=0 // pred_check_branch
    %755 = sbr.rel (%p753) target = $region21
  $region20: #{_lambda_.14} parent=0 // pred_region
    %v756 = vld [vmem:[#allocation2] sm:$0xff]
    %v757 = vld [vmem:[#allocation2 + $0x8] sm:$0xff]
    %v758 = vld [vmem:[%s2] sm:$0x1]
    %v760 = vlaneseq
    %v761 = vshrl.u32 %v760, 7
    %v762 = vsub.s32 0, %v761
    %v763 = vrot.slane %v758, %v762
    %v765 = vadd.f32 %v756, %v763
    %v766 = vadd.f32 %v757, %v763
    %v767 = vmax.f32 %v765, 0.0
    %v768 = vmax.f32 %v766, 0.0
    %769 = vst.msk [vmem:[%s3] sm:$0xff] %vm750, %v767
    %770 = vst.msk [vmem:[%s3 + $0x8] sm:$0xff] %vm750, %v768
  $region21: #{_lambda_.14} parent=0 // pred_fallthru
    _
  // Predicated region
  $region22: #{_lambda_.14} parent=0 // pred_check
    _
  $region23: #{_lambda_.14} parent=0 // pred_check_branch
    %772 = sbr.rel (0) target = $region25
  $region24: #{_lambda_.14} parent=0 // pred_region
    _
  $region25: #{_lambda_.14} parent=0 // pred_fallthru
    _
  // Predicated region
  $region26: #{_lambda_.14} parent=0 // pred_check
    _
  $region27: #{_lambda_.14} parent=0 // pred_check_branch
    %774 = sbr.rel (0) target = $region29
  $region28: #{_lambda_.14} parent=0 // pred_region
    _
  $region29: #{_lambda_.14} parent=0 // pred_fallthru
    _

// kernel: _lambda_.16
$region0: #{_lambda_.16}
  #allocation0 [shape = 'u32[]', space=smem, size = 0x4, offset = 0x4, fixed_abs, tag = 'smem constant byte address 0x4 - core index']
  #allocation1 [shape = 'u32[144,128]{1,0:T(1,128)}', space=vmem, size = 0x12000, scoped, tag = 'internal scratch']
  #allocation2 [shape = 'f32[16,32]{1,0:T(8,128)}', space=vmem, size = 0x2000, scoped, tag = 'scratch operand']
  %s0 = inlined_call_operand.vmem [shape: bf16[4,16,512], index: 0, kind: input, shape index: {}]
  %s1 = inlined_call_operand.vmem [shape: bf16[4,512,32], index: 1, kind: input, shape index: {}]
  %s2 = inlined_call_operand.vmem [shape: f32[1,32], index: 2, kind: input, shape index: {}]
  %s3 = inlined_call_operand.vmem [shape: f32[4,16,32], index: 3, kind: output, shape index: {}]
  %s4 = sld [smem:[#allocation0]]
  $region53: #{_lambda_.16} parent=0
    _
  %s6 = ssub.s32 1, %s4
  %s7 = scalar_select 0, %s6, %s4
  loop: start=0, step=1, limit=6
  $region2: #{_lambda_.16} parent=0 // loop_pre_header
    _
  $region3: #{_lambda_.16} parent=0 // loop_header
    %s9 = sphi 0, %s13
    %p10 = scmp.ge.s32.totalorder %s9, 6
    %s16 = sphi 0, %s42
    %s17 = sphi 0, %s38
    %s18 = sphi 0, %s34
    %s19 = sphi 0, %s30
    %s20 = sphi 0, %s16
    %s21 = sphi 0, %s17
    %s22 = sphi 0, %s18
    %s23 = sphi 0, %s19
    %s24 = sphi 0, %s20
    %s25 = sphi 0, %s21
    %s26 = sphi 0, %s22
    %s27 = sphi 0, %s23
    %s49 = sphi 0, %s51
    %s52 = sphi 0, %s49
    %s53 = sphi 0, %s52
    %s69 = sphi 0, %s53
    %s79 = sphi 0, %s81
    %s82 = sphi 0, %s79
    %s83 = sphi 0, %s82
    %s99 = sphi 0, %s83
    %s105 = sphi 0, %s107
    %s108 = sphi 0, %s105
    %s109 = sphi 0, %s108
    %s125 = sphi 0, %s109
    %s135 = sphi 0, %s137
    %s138 = sphi 0, %s135
    %s139 = sphi 0, %s138
    %s155 = sphi 0, %s139
  $region4: #{_lambda_.16} parent=0 // loop_header_branch
    %12 = sbr.rel (%p10) target = $region8
  $region5: #{_lambda_.16} parent=0 // loop_body
    %s14 = ssub.s32 %s9, 1
    %s15 = ssub.s32 %s9, 2
    %s28 = sadd.s32 1, %s19
    %p29 = scmp.ge.s32.totalorder %s28, 1
    %s30 = scalar_select %p29, 0, %s28
    %s31 = sadd.s32 1, %s18
    %s32 = scalar_select %p29, %s31, %s18
    %p33 = scmp.ge.s32.totalorder %s32, 1
    %s34 = scalar_select %p33, 0, %s32
    %s35 = sadd.s32 1, %s17
    %s36 = scalar_select %p33, %s35, %s17
    %p37 = scmp.ge.s32.totalorder %s36, 1
    %s38 = scalar_select %p37, 0, %s36
    %s39 = sadd.s32 1, %s16
    %s40 = scalar_select %p37, %s39, %s16
    %p41 = scmp.ge.s32.totalorder %s40, 4
    %s42 = scalar_select %p41, 0, %s40
    %s43 = ssub.s32 %s16, %s42
    %s44 = ssub.s32 %s17, %s38
    %s45 = sor.u32 %s43, %s44
    %s46 = ssub.s32 %s19, %s30
    %s47 = sor.u32 %s45, %s46
    %p48 = scmp.eq.s32.totalorder %s47, 0
    %s50 = sadd.s32 %s49, 1
    %s51 = scalar_select %p48, %s49, %s50
    %p54 = pneg %p48
    %p55 = scmp.eq.s32.totalorder %s9, 3
    %p56 = por %p54, %p55
    %p57 = scmp.ne.s32.totalorder %s49, %s52
    %p58 = scmp.eq.s32.totalorder %s9, 0
    %p59 = por %p57, %p58
    %p60 = scmp.ne.s32.totalorder %s49, %s52
    %p61 = scmp.eq.s32.totalorder %s14, 3
    %p62 = por %p60, %p61
    %p63 = scmp.ne.s32.totalorder %s52, %s53
    %p64 = scmp.eq.s32.totalorder %s14, 0
    %p65 = por %p63, %p64
    %p66 = scmp.ne.s32.totalorder %s52, %s53
    %p67 = scmp.eq.s32.totalorder %s15, 3
    %p68 = por %p66, %p67
    %p70 = scmp.ne.s32.totalorder %s53, %s69
    %p71 = scmp.eq.s32.totalorder %s15, 0
    %p72 = por %p70, %p71
    %s73 = ssub.s32 %s16, %s42
    %s74 = ssub.s32 %s19, %s30
    %s75 = sor.u32 %s73, %s74
    %s76 = ssub.s32 %s18, %s34
    %s77 = sor.u32 %s75, %s76
    %p78 = scmp.eq.s32.totalorder %s77, 0
    %s80 = sadd.s32 %s79, 1
    %s81 = scalar_select %p78, %s79, %s80
    %p84 = pneg %p78
    %p85 = scmp.eq.s32.totalorder %s9, 3
    %p86 = por %p84, %p85
    %p87 = scmp.ne.s32.totalorder %s79, %s82
    %p88 = scmp.eq.s32.totalorder %s9, 0
    %p89 = por %p87, %p88
    %p90 = scmp.ne.s32.totalorder %s79, %s82
    %p91 = scmp.eq.s32.totalorder %s14, 3
    %p92 = por %p90, %p91
    %p93 = scmp.ne.s32.totalorder %s82, %s83
    %p94 = scmp.eq.s32.totalorder %s14, 0
    %p95 = por %p93, %p94
    %p96 = scmp.ne.s32.totalorder %s82, %s83
    %p97 = scmp.eq.s32.totalorder %s15, 3
    %p98 = por %p96, %p97
    %p100 = scmp.ne.s32.totalorder %s83, %s99
    %p101 = scmp.eq.s32.totalorder %s15, 0
    %p102 = por %p100, %p101
    %s103 = ssub.s32 %s18, %s34
    %p104 = scmp.eq.s32.totalorder %s103, 0
    %s106 = sadd.s32 %s105, 1
    %s107 = scalar_select %p104, %s105, %s106
    %p110 = pneg %p104
    %p111 = scmp.eq.s32.totalorder %s9, 3
    %p112 = por %p110, %p111
    %p113 = scmp.ne.s32.totalorder %s105, %s108
    %p114 = scmp.eq.s32.totalorder %s9, 0
    %p115 = por %p113, %p114
    %p116 = scmp.ne.s32.totalorder %s105, %s108
    %p117 = scmp.eq.s32.totalorder %s14, 3
    %p118 = por %p116, %p117
    %p119 = scmp.ne.s32.totalorder %s108, %s109
    %p120 = scmp.eq.s32.totalorder %s14, 0
    %p121 = por %p119, %p120
    %p122 = scmp.ne.s32.totalorder %s108, %s109
    %p123 = scmp.eq.s32.totalorder %s15, 3
    %p124 = por %p122, %p123
    %p126 = scmp.ne.s32.totalorder %s109, %s125
    %p127 = scmp.eq.s32.totalorder %s15, 0
    %p128 = por %p126, %p127
    %s129 = ssub.s32 %s16, %s42
    %s130 = ssub.s32 %s17, %s38
    %s131 = sor.u32 %s129, %s130
    %s132 = ssub.s32 %s18, %s34
    %s133 = sor.u32 %s131, %s132
    %p134 = scmp.eq.s32.totalorder %s133, 0
    %s136 = sadd.s32 %s135, 1
    %s137 = scalar_select %p134, %s135, %s136
    %p140 = pneg %p134
    %p141 = scmp.eq.s32.totalorder %s9, 3
    %p142 = por %p140, %p141
    %p143 = scmp.ne.s32.totalorder %s135, %s138
    %p144 = scmp.eq.s32.totalorder %s9, 0
    %p145 = por %p143, %p144
    %p146 = scmp.ne.s32.totalorder %s135, %s138
    %p147 = scmp.eq.s32.totalorder %s14, 3
    %p148 = por %p146, %p147
    %p149 = scmp.ne.s32.totalorder %s138, %s139
    %p150 = scmp.eq.s32.totalorder %s14, 0
    %p151 = por %p149, %p150
    %p152 = scmp.ne.s32.totalorder %s138, %s139
    %p153 = scmp.eq.s32.totalorder %s15, 3
    %p154 = por %p152, %p153
    %p156 = scmp.ne.s32.totalorder %s139, %s155
    %p157 = scmp.eq.s32.totalorder %s15, 0
    %p158 = por %p156, %p157
    %p159 = scmp.le.s32.totalorder 1, %s9
    %p160 = scmp.lt.s32.totalorder %s9, 5
    %p161 = pnand %p159, %p160
    %p162 = pneg %p161
    // Predicated region
    $region9: #{_lambda_.16} parent=5 // pred_check
      _
    $region10: #{_lambda_.16} parent=5 // pred_check_branch
      %164 = sbr.rel (%p161) target = $region12
    $region11: #{_lambda_.16} parent=5 // pred_region
      %s165 = ssub.s32 %s9, 1
      // Predicated region
      $region13: #{_lambda_.16} parent=11 // pred_check
        %p166 = pneg %p121
      $region14: #{_lambda_.16} parent=11 // pred_check_branch
        %168 = sbr.rel (%p166) target = $region16
      $region15: #{_lambda_.16} parent=11 // pred_region
        %p169 = scmp.lt.s32.totalorder %s22, 0
        %s170 = scalar_select %p169, %s22, 0
        %s171 = scalar_lea.vmem %s2, %s170
      $region16: #{_lambda_.16} parent=11 // pred_fallthru
        _
    $region12: #{_lambda_.16} parent=5 // pred_fallthru
      _
    %p172 = scmp.lt.s32.totalorder %s9, 4
    // Predicated region
    $region17: #{_lambda_.16} parent=5 // pred_check
      %p173 = pneg %p172
    $region18: #{_lambda_.16} parent=5 // pred_check_branch
      %175 = sbr.rel (%p173) target = $region20
    $region19: #{_lambda_.16} parent=5 // pred_region
      // Predicated region
      $region21: #{_lambda_.16} parent=19 // pred_check
        %p176 = pneg %p59
      $region22: #{_lambda_.16} parent=19 // pred_check_branch
        %178 = sbr.rel (%p176) target = $region24
      $region23: #{_lambda_.16} parent=19 // pred_region
        %s179 = smul.u32 2, %s17
        %s180 = smul.u32 4, %s19
        %p181 = scmp.lt.s32.totalorder %s16, 3
        %s182 = scalar_select %p181, %s16, 3
        %p183 = scmp.lt.s32.totalorder %s179, 1
        %s184 = scalar_select %p183, %s179, 1
        %p185 = scmp.lt.s32.totalorder %s180, 3
        %s186 = scalar_select %p185, %s180, 3
        %s187 = smul.addr %s184, 4
        %s188 = sadd.s32 %s186, %s187
        %s189 = smul.addr %s182, 8
        %s190 = sadd.s32 %s188, %s189
        %s191 = smul.addr %s190, 4
        %s192 = scalar_lea.vmem %s0, %s191
        %s193 = smul.u32 2, %s17
        %s194 = smul.u32 4, %s19
      $region24: #{_lambda_.16} parent=19 // pred_fallthru
        _
      // Predicated region
      $region25: #{_lambda_.16} parent=19 // pred_check
        %p195 = pneg %p89
      $region26: #{_lambda_.16} parent=19 // pred_check_branch
        %197 = sbr.rel (%p195) target = $region28
      $region27: #{_lambda_.16} parent=19 // pred_region
        %s198 = smul.u32 64, %s19
        %p199 = scmp.lt.s32.totalorder %s16, 3
        %s200 = scalar_select %p199, %s16, 3
        %p201 = scmp.lt.s32.totalorder %s198, 63
        %s202 = scalar_select %p201, %s198, 63
        %p203 = scmp.lt.s32.totalorder %s18, 0
        %s204 = scalar_select %p203, %s18, 0
        %s205 = sadd.s32 %s204, %s202
        %s206 = smul.addr %s200, 64
        %s207 = sadd.s32 %s205, %s206
        %s208 = smul.addr %s207, 4
        %s209 = scalar_lea.vmem %s1, %s208
        %s210 = smul.u32 64, %s19
      $region28: #{_lambda_.16} parent=19 // pred_fallthru
        _
    $region20: #{_lambda_.16} parent=5 // pred_fallthru
      _
    %p211 = scmp.le.s32.totalorder 1, %s9
    %p212 = scmp.lt.s32.totalorder %s9, 5
    %p213 = pnand %p211, %p212
    %p214 = pneg %p213
    // Predicated region
    $region29: #{_lambda_.16} parent=5 // pred_check
      _
    $region30: #{_lambda_.16} parent=5 // pred_check_branch
      %216 = sbr.rel (%p213) target = $region32
    $region31: #{_lambda_.16} parent=5 // pred_region
      %s217 = ssub.s32 %s9, 1
      %s218 = smul.u32 2, %s21
      %s219 = smul.u32 4, %s23
      %p220 = scmp.lt.s32.totalorder %s20, 3
      %s221 = scalar_select %p220, %s20, 3
      %p222 = scmp.lt.s32.totalorder %s218, 1
      %s223 = scalar_select %p222, %s218, 1
      %p224 = scmp.lt.s32.totalorder %s219, 3
      %s225 = scalar_select %p224, %s219, 3
      %s226 = smul.addr %s223, 4
      %s227 = sadd.s32 %s225, %s226
      %s228 = smul.addr %s221, 8
      %s229 = sadd.s32 %s227, %s228
      %s230 = smul.addr %s229, 4
      %s231 = scalar_lea.vmem %s0, %s230
      %p232 = pneg %p65
      %p233 = pneg %p62
      %s234 = smul.u32 64, %s23
      %p235 = scmp.lt.s32.totalorder %s20, 3
      %s236 = scalar_select %p235, %s20, 3
      %p237 = scmp.lt.s32.totalorder %s234, 63
      %s238 = scalar_select %p237, %s234, 63
      %p239 = scmp.lt.s32.totalorder %s22, 0
      %s240 = scalar_select %p239, %s22, 0
      %s241 = sadd.s32 %s240, %s238
      %s242 = smul.addr %s236, 64
      %s243 = sadd.s32 %s241, %s242
      %s244 = smul.addr %s243, 4
      %s245 = scalar_lea.vmem %s1, %s244
      %p246 = pneg %p95
      %p247 = pneg %p92
      %p248 = scmp.lt.s32.totalorder %s22, 0
      %s249 = scalar_select %p248, %s22, 0
      %s250 = scalar_lea.vmem %s2, %s249
      %p251 = pneg %p121
      %p252 = pneg %p118
      %p253 = pneg %p151
      %p254 = pneg %p148
      %s255 = smul.u32 2, %s21
      %p256 = scmp.lt.s32.totalorder %s20, 3
      %s257 = scalar_select %p256, %s20, 3
      %p258 = scmp.lt.s32.totalorder %s255, 1
      %s259 = scalar_select %p258, %s255, 1
      %p260 = scmp.lt.s32.totalorder %s22, 0
      %s261 = scalar_select %p260, %s22, 0
      %s262 = sadd.s32 %s261, %s259
      %s263 = smul.addr %s257, 2
      %s264 = sadd.s32 %s262, %s263
      %s265 = smul.addr %s264, 8
      %s266 = scalar_lea.vmem %s3, %s265
      %s267 = smul.u32 2, %s21
      %s268 = smul.u32 4, %s23
      %p269 = scmp.lt.s32.totalorder %s20, 3
      %s270 = scalar_select %p269, %s20, 3
      %p271 = scmp.lt.s32.totalorder %s267, 1
      %s272 = scalar_select %p271, %s267, 1
      %p273 = scmp.lt.s32.totalorder %s268, 3
      %s274 = scalar_select %p273, %s268, 3
      %s275 = smul.addr %s272, 4
      %s276 = sadd.s32 %s274, %s275
      %s277 = smul.addr %s270, 8
      %s278 = sadd.s32 %s276, %s277
      %s279 = smul.addr %s278, 4
      %s280 = scalar_lea.vmem %s0, %s279
      %s281 = smul.u32 2, %s21
      %s282 = smul.u32 4, %s23
      %s283 = smul.u32 64, %s23
      %p284 = scmp.lt.s32.totalorder %s20, 3
      %s285 = scalar_select %p284, %s20, 3
      %p286 = scmp.lt.s32.totalorder %s283, 63
      %s287 = scalar_select %p286, %s283, 63
      %p288 = scmp.lt.s32.totalorder %s22, 0
      %s289 = scalar_select %p288, %s22, 0
      %s290 = sadd.s32 %s289, %s287
      %s291 = smul.addr %s285, 64
      %s292 = sadd.s32 %s290, %s291
      %s293 = smul.addr %s292, 4
      %s294 = scalar_lea.vmem %s1, %s293
      %s295 = smul.u32 64, %s23
      %p296 = scmp.lt.s32.totalorder %s22, 0
      %s297 = scalar_select %p296, %s22, 0
      %s298 = scalar_lea.vmem %s2, %s297
      %s299 = smul.u32 2, %s21
      %p300 = scmp.lt.s32.totalorder %s20, 3
      %s301 = scalar_select %p300, %s20, 3
      %p302 = scmp.lt.s32.totalorder %s299, 1
      %s303 = scalar_select %p302, %s299, 1
      %p304 = scmp.lt.s32.totalorder %s22, 0
      %s305 = scalar_select %p304, %s22, 0
      %s306 = sadd.s32 %s305, %s303
      %s307 = smul.addr %s301, 2
      %s308 = sadd.s32 %s306, %s307
      %s309 = smul.addr %s308, 8
      %s310 = scalar_lea.vmem %s3, %s309
      %s311 = smul.u32 2, %s21
      %p313 = scmp.eq.s32.totalorder %s23, 0
      // Predicated region
      $region33: #{_lambda_.16} parent=31 // pred_check
        %p314 = pneg %p313
      $region34: #{_lambda_.16} parent=31 // pred_check_branch
        %316 = sbr.rel (%p314) target = $region36
      $region35: #{_lambda_.16} parent=31 // pred_region
        %vm317 = vcmask 261120
        %318 = vst.msk [vmem:[#allocation2] sm:$0xff] %vm317, 0.0
        %319 = vst.msk [vmem:[#allocation2 + $0x8] sm:$0xff] %vm317, 0.0
      $region36: #{_lambda_.16} parent=31 // pred_fallthru
        _
      %v320 = vld [vmem:[#allocation2] sm:$0xff]
      %v321 = vld [vmem:[#allocation2 + $0x8] sm:$0xff]
      %v322 = vld [vmem:[%s280] sm:$0xff]
      %v323 = vld [vmem:[%s280 + $0x8] sm:$0xff]
      %v324 = vld [vmem:[%s280 + $0x10] sm:$0xff]
      %v325 = vld [vmem:[%s280 + $0x18] sm:$0xff]
      %v326 = vld [vmem:[%s294] sm:$0xf]
      %v327 = vld [vmem:[%s294 + $0x4] sm:$0xf]
      %v328 = vld [vmem:[%s294 + $0x8] sm:$0xf]
      %v329 = vld [vmem:[%s294 + $0xc] sm:$0xf]
      %v330 = vld [vmem:[%s294 + $0x10] sm:$0xf]
      %v331 = vld [vmem:[%s294 + $0x14] sm:$0xf]
      %v332 = vld [vmem:[%s294 + $0x18] sm:$0xf]
      %v333 = vld [vmem:[%s294 + $0x1c] sm:$0xf]
      %v334 = vld [vmem:[%s294 + $0x20] sm:$0xf]
      %v335 = vld [vmem:[%s294 + $0x24] sm:$0xf]
      %v336 = vld [vmem:[%s294 + $0x28] sm:$0xf]
      %v337 = vld [vmem:[%s294 + $0x2c] sm:$0xf]
      %v338 = vld [vmem:[%s294 + $0x30] sm:$0xf]
      %v339 = vld [vmem:[%s294 + $0x34] sm:$0xf]
      %v340 = vld [vmem:[%s294 + $0x38] sm:$0xf]
      %v341 = vld [vmem:[%s294 + $0x3c] sm:$0xf]
      %v342 = vld [vmem:[%s294 + $0x40] sm:$0xf]
      %v343 = vld [vmem:[%s294 + $0x44] sm:$0xf]
      %v344 = vld [vmem:[%s294 + $0x48] sm:$0xf]
      %v345 = vld [vmem:[%s294 + $0x4c] sm:$0xf]
      %v346 = vld [vmem:[%s294 + $0x50] sm:$0xf]
      %v347 = vld [vmem:[%s294 + $0x54] sm:$0xf]
      %v348 = vld [vmem:[%s294 + $0x58] sm:$0xf]
      %v349 = vld [vmem:[%s294 + $0x5c] sm:$0xf]
      %v350 = vld [vmem:[%s294 + $0x60] sm:$0xf]
      %v351 = vld [vmem:[%s294 + $0x64] sm:$0xf]
      %v352 = vld [vmem:[%s294 + $0x68] sm:$0xf]
      %v353 = vld [vmem:[%s294 + $0x6c] sm:$0xf]
      %v354 = vld [vmem:[%s294 + $0x70] sm:$0xf]
      %v355 = vld [vmem:[%s294 + $0x74] sm:$0xf]
      %v356 = vld [vmem:[%s294 + $0x78] sm:$0xf]
      %v357 = vld [vmem:[%s294 + $0x7c] sm:$0xf]
      %v358 = vld [vmem:[%s294 + $0x80] sm:$0xf]
      %v359 = vld [vmem:[%s294 + $0x84] sm:$0xf]
      %v360 = vld [vmem:[%s294 + $0x88] sm:$0xf]
      %v361 = vld [vmem:[%s294 + $0x8c] sm:$0xf]
      %v362 = vld [vmem:[%s294 + $0x90] sm:$0xf]
      %v363 = vld [vmem:[%s294 + $0x94] sm:$0xf]
      %v364 = vld [vmem:[%s294 + $0x98] sm:$0xf]
      %v365 = vld [vmem:[%s294 + $0x9c] sm:$0xf]
      %v366 = vld [vmem:[%s294 + $0xa0] sm:$0xf]
      %v367 = vld [vmem:[%s294 + $0xa4] sm:$0xf]
      %v368 = vld [vmem:[%s294 + $0xa8] sm:$0xf]
      %v369 = vld [vmem:[%s294 + $0xac] sm:$0xf]
      %v370 = vld [vmem:[%s294 + $0xb0] sm:$0xf]
      %v371 = vld [vmem:[%s294 + $0xb4] sm:$0xf]
      %v372 = vld [vmem:[%s294 + $0xb8] sm:$0xf]
      %v373 = vld [vmem:[%s294 + $0xbc] sm:$0xf]
      %v374 = vld [vmem:[%s294 + $0xc0] sm:$0xf]
      %v375 = vld [vmem:[%s294 + $0xc4] sm:$0xf]
      %v376 = vld [vmem:[%s294 + $0xc8] sm:$0xf]
      %v377 = vld [vmem:[%s294 + $0xcc] sm:$0xf]
      %v378 = vld [vmem:[%s294 + $0xd0] sm:$0xf]
      %v379 = vld [vmem:[%s294 + $0xd4] sm:$0xf]
      %v380 = vld [vmem:[%s294 + $0xd8] sm:$0xf]
      %v381 = vld [vmem:[%s294 + $0xdc] sm:$0xf]
      %v382 = vld [vmem:[%s294 + $0xe0] sm:$0xf]
      %v383 = vld [vmem:[%s294 + $0xe4] sm:$0xf]
      %v384 = vld [vmem:[%s294 + $0xe8] sm:$0xf]
      %v385 = vld [vmem:[%s294 + $0xec] sm:$0xf]
      %v386 = vld [vmem:[%s294 + $0xf0] sm:$0xf]
      %v387 = vld [vmem:[%s294 + $0xf4] sm:$0xf]
      %v388 = vld [vmem:[%s294 + $0xf8] sm:$0xf]
      %v389 = vld [vmem:[%s294 + $0xfc] sm:$0xf]
      %v394 = vunpack.c.l.b16 %v322
      %v395 = vunpack.c.h.b16 %v322
      %v396 = vunpack.c.l.b16 %v323
      %v397 = vunpack.c.h.b16 %v323
      %v398 = vunpack.c.l.b16 %v324
      %v399 = vunpack.c.h.b16 %v324
      %v400 = vunpack.c.l.b16 %v325
      %v401 = vunpack.c.h.b16 %v325
      %v402 = vpack.c.b16 %v398, %v394
      %v403 = vpack.c.b16 %v399, %v395
      %v404 = vpack.c.b16 %v400, %v396
      %v405 = vpack.c.b16 %v401, %v397
      %v474 = vunpack.c.l.b16 %v326
      %v475 = vunpack.c.l.b16 %v327
      %v476 = vunpack.c.l.b16 %v328
      %v477 = vunpack.c.l.b16 %v329
      %v478 = vunpack.c.l.b16 %v330
      %v479 = vunpack.c.l.b16 %v331
      %v480 = vunpack.c.l.b16 %v332
      %v481 = vunpack.c.l.b16 %v333
      %v482 = vunpack.c.l.b16 %v334
      %v483 = vunpack.c.l.b16 %v335
      %v484 = vunpack.c.l.b16 %v336
      %v485 = vunpack.c.l.b16 %v337
      %v486 = vunpack.c.l.b16 %v338
      %v487 = vunpack.c.l.b16 %v339
      %v488 = vunpack.c.l.b16 %v340
      %v489 = vunpack.c.l.b16 %v341
      %v490 = vunpack.c.l.b16 %v342
      %v491 = vunpack.c.l.b16 %v343
      %v492 = vunpack.c.l.b16 %v344
      %v493 = vunpack.c.l.b16 %v345
      %v494 = vunpack.c.l.b16 %v346
      %v495 = vunpack.c.l.b16 %v347
      %v496 = vunpack.c.l.b16 %v348
      %v497 = vunpack.c.l.b16 %v349
      %v498 = vunpack.c.l.b16 %v350
      %v499 = vunpack.c.l.b16 %v351
      %v500 = vunpack.c.l.b16 %v352
      %v501 = vunpack.c.l.b16 %v353
      %v502 = vunpack.c.l.b16 %v354
      %v503 = vunpack.c.l.b16 %v355
      %v504 = vunpack.c.l.b16 %v356
      %v505 = vunpack.c.l.b16 %v357
      %v506 = vunpack.c.l.b16 %v358
      %v507 = vunpack.c.l.b16 %v359
      %v508 = vunpack.c.l.b16 %v360
      %v509 = vunpack.c.l.b16 %v361
      %v510 = vunpack.c.l.b16 %v362
      %v511 = vunpack.c.l.b16 %v363
      %v512 = vunpack.c.l.b16 %v364
      %v513 = vunpack.c.l.b16 %v365
      %v514 = vunpack.c.l.b16 %v366
      %v515 = vunpack.c.l.b16 %v367
      %v516 = vunpack.c.l.b16 %v368
      %v517 = vunpack.c.l.b16 %v369
      %v518 = vunpack.c.l.b16 %v370
      %v519 = vunpack.c.l.b16 %v371
      %v520 = vunpack.c.l.b16 %v372
      %v521 = vunpack.c.l.b16 %v373
      %v522 = vunpack.c.l.b16 %v374
      %v523 = vunpack.c.l.b16 %v375
      %v524 = vunpack.c.l.b16 %v376
      %v525 = vunpack.c.l.b16 %v377
      %v526 = vunpack.c.l.b16 %v378
      %v527 = vunpack.c.l.b16 %v379
      %v528 = vunpack.c.l.b16 %v380
      %v529 = vunpack.c.l.b16 %v381
      %v530 = vunpack.c.l.b16 %v382
      %v531 = vunpack.c.l.b16 %v383
      %v532 = vunpack.c.l.b16 %v384
      %v533 = vunpack.c.l.b16 %v385
      %v534 = vunpack.c.l.b16 %v386
      %v535 = vunpack.c.l.b16 %v387
      %v536 = vunpack.c.l.b16 %v388
      %v537 = vunpack.c.l.b16 %v389
      %v538 = vpack.c.b16 %v475, %v474
      %v539 = vpack.c.b16 %v477, %v476
      %v540 = vpack.c.b16 %v479, %v478
      %v541 = vpack.c.b16 %v481, %v480
      %v542 = vpack.c.b16 %v483, %v482
      %v543 = vpack.c.b16 %v485, %v484
      %v544 = vpack.c.b16 %v487, %v486
      %v545 = vpack.c.b16 %v489, %v488
      %v546 = vpack.c.b16 %v491, %v490
      %v547 = vpack.c.b16 %v493, %v492
      %v548 = vpack.c.b16 %v495, %v494
      %v549 = vpack.c.b16 %v497, %v496
      %v550 = vpack.c.b16 %v499, %v498
      %v551 = vpack.c.b16 %v501, %v500
      %v552 = vpack.c.b16 %v503, %v502
      %v553 = vpack.c.b16 %v505, %v504
      %v554 = vpack.c.b16 %v507, %v506
      %v555 = vpack.c.b16 %v509, %v508
      %v556 = vpack.c.b16 %v511, %v510
      %v557 = vpack.c.b16 %v513, %v512
      %v558 = vpack.c.b16 %v515, %v514
      %v559 = vpack.c.b16 %v517, %v516
      %v560 = vpack.c.b16 %v519, %v518
      %v561 = vpack.c.b16 %v521, %v520
      %v562 = vpack.c.b16 %v523, %v522
      %v563 = vpack.c.b16 %v525, %v524
      %v564 = vpack.c.b16 %v527, %v526
      %v565 = vpack.c.b16 %v529, %v528
      %v566 = vpack.c.b16 %v531, %v530
      %v567 = vpack.c.b16 %v533, %v532
      %v568 = vpack.c.b16 %v535, %v534
      %v569 = vpack.c.b16 %v537, %v536
      %602 = vmatprep.subr.bf16.mxu0 0
      %603 = vmatpush1.bf16.msra.mxu0 %v538
      %604 = vmatprep.subr.bf16.mxu0 0
      %605 = vmatpush1.bf16.msra.mxu0 %v539
      %606 = vmatprep.subr.bf16.mxu0 0
      %607 = vmatpush1.bf16.msra.mxu0 %v540
      %608 = vmatprep.subr.bf16.mxu0 0
      %609 = vmatpush1.bf16.msra.mxu0 %v541
      %610 = vmatprep.subr.bf16.mxu0 0
      %611 = vmatpush1.bf16.msra.mxu0 %v542
      %612 = vmatprep.subr.bf16.mxu0 0
      %613 = vmatpush1.bf16.msra.mxu0 %v543
      %614 = vmatprep.subr.bf16.mxu0 0
      %615 = vmatpush1.bf16.msra.mxu0 %v544
      %616 = vmatprep.subr.bf16.mxu0 0
      %617 = vmatpush1.bf16.msra.mxu0 %v545
      %618 = vmatprep.subr.bf16.mxu0 0
      %619 = vmatpush1.bf16.msra.mxu0 %v546
      %620 = vmatprep.subr.bf16.mxu0 0
      %621 = vmatpush1.bf16.msra.mxu0 %v547
      %622 = vmatprep.subr.bf16.mxu0 0
      %623 = vmatpush1.bf16.msra.mxu0 %v548
      %624 = vmatprep.subr.bf16.mxu0 0
      %625 = vmatpush1.bf16.msra.mxu0 %v549
      %626 = vmatprep.subr.bf16.mxu0 0
      %627 = vmatpush1.bf16.msra.mxu0 %v550
      %628 = vmatprep.subr.bf16.mxu0 0
      %629 = vmatpush1.bf16.msra.mxu0 %v551
      %630 = vmatprep.subr.bf16.mxu0 0
      %631 = vmatpush1.bf16.msra.mxu0 %v552
      %632 = vmatprep.subr.bf16.mxu0 0
      %633 = vmatpush1.bf16.msra.mxu0 %v553
      %634 = vmatprep.mubr.bf16.mxu0 %v403
      %635 = vmatmul.mubr.bf16.gmra.mrb[0].mxu0 %v402
      %v636 = vpop.f32.mrb[0].mxu0
      %v637 = vadd.f32 0.0, %v636
      %v638 = vpop.f32.mrb[0].mxu0
      %v639 = vpop.f32.mrb[0].mxu0
      %v640 = vadd.f32 0.0, %v639
      %v641 = vpop.f32.mrb[0].mxu0
      %642 = vdwg.mxu0
      %643 = vmatprep.subr.bf16.mxu0 0
      %644 = vmatpush1.bf16.msra.mxu0 %v554
      %645 = vmatprep.subr.bf16.mxu0 0
      %646 = vmatpush1.bf16.msra.mxu0 %v555
      %647 = vmatprep.subr.bf16.mxu0 0
      %648 = vmatpush1.bf16.msra.mxu0 %v556
      %649 = vmatprep.subr.bf16.mxu0 0
      %650 = vmatpush1.bf16.msra.mxu0 %v557
      %651 = vmatprep.subr.bf16.mxu0 0
      %652 = vmatpush1.bf16.msra.mxu0 %v558
      %653 = vmatprep.subr.bf16.mxu0 0
      %654 = vmatpush1.bf16.msra.mxu0 %v559
      %655 = vmatprep.subr.bf16.mxu0 0
      %656 = vmatpush1.bf16.msra.mxu0 %v560
      %657 = vmatprep.subr.bf16.mxu0 0
      %658 = vmatpush1.bf16.msra.mxu0 %v561
      %659 = vmatprep.subr.bf16.mxu0 0
      %660 = vmatpush1.bf16.msra.mxu0 %v562
      %661 = vmatprep.subr.bf16.mxu0 0
      %662 = vmatpush1.bf16.msra.mxu0 %v563
      %663 = vmatprep.subr.bf16.mxu0 0
      %664 = vmatpush1.bf16.msra.mxu0 %v564
      %665 = vmatprep.subr.bf16.mxu0 0
      %666 = vmatpush1.bf16.msra.mxu0 %v565
      %667 = vmatprep.subr.bf16.mxu0 0
      %668 = vmatpush1.bf16.msra.mxu0 %v566
      %669 = vmatprep.subr.bf16.mxu0 0
      %670 = vmatpush1.bf16.msra.mxu0 %v567
      %671 = vmatprep.subr.bf16.mxu0 0
      %672 = vmatpush1.bf16.msra.mxu0 %v568
      %673 = vmatprep.subr.bf16.mxu0 0
      %674 = vmatpush1.bf16.msra.mxu0 %v569
      %675 = vmatprep.mubr.bf16.mxu0 %v405
      %676 = vmatmul.mubr.bf16.gmra.mrb[0].mxu0 %v404
      %v677 = vpop.f32.mrb[0].mxu0
      %v678 = vadd.f32 %v637, %v677
      %v679 = vpop.f32.mrb[0].mxu0
      %v680 = vpop.f32.mrb[0].mxu0
      %v681 = vadd.f32 %v640, %v680
      %v682 = vpop.f32.mrb[0].mxu0
      %683 = vdwg.mxu0
      %v684 = vadd.f32 %v320, %v678
      %v685 = vadd.f32 %v321, %v681
      %vm686 = vcmask 261120
      %687 = vst.msk [vmem:[#allocation2] sm:$0xff] %vm686, %v684
      %688 = vst.msk [vmem:[#allocation2 + $0x8] sm:$0xff] %vm686, %v685
      // Predicated region
      $region37: #{_lambda_.16} parent=31 // pred_check
        %p689 = pneg %p313
      $region38: #{_lambda_.16} parent=31 // pred_check_branch
        %691 = sbr.rel (%p689) target = $region40
      $region39: #{_lambda_.16} parent=31 // pred_region
        %v692 = vld [vmem:[#allocation2] sm:$0xff]
        %v693 = vld [vmem:[#allocation2 + $0x8] sm:$0xff]
        %v694 = vld [vmem:[%s298] sm:$0x1]
        %v696 = vlaneseq
        %v697 = vshrl.u32 %v696, 7
        %v698 = vsub.s32 0, %v697
        %v699 = vrot.slane %v694, %v698
        %v701 = vadd.f32 %v692, %v699
        %v702 = vadd.f32 %v693, %v699
        %703 = vst.msk [vmem:[%s310] sm:$0xff] %vm686, %v701
        %704 = vst.msk [vmem:[%s310 + $0x8] sm:$0xff] %vm686, %v702
      $region40: #{_lambda_.16} parent=31 // pred_fallthru
        _
      %s705 = smul.u32 2, %s21
      %p706 = scmp.lt.s32.totalorder %s20, 3
      %s707 = scalar_select %p706, %s20, 3
      %p708 = scmp.lt.s32.totalorder %s705, 1
      %s709 = scalar_select %p708, %s705, 1
      %p710 = scmp.lt.s32.totalorder %s22, 0
      %s711 = scalar_select %p710, %s22, 0
      %s712 = sadd.s32 %s711, %s709
      %s713 = smul.addr %s707, 2
      %s714 = sadd.s32 %s712, %s713
      %s715 = smul.addr %s714, 8
      %s716 = scalar_lea.vmem %s3, %s715
      // Predicated region
      $region41: #{_lambda_.16} parent=31 // pred_check
        %p717 = pneg %p148
      $region42: #{_lambda_.16} parent=31 // pred_check_branch
        %719 = sbr.rel (%p717) target = $region44
      $region43: #{_lambda_.16} parent=31 // pred_region
        %s720 = smul.u32 2, %s21
      $region44: #{_lambda_.16} parent=31 // pred_fallthru
        _
    $region32: #{_lambda_.16} parent=5 // pred_fallthru
      _
    %p721 = scmp.le.s32.totalorder 2, %s9
    // Predicated region
    $region45: #{_lambda_.16} parent=5 // pred_check
      %p722 = pneg %p721
    $region46: #{_lambda_.16} parent=5 // pred_check_branch
      %724 = sbr.rel (%p722) target = $region48
    $region47: #{_lambda_.16} parent=5 // pred_region
      %s725 = ssub.s32 %s9, 2
      // Predicated region
      $region49: #{_lambda_.16} parent=47 // pred_check
        %p726 = pneg %p154
      $region50: #{_lambda_.16} parent=47 // pred_check_branch
        %728 = sbr.rel (%p726) target = $region52
      $region51: #{_lambda_.16} parent=47 // pred_region
        %s729 = smul.u32 2, %s25
        %p730 = scmp.lt.s32.totalorder %s24, 3
        %s731 = scalar_select %p730, %s24, 3
        %p732 = scmp.lt.s32.totalorder %s729, 1
        %s733 = scalar_select %p732, %s729, 1
        %p734 = scmp.lt.s32.totalorder %s26, 0
        %s735 = scalar_select %p734, %s26, 0
        %s736 = sadd.s32 %s735, %s733
        %s737 = smul.addr %s731, 2
        %s738 = sadd.s32 %s736, %s737
        %s739 = smul.addr %s738, 8
        %s740 = scalar_lea.vmem %s3, %s739
      $region52: #{_lambda_.16} parent=47 // pred_fallthru
        _
    $region48: #{_lambda_.16} parent=5 // pred_fallthru
      _
  $region6: #{_lambda_.16} parent=0 // loop_footer
    %s13 = sadd.s32 1, %s9
  $region7: #{_lambda_.16} parent=0 // loop_footer_branch
    %8 = sbr.rel target = $region3
  $region8: #{_lambda_.16} parent=0 // loop_exit
    _

// kernel: _lambda_.17
$region0: #{_lambda_.17}
  #allocation0 [shape = 'u32[]', space=smem, size = 0x4, offset = 0x4, fixed_abs, tag = 'smem constant byte address 0x4 - core index']
  #allocation1 [shape = 'u32[144,128]{1,0:T(1,128)}', space=vmem, size = 0x12000, scoped, tag = 'internal scratch']
  #allocation2 [shape = 'f32[32,16]{1,0:T(8,128)}', space=vmem, size = 0x4000, scoped, tag = 'scratch operand']
  %s0 = inlined_call_operand.vmem [shape: bf16[4,32,256], index: 0, kind: input, shape index: {}]
  %s1 = inlined_call_operand.vmem [shape: bf16[4,256,16], index: 1, kind: input, shape index: {}]
  %s2 = inlined_call_operand.vmem [shape: f32[1,16], index: 2, kind: input, shape index: {}]
  %s3 = inlined_call_operand.vmem [shape: f32[4,32,16], index: 3, kind: output, shape index: {}]
  %s4 = sld [smem:[#allocation0]]
  $region53: #{_lambda_.17} parent=0
    _
  %s6 = ssub.s32 1, %s4
  %s7 = scalar_select 0, %s6, %s4
  loop: start=0, step=1, limit=6
  $region2: #{_lambda_.17} parent=0 // loop_pre_header
    _
  $region3: #{_lambda_.17} parent=0 // loop_header
    %s9 = sphi 0, %s13
    %p10 = scmp.ge.s32.totalorder %s9, 6
    %s16 = sphi 0, %s42
    %s17 = sphi 0, %s38
    %s18 = sphi 0, %s34
    %s19 = sphi 0, %s30
    %s20 = sphi 0, %s16
    %s21 = sphi 0, %s17
    %s22 = sphi 0, %s18
    %s23 = sphi 0, %s19
    %s24 = sphi 0, %s20
    %s25 = sphi 0, %s21
    %s26 = sphi 0, %s22
    %s27 = sphi 0, %s23
    %s49 = sphi 0, %s51
    %s52 = sphi 0, %s49
    %s53 = sphi 0, %s52
    %s69 = sphi 0, %s53
    %s79 = sphi 0, %s81
    %s82 = sphi 0, %s79
    %s83 = sphi 0, %s82
    %s99 = sphi 0, %s83
    %s105 = sphi 0, %s107
    %s108 = sphi 0, %s105
    %s109 = sphi 0, %s108
    %s125 = sphi 0, %s109
    %s135 = sphi 0, %s137
    %s138 = sphi 0, %s135
    %s139 = sphi 0, %s138
    %s155 = sphi 0, %s139
  $region4: #{_lambda_.17} parent=0 // loop_header_branch
    %12 = sbr.rel (%p10) target = $region8
  $region5: #{_lambda_.17} parent=0 // loop_body
    %s14 = ssub.s32 %s9, 1
    %s15 = ssub.s32 %s9, 2
    %s28 = sadd.s32 1, %s19
    %p29 = scmp.ge.s32.totalorder %s28, 1
    %s30 = scalar_select %p29, 0, %s28
    %s31 = sadd.s32 1, %s18
    %s32 = scalar_select %p29, %s31, %s18
    %p33 = scmp.ge.s32.totalorder %s32, 1
    %s34 = scalar_select %p33, 0, %s32
    %s35 = sadd.s32 1, %s17
    %s36 = scalar_select %p33, %s35, %s17
    %p37 = scmp.ge.s32.totalorder %s36, 1
    %s38 = scalar_select %p37, 0, %s36
    %s39 = sadd.s32 1, %s16
    %s40 = scalar_select %p37, %s39, %s16
    %p41 = scmp.ge.s32.totalorder %s40, 4
    %s42 = scalar_select %p41, 0, %s40
    %s43 = ssub.s32 %s16, %s42
    %s44 = ssub.s32 %s17, %s38
    %s45 = sor.u32 %s43, %s44
    %s46 = ssub.s32 %s19, %s30
    %s47 = sor.u32 %s45, %s46
    %p48 = scmp.eq.s32.totalorder %s47, 0
    %s50 = sadd.s32 %s49, 1
    %s51 = scalar_select %p48, %s49, %s50
    %p54 = pneg %p48
    %p55 = scmp.eq.s32.totalorder %s9, 3
    %p56 = por %p54, %p55
    %p57 = scmp.ne.s32.totalorder %s49, %s52
    %p58 = scmp.eq.s32.totalorder %s9, 0
    %p59 = por %p57, %p58
    %p60 = scmp.ne.s32.totalorder %s49, %s52
    %p61 = scmp.eq.s32.totalorder %s14, 3
    %p62 = por %p60, %p61
    %p63 = scmp.ne.s32.totalorder %s52, %s53
    %p64 = scmp.eq.s32.totalorder %s14, 0
    %p65 = por %p63, %p64
    %p66 = scmp.ne.s32.totalorder %s52, %s53
    %p67 = scmp.eq.s32.totalorder %s15, 3
    %p68 = por %p66, %p67
    %p70 = scmp.ne.s32.totalorder %s53, %s69
    %p71 = scmp.eq.s32.totalorder %s15, 0
    %p72 = por %p70, %p71
    %s73 = ssub.s32 %s16, %s42
    %s74 = ssub.s32 %s19, %s30
    %s75 = sor.u32 %s73, %s74
    %s76 = ssub.s32 %s18, %s34
    %s77 = sor.u32 %s75, %s76
    %p78 = scmp.eq.s32.totalorder %s77, 0
    %s80 = sadd.s32 %s79, 1
    %s81 = scalar_select %p78, %s79, %s80
    %p84 = pneg %p78
    %p85 = scmp.eq.s32.totalorder %s9, 3
    %p86 = por %p84, %p85
    %p87 = scmp.ne.s32.totalorder %s79, %s82
    %p88 = scmp.eq.s32.totalorder %s9, 0
    %p89 = por %p87, %p88
    %p90 = scmp.ne.s32.totalorder %s79, %s82
    %p91 = scmp.eq.s32.totalorder %s14, 3
    %p92 = por %p90, %p91
    %p93 = scmp.ne.s32.totalorder %s82, %s83
    %p94 = scmp.eq.s32.totalorder %s14, 0
    %p95 = por %p93, %p94
    %p96 = scmp.ne.s32.totalorder %s82, %s83
    %p97 = scmp.eq.s32.totalorder %s15, 3
    %p98 = por %p96, %p97
    %p100 = scmp.ne.s32.totalorder %s83, %s99
    %p101 = scmp.eq.s32.totalorder %s15, 0
    %p102 = por %p100, %p101
    %s103 = ssub.s32 %s18, %s34
    %p104 = scmp.eq.s32.totalorder %s103, 0
    %s106 = sadd.s32 %s105, 1
    %s107 = scalar_select %p104, %s105, %s106
    %p110 = pneg %p104
    %p111 = scmp.eq.s32.totalorder %s9, 3
    %p112 = por %p110, %p111
    %p113 = scmp.ne.s32.totalorder %s105, %s108
    %p114 = scmp.eq.s32.totalorder %s9, 0
    %p115 = por %p113, %p114
    %p116 = scmp.ne.s32.totalorder %s105, %s108
    %p117 = scmp.eq.s32.totalorder %s14, 3
    %p118 = por %p116, %p117
    %p119 = scmp.ne.s32.totalorder %s108, %s109
    %p120 = scmp.eq.s32.totalorder %s14, 0
    %p121 = por %p119, %p120
    %p122 = scmp.ne.s32.totalorder %s108, %s109
    %p123 = scmp.eq.s32.totalorder %s15, 3
    %p124 = por %p122, %p123
    %p126 = scmp.ne.s32.totalorder %s109, %s125
    %p127 = scmp.eq.s32.totalorder %s15, 0
    %p128 = por %p126, %p127
    %s129 = ssub.s32 %s16, %s42
    %s130 = ssub.s32 %s17, %s38
    %s131 = sor.u32 %s129, %s130
    %s132 = ssub.s32 %s18, %s34
    %s133 = sor.u32 %s131, %s132
    %p134 = scmp.eq.s32.totalorder %s133, 0
    %s136 = sadd.s32 %s135, 1
    %s137 = scalar_select %p134, %s135, %s136
    %p140 = pneg %p134
    %p141 = scmp.eq.s32.totalorder %s9, 3
    %p142 = por %p140, %p141
    %p143 = scmp.ne.s32.totalorder %s135, %s138
    %p144 = scmp.eq.s32.totalorder %s9, 0
    %p145 = por %p143, %p144
    %p146 = scmp.ne.s32.totalorder %s135, %s138
    %p147 = scmp.eq.s32.totalorder %s14, 3
    %p148 = por %p146, %p147
    %p149 = scmp.ne.s32.totalorder %s138, %s139
    %p150 = scmp.eq.s32.totalorder %s14, 0
    %p151 = por %p149, %p150
    %p152 = scmp.ne.s32.totalorder %s138, %s139
    %p153 = scmp.eq.s32.totalorder %s15, 3
    %p154 = por %p152, %p153
    %p156 = scmp.ne.s32.totalorder %s139, %s155
    %p157 = scmp.eq.s32.totalorder %s15, 0
    %p158 = por %p156, %p157
    %p159 = scmp.le.s32.totalorder 1, %s9
    %p160 = scmp.lt.s32.totalorder %s9, 5
    %p161 = pnand %p159, %p160
    %p162 = pneg %p161
    // Predicated region
    $region9: #{_lambda_.17} parent=5 // pred_check
      _
    $region10: #{_lambda_.17} parent=5 // pred_check_branch
      %164 = sbr.rel (%p161) target = $region12
    $region11: #{_lambda_.17} parent=5 // pred_region
      %s165 = ssub.s32 %s9, 1
      // Predicated region
      $region13: #{_lambda_.17} parent=11 // pred_check
        %p166 = pneg %p121
      $region14: #{_lambda_.17} parent=11 // pred_check_branch
        %168 = sbr.rel (%p166) target = $region16
      $region15: #{_lambda_.17} parent=11 // pred_region
        %p169 = scmp.lt.s32.totalorder %s22, 0
        %s170 = scalar_select %p169, %s22, 0
        %s171 = scalar_lea.vmem %s2, %s170
      $region16: #{_lambda_.17} parent=11 // pred_fallthru
        _
    $region12: #{_lambda_.17} parent=5 // pred_fallthru
      _
    %p172 = scmp.lt.s32.totalorder %s9, 4
    // Predicated region
    $region17: #{_lambda_.17} parent=5 // pred_check
      %p173 = pneg %p172
    $region18: #{_lambda_.17} parent=5 // pred_check_branch
      %175 = sbr.rel (%p173) target = $region20
    $region19: #{_lambda_.17} parent=5 // pred_region
      // Predicated region
      $region21: #{_lambda_.17} parent=19 // pred_check
        %p176 = pneg %p59
      $region22: #{_lambda_.17} parent=19 // pred_check_branch
        %178 = sbr.rel (%p176) target = $region24
      $region23: #{_lambda_.17} parent=19 // pred_region
        %s179 = smul.u32 4, %s17
        %s180 = smul.u32 2, %s19
        %p181 = scmp.lt.s32.totalorder %s16, 3
        %s182 = scalar_select %p181, %s16, 3
        %p183 = scmp.lt.s32.totalorder %s179, 3
        %s184 = scalar_select %p183, %s179, 3
        %p185 = scmp.lt.s32.totalorder %s180, 1
        %s186 = scalar_select %p185, %s180, 1
        %s187 = smul.addr %s184, 2
        %s188 = sadd.s32 %s186, %s187
        %s189 = smul.addr %s182, 8
        %s190 = sadd.s32 %s188, %s189
        %s191 = smul.addr %s190, 4
        %s192 = scalar_lea.vmem %s0, %s191
        %s193 = smul.u32 4, %s17
        %s194 = smul.u32 2, %s19
      $region24: #{_lambda_.17} parent=19 // pred_fallthru
        _
      // Predicated region
      $region25: #{_lambda_.17} parent=19 // pred_check
        %p195 = pneg %p89
      $region26: #{_lambda_.17} parent=19 // pred_check_branch
        %197 = sbr.rel (%p195) target = $region28
      $region27: #{_lambda_.17} parent=19 // pred_region
        %s198 = smul.u32 32, %s19
        %p199 = scmp.lt.s32.totalorder %s16, 3
        %s200 = scalar_select %p199, %s16, 3
        %p201 = scmp.lt.s32.totalorder %s198, 31
        %s202 = scalar_select %p201, %s198, 31
        %p203 = scmp.lt.s32.totalorder %s18, 0
        %s204 = scalar_select %p203, %s18, 0
        %s205 = sadd.s32 %s204, %s202
        %s206 = smul.addr %s200, 32
        %s207 = sadd.s32 %s205, %s206
        %s208 = smul.addr %s207, 4
        %s209 = scalar_lea.vmem %s1, %s208
        %s210 = smul.u32 32, %s19
      $region28: #{_lambda_.17} parent=19 // pred_fallthru
        _
    $region20: #{_lambda_.17} parent=5 // pred_fallthru
      _
    %p211 = scmp.le.s32.totalorder 1, %s9
    %p212 = scmp.lt.s32.totalorder %s9, 5
    %p213 = pnand %p211, %p212
    %p214 = pneg %p213
    // Predicated region
    $region29: #{_lambda_.17} parent=5 // pred_check
      _
    $region30: #{_lambda_.17} parent=5 // pred_check_branch
      %216 = sbr.rel (%p213) target = $region32
    $region31: #{_lambda_.17} parent=5 // pred_region
      %s217 = ssub.s32 %s9, 1
      %s218 = smul.u32 4, %s21
      %s219 = smul.u32 2, %s23
      %p220 = scmp.lt.s32.totalorder %s20, 3
      %s221 = scalar_select %p220, %s20, 3
      %p222 = scmp.lt.s32.totalorder %s218, 3
      %s223 = scalar_select %p222, %s218, 3
      %p224 = scmp.lt.s32.totalorder %s219, 1
      %s225 = scalar_select %p224, %s219, 1
      %s226 = smul.addr %s223, 2
      %s227 = sadd.s32 %s225, %s226
      %s228 = smul.addr %s221, 8
      %s229 = sadd.s32 %s227, %s228
      %s230 = smul.addr %s229, 4
      %s231 = scalar_lea.vmem %s0, %s230
      %p232 = pneg %p65
      %p233 = pneg %p62
      %s234 = smul.u32 32, %s23
      %p235 = scmp.lt.s32.totalorder %s20, 3
      %s236 = scalar_select %p235, %s20, 3
      %p237 = scmp.lt.s32.totalorder %s234, 31
      %s238 = scalar_select %p237, %s234, 31
      %p239 = scmp.lt.s32.totalorder %s22, 0
      %s240 = scalar_select %p239, %s22, 0
      %s241 = sadd.s32 %s240, %s238
      %s242 = smul.addr %s236, 32
      %s243 = sadd.s32 %s241, %s242
      %s244 = smul.addr %s243, 4
      %s245 = scalar_lea.vmem %s1, %s244
      %p246 = pneg %p95
      %p247 = pneg %p92
      %p248 = scmp.lt.s32.totalorder %s22, 0
      %s249 = scalar_select %p248, %s22, 0
      %s250 = scalar_lea.vmem %s2, %s249
      %p251 = pneg %p121
      %p252 = pneg %p118
      %p253 = pneg %p151
      %p254 = pneg %p148
      %s255 = smul.u32 4, %s21
      %p256 = scmp.lt.s32.totalorder %s20, 3
      %s257 = scalar_select %p256, %s20, 3
      %p258 = scmp.lt.s32.totalorder %s255, 3
      %s259 = scalar_select %p258, %s255, 3
      %p260 = scmp.lt.s32.totalorder %s22, 0
      %s261 = scalar_select %p260, %s22, 0
      %s262 = sadd.s32 %s261, %s259
      %s263 = smul.addr %s257, 4
      %s264 = sadd.s32 %s262, %s263
      %s265 = smul.addr %s264, 8
      %s266 = scalar_lea.vmem %s3, %s265
      %s267 = smul.u32 4, %s21
      %s268 = smul.u32 2, %s23
      %p269 = scmp.lt.s32.totalorder %s20, 3
      %s270 = scalar_select %p269, %s20, 3
      %p271 = scmp.lt.s32.totalorder %s267, 3
      %s272 = scalar_select %p271, %s267, 3
      %p273 = scmp.lt.s32.totalorder %s268, 1
      %s274 = scalar_select %p273, %s268, 1
      %s275 = smul.addr %s272, 2
      %s276 = sadd.s32 %s274, %s275
      %s277 = smul.addr %s270, 8
      %s278 = sadd.s32 %s276, %s277
      %s279 = smul.addr %s278, 4
      %s280 = scalar_lea.vmem %s0, %s279
      %s281 = smul.u32 4, %s21
      %s282 = smul.u32 2, %s23
      %s283 = smul.u32 32, %s23
      %p284 = scmp.lt.s32.totalorder %s20, 3
      %s285 = scalar_select %p284, %s20, 3
      %p286 = scmp.lt.s32.totalorder %s283, 31
      %s287 = scalar_select %p286, %s283, 31
      %p288 = scmp.lt.s32.totalorder %s22, 0
      %s289 = scalar_select %p288, %s22, 0
      %s290 = sadd.s32 %s289, %s287
      %s291 = smul.addr %s285, 32
      %s292 = sadd.s32 %s290, %s291
      %s293 = smul.addr %s292, 4
      %s294 = scalar_lea.vmem %s1, %s293
      %s295 = smul.u32 32, %s23
      %p296 = scmp.lt.s32.totalorder %s22, 0
      %s297 = scalar_select %p296, %s22, 0
      %s298 = scalar_lea.vmem %s2, %s297
      %s299 = smul.u32 4, %s21
      %p300 = scmp.lt.s32.totalorder %s20, 3
      %s301 = scalar_select %p300, %s20, 3
      %p302 = scmp.lt.s32.totalorder %s299, 3
      %s303 = scalar_select %p302, %s299, 3
      %p304 = scmp.lt.s32.totalorder %s22, 0
      %s305 = scalar_select %p304, %s22, 0
      %s306 = sadd.s32 %s305, %s303
      %s307 = smul.addr %s301, 4
      %s308 = sadd.s32 %s306, %s307
      %s309 = smul.addr %s308, 8
      %s310 = scalar_lea.vmem %s3, %s309
      %s311 = smul.u32 4, %s21
      %p313 = scmp.eq.s32.totalorder %s23, 0
      // Predicated region
      $region33: #{_lambda_.17} parent=31 // pred_check
        %p314 = pneg %p313
      $region34: #{_lambda_.17} parent=31 // pred_check_branch
        %316 = sbr.rel (%p314) target = $region36
      $region35: #{_lambda_.17} parent=31 // pred_region
        %vm317 = vcmask 130048
        %318 = vst.msk [vmem:[#allocation2] sm:$0xff] %vm317, 0.0
        %319 = vst.msk [vmem:[#allocation2 + $0x8] sm:$0xff] %vm317, 0.0
        %320 = vst.msk [vmem:[#allocation2 + $0x10] sm:$0xff] %vm317, 0.0
        %321 = vst.msk [vmem:[#allocation2 + $0x18] sm:$0xff] %vm317, 0.0
      $region36: #{_lambda_.17} parent=31 // pred_fallthru
        _
      %v322 = vld [vmem:[#allocation2] sm:$0xff]
      %v323 = vld [vmem:[#allocation2 + $0x8] sm:$0xff]
      %v324 = vld [vmem:[#allocation2 + $0x10] sm:$0xff]
      %v325 = vld [vmem:[#allocation2 + $0x18] sm:$0xff]
      %v326 = vld [vmem:[%s280] sm:$0xff]
      %v327 = vld [vmem:[%s280 + $0x8] sm:$0xff]
      %v328 = vld [vmem:[%s280 + $0x10] sm:$0xff]
      %v329 = vld [vmem:[%s280 + $0x18] sm:$0xff]
      %v330 = vld [vmem:[%s294] sm:$0xf]
      %v331 = vld [vmem:[%s294 + $0x4] sm:$0xf]
      %v332 = vld [vmem:[%s294 + $0x8] sm:$0xf]
      %v333 = vld [vmem:[%s294 + $0xc] sm:$0xf]
      %v334 = vld [vmem:[%s294 + $0x10] sm:$0xf]
      %v335 = vld [vmem:[%s294 + $0x14] sm:$0xf]
      %v336 = vld [vmem:[%s294 + $0x18] sm:$0xf]
      %v337 = vld [vmem:[%s294 + $0x1c] sm:$0xf]
      %v338 = vld [vmem:[%s294 + $0x20] sm:$0xf]
      %v339 = vld [vmem:[%s294 + $0x24] sm:$0xf]
      %v340 = vld [vmem:[%s294 + $0x28] sm:$0xf]
      %v341 = vld [vmem:[%s294 + $0x2c] sm:$0xf]
      %v342 = vld [vmem:[%s294 + $0x30] sm:$0xf]
      %v343 = vld [vmem:[%s294 + $0x34] sm:$0xf]
      %v344 = vld [vmem:[%s294 + $0x38] sm:$0xf]
      %v345 = vld [vmem:[%s294 + $0x3c] sm:$0xf]
      %v346 = vld [vmem:[%s294 + $0x40] sm:$0xf]
      %v347 = vld [vmem:[%s294 + $0x44] sm:$0xf]
      %v348 = vld [vmem:[%s294 + $0x48] sm:$0xf]
      %v349 = vld [vmem:[%s294 + $0x4c] sm:$0xf]
      %v350 = vld [vmem:[%s294 + $0x50] sm:$0xf]
      %v351 = vld [vmem:[%s294 + $0x54] sm:$0xf]
      %v352 = vld [vmem:[%s294 + $0x58] sm:$0xf]
      %v353 = vld [vmem:[%s294 + $0x5c] sm:$0xf]
      %v354 = vld [vmem:[%s294 + $0x60] sm:$0xf]
      %v355 = vld [vmem:[%s294 + $0x64] sm:$0xf]
      %v356 = vld [vmem:[%s294 + $0x68] sm:$0xf]
      %v357 = vld [vmem:[%s294 + $0x6c] sm:$0xf]
      %v358 = vld [vmem:[%s294 + $0x70] sm:$0xf]
      %v359 = vld [vmem:[%s294 + $0x74] sm:$0xf]
      %v360 = vld [vmem:[%s294 + $0x78] sm:$0xf]
      %v361 = vld [vmem:[%s294 + $0x7c] sm:$0xf]
      %v366 = vunpack.c.l.b16 %v326
      %v367 = vunpack.c.h.b16 %v326
      %v368 = vunpack.c.l.b16 %v327
      %v369 = vunpack.c.h.b16 %v327
      %v370 = vunpack.c.l.b16 %v328
      %v371 = vunpack.c.h.b16 %v328
      %v372 = vunpack.c.l.b16 %v329
      %v373 = vunpack.c.h.b16 %v329
      %v374 = vpack.c.b16 %v368, %v366
      %v375 = vpack.c.b16 %v369, %v367
      %v376 = vpack.c.b16 %v372, %v370
      %v377 = vpack.c.b16 %v373, %v371
      %v414 = vunpack.c.l.b16 %v330
      %v415 = vunpack.c.l.b16 %v331
      %v416 = vunpack.c.l.b16 %v332
      %v417 = vunpack.c.l.b16 %v333
      %v418 = vunpack.c.l.b16 %v334
      %v419 = vunpack.c.l.b16 %v335
      %v420 = vunpack.c.l.b16 %v336
      %v421 = vunpack.c.l.b16 %v337
      %v422 = vunpack.c.l.b16 %v338
      %v423 = vunpack.c.l.b16 %v339
      %v424 = vunpack.c.l.b16 %v340
      %v425 = vunpack.c.l.b16 %v341
      %v426 = vunpack.c.l.b16 %v342
      %v427 = vunpack.c.l.b16 %v343
      %v428 = vunpack.c.l.b16 %v344
      %v429 = vunpack.c.l.b16 %v345
      %v430 = vunpack.c.l.b16 %v346
      %v431 = vunpack.c.l.b16 %v347
      %v432 = vunpack.c.l.b16 %v348
      %v433 = vunpack.c.l.b16 %v349
      %v434 = vunpack.c.l.b16 %v350
      %v435 = vunpack.c.l.b16 %v351
      %v436 = vunpack.c.l.b16 %v352
      %v437 = vunpack.c.l.b16 %v353
      %v438 = vunpack.c.l.b16 %v354
      %v439 = vunpack.c.l.b16 %v355
      %v440 = vunpack.c.l.b16 %v356
      %v441 = vunpack.c.l.b16 %v357
      %v442 = vunpack.c.l.b16 %v358
      %v443 = vunpack.c.l.b16 %v359
      %v444 = vunpack.c.l.b16 %v360
      %v445 = vunpack.c.l.b16 %v361
      %v446 = vpack.c.b16 %v415, %v414
      %v447 = vpack.c.b16 %v417, %v416
      %v448 = vpack.c.b16 %v419, %v418
      %v449 = vpack.c.b16 %v421, %v420
      %v450 = vpack.c.b16 %v423, %v422
      %v451 = vpack.c.b16 %v425, %v424
      %v452 = vpack.c.b16 %v427, %v426
      %v453 = vpack.c.b16 %v429, %v428
      %v454 = vpack.c.b16 %v431, %v430
      %v455 = vpack.c.b16 %v433, %v432
      %v456 = vpack.c.b16 %v435, %v434
      %v457 = vpack.c.b16 %v437, %v436
      %v458 = vpack.c.b16 %v439, %v438
      %v459 = vpack.c.b16 %v441, %v440
      %v460 = vpack.c.b16 %v443, %v442
      %v461 = vpack.c.b16 %v445, %v444
      %478 = vmatprep.subr.bf16.mxu0 0
      %479 = vmatpush1.bf16.msra.mxu0 %v446
      %480 = vmatprep.subr.bf16.mxu0 0
      %481 = vmatpush1.bf16.msra.mxu0 %v447
      %482 = vmatprep.subr.bf16.mxu0 0
      %483 = vmatpush1.bf16.msra.mxu0 %v448
      %484 = vmatprep.subr.bf16.mxu0 0
      %485 = vmatpush1.bf16.msra.mxu0 %v449
      %486 = vmatprep.subr.bf16.mxu0 0
      %487 = vmatpush1.bf16.msra.mxu0 %v450
      %488 = vmatprep.subr.bf16.mxu0 0
      %489 = vmatpush1.bf16.msra.mxu0 %v451
      %490 = vmatprep.subr.bf16.mxu0 0
      %491 = vmatpush1.bf16.msra.mxu0 %v452
      %492 = vmatprep.subr.bf16.mxu0 0
      %493 = vmatpush1.bf16.msra.mxu0 %v453
      %494 = vmatprep.subr.bf16.mxu0 0
      %495 = vmatpush1.bf16.msra.mxu0 %v454
      %496 = vmatprep.subr.bf16.mxu0 0
      %497 = vmatpush1.bf16.msra.mxu0 %v455
      %498 = vmatprep.subr.bf16.mxu0 0
      %499 = vmatpush1.bf16.msra.mxu0 %v456
      %500 = vmatprep.subr.bf16.mxu0 0
      %501 = vmatpush1.bf16.msra.mxu0 %v457
      %502 = vmatprep.subr.bf16.mxu0 0
      %503 = vmatpush1.bf16.msra.mxu0 %v458
      %504 = vmatprep.subr.bf16.mxu0 0
      %505 = vmatpush1.bf16.msra.mxu0 %v459
      %506 = vmatprep.subr.bf16.mxu0 0
      %507 = vmatpush1.bf16.msra.mxu0 %v460
      %508 = vmatprep.subr.bf16.mxu0 0
      %509 = vmatpush1.bf16.msra.mxu0 %v461
      %510 = vmatprep.mubr.bf16.mxu0 %v375
      %511 = vmatmul.mubr.bf16.gmra.mrb[0].mxu0 %v374
      %v512 = vpop.f32.mrb[0].mxu0
      %v513 = vadd.f32 0.0, %v512
      %v514 = vpop.f32.mrb[0].mxu0
      %v515 = vpop.f32.mrb[0].mxu0
      %v516 = vadd.f32 0.0, %v515
      %v517 = vpop.f32.mrb[0].mxu0
      %518 = vmatprep.mubr.bf16.mxu0 %v377
      %519 = vmatmul.mubr.bf16.gmra.mrb[0].mxu0 %v376
      %v520 = vpop.f32.mrb[0].mxu0
      %v521 = vadd.f32 0.0, %v520
      %v522 = vpop.f32.mrb[0].mxu0
      %v523 = vpop.f32.mrb[0].mxu0
      %v524 = vadd.f32 0.0, %v523
      %v525 = vpop.f32.mrb[0].mxu0
      %526 = vdwg.mxu0
      %v527 = vadd.f32 %v322, %v513
      %v528 = vadd.f32 %v323, %v516
      %v529 = vadd.f32 %v324, %v521
      %v530 = vadd.f32 %v325, %v524
      %vm531 = vcmask 130048
      %532 = vst.msk [vmem:[#allocation2] sm:$0xff] %vm531, %v527
      %533 = vst.msk [vmem:[#allocation2 + $0x8] sm:$0xff] %vm531, %v528
      %534 = vst.msk [vmem:[#allocation2 + $0x10] sm:$0xff] %vm531, %v529
      %535 = vst.msk [vmem:[#allocation2 + $0x18] sm:$0xff] %vm531, %v530
      // Predicated region
      $region37: #{_lambda_.17} parent=31 // pred_check
        %p536 = pneg %p313
      $region38: #{_lambda_.17} parent=31 // pred_check_branch
        %538 = sbr.rel (%p536) target = $region40
      $region39: #{_lambda_.17} parent=31 // pred_region
        %v539 = vld [vmem:[#allocation2] sm:$0xff]
        %v540 = vld [vmem:[#allocation2 + $0x8] sm:$0xff]
        %v541 = vld [vmem:[#allocation2 + $0x10] sm:$0xff]
        %v542 = vld [vmem:[#allocation2 + $0x18] sm:$0xff]
        %v543 = vld [vmem:[%s298] sm:$0x1]
        %v545 = vlaneseq
        %v546 = vshrl.u32 %v545, 7
        %v547 = vsub.s32 0, %v546
        %v548 = vrot.slane %v543, %v547
        %v550 = vadd.f32 %v539, %v548
        %v551 = vadd.f32 %v540, %v548
        %v552 = vadd.f32 %v541, %v548
        %v553 = vadd.f32 %v542, %v548
        %554 = vst.msk [vmem:[%s310] sm:$0xff] %vm531, %v550
        %555 = vst.msk [vmem:[%s310 + $0x8] sm:$0xff] %vm531, %v551
        %556 = vst.msk [vmem:[%s310 + $0x10] sm:$0xff] %vm531, %v552
        %557 = vst.msk [vmem:[%s310 + $0x18] sm:$0xff] %vm531, %v553
      $region40: #{_lambda_.17} parent=31 // pred_fallthru
        _
      %s558 = smul.u32 4, %s21
      %p559 = scmp.lt.s32.totalorder %s20, 3
      %s560 = scalar_select %p559, %s20, 3
      %p561 = scmp.lt.s32.totalorder %s558, 3
      %s562 = scalar_select %p561, %s558, 3
      %p563 = scmp.lt.s32.totalorder %s22, 0
      %s564 = scalar_select %p563, %s22, 0
      %s565 = sadd.s32 %s564, %s562
      %s566 = smul.addr %s560, 4
      %s567 = sadd.s32 %s565, %s566
      %s568 = smul.addr %s567, 8
      %s569 = scalar_lea.vmem %s3, %s568
      // Predicated region
      $region41: #{_lambda_.17} parent=31 // pred_check
        %p570 = pneg %p148
      $region42: #{_lambda_.17} parent=31 // pred_check_branch
        %572 = sbr.rel (%p570) target = $region44
      $region43: #{_lambda_.17} parent=31 // pred_region
        %s573 = smul.u32 4, %s21
      $region44: #{_lambda_.17} parent=31 // pred_fallthru
        _
    $region32: #{_lambda_.17} parent=5 // pred_fallthru
      _
    %p574 = scmp.le.s32.totalorder 2, %s9
    // Predicated region
    $region45: #{_lambda_.17} parent=5 // pred_check
      %p575 = pneg %p574
    $region46: #{_lambda_.17} parent=5 // pred_check_branch
      %577 = sbr.rel (%p575) target = $region48
    $region47: #{_lambda_.17} parent=5 // pred_region
      %s578 = ssub.s32 %s9, 2
      // Predicated region
      $region49: #{_lambda_.17} parent=47 // pred_check
        %p579 = pneg %p154
      $region50: #{_lambda_.17} parent=47 // pred_check_branch
        %581 = sbr.rel (%p579) target = $region52
      $region51: #{_lambda_.17} parent=47 // pred_region
        %s582 = smul.u32 4, %s25
        %p583 = scmp.lt.s32.totalorder %s24, 3
        %s584 = scalar_select %p583, %s24, 3
        %p585 = scmp.lt.s32.totalorder %s582, 3
        %s586 = scalar_select %p585, %s582, 3
        %p587 = scmp.lt.s32.totalorder %s26, 0
        %s588 = scalar_select %p587, %s26, 0
        %s589 = sadd.s32 %s588, %s586
        %s590 = smul.addr %s584, 4
        %s591 = sadd.s32 %s589, %s590
        %s592 = smul.addr %s591, 8
        %s593 = scalar_lea.vmem %s3, %s592
      $region52: #{_lambda_.17} parent=47 // pred_fallthru
        _
    $region48: #{_lambda_.17} parent=5 // pred_fallthru
      _
  $region6: #{_lambda_.17} parent=0 // loop_footer
    %s13 = sadd.s32 1, %s9
  $region7: #{_lambda_.17} parent=0 // loop_footer_branch
    %8 = sbr.rel target = $region3
  $region8: #{_lambda_.17} parent=0 // loop_exit
    _

// kernel: _lambda_.18
$region0: #{_lambda_.18}
  #allocation0 [shape = 'u32[]', space=smem, size = 0x4, offset = 0x4, fixed_abs, tag = 'smem constant byte address 0x4 - core index']
  #allocation1 [shape = 'u32[144,128]{1,0:T(1,128)}', space=vmem, size = 0x12000, scoped, tag = 'internal scratch']
  #allocation2 [shape = 'f32[128,8]{1,0:T(8,128)}', space=vmem, size = 0x10000, scoped, tag = 'scratch operand']
  %s0 = inlined_call_operand.vmem [shape: bf16[4,128,128], index: 0, kind: input, shape index: {}]
  %s1 = inlined_call_operand.vmem [shape: bf16[4,128,8], index: 1, kind: input, shape index: {}]
  %s2 = inlined_call_operand.vmem [shape: f32[1,8], index: 2, kind: input, shape index: {}]
  %s3 = inlined_call_operand.vmem [shape: f32[4,128,8], index: 3, kind: output, shape index: {}]
  %s4 = sld [smem:[#allocation0]]
  $region53: #{_lambda_.18} parent=0
    _
  %s6 = ssub.s32 1, %s4
  %s7 = scalar_select 0, %s6, %s4
  loop: start=0, step=1, limit=6
  $region2: #{_lambda_.18} parent=0 // loop_pre_header
    _
  $region3: #{_lambda_.18} parent=0 // loop_header
    %s9 = sphi 0, %s13
    %p10 = scmp.ge.s32.totalorder %s9, 6
    %s16 = sphi 0, %s42
    %s17 = sphi 0, %s38
    %s18 = sphi 0, %s34
    %s19 = sphi 0, %s30
    %s20 = sphi 0, %s16
    %s21 = sphi 0, %s17
    %s22 = sphi 0, %s18
    %s23 = sphi 0, %s19
    %s24 = sphi 0, %s20
    %s25 = sphi 0, %s21
    %s26 = sphi 0, %s22
    %s27 = sphi 0, %s23
    %s49 = sphi 0, %s51
    %s52 = sphi 0, %s49
    %s53 = sphi 0, %s52
    %s69 = sphi 0, %s53
    %s79 = sphi 0, %s81
    %s82 = sphi 0, %s79
    %s83 = sphi 0, %s82
    %s99 = sphi 0, %s83
    %s105 = sphi 0, %s107
    %s108 = sphi 0, %s105
    %s109 = sphi 0, %s108
    %s125 = sphi 0, %s109
    %s135 = sphi 0, %s137
    %s138 = sphi 0, %s135
    %s139 = sphi 0, %s138
    %s155 = sphi 0, %s139
  $region4: #{_lambda_.18} parent=0 // loop_header_branch
    %12 = sbr.rel (%p10) target = $region8
  $region5: #{_lambda_.18} parent=0 // loop_body
    %s14 = ssub.s32 %s9, 1
    %s15 = ssub.s32 %s9, 2
    %s28 = sadd.s32 1, %s19
    %p29 = scmp.ge.s32.totalorder %s28, 1
    %s30 = scalar_select %p29, 0, %s28
    %s31 = sadd.s32 1, %s18
    %s32 = scalar_select %p29, %s31, %s18
    %p33 = scmp.ge.s32.totalorder %s32, 1
    %s34 = scalar_select %p33, 0, %s32
    %s35 = sadd.s32 1, %s17
    %s36 = scalar_select %p33, %s35, %s17
    %p37 = scmp.ge.s32.totalorder %s36, 1
    %s38 = scalar_select %p37, 0, %s36
    %s39 = sadd.s32 1, %s16
    %s40 = scalar_select %p37, %s39, %s16
    %p41 = scmp.ge.s32.totalorder %s40, 4
    %s42 = scalar_select %p41, 0, %s40
    %s43 = ssub.s32 %s16, %s42
    %s44 = ssub.s32 %s17, %s38
    %s45 = sor.u32 %s43, %s44
    %s46 = ssub.s32 %s19, %s30
    %s47 = sor.u32 %s45, %s46
    %p48 = scmp.eq.s32.totalorder %s47, 0
    %s50 = sadd.s32 %s49, 1
    %s51 = scalar_select %p48, %s49, %s50
    %p54 = pneg %p48
    %p55 = scmp.eq.s32.totalorder %s9, 3
    %p56 = por %p54, %p55
    %p57 = scmp.ne.s32.totalorder %s49, %s52
    %p58 = scmp.eq.s32.totalorder %s9, 0
    %p59 = por %p57, %p58
    %p60 = scmp.ne.s32.totalorder %s49, %s52
    %p61 = scmp.eq.s32.totalorder %s14, 3
    %p62 = por %p60, %p61
    %p63 = scmp.ne.s32.totalorder %s52, %s53
    %p64 = scmp.eq.s32.totalorder %s14, 0
    %p65 = por %p63, %p64
    %p66 = scmp.ne.s32.totalorder %s52, %s53
    %p67 = scmp.eq.s32.totalorder %s15, 3
    %p68 = por %p66, %p67
    %p70 = scmp.ne.s32.totalorder %s53, %s69
    %p71 = scmp.eq.s32.totalorder %s15, 0
    %p72 = por %p70, %p71
    %s73 = ssub.s32 %s16, %s42
    %s74 = ssub.s32 %s19, %s30
    %s75 = sor.u32 %s73, %s74
    %s76 = ssub.s32 %s18, %s34
    %s77 = sor.u32 %s75, %s76
    %p78 = scmp.eq.s32.totalorder %s77, 0
    %s80 = sadd.s32 %s79, 1
    %s81 = scalar_select %p78, %s79, %s80
    %p84 = pneg %p78
    %p85 = scmp.eq.s32.totalorder %s9, 3
    %p86 = por %p84, %p85
    %p87 = scmp.ne.s32.totalorder %s79, %s82
    %p88 = scmp.eq.s32.totalorder %s9, 0
    %p89 = por %p87, %p88
    %p90 = scmp.ne.s32.totalorder %s79, %s82
    %p91 = scmp.eq.s32.totalorder %s14, 3
    %p92 = por %p90, %p91
    %p93 = scmp.ne.s32.totalorder %s82, %s83
    %p94 = scmp.eq.s32.totalorder %s14, 0
    %p95 = por %p93, %p94
    %p96 = scmp.ne.s32.totalorder %s82, %s83
    %p97 = scmp.eq.s32.totalorder %s15, 3
    %p98 = por %p96, %p97
    %p100 = scmp.ne.s32.totalorder %s83, %s99
    %p101 = scmp.eq.s32.totalorder %s15, 0
    %p102 = por %p100, %p101
    %s103 = ssub.s32 %s18, %s34
    %p104 = scmp.eq.s32.totalorder %s103, 0
    %s106 = sadd.s32 %s105, 1
    %s107 = scalar_select %p104, %s105, %s106
    %p110 = pneg %p104
    %p111 = scmp.eq.s32.totalorder %s9, 3
    %p112 = por %p110, %p111
    %p113 = scmp.ne.s32.totalorder %s105, %s108
    %p114 = scmp.eq.s32.totalorder %s9, 0
    %p115 = por %p113, %p114
    %p116 = scmp.ne.s32.totalorder %s105, %s108
    %p117 = scmp.eq.s32.totalorder %s14, 3
    %p118 = por %p116, %p117
    %p119 = scmp.ne.s32.totalorder %s108, %s109
    %p120 = scmp.eq.s32.totalorder %s14, 0
    %p121 = por %p119, %p120
    %p122 = scmp.ne.s32.totalorder %s108, %s109
    %p123 = scmp.eq.s32.totalorder %s15, 3
    %p124 = por %p122, %p123
    %p126 = scmp.ne.s32.totalorder %s109, %s125
    %p127 = scmp.eq.s32.totalorder %s15, 0
    %p128 = por %p126, %p127
    %s129 = ssub.s32 %s16, %s42
    %s130 = ssub.s32 %s17, %s38
    %s131 = sor.u32 %s129, %s130
    %s132 = ssub.s32 %s18, %s34
    %s133 = sor.u32 %s131, %s132
    %p134 = scmp.eq.s32.totalorder %s133, 0
    %s136 = sadd.s32 %s135, 1
    %s137 = scalar_select %p134, %s135, %s136
    %p140 = pneg %p134
    %p141 = scmp.eq.s32.totalorder %s9, 3
    %p142 = por %p140, %p141
    %p143 = scmp.ne.s32.totalorder %s135, %s138
    %p144 = scmp.eq.s32.totalorder %s9, 0
    %p145 = por %p143, %p144
    %p146 = scmp.ne.s32.totalorder %s135, %s138
    %p147 = scmp.eq.s32.totalorder %s14, 3
    %p148 = por %p146, %p147
    %p149 = scmp.ne.s32.totalorder %s138, %s139
    %p150 = scmp.eq.s32.totalorder %s14, 0
    %p151 = por %p149, %p150
    %p152 = scmp.ne.s32.totalorder %s138, %s139
    %p153 = scmp.eq.s32.totalorder %s15, 3
    %p154 = por %p152, %p153
    %p156 = scmp.ne.s32.totalorder %s139, %s155
    %p157 = scmp.eq.s32.totalorder %s15, 0
    %p158 = por %p156, %p157
    %p159 = scmp.le.s32.totalorder 1, %s9
    %p160 = scmp.lt.s32.totalorder %s9, 5
    %p161 = pnand %p159, %p160
    %p162 = pneg %p161
    // Predicated region
    $region9: #{_lambda_.18} parent=5 // pred_check
      _
    $region10: #{_lambda_.18} parent=5 // pred_check_branch
      %164 = sbr.rel (%p161) target = $region12
    $region11: #{_lambda_.18} parent=5 // pred_region
      %s165 = ssub.s32 %s9, 1
      // Predicated region
      $region13: #{_lambda_.18} parent=11 // pred_check
        %p166 = pneg %p121
      $region14: #{_lambda_.18} parent=11 // pred_check_branch
        %168 = sbr.rel (%p166) target = $region16
      $region15: #{_lambda_.18} parent=11 // pred_region
        %p169 = scmp.lt.s32.totalorder %s22, 0
        %s170 = scalar_select %p169, %s22, 0
        %s171 = scalar_lea.vmem %s2, %s170
      $region16: #{_lambda_.18} parent=11 // pred_fallthru
        _
    $region12: #{_lambda_.18} parent=5 // pred_fallthru
      _
    %p172 = scmp.lt.s32.totalorder %s9, 4
    // Predicated region
    $region17: #{_lambda_.18} parent=5 // pred_check
      %p173 = pneg %p172
    $region18: #{_lambda_.18} parent=5 // pred_check_branch
      %175 = sbr.rel (%p173) target = $region20
    $region19: #{_lambda_.18} parent=5 // pred_region
      // Predicated region
      $region21: #{_lambda_.18} parent=19 // pred_check
        %p176 = pneg %p59
      $region22: #{_lambda_.18} parent=19 // pred_check_branch
        %178 = sbr.rel (%p176) target = $region24
      $region23: #{_lambda_.18} parent=19 // pred_region
        %s179 = smul.u32 16, %s17
        %p180 = scmp.lt.s32.totalorder %s16, 3
        %s181 = scalar_select %p180, %s16, 3
        %p182 = scmp.lt.s32.totalorder %s179, 15
        %s183 = scalar_select %p182, %s179, 15
        %p184 = scmp.lt.s32.totalorder %s19, 0
        %s185 = scalar_select %p184, %s19, 0
        %s186 = sadd.s32 %s185, %s183
        %s187 = smul.addr %s181, 16
        %s188 = sadd.s32 %s186, %s187
        %s189 = smul.addr %s188, 4
        %s190 = scalar_lea.vmem %s0, %s189
        %s191 = smul.u32 16, %s17
      $region24: #{_lambda_.18} parent=19 // pred_fallthru
        _
      // Predicated region
      $region25: #{_lambda_.18} parent=19 // pred_check
        %p192 = pneg %p89
      $region26: #{_lambda_.18} parent=19 // pred_check_branch
        %194 = sbr.rel (%p192) target = $region28
      $region27: #{_lambda_.18} parent=19 // pred_region
        %s195 = smul.u32 16, %s19
        %p196 = scmp.lt.s32.totalorder %s16, 3
        %s197 = scalar_select %p196, %s16, 3
        %p198 = scmp.lt.s32.totalorder %s195, 15
        %s199 = scalar_select %p198, %s195, 15
        %p200 = scmp.lt.s32.totalorder %s18, 0
        %s201 = scalar_select %p200, %s18, 0
        %s202 = sadd.s32 %s201, %s199
        %s203 = smul.addr %s197, 16
        %s204 = sadd.s32 %s202, %s203
        %s205 = smul.addr %s204, 4
        %s206 = scalar_lea.vmem %s1, %s205
        %s207 = smul.u32 16, %s19
      $region28: #{_lambda_.18} parent=19 // pred_fallthru
        _
    $region20: #{_lambda_.18} parent=5 // pred_fallthru
      _
    %p208 = scmp.le.s32.totalorder 1, %s9
    %p209 = scmp.lt.s32.totalorder %s9, 5
    %p210 = pnand %p208, %p209
    %p211 = pneg %p210
    // Predicated region
    $region29: #{_lambda_.18} parent=5 // pred_check
      _
    $region30: #{_lambda_.18} parent=5 // pred_check_branch
      %213 = sbr.rel (%p210) target = $region32
    $region31: #{_lambda_.18} parent=5 // pred_region
      %s214 = ssub.s32 %s9, 1
      %s215 = smul.u32 16, %s21
      %p216 = scmp.lt.s32.totalorder %s20, 3
      %s217 = scalar_select %p216, %s20, 3
      %p218 = scmp.lt.s32.totalorder %s215, 15
      %s219 = scalar_select %p218, %s215, 15
      %p220 = scmp.lt.s32.totalorder %s23, 0
      %s221 = scalar_select %p220, %s23, 0
      %s222 = sadd.s32 %s221, %s219
      %s223 = smul.addr %s217, 16
      %s224 = sadd.s32 %s222, %s223
      %s225 = smul.addr %s224, 4
      %s226 = scalar_lea.vmem %s0, %s225
      %p227 = pneg %p65
      %p228 = pneg %p62
      %s229 = smul.u32 16, %s23
      %p230 = scmp.lt.s32.totalorder %s20, 3
      %s231 = scalar_select %p230, %s20, 3
      %p232 = scmp.lt.s32.totalorder %s229, 15
      %s233 = scalar_select %p232, %s229, 15
      %p234 = scmp.lt.s32.totalorder %s22, 0
      %s235 = scalar_select %p234, %s22, 0
      %s236 = sadd.s32 %s235, %s233
      %s237 = smul.addr %s231, 16
      %s238 = sadd.s32 %s236, %s237
      %s239 = smul.addr %s238, 4
      %s240 = scalar_lea.vmem %s1, %s239
      %p241 = pneg %p95
      %p242 = pneg %p92
      %p243 = scmp.lt.s32.totalorder %s22, 0
      %s244 = scalar_select %p243, %s22, 0
      %s245 = scalar_lea.vmem %s2, %s244
      %p246 = pneg %p121
      %p247 = pneg %p118
      %p248 = pneg %p151
      %p249 = pneg %p148
      %s250 = smul.u32 16, %s21
      %p251 = scmp.lt.s32.totalorder %s20, 3
      %s252 = scalar_select %p251, %s20, 3
      %p253 = scmp.lt.s32.totalorder %s250, 15
      %s254 = scalar_select %p253, %s250, 15
      %p255 = scmp.lt.s32.totalorder %s22, 0
      %s256 = scalar_select %p255, %s22, 0
      %s257 = sadd.s32 %s256, %s254
      %s258 = smul.addr %s252, 16
      %s259 = sadd.s32 %s257, %s258
      %s260 = smul.addr %s259, 8
      %s261 = scalar_lea.vmem %s3, %s260
      %s262 = smul.u32 16, %s21
      %p263 = scmp.lt.s32.totalorder %s20, 3
      %s264 = scalar_select %p263, %s20, 3
      %p265 = scmp.lt.s32.totalorder %s262, 15
      %s266 = scalar_select %p265, %s262, 15
      %p267 = scmp.lt.s32.totalorder %s23, 0
      %s268 = scalar_select %p267, %s23, 0
      %s269 = sadd.s32 %s268, %s266
      %s270 = smul.addr %s264, 16
      %s271 = sadd.s32 %s269, %s270
      %s272 = smul.addr %s271, 4
      %s273 = scalar_lea.vmem %s0, %s272
      %s274 = smul.u32 16, %s21
      %s275 = smul.u32 16, %s23
      %p276 = scmp.lt.s32.totalorder %s20, 3
      %s277 = scalar_select %p276, %s20, 3
      %p278 = scmp.lt.s32.totalorder %s275, 15
      %s279 = scalar_select %p278, %s275, 15
      %p280 = scmp.lt.s32.totalorder %s22, 0
      %s281 = scalar_select %p280, %s22, 0
      %s282 = sadd.s32 %s281, %s279
      %s283 = smul.addr %s277, 16
      %s284 = sadd.s32 %s282, %s283
      %s285 = smul.addr %s284, 4
      %s286 = scalar_lea.vmem %s1, %s285
      %s287 = smul.u32 16, %s23
      %p288 = scmp.lt.s32.totalorder %s22, 0
      %s289 = scalar_select %p288, %s22, 0
      %s290 = scalar_lea.vmem %s2, %s289
      %s291 = smul.u32 16, %s21
      %p292 = scmp.lt.s32.totalorder %s20, 3
      %s293 = scalar_select %p292, %s20, 3
      %p294 = scmp.lt.s32.totalorder %s291, 15
      %s295 = scalar_select %p294, %s291, 15
      %p296 = scmp.lt.s32.totalorder %s22, 0
      %s297 = scalar_select %p296, %s22, 0
      %s298 = sadd.s32 %s297, %s295
      %s299 = smul.addr %s293, 16
      %s300 = sadd.s32 %s298, %s299
      %s301 = smul.addr %s300, 8
      %s302 = scalar_lea.vmem %s3, %s301
      %s303 = smul.u32 16, %s21
      %p305 = scmp.eq.s32.totalorder %s23, 0
      // Predicated region
      $region33: #{_lambda_.18} parent=31 // pred_check
        %p306 = pneg %p305
      $region34: #{_lambda_.18} parent=31 // pred_check_branch
        %308 = sbr.rel (%p306) target = $region36
      $region35: #{_lambda_.18} parent=31 // pred_region
        %vm309 = vcmask 64512
        %310 = vst.msk [vmem:[#allocation2] sm:$0xff] %vm309, 0.0
        %311 = vst.msk [vmem:[#allocation2 + $0x8] sm:$0xff] %vm309, 0.0
        %312 = vst.msk [vmem:[#allocation2 + $0x10] sm:$0xff] %vm309, 0.0
        %313 = vst.msk [vmem:[#allocation2 + $0x18] sm:$0xff] %vm309, 0.0
        %314 = vst.msk [vmem:[#allocation2 + $0x20] sm:$0xff] %vm309, 0.0
        %315 = vst.msk [vmem:[#allocation2 + $0x28] sm:$0xff] %vm309, 0.0
        %316 = vst.msk [vmem:[#allocation2 + $0x30] sm:$0xff] %vm309, 0.0
        %317 = vst.msk [vmem:[#allocation2 + $0x38] sm:$0xff] %vm309, 0.0
        %318 = vst.msk [vmem:[#allocation2 + $0x40] sm:$0xff] %vm309, 0.0
        %319 = vst.msk [vmem:[#allocation2 + $0x48] sm:$0xff] %vm309, 0.0
        %320 = vst.msk [vmem:[#allocation2 + $0x50] sm:$0xff] %vm309, 0.0
        %321 = vst.msk [vmem:[#allocation2 + $0x58] sm:$0xff] %vm309, 0.0
        %322 = vst.msk [vmem:[#allocation2 + $0x60] sm:$0xff] %vm309, 0.0
        %323 = vst.msk [vmem:[#allocation2 + $0x68] sm:$0xff] %vm309, 0.0
        %324 = vst.msk [vmem:[#allocation2 + $0x70] sm:$0xff] %vm309, 0.0
        %325 = vst.msk [vmem:[#allocation2 + $0x78] sm:$0xff] %vm309, 0.0
      $region36: #{_lambda_.18} parent=31 // pred_fallthru
        _
      %v326 = vld [vmem:[#allocation2] sm:$0xff]
      %v327 = vld [vmem:[#allocation2 + $0x8] sm:$0xff]
      %v328 = vld [vmem:[#allocation2 + $0x10] sm:$0xff]
      %v329 = vld [vmem:[#allocation2 + $0x18] sm:$0xff]
      %v330 = vld [vmem:[#allocation2 + $0x20] sm:$0xff]
      %v331 = vld [vmem:[#allocation2 + $0x28] sm:$0xff]
      %v332 = vld [vmem:[#allocation2 + $0x30] sm:$0xff]
      %v333 = vld [vmem:[#allocation2 + $0x38] sm:$0xff]
      %v334 = vld [vmem:[#allocation2 + $0x40] sm:$0xff]
      %v335 = vld [vmem:[#allocation2 + $0x48] sm:$0xff]
      %v336 = vld [vmem:[#allocation2 + $0x50] sm:$0xff]
      %v337 = vld [vmem:[#allocation2 + $0x58] sm:$0xff]
      %v338 = vld [vmem:[#allocation2 + $0x60] sm:$0xff]
      %v339 = vld [vmem:[#allocation2 + $0x68] sm:$0xff]
      %v340 = vld [vmem:[#allocation2 + $0x70] sm:$0xff]
      %v341 = vld [vmem:[#allocation2 + $0x78] sm:$0xff]
      %v342 = vld [vmem:[%s273] sm:$0xf]
      %v343 = vld [vmem:[%s273 + $0x4] sm:$0xf]
      %v344 = vld [vmem:[%s273 + $0x8] sm:$0xf]
      %v345 = vld [vmem:[%s273 + $0xc] sm:$0xf]
      %v346 = vld [vmem:[%s273 + $0x10] sm:$0xf]
      %v347 = vld [vmem:[%s273 + $0x14] sm:$0xf]
      %v348 = vld [vmem:[%s273 + $0x18] sm:$0xf]
      %v349 = vld [vmem:[%s273 + $0x1c] sm:$0xf]
      %v350 = vld [vmem:[%s273 + $0x20] sm:$0xf]
      %v351 = vld [vmem:[%s273 + $0x24] sm:$0xf]
      %v352 = vld [vmem:[%s273 + $0x28] sm:$0xf]
      %v353 = vld [vmem:[%s273 + $0x2c] sm:$0xf]
      %v354 = vld [vmem:[%s273 + $0x30] sm:$0xf]
      %v355 = vld [vmem:[%s273 + $0x34] sm:$0xf]
      %v356 = vld [vmem:[%s273 + $0x38] sm:$0xf]
      %v357 = vld [vmem:[%s273 + $0x3c] sm:$0xf]
      %v358 = vld [vmem:[%s286] sm:$0xf]
      %v359 = vld [vmem:[%s286 + $0x4] sm:$0xf]
      %v360 = vld [vmem:[%s286 + $0x8] sm:$0xf]
      %v361 = vld [vmem:[%s286 + $0xc] sm:$0xf]
      %v362 = vld [vmem:[%s286 + $0x10] sm:$0xf]
      %v363 = vld [vmem:[%s286 + $0x14] sm:$0xf]
      %v364 = vld [vmem:[%s286 + $0x18] sm:$0xf]
      %v365 = vld [vmem:[%s286 + $0x1c] sm:$0xf]
      %v366 = vld [vmem:[%s286 + $0x20] sm:$0xf]
      %v367 = vld [vmem:[%s286 + $0x24] sm:$0xf]
      %v368 = vld [vmem:[%s286 + $0x28] sm:$0xf]
      %v369 = vld [vmem:[%s286 + $0x2c] sm:$0xf]
      %v370 = vld [vmem:[%s286 + $0x30] sm:$0xf]
      %v371 = vld [vmem:[%s286 + $0x34] sm:$0xf]
      %v372 = vld [vmem:[%s286 + $0x38] sm:$0xf]
      %v373 = vld [vmem:[%s286 + $0x3c] sm:$0xf]
      %v390 = vunpack.c.l.b16 %v342
      %v391 = vunpack.c.l.b16 %v343
      %v392 = vunpack.c.l.b16 %v344
      %v393 = vunpack.c.l.b16 %v345
      %v394 = vunpack.c.l.b16 %v346
      %v395 = vunpack.c.l.b16 %v347
      %v396 = vunpack.c.l.b16 %v348
      %v397 = vunpack.c.l.b16 %v349
      %v398 = vunpack.c.l.b16 %v350
      %v399 = vunpack.c.l.b16 %v351
      %v400 = vunpack.c.l.b16 %v352
      %v401 = vunpack.c.l.b16 %v353
      %v402 = vunpack.c.l.b16 %v354
      %v403 = vunpack.c.l.b16 %v355
      %v404 = vunpack.c.l.b16 %v356
      %v405 = vunpack.c.l.b16 %v357
      %v406 = vpack.c.b16 %v391, %v390
      %v407 = vpack.c.b16 %v393, %v392
      %v408 = vpack.c.b16 %v395, %v394
      %v409 = vpack.c.b16 %v397, %v396
      %v410 = vpack.c.b16 %v399, %v398
      %v411 = vpack.c.b16 %v401, %v400
      %v412 = vpack.c.b16 %v403, %v402
      %v413 = vpack.c.b16 %v405, %v404
      %v438 = vunpack.c.l.b16 %v358
      %v439 = vunpack.c.l.b16 %v359
      %v440 = vunpack.c.l.b16 %v360
      %v441 = vunpack.c.l.b16 %v361
      %v442 = vunpack.c.l.b16 %v362
      %v443 = vunpack.c.l.b16 %v363
      %v444 = vunpack.c.l.b16 %v364
      %v445 = vunpack.c.l.b16 %v365
      %v446 = vunpack.c.l.b16 %v366
      %v447 = vunpack.c.l.b16 %v367
      %v448 = vunpack.c.l.b16 %v368
      %v449 = vunpack.c.l.b16 %v369
      %v450 = vunpack.c.l.b16 %v370
      %v451 = vunpack.c.l.b16 %v371
      %v452 = vunpack.c.l.b16 %v372
      %v453 = vunpack.c.l.b16 %v373
      %v454 = vpack.c.b16 %v439, %v438
      %v455 = vpack.c.b16 %v441, %v440
      %v456 = vpack.c.b16 %v443, %v442
      %v457 = vpack.c.b16 %v445, %v444
      %v458 = vpack.c.b16 %v447, %v446
      %v459 = vpack.c.b16 %v449, %v448
      %v460 = vpack.c.b16 %v451, %v450
      %v461 = vpack.c.b16 %v453, %v452
      %470 = vmatprep.subr.bf16.mxu0 0
      %471 = vmatpush1.bf16.msra.mxu0 %v454
      %472 = vmatprep.subr.bf16.mxu0 0
      %473 = vmatpush1.bf16.msra.mxu0 %v455
      %474 = vmatprep.subr.bf16.mxu0 0
      %475 = vmatpush1.bf16.msra.mxu0 %v456
      %476 = vmatprep.subr.bf16.mxu0 0
      %477 = vmatpush1.bf16.msra.mxu0 %v457
      %478 = vmatprep.subr.bf16.mxu0 0
      %479 = vmatpush1.bf16.msra.mxu0 %v458
      %480 = vmatprep.subr.bf16.mxu0 0
      %481 = vmatpush1.bf16.msra.mxu0 %v459
      %482 = vmatprep.subr.bf16.mxu0 0
      %483 = vmatpush1.bf16.msra.mxu0 %v460
      %484 = vmatprep.subr.bf16.mxu0 0
      %485 = vmatpush1.bf16.msra.mxu0 %v461
      %486 = vmatprep.subr.bf16.mxu0 0
      %487 = vmatpush1.bf16.msra.mxu0 0
      %488 = vmatprep.subr.bf16.mxu0 0
      %489 = vmatpush1.bf16.msra.mxu0 0
      %490 = vmatprep.subr.bf16.mxu0 0
      %491 = vmatpush1.bf16.msra.mxu0 0
      %492 = vmatprep.subr.bf16.mxu0 0
      %493 = vmatpush1.bf16.msra.mxu0 0
      %494 = vmatprep.subr.bf16.mxu0 0
      %495 = vmatpush1.bf16.msra.mxu0 0
      %496 = vmatprep.subr.bf16.mxu0 0
      %497 = vmatpush1.bf16.msra.mxu0 0
      %498 = vmatprep.subr.bf16.mxu0 0
      %499 = vmatpush1.bf16.msra.mxu0 0
      %500 = vmatprep.subr.bf16.mxu0 0
      %501 = vmatpush1.bf16.msra.mxu0 0
      %502 = vmatprep.mubr.bf16.mxu0 0
      %503 = vmatmul.mubr.bf16.gmra.mrb[0].mxu0 %v406
      %v504 = vpop.f32.mrb[0].mxu0
      %v505 = vadd.f32 0.0, %v504
      %v506 = vpop.f32.mrb[0].mxu0
      %v507 = vpop.f32.mrb[0].mxu0
      %v508 = vadd.f32 0.0, %v507
      %v509 = vpop.f32.mrb[0].mxu0
      %510 = vmatprep.mubr.bf16.mxu0 0
      %511 = vmatmul.mubr.bf16.gmra.mrb[0].mxu0 %v407
      %v512 = vpop.f32.mrb[0].mxu0
      %v513 = vadd.f32 0.0, %v512
      %v514 = vpop.f32.mrb[0].mxu0
      %v515 = vpop.f32.mrb[0].mxu0
      %v516 = vadd.f32 0.0, %v515
      %v517 = vpop.f32.mrb[0].mxu0
      %518 = vmatprep.mubr.bf16.mxu0 0
      %519 = vmatmul.mubr.bf16.gmra.mrb[0].mxu0 %v408
      %v520 = vpop.f32.mrb[0].mxu0
      %v521 = vadd.f32 0.0, %v520
      %v522 = vpop.f32.mrb[0].mxu0
      %v523 = vpop.f32.mrb[0].mxu0
      %v524 = vadd.f32 0.0, %v523
      %v525 = vpop.f32.mrb[0].mxu0
      %526 = vmatprep.mubr.bf16.mxu0 0
      %527 = vmatmul.mubr.bf16.gmra.mrb[0].mxu0 %v409
      %v528 = vpop.f32.mrb[0].mxu0
      %v529 = vadd.f32 0.0, %v528
      %v530 = vpop.f32.mrb[0].mxu0
      %v531 = vpop.f32.mrb[0].mxu0
      %v532 = vadd.f32 0.0, %v531
      %v533 = vpop.f32.mrb[0].mxu0
      %534 = vmatprep.mubr.bf16.mxu0 0
      %535 = vmatmul.mubr.bf16.gmra.mrb[0].mxu0 %v410
      %v536 = vpop.f32.mrb[0].mxu0
      %v537 = vadd.f32 0.0, %v536
      %v538 = vpop.f32.mrb[0].mxu0
      %v539 = vpop.f32.mrb[0].mxu0
      %v540 = vadd.f32 0.0, %v539
      %v541 = vpop.f32.mrb[0].mxu0
      %542 = vmatprep.mubr.bf16.mxu0 0
      %543 = vmatmul.mubr.bf16.gmra.mrb[0].mxu0 %v411
      %v544 = vpop.f32.mrb[0].mxu0
      %v545 = vadd.f32 0.0, %v544
      %v546 = vpop.f32.mrb[0].mxu0
      %v547 = vpop.f32.mrb[0].mxu0
      %v548 = vadd.f32 0.0, %v547
      %v549 = vpop.f32.mrb[0].mxu0
      %550 = vmatprep.mubr.bf16.mxu0 0
      %551 = vmatmul.mubr.bf16.gmra.mrb[0].mxu0 %v412
      %v552 = vpop.f32.mrb[0].mxu0
      %v553 = vadd.f32 0.0, %v552
      %v554 = vpop.f32.mrb[0].mxu0
      %v555 = vpop.f32.mrb[0].mxu0
      %v556 = vadd.f32 0.0, %v555
      %v557 = vpop.f32.mrb[0].mxu0
      %558 = vmatprep.mubr.bf16.mxu0 0
      %559 = vmatmul.mubr.bf16.gmra.mrb[0].mxu0 %v413
      %v560 = vpop.f32.mrb[0].mxu0
      %v561 = vadd.f32 0.0, %v560
      %v562 = vpop.f32.mrb[0].mxu0
      %v563 = vpop.f32.mrb[0].mxu0
      %v564 = vadd.f32 0.0, %v563
      %v565 = vpop.f32.mrb[0].mxu0
      %566 = vdwg.mxu0
      %v567 = vadd.f32 %v326, %v505
      %v568 = vadd.f32 %v327, %v508
      %v569 = vadd.f32 %v328, %v513
      %v570 = vadd.f32 %v329, %v516
      %v571 = vadd.f32 %v330, %v521
      %v572 = vadd.f32 %v331, %v524
      %v573 = vadd.f32 %v332, %v529
      %v574 = vadd.f32 %v333, %v532
      %v575 = vadd.f32 %v334, %v537
      %v576 = vadd.f32 %v335, %v540
      %v577 = vadd.f32 %v336, %v545
      %v578 = vadd.f32 %v337, %v548
      %v579 = vadd.f32 %v338, %v553
      %v580 = vadd.f32 %v339, %v556
      %v581 = vadd.f32 %v340, %v561
      %v582 = vadd.f32 %v341, %v564
      %vm583 = vcmask 64512
      %584 = vst.msk [vmem:[#allocation2] sm:$0xff] %vm583, %v567
      %585 = vst.msk [vmem:[#allocation2 + $0x8] sm:$0xff] %vm583, %v568
      %586 = vst.msk [vmem:[#allocation2 + $0x10] sm:$0xff] %vm583, %v569
      %587 = vst.msk [vmem:[#allocation2 + $0x18] sm:$0xff] %vm583, %v570
      %588 = vst.msk [vmem:[#allocation2 + $0x20] sm:$0xff] %vm583, %v571
      %589 = vst.msk [vmem:[#allocation2 + $0x28] sm:$0xff] %vm583, %v572
      %590 = vst.msk [vmem:[#allocation2 + $0x30] sm:$0xff] %vm583, %v573
      %591 = vst.msk [vmem:[#allocation2 + $0x38] sm:$0xff] %vm583, %v574
      %592 = vst.msk [vmem:[#allocation2 + $0x40] sm:$0xff] %vm583, %v575
      %593 = vst.msk [vmem:[#allocation2 + $0x48] sm:$0xff] %vm583, %v576
      %594 = vst.msk [vmem:[#allocation2 + $0x50] sm:$0xff] %vm583, %v577
      %595 = vst.msk [vmem:[#allocation2 + $0x58] sm:$0xff] %vm583, %v578
      %596 = vst.msk [vmem:[#allocation2 + $0x60] sm:$0xff] %vm583, %v579
      %597 = vst.msk [vmem:[#allocation2 + $0x68] sm:$0xff] %vm583, %v580
      %598 = vst.msk [vmem:[#allocation2 + $0x70] sm:$0xff] %vm583, %v581
      %599 = vst.msk [vmem:[#allocation2 + $0x78] sm:$0xff] %vm583, %v582
      // Predicated region
      $region37: #{_lambda_.18} parent=31 // pred_check
        %p600 = pneg %p305
      $region38: #{_lambda_.18} parent=31 // pred_check_branch
        %602 = sbr.rel (%p600) target = $region40
      $region39: #{_lambda_.18} parent=31 // pred_region
        %v603 = vld [vmem:[#allocation2] sm:$0xff]
        %v604 = vld [vmem:[#allocation2 + $0x8] sm:$0xff]
        %v605 = vld [vmem:[#allocation2 + $0x10] sm:$0xff]
        %v606 = vld [vmem:[#allocation2 + $0x18] sm:$0xff]
        %v607 = vld [vmem:[#allocation2 + $0x20] sm:$0xff]
        %v608 = vld [vmem:[#allocation2 + $0x28] sm:$0xff]
        %v609 = vld [vmem:[#allocation2 + $0x30] sm:$0xff]
        %v610 = vld [vmem:[#allocation2 + $0x38] sm:$0xff]
        %v611 = vld [vmem:[#allocation2 + $0x40] sm:$0xff]
        %v612 = vld [vmem:[#allocation2 + $0x48] sm:$0xff]
        %v613 = vld [vmem:[#allocation2 + $0x50] sm:$0xff]
        %v614 = vld [vmem:[#allocation2 + $0x58] sm:$0xff]
        %v615 = vld [vmem:[#allocation2 + $0x60] sm:$0xff]
        %v616 = vld [vmem:[#allocation2 + $0x68] sm:$0xff]
        %v617 = vld [vmem:[#allocation2 + $0x70] sm:$0xff]
        %v618 = vld [vmem:[#allocation2 + $0x78] sm:$0xff]
        %v619 = vld [vmem:[%s290] sm:$0x1]
        %v621 = vlaneseq
        %v622 = vshrl.u32 %v621, 7
        %v623 = vsub.s32 0, %v622
        %v624 = vrot.slane %v619, %v623
        %v626 = vadd.f32 %v603, %v624
        %v627 = vadd.f32 %v604, %v624
        %v628 = vadd.f32 %v605, %v624
        %v629 = vadd.f32 %v606, %v624
        %v630 = vadd.f32 %v607, %v624
        %v631 = vadd.f32 %v608, %v624
        %v632 = vadd.f32 %v609, %v624
        %v633 = vadd.f32 %v610, %v624
        %v634 = vadd.f32 %v611, %v624
        %v635 = vadd.f32 %v612, %v624
        %v636 = vadd.f32 %v613, %v624
        %v637 = vadd.f32 %v614, %v624
        %v638 = vadd.f32 %v615, %v624
        %v639 = vadd.f32 %v616, %v624
        %v640 = vadd.f32 %v617, %v624
        %v641 = vadd.f32 %v618, %v624
        %642 = vst.msk [vmem:[%s302] sm:$0xff] %vm583, %v626
        %643 = vst.msk [vmem:[%s302 + $0x8] sm:$0xff] %vm583, %v627
        %644 = vst.msk [vmem:[%s302 + $0x10] sm:$0xff] %vm583, %v628
        %645 = vst.msk [vmem:[%s302 + $0x18] sm:$0xff] %vm583, %v629
        %646 = vst.msk [vmem:[%s302 + $0x20] sm:$0xff] %vm583, %v630
        %647 = vst.msk [vmem:[%s302 + $0x28] sm:$0xff] %vm583, %v631
        %648 = vst.msk [vmem:[%s302 + $0x30] sm:$0xff] %vm583, %v632
        %649 = vst.msk [vmem:[%s302 + $0x38] sm:$0xff] %vm583, %v633
        %650 = vst.msk [vmem:[%s302 + $0x40] sm:$0xff] %vm583, %v634
        %651 = vst.msk [vmem:[%s302 + $0x48] sm:$0xff] %vm583, %v635
        %652 = vst.msk [vmem:[%s302 + $0x50] sm:$0xff] %vm583, %v636
        %653 = vst.msk [vmem:[%s302 + $0x58] sm:$0xff] %vm583, %v637
        %654 = vst.msk [vmem:[%s302 + $0x60] sm:$0xff] %vm583, %v638
        %655 = vst.msk [vmem:[%s302 + $0x68] sm:$0xff] %vm583, %v639
        %656 = vst.msk [vmem:[%s302 + $0x70] sm:$0xff] %vm583, %v640
        %657 = vst.msk [vmem:[%s302 + $0x78] sm:$0xff] %vm583, %v641
      $region40: #{_lambda_.18} parent=31 // pred_fallthru
        _
      %s658 = smul.u32 16, %s21
      %p659 = scmp.lt.s32.totalorder %s20, 3
      %s660 = scalar_select %p659, %s20, 3
      %p661 = scmp.lt.s32.totalorder %s658, 15
      %s662 = scalar_select %p661, %s658, 15
      %p663 = scmp.lt.s32.totalorder %s22, 0
      %s664 = scalar_select %p663, %s22, 0
      %s665 = sadd.s32 %s664, %s662
      %s666 = smul.addr %s660, 16
      %s667 = sadd.s32 %s665, %s666
      %s668 = smul.addr %s667, 8
      %s669 = scalar_lea.vmem %s3, %s668
      // Predicated region
      $region41: #{_lambda_.18} parent=31 // pred_check
        %p670 = pneg %p148
      $region42: #{_lambda_.18} parent=31 // pred_check_branch
        %672 = sbr.rel (%p670) target = $region44
      $region43: #{_lambda_.18} parent=31 // pred_region
        %s673 = smul.u32 16, %s21
      $region44: #{_lambda_.18} parent=31 // pred_fallthru
        _
    $region32: #{_lambda_.18} parent=5 // pred_fallthru
      _
    %p674 = scmp.le.s32.totalorder 2, %s9
    // Predicated region
    $region45: #{_lambda_.18} parent=5 // pred_check
      %p675 = pneg %p674
    $region46: #{_lambda_.18} parent=5 // pred_check_branch
      %677 = sbr.rel (%p675) target = $region48
    $region47: #{_lambda_.18} parent=5 // pred_region
      %s678 = ssub.s32 %s9, 2
      // Predicated region
      $region49: #{_lambda_.18} parent=47 // pred_check
        %p679 = pneg %p154
      $region50: #{_lambda_.18} parent=47 // pred_check_branch
        %681 = sbr.rel (%p679) target = $region52
      $region51: #{_lambda_.18} parent=47 // pred_region
        %s682 = smul.u32 16, %s25
        %p683 = scmp.lt.s32.totalorder %s24, 3
        %s684 = scalar_select %p683, %s24, 3
        %p685 = scmp.lt.s32.totalorder %s682, 15
        %s686 = scalar_select %p685, %s682, 15
        %p687 = scmp.lt.s32.totalorder %s26, 0
        %s688 = scalar_select %p687, %s26, 0
        %s689 = sadd.s32 %s688, %s686
        %s690 = smul.addr %s684, 16
        %s691 = sadd.s32 %s689, %s690
        %s692 = smul.addr %s691, 8
        %s693 = scalar_lea.vmem %s3, %s692
      $region52: #{_lambda_.18} parent=47 // pred_fallthru
        _
    $region48: #{_lambda_.18} parent=5 // pred_fallthru
      _
  $region6: #{_lambda_.18} parent=0 // loop_footer
    %s13 = sadd.s32 1, %s9
  $region7: #{_lambda_.18} parent=0 // loop_footer_branch
    %8 = sbr.rel target = $region3
  $region8: #{_lambda_.18} parent=0 // loop_exit
    _

// kernel: _lambda_.19
$region0: #{_lambda_.19}
  #allocation0 [shape = 'u32[]', space=smem, size = 0x4, offset = 0x4, fixed_abs, tag = 'smem constant byte address 0x4 - core index']
  #allocation1 [shape = 'u32[144,128]{1,0:T(1,128)}', space=vmem, size = 0x12000, scoped, tag = 'internal scratch']
  #allocation2 [shape = 'f32[256,3]{1,0:T(8,128)}', space=vmem, size = 0x20000, scoped, tag = 'scratch operand']
  %s0 = inlined_call_operand.vmem [shape: bf16[4,512,64], index: 0, kind: input, shape index: {}]
  %s1 = inlined_call_operand.vmem [shape: bf16[4,64,3], index: 1, kind: input, shape index: {}]
  %s2 = inlined_call_operand.vmem [shape: f32[1,3], index: 2, kind: input, shape index: {}]
  %s3 = inlined_call_operand.vmem [shape: f32[4,512,3], index: 3, kind: output, shape index: {}]
  %s4 = sld [smem:[#allocation0]]
  $region53: #{_lambda_.19} parent=0
    _
  %s6 = ssub.s32 1, %s4
  %s7 = scalar_select 0, %s6, %s4
  loop: start=0, step=1, limit=10
  $region2: #{_lambda_.19} parent=0 // loop_pre_header
    _
  $region3: #{_lambda_.19} parent=0 // loop_header
    %s9 = sphi 0, %s13
    %p10 = scmp.ge.s32.totalorder %s9, 10
    %s16 = sphi 0, %s42
    %s17 = sphi 0, %s38
    %s18 = sphi 0, %s34
    %s19 = sphi 0, %s30
    %s20 = sphi 0, %s16
    %s21 = sphi 0, %s17
    %s22 = sphi 0, %s18
    %s23 = sphi 0, %s19
    %s24 = sphi 0, %s20
    %s25 = sphi 0, %s21
    %s26 = sphi 0, %s22
    %s27 = sphi 0, %s23
    %s49 = sphi 0, %s51
    %s52 = sphi 0, %s49
    %s53 = sphi 0, %s52
    %s69 = sphi 0, %s53
    %s79 = sphi 0, %s81
    %s82 = sphi 0, %s79
    %s83 = sphi 0, %s82
    %s99 = sphi 0, %s83
    %s105 = sphi 0, %s107
    %s108 = sphi 0, %s105
    %s109 = sphi 0, %s108
    %s125 = sphi 0, %s109
    %s135 = sphi 0, %s137
    %s138 = sphi 0, %s135
    %s139 = sphi 0, %s138
    %s155 = sphi 0, %s139
  $region4: #{_lambda_.19} parent=0 // loop_header_branch
    %12 = sbr.rel (%p10) target = $region8
  $region5: #{_lambda_.19} parent=0 // loop_body
    %s14 = ssub.s32 %s9, 1
    %s15 = ssub.s32 %s9, 2
    %s28 = sadd.s32 1, %s19
    %p29 = scmp.ge.s32.totalorder %s28, 1
    %s30 = scalar_select %p29, 0, %s28
    %s31 = sadd.s32 1, %s18
    %s32 = scalar_select %p29, %s31, %s18
    %p33 = scmp.ge.s32.totalorder %s32, 1
    %s34 = scalar_select %p33, 0, %s32
    %s35 = sadd.s32 1, %s17
    %s36 = scalar_select %p33, %s35, %s17
    %p37 = scmp.ge.s32.totalorder %s36, 2
    %s38 = scalar_select %p37, 0, %s36
    %s39 = sadd.s32 1, %s16
    %s40 = scalar_select %p37, %s39, %s16
    %p41 = scmp.ge.s32.totalorder %s40, 4
    %s42 = scalar_select %p41, 0, %s40
    %s43 = ssub.s32 %s16, %s42
    %s44 = ssub.s32 %s17, %s38
    %s45 = sor.u32 %s43, %s44
    %s46 = ssub.s32 %s19, %s30
    %s47 = sor.u32 %s45, %s46
    %p48 = scmp.eq.s32.totalorder %s47, 0
    %s50 = sadd.s32 %s49, 1
    %s51 = scalar_select %p48, %s49, %s50
    %p54 = pneg %p48
    %p55 = scmp.eq.s32.totalorder %s9, 7
    %p56 = por %p54, %p55
    %p57 = scmp.ne.s32.totalorder %s49, %s52
    %p58 = scmp.eq.s32.totalorder %s9, 0
    %p59 = por %p57, %p58
    %p60 = scmp.ne.s32.totalorder %s49, %s52
    %p61 = scmp.eq.s32.totalorder %s14, 7
    %p62 = por %p60, %p61
    %p63 = scmp.ne.s32.totalorder %s52, %s53
    %p64 = scmp.eq.s32.totalorder %s14, 0
    %p65 = por %p63, %p64
    %p66 = scmp.ne.s32.totalorder %s52, %s53
    %p67 = scmp.eq.s32.totalorder %s15, 7
    %p68 = por %p66, %p67
    %p70 = scmp.ne.s32.totalorder %s53, %s69
    %p71 = scmp.eq.s32.totalorder %s15, 0
    %p72 = por %p70, %p71
    %s73 = ssub.s32 %s16, %s42
    %s74 = ssub.s32 %s19, %s30
    %s75 = sor.u32 %s73, %s74
    %s76 = ssub.s32 %s18, %s34
    %s77 = sor.u32 %s75, %s76
    %p78 = scmp.eq.s32.totalorder %s77, 0
    %s80 = sadd.s32 %s79, 1
    %s81 = scalar_select %p78, %s79, %s80
    %p84 = pneg %p78
    %p85 = scmp.eq.s32.totalorder %s9, 7
    %p86 = por %p84, %p85
    %p87 = scmp.ne.s32.totalorder %s79, %s82
    %p88 = scmp.eq.s32.totalorder %s9, 0
    %p89 = por %p87, %p88
    %p90 = scmp.ne.s32.totalorder %s79, %s82
    %p91 = scmp.eq.s32.totalorder %s14, 7
    %p92 = por %p90, %p91
    %p93 = scmp.ne.s32.totalorder %s82, %s83
    %p94 = scmp.eq.s32.totalorder %s14, 0
    %p95 = por %p93, %p94
    %p96 = scmp.ne.s32.totalorder %s82, %s83
    %p97 = scmp.eq.s32.totalorder %s15, 7
    %p98 = por %p96, %p97
    %p100 = scmp.ne.s32.totalorder %s83, %s99
    %p101 = scmp.eq.s32.totalorder %s15, 0
    %p102 = por %p100, %p101
    %s103 = ssub.s32 %s18, %s34
    %p104 = scmp.eq.s32.totalorder %s103, 0
    %s106 = sadd.s32 %s105, 1
    %s107 = scalar_select %p104, %s105, %s106
    %p110 = pneg %p104
    %p111 = scmp.eq.s32.totalorder %s9, 7
    %p112 = por %p110, %p111
    %p113 = scmp.ne.s32.totalorder %s105, %s108
    %p114 = scmp.eq.s32.totalorder %s9, 0
    %p115 = por %p113, %p114
    %p116 = scmp.ne.s32.totalorder %s105, %s108
    %p117 = scmp.eq.s32.totalorder %s14, 7
    %p118 = por %p116, %p117
    %p119 = scmp.ne.s32.totalorder %s108, %s109
    %p120 = scmp.eq.s32.totalorder %s14, 0
    %p121 = por %p119, %p120
    %p122 = scmp.ne.s32.totalorder %s108, %s109
    %p123 = scmp.eq.s32.totalorder %s15, 7
    %p124 = por %p122, %p123
    %p126 = scmp.ne.s32.totalorder %s109, %s125
    %p127 = scmp.eq.s32.totalorder %s15, 0
    %p128 = por %p126, %p127
    %s129 = ssub.s32 %s16, %s42
    %s130 = ssub.s32 %s17, %s38
    %s131 = sor.u32 %s129, %s130
    %s132 = ssub.s32 %s18, %s34
    %s133 = sor.u32 %s131, %s132
    %p134 = scmp.eq.s32.totalorder %s133, 0
    %s136 = sadd.s32 %s135, 1
    %s137 = scalar_select %p134, %s135, %s136
    %p140 = pneg %p134
    %p141 = scmp.eq.s32.totalorder %s9, 7
    %p142 = por %p140, %p141
    %p143 = scmp.ne.s32.totalorder %s135, %s138
    %p144 = scmp.eq.s32.totalorder %s9, 0
    %p145 = por %p143, %p144
    %p146 = scmp.ne.s32.totalorder %s135, %s138
    %p147 = scmp.eq.s32.totalorder %s14, 7
    %p148 = por %p146, %p147
    %p149 = scmp.ne.s32.totalorder %s138, %s139
    %p150 = scmp.eq.s32.totalorder %s14, 0
    %p151 = por %p149, %p150
    %p152 = scmp.ne.s32.totalorder %s138, %s139
    %p153 = scmp.eq.s32.totalorder %s15, 7
    %p154 = por %p152, %p153
    %p156 = scmp.ne.s32.totalorder %s139, %s155
    %p157 = scmp.eq.s32.totalorder %s15, 0
    %p158 = por %p156, %p157
    %p159 = scmp.le.s32.totalorder 1, %s9
    %p160 = scmp.lt.s32.totalorder %s9, 9
    %p161 = pnand %p159, %p160
    %p162 = pneg %p161
    // Predicated region
    $region9: #{_lambda_.19} parent=5 // pred_check
      _
    $region10: #{_lambda_.19} parent=5 // pred_check_branch
      %164 = sbr.rel (%p161) target = $region12
    $region11: #{_lambda_.19} parent=5 // pred_region
      %s165 = ssub.s32 %s9, 1
      // Predicated region
      $region13: #{_lambda_.19} parent=11 // pred_check
        %p166 = pneg %p121
      $region14: #{_lambda_.19} parent=11 // pred_check_branch
        %168 = sbr.rel (%p166) target = $region16
      $region15: #{_lambda_.19} parent=11 // pred_region
        %p169 = scmp.lt.s32.totalorder %s22, 0
        %s170 = scalar_select %p169, %s22, 0
        %s171 = scalar_lea.vmem %s2, %s170
      $region16: #{_lambda_.19} parent=11 // pred_fallthru
        _
    $region12: #{_lambda_.19} parent=5 // pred_fallthru
      _
    %p172 = scmp.lt.s32.totalorder %s9, 8
    // Predicated region
    $region17: #{_lambda_.19} parent=5 // pred_check
      %p173 = pneg %p172
    $region18: #{_lambda_.19} parent=5 // pred_check_branch
      %175 = sbr.rel (%p173) target = $region20
    $region19: #{_lambda_.19} parent=5 // pred_region
      // Predicated region
      $region21: #{_lambda_.19} parent=19 // pred_check
        %p176 = pneg %p59
      $region22: #{_lambda_.19} parent=19 // pred_check_branch
        %178 = sbr.rel (%p176) target = $region24
      $region23: #{_lambda_.19} parent=19 // pred_region
        %s179 = smul.u32 32, %s17
        %p180 = scmp.lt.s32.totalorder %s16, 3
        %s181 = scalar_select %p180, %s16, 3
        %p182 = scmp.lt.s32.totalorder %s179, 63
        %s183 = scalar_select %p182, %s179, 63
        %p184 = scmp.lt.s32.totalorder %s19, 0
        %s185 = scalar_select %p184, %s19, 0
        %s186 = sadd.s32 %s185, %s183
        %s187 = smul.addr %s181, 64
        %s188 = sadd.s32 %s186, %s187
        %s189 = smul.addr %s188, 4
        %s190 = scalar_lea.vmem %s0, %s189
        %s191 = smul.u32 32, %s17
      $region24: #{_lambda_.19} parent=19 // pred_fallthru
        _
      // Predicated region
      $region25: #{_lambda_.19} parent=19 // pred_check
        %p192 = pneg %p89
      $region26: #{_lambda_.19} parent=19 // pred_check_branch
        %194 = sbr.rel (%p192) target = $region28
      $region27: #{_lambda_.19} parent=19 // pred_region
        %s195 = smul.u32 8, %s19
        %p196 = scmp.lt.s32.totalorder %s16, 3
        %s197 = scalar_select %p196, %s16, 3
        %p198 = scmp.lt.s32.totalorder %s195, 7
        %s199 = scalar_select %p198, %s195, 7
        %p200 = scmp.lt.s32.totalorder %s18, 0
        %s201 = scalar_select %p200, %s18, 0
        %s202 = sadd.s32 %s201, %s199
        %s203 = smul.addr %s197, 8
        %s204 = sadd.s32 %s202, %s203
        %s205 = smul.addr %s204, 4
        %s206 = scalar_lea.vmem %s1, %s205
        %s207 = smul.u32 8, %s19
      $region28: #{_lambda_.19} parent=19 // pred_fallthru
        _
    $region20: #{_lambda_.19} parent=5 // pred_fallthru
      _
    %p208 = scmp.le.s32.totalorder 1, %s9
    %p209 = scmp.lt.s32.totalorder %s9, 9
    %p210 = pnand %p208, %p209
    %p211 = pneg %p210
    // Predicated region
    $region29: #{_lambda_.19} parent=5 // pred_check
      _
    $region30: #{_lambda_.19} parent=5 // pred_check_branch
      %213 = sbr.rel (%p210) target = $region32
    $region31: #{_lambda_.19} parent=5 // pred_region
      %s214 = ssub.s32 %s9, 1
      %s215 = smul.u32 32, %s21
      %p216 = scmp.lt.s32.totalorder %s20, 3
      %s217 = scalar_select %p216, %s20, 3
      %p218 = scmp.lt.s32.totalorder %s215, 63
      %s219 = scalar_select %p218, %s215, 63
      %p220 = scmp.lt.s32.totalorder %s23, 0
      %s221 = scalar_select %p220, %s23, 0
      %s222 = sadd.s32 %s221, %s219
      %s223 = smul.addr %s217, 64
      %s224 = sadd.s32 %s222, %s223
      %s225 = smul.addr %s224, 4
      %s226 = scalar_lea.vmem %s0, %s225
      %p227 = pneg %p65
      %p228 = pneg %p62
      %s229 = smul.u32 8, %s23
      %p230 = scmp.lt.s32.totalorder %s20, 3
      %s231 = scalar_select %p230, %s20, 3
      %p232 = scmp.lt.s32.totalorder %s229, 7
      %s233 = scalar_select %p232, %s229, 7
      %p234 = scmp.lt.s32.totalorder %s22, 0
      %s235 = scalar_select %p234, %s22, 0
      %s236 = sadd.s32 %s235, %s233
      %s237 = smul.addr %s231, 8
      %s238 = sadd.s32 %s236, %s237
      %s239 = smul.addr %s238, 4
      %s240 = scalar_lea.vmem %s1, %s239
      %p241 = pneg %p95
      %p242 = pneg %p92
      %p243 = scmp.lt.s32.totalorder %s22, 0
      %s244 = scalar_select %p243, %s22, 0
      %s245 = scalar_lea.vmem %s2, %s244
      %p246 = pneg %p121
      %p247 = pneg %p118
      %p248 = pneg %p151
      %p249 = pneg %p148
      %s250 = smul.u32 32, %s21
      %p251 = scmp.lt.s32.totalorder %s20, 3
      %s252 = scalar_select %p251, %s20, 3
      %p253 = scmp.lt.s32.totalorder %s250, 63
      %s254 = scalar_select %p253, %s250, 63
      %p255 = scmp.lt.s32.totalorder %s22, 0
      %s256 = scalar_select %p255, %s22, 0
      %s257 = sadd.s32 %s256, %s254
      %s258 = smul.addr %s252, 64
      %s259 = sadd.s32 %s257, %s258
      %s260 = smul.addr %s259, 8
      %s261 = scalar_lea.vmem %s3, %s260
      %s262 = smul.u32 32, %s21
      %p263 = scmp.lt.s32.totalorder %s20, 3
      %s264 = scalar_select %p263, %s20, 3
      %p265 = scmp.lt.s32.totalorder %s262, 63
      %s266 = scalar_select %p265, %s262, 63
      %p267 = scmp.lt.s32.totalorder %s23, 0
      %s268 = scalar_select %p267, %s23, 0
      %s269 = sadd.s32 %s268, %s266
      %s270 = smul.addr %s264, 64
      %s271 = sadd.s32 %s269, %s270
      %s272 = smul.addr %s271, 4
      %s273 = scalar_lea.vmem %s0, %s272
      %s274 = smul.u32 32, %s21
      %s275 = smul.u32 8, %s23
      %p276 = scmp.lt.s32.totalorder %s20, 3
      %s277 = scalar_select %p276, %s20, 3
      %p278 = scmp.lt.s32.totalorder %s275, 7
      %s279 = scalar_select %p278, %s275, 7
      %p280 = scmp.lt.s32.totalorder %s22, 0
      %s281 = scalar_select %p280, %s22, 0
      %s282 = sadd.s32 %s281, %s279
      %s283 = smul.addr %s277, 8
      %s284 = sadd.s32 %s282, %s283
      %s285 = smul.addr %s284, 4
      %s286 = scalar_lea.vmem %s1, %s285
      %s287 = smul.u32 8, %s23
      %p288 = scmp.lt.s32.totalorder %s22, 0
      %s289 = scalar_select %p288, %s22, 0
      %s290 = scalar_lea.vmem %s2, %s289
      %s291 = smul.u32 32, %s21
      %p292 = scmp.lt.s32.totalorder %s20, 3
      %s293 = scalar_select %p292, %s20, 3
      %p294 = scmp.lt.s32.totalorder %s291, 63
      %s295 = scalar_select %p294, %s291, 63
      %p296 = scmp.lt.s32.totalorder %s22, 0
      %s297 = scalar_select %p296, %s22, 0
      %s298 = sadd.s32 %s297, %s295
      %s299 = smul.addr %s293, 64
      %s300 = sadd.s32 %s298, %s299
      %s301 = smul.addr %s300, 8
      %s302 = scalar_lea.vmem %s3, %s301
      %s303 = smul.u32 32, %s21
      %p305 = scmp.eq.s32.totalorder %s23, 0
      // Predicated region
      $region33: #{_lambda_.19} parent=31 // pred_check
        %p306 = pneg %p305
      $region34: #{_lambda_.19} parent=31 // pred_check_branch
        %308 = sbr.rel (%p306) target = $region36
      $region35: #{_lambda_.19} parent=31 // pred_region
        %vm309 = vcmask 23552
        %310 = vst.msk [vmem:[#allocation2] sm:$0xff] %vm309, 0.0
        %311 = vst.msk [vmem:[#allocation2 + $0x8] sm:$0xff] %vm309, 0.0
        %312 = vst.msk [vmem:[#allocation2 + $0x10] sm:$0xff] %vm309, 0.0
        %313 = vst.msk [vmem:[#allocation2 + $0x18] sm:$0xff] %vm309, 0.0
        %314 = vst.msk [vmem:[#allocation2 + $0x20] sm:$0xff] %vm309, 0.0
        %315 = vst.msk [vmem:[#allocation2 + $0x28] sm:$0xff] %vm309, 0.0
        %316 = vst.msk [vmem:[#allocation2 + $0x30] sm:$0xff] %vm309, 0.0
        %317 = vst.msk [vmem:[#allocation2 + $0x38] sm:$0xff] %vm309, 0.0
        %318 = vst.msk [vmem:[#allocation2 + $0x40] sm:$0xff] %vm309, 0.0
        %319 = vst.msk [vmem:[#allocation2 + $0x48] sm:$0xff] %vm309, 0.0
        %320 = vst.msk [vmem:[#allocation2 + $0x50] sm:$0xff] %vm309, 0.0
        %321 = vst.msk [vmem:[#allocation2 + $0x58] sm:$0xff] %vm309, 0.0
        %322 = vst.msk [vmem:[#allocation2 + $0x60] sm:$0xff] %vm309, 0.0
        %323 = vst.msk [vmem:[#allocation2 + $0x68] sm:$0xff] %vm309, 0.0
        %324 = vst.msk [vmem:[#allocation2 + $0x70] sm:$0xff] %vm309, 0.0
        %325 = vst.msk [vmem:[#allocation2 + $0x78] sm:$0xff] %vm309, 0.0
        %326 = vst.msk [vmem:[#allocation2 + $0x80] sm:$0xff] %vm309, 0.0
        %327 = vst.msk [vmem:[#allocation2 + $0x88] sm:$0xff] %vm309, 0.0
        %328 = vst.msk [vmem:[#allocation2 + $0x90] sm:$0xff] %vm309, 0.0
        %329 = vst.msk [vmem:[#allocation2 + $0x98] sm:$0xff] %vm309, 0.0
        %330 = vst.msk [vmem:[#allocation2 + $0xa0] sm:$0xff] %vm309, 0.0
        %331 = vst.msk [vmem:[#allocation2 + $0xa8] sm:$0xff] %vm309, 0.0
        %332 = vst.msk [vmem:[#allocation2 + $0xb0] sm:$0xff] %vm309, 0.0
        %333 = vst.msk [vmem:[#allocation2 + $0xb8] sm:$0xff] %vm309, 0.0
        %334 = vst.msk [vmem:[#allocation2 + $0xc0] sm:$0xff] %vm309, 0.0
        %335 = vst.msk [vmem:[#allocation2 + $0xc8] sm:$0xff] %vm309, 0.0
        %336 = vst.msk [vmem:[#allocation2 + $0xd0] sm:$0xff] %vm309, 0.0
        %337 = vst.msk [vmem:[#allocation2 + $0xd8] sm:$0xff] %vm309, 0.0
        %338 = vst.msk [vmem:[#allocation2 + $0xe0] sm:$0xff] %vm309, 0.0
        %339 = vst.msk [vmem:[#allocation2 + $0xe8] sm:$0xff] %vm309, 0.0
        %340 = vst.msk [vmem:[#allocation2 + $0xf0] sm:$0xff] %vm309, 0.0
        %341 = vst.msk [vmem:[#allocation2 + $0xf8] sm:$0xff] %vm309, 0.0
      $region36: #{_lambda_.19} parent=31 // pred_fallthru
        _
      %v342 = vld [vmem:[#allocation2] sm:$0xff]
      %v343 = vld [vmem:[#allocation2 + $0x8] sm:$0xff]
      %v344 = vld [vmem:[#allocation2 + $0x10] sm:$0xff]
      %v345 = vld [vmem:[#allocation2 + $0x18] sm:$0xff]
      %v346 = vld [vmem:[#allocation2 + $0x20] sm:$0xff]
      %v347 = vld [vmem:[#allocation2 + $0x28] sm:$0xff]
      %v348 = vld [vmem:[#allocation2 + $0x30] sm:$0xff]
      %v349 = vld [vmem:[#allocation2 + $0x38] sm:$0xff]
      %v350 = vld [vmem:[#allocation2 + $0x40] sm:$0xff]
      %v351 = vld [vmem:[#allocation2 + $0x48] sm:$0xff]
      %v352 = vld [vmem:[#allocation2 + $0x50] sm:$0xff]
      %v353 = vld [vmem:[#allocation2 + $0x58] sm:$0xff]
      %v354 = vld [vmem:[#allocation2 + $0x60] sm:$0xff]
      %v355 = vld [vmem:[#allocation2 + $0x68] sm:$0xff]
      %v356 = vld [vmem:[#allocation2 + $0x70] sm:$0xff]
      %v357 = vld [vmem:[#allocation2 + $0x78] sm:$0xff]
      %v358 = vld [vmem:[#allocation2 + $0x80] sm:$0xff]
      %v359 = vld [vmem:[#allocation2 + $0x88] sm:$0xff]
      %v360 = vld [vmem:[#allocation2 + $0x90] sm:$0xff]
      %v361 = vld [vmem:[#allocation2 + $0x98] sm:$0xff]
      %v362 = vld [vmem:[#allocation2 + $0xa0] sm:$0xff]
      %v363 = vld [vmem:[#allocation2 + $0xa8] sm:$0xff]
      %v364 = vld [vmem:[#allocation2 + $0xb0] sm:$0xff]
      %v365 = vld [vmem:[#allocation2 + $0xb8] sm:$0xff]
      %v366 = vld [vmem:[#allocation2 + $0xc0] sm:$0xff]
      %v367 = vld [vmem:[#allocation2 + $0xc8] sm:$0xff]
      %v368 = vld [vmem:[#allocation2 + $0xd0] sm:$0xff]
      %v369 = vld [vmem:[#allocation2 + $0xd8] sm:$0xff]
      %v370 = vld [vmem:[#allocation2 + $0xe0] sm:$0xff]
      %v371 = vld [vmem:[#allocation2 + $0xe8] sm:$0xff]
      %v372 = vld [vmem:[#allocation2 + $0xf0] sm:$0xff]
      %v373 = vld [vmem:[#allocation2 + $0xf8] sm:$0xff]
      %v374 = vld [vmem:[%s273] sm:$0xf]
      %v375 = vld [vmem:[%s273 + $0x4] sm:$0xf]
      %v376 = vld [vmem:[%s273 + $0x8] sm:$0xf]
      %v377 = vld [vmem:[%s273 + $0xc] sm:$0xf]
      %v378 = vld [vmem:[%s273 + $0x10] sm:$0xf]
      %v379 = vld [vmem:[%s273 + $0x14] sm:$0xf]
      %v380 = vld [vmem:[%s273 + $0x18] sm:$0xf]
      %v381 = vld [vmem:[%s273 + $0x1c] sm:$0xf]
      %v382 = vld [vmem:[%s273 + $0x20] sm:$0xf]
      %v383 = vld [vmem:[%s273 + $0x24] sm:$0xf]
      %v384 = vld [vmem:[%s273 + $0x28] sm:$0xf]
      %v385 = vld [vmem:[%s273 + $0x2c] sm:$0xf]
      %v386 = vld [vmem:[%s273 + $0x30] sm:$0xf]
      %v387 = vld [vmem:[%s273 + $0x34] sm:$0xf]
      %v388 = vld [vmem:[%s273 + $0x38] sm:$0xf]
      %v389 = vld [vmem:[%s273 + $0x3c] sm:$0xf]
      %v390 = vld [vmem:[%s273 + $0x40] sm:$0xf]
      %v391 = vld [vmem:[%s273 + $0x44] sm:$0xf]
      %v392 = vld [vmem:[%s273 + $0x48] sm:$0xf]
      %v393 = vld [vmem:[%s273 + $0x4c] sm:$0xf]
      %v394 = vld [vmem:[%s273 + $0x50] sm:$0xf]
      %v395 = vld [vmem:[%s273 + $0x54] sm:$0xf]
      %v396 = vld [vmem:[%s273 + $0x58] sm:$0xf]
      %v397 = vld [vmem:[%s273 + $0x5c] sm:$0xf]
      %v398 = vld [vmem:[%s273 + $0x60] sm:$0xf]
      %v399 = vld [vmem:[%s273 + $0x64] sm:$0xf]
      %v400 = vld [vmem:[%s273 + $0x68] sm:$0xf]
      %v401 = vld [vmem:[%s273 + $0x6c] sm:$0xf]
      %v402 = vld [vmem:[%s273 + $0x70] sm:$0xf]
      %v403 = vld [vmem:[%s273 + $0x74] sm:$0xf]
      %v404 = vld [vmem:[%s273 + $0x78] sm:$0xf]
      %v405 = vld [vmem:[%s273 + $0x7c] sm:$0xf]
      %v406 = vld [vmem:[%s286] sm:$0xf]
      %v407 = vld [vmem:[%s286 + $0x4] sm:$0xf]
      %v408 = vld [vmem:[%s286 + $0x8] sm:$0xf]
      %v409 = vld [vmem:[%s286 + $0xc] sm:$0xf]
      %v410 = vld [vmem:[%s286 + $0x10] sm:$0xf]
      %v411 = vld [vmem:[%s286 + $0x14] sm:$0xf]
      %v412 = vld [vmem:[%s286 + $0x18] sm:$0xf]
      %v413 = vld [vmem:[%s286 + $0x1c] sm:$0xf]
      %v446 = vunpack.c.l.b16 %v374
      %v447 = vunpack.c.l.b16 %v375
      %v448 = vunpack.c.l.b16 %v376
      %v449 = vunpack.c.l.b16 %v377
      %v450 = vunpack.c.l.b16 %v378
      %v451 = vunpack.c.l.b16 %v379
      %v452 = vunpack.c.l.b16 %v380
      %v453 = vunpack.c.l.b16 %v381
      %v454 = vunpack.c.l.b16 %v382
      %v455 = vunpack.c.l.b16 %v383
      %v456 = vunpack.c.l.b16 %v384
      %v457 = vunpack.c.l.b16 %v385
      %v458 = vunpack.c.l.b16 %v386
      %v459 = vunpack.c.l.b16 %v387
      %v460 = vunpack.c.l.b16 %v388
      %v461 = vunpack.c.l.b16 %v389
      %v462 = vunpack.c.l.b16 %v390
      %v463 = vunpack.c.l.b16 %v391
      %v464 = vunpack.c.l.b16 %v392
      %v465 = vunpack.c.l.b16 %v393
      %v466 = vunpack.c.l.b16 %v394
      %v467 = vunpack.c.l.b16 %v395
      %v468 = vunpack.c.l.b16 %v396
      %v469 = vunpack.c.l.b16 %v397
      %v470 = vunpack.c.l.b16 %v398
      %v471 = vunpack.c.l.b16 %v399
      %v472 = vunpack.c.l.b16 %v400
      %v473 = vunpack.c.l.b16 %v401
      %v474 = vunpack.c.l.b16 %v402
      %v475 = vunpack.c.l.b16 %v403
      %v476 = vunpack.c.l.b16 %v404
      %v477 = vunpack.c.l.b16 %v405
      %v478 = vpack.c.b16 %v447, %v446
      %v479 = vpack.c.b16 %v449, %v448
      %v480 = vpack.c.b16 %v451, %v450
      %v481 = vpack.c.b16 %v453, %v452
      %v482 = vpack.c.b16 %v455, %v454
      %v483 = vpack.c.b16 %v457, %v456
      %v484 = vpack.c.b16 %v459, %v458
      %v485 = vpack.c.b16 %v461, %v460
      %v486 = vpack.c.b16 %v463, %v462
      %v487 = vpack.c.b16 %v465, %v464
      %v488 = vpack.c.b16 %v467, %v466
      %v489 = vpack.c.b16 %v469, %v468
      %v490 = vpack.c.b16 %v471, %v470
      %v491 = vpack.c.b16 %v473, %v472
      %v492 = vpack.c.b16 %v475, %v474
      %v493 = vpack.c.b16 %v477, %v476
      %v502 = vunpack.c.l.b16 %v406
      %v503 = vunpack.c.l.b16 %v407
      %v504 = vunpack.c.l.b16 %v408
      %v505 = vunpack.c.l.b16 %v409
      %v506 = vunpack.c.l.b16 %v410
      %v507 = vunpack.c.l.b16 %v411
      %v508 = vunpack.c.l.b16 %v412
      %v509 = vunpack.c.l.b16 %v413
      %v510 = vpack.c.b16 %v503, %v502
      %v511 = vpack.c.b16 %v505, %v504
      %v512 = vpack.c.b16 %v507, %v506
      %v513 = vpack.c.b16 %v509, %v508
      %vm518 = vcmask 523264
      %v520 = vsel %vm518, %v478, 0
      %v523 = vsel %vm518, %v479, 0
      %v526 = vsel %vm518, %v480, 0
      %v529 = vsel %vm518, %v481, 0
      %v532 = vsel %vm518, %v482, 0
      %v535 = vsel %vm518, %v483, 0
      %v538 = vsel %vm518, %v484, 0
      %v541 = vsel %vm518, %v485, 0
      %v544 = vsel %vm518, %v486, 0
      %v547 = vsel %vm518, %v487, 0
      %v550 = vsel %vm518, %v488, 0
      %v553 = vsel %vm518, %v489, 0
      %v556 = vsel %vm518, %v490, 0
      %v559 = vsel %vm518, %v491, 0
      %v562 = vsel %vm518, %v492, 0
      %v565 = vsel %vm518, %v493, 0
      %567 = vmatprep.subr.bf16.mxu0 0
      %568 = vmatpush1.bf16.msra.mxu0 %v510
      %569 = vmatprep.subr.bf16.mxu0 0
      %570 = vmatpush1.bf16.msra.mxu0 %v511
      %571 = vmatprep.subr.bf16.mxu0 0
      %572 = vmatpush1.bf16.msra.mxu0 %v512
      %573 = vmatprep.subr.bf16.mxu0 0
      %574 = vmatpush1.bf16.msra.mxu0 %v513
      %575 = vmatprep.subr.bf16.mxu0 0
      %576 = vmatpush1.bf16.msra.mxu0 0
      %577 = vmatprep.subr.bf16.mxu0 0
      %578 = vmatpush1.bf16.msra.mxu0 0
      %579 = vmatprep.subr.bf16.mxu0 0
      %580 = vmatpush1.bf16.msra.mxu0 0
      %581 = vmatprep.subr.bf16.mxu0 0
      %582 = vmatpush1.bf16.msra.mxu0 0
      %583 = vmatprep.subr.bf16.mxu0 0
      %584 = vmatpush1.bf16.msra.mxu0 0
      %585 = vmatprep.subr.bf16.mxu0 0
      %586 = vmatpush1.bf16.msra.mxu0 0
      %587 = vmatprep.subr.bf16.mxu0 0
      %588 = vmatpush1.bf16.msra.mxu0 0
      %589 = vmatprep.subr.bf16.mxu0 0
      %590 = vmatpush1.bf16.msra.mxu0 0
      %591 = vmatprep.subr.bf16.mxu0 0
      %592 = vmatpush1.bf16.msra.mxu0 0
      %593 = vmatprep.subr.bf16.mxu0 0
      %594 = vmatpush1.bf16.msra.mxu0 0
      %595 = vmatprep.subr.bf16.mxu0 0
      %596 = vmatpush1.bf16.msra.mxu0 0
      %597 = vmatprep.subr.bf16.mxu0 0
      %598 = vmatpush1.bf16.msra.mxu0 0
      %599 = vmatprep.mubr.bf16.mxu0 0
      %600 = vmatmul.mubr.bf16.gmra.mrb[0].mxu0 %v520
      %v601 = vpop.f32.mrb[0].mxu0
      %v602 = vadd.f32 0.0, %v601
      %v603 = vpop.f32.mrb[0].mxu0
      %v604 = vpop.f32.mrb[0].mxu0
      %v605 = vadd.f32 0.0, %v604
      %v606 = vpop.f32.mrb[0].mxu0
      %607 = vmatprep.mubr.bf16.mxu0 0
      %608 = vmatmul.mubr.bf16.gmra.mrb[0].mxu0 %v523
      %v609 = vpop.f32.mrb[0].mxu0
      %v610 = vadd.f32 0.0, %v609
      %v611 = vpop.f32.mrb[0].mxu0
      %v612 = vpop.f32.mrb[0].mxu0
      %v613 = vadd.f32 0.0, %v612
      %v614 = vpop.f32.mrb[0].mxu0
      %615 = vmatprep.mubr.bf16.mxu0 0
      %616 = vmatmul.mubr.bf16.gmra.mrb[0].mxu0 %v526
      %v617 = vpop.f32.mrb[0].mxu0
      %v618 = vadd.f32 0.0, %v617
      %v619 = vpop.f32.mrb[0].mxu0
      %v620 = vpop.f32.mrb[0].mxu0
      %v621 = vadd.f32 0.0, %v620
      %v622 = vpop.f32.mrb[0].mxu0
      %623 = vmatprep.mubr.bf16.mxu0 0
      %624 = vmatmul.mubr.bf16.gmra.mrb[0].mxu0 %v529
      %v625 = vpop.f32.mrb[0].mxu0
      %v626 = vadd.f32 0.0, %v625
      %v627 = vpop.f32.mrb[0].mxu0
      %v628 = vpop.f32.mrb[0].mxu0
      %v629 = vadd.f32 0.0, %v628
      %v630 = vpop.f32.mrb[0].mxu0
      %631 = vmatprep.mubr.bf16.mxu0 0
      %632 = vmatmul.mubr.bf16.gmra.mrb[0].mxu0 %v532
      %v633 = vpop.f32.mrb[0].mxu0
      %v634 = vadd.f32 0.0, %v633
      %v635 = vpop.f32.mrb[0].mxu0
      %v636 = vpop.f32.mrb[0].mxu0
      %v637 = vadd.f32 0.0, %v636
      %v638 = vpop.f32.mrb[0].mxu0
      %639 = vmatprep.mubr.bf16.mxu0 0
      %640 = vmatmul.mubr.bf16.gmra.mrb[0].mxu0 %v535
      %v641 = vpop.f32.mrb[0].mxu0
      %v642 = vadd.f32 0.0, %v641
      %v643 = vpop.f32.mrb[0].mxu0
      %v644 = vpop.f32.mrb[0].mxu0
      %v645 = vadd.f32 0.0, %v644
      %v646 = vpop.f32.mrb[0].mxu0
      %647 = vmatprep.mubr.bf16.mxu0 0
      %648 = vmatmul.mubr.bf16.gmra.mrb[0].mxu0 %v538
      %v649 = vpop.f32.mrb[0].mxu0
      %v650 = vadd.f32 0.0, %v649
      %v651 = vpop.f32.mrb[0].mxu0
      %v652 = vpop.f32.mrb[0].mxu0
      %v653 = vadd.f32 0.0, %v652
      %v654 = vpop.f32.mrb[0].mxu0
      %655 = vmatprep.mubr.bf16.mxu0 0
      %656 = vmatmul.mubr.bf16.gmra.mrb[0].mxu0 %v541
      %v657 = vpop.f32.mrb[0].mxu0
      %v658 = vadd.f32 0.0, %v657
      %v659 = vpop.f32.mrb[0].mxu0
      %v660 = vpop.f32.mrb[0].mxu0
      %v661 = vadd.f32 0.0, %v660
      %v662 = vpop.f32.mrb[0].mxu0
      %663 = vmatprep.mubr.bf16.mxu0 0
      %664 = vmatmul.mubr.bf16.gmra.mrb[0].mxu0 %v544
      %v665 = vpop.f32.mrb[0].mxu0
      %v666 = vadd.f32 0.0, %v665
      %v667 = vpop.f32.mrb[0].mxu0
      %v668 = vpop.f32.mrb[0].mxu0
      %v669 = vadd.f32 0.0, %v668
      %v670 = vpop.f32.mrb[0].mxu0
      %671 = vmatprep.mubr.bf16.mxu0 0
      %672 = vmatmul.mubr.bf16.gmra.mrb[0].mxu0 %v547
      %v673 = vpop.f32.mrb[0].mxu0
      %v674 = vadd.f32 0.0, %v673
      %v675 = vpop.f32.mrb[0].mxu0
      %v676 = vpop.f32.mrb[0].mxu0
      %v677 = vadd.f32 0.0, %v676
      %v678 = vpop.f32.mrb[0].mxu0
      %679 = vmatprep.mubr.bf16.mxu0 0
      %680 = vmatmul.mubr.bf16.gmra.mrb[0].mxu0 %v550
      %v681 = vpop.f32.mrb[0].mxu0
      %v682 = vadd.f32 0.0, %v681
      %v683 = vpop.f32.mrb[0].mxu0
      %v684 = vpop.f32.mrb[0].mxu0
      %v685 = vadd.f32 0.0, %v684
      %v686 = vpop.f32.mrb[0].mxu0
      %687 = vmatprep.mubr.bf16.mxu0 0
      %688 = vmatmul.mubr.bf16.gmra.mrb[0].mxu0 %v553
      %v689 = vpop.f32.mrb[0].mxu0
      %v690 = vadd.f32 0.0, %v689
      %v691 = vpop.f32.mrb[0].mxu0
      %v692 = vpop.f32.mrb[0].mxu0
      %v693 = vadd.f32 0.0, %v692
      %v694 = vpop.f32.mrb[0].mxu0
      %695 = vmatprep.mubr.bf16.mxu0 0
      %696 = vmatmul.mubr.bf16.gmra.mrb[0].mxu0 %v556
      %v697 = vpop.f32.mrb[0].mxu0
      %v698 = vadd.f32 0.0, %v697
      %v699 = vpop.f32.mrb[0].mxu0
      %v700 = vpop.f32.mrb[0].mxu0
      %v701 = vadd.f32 0.0, %v700
      %v702 = vpop.f32.mrb[0].mxu0
      %703 = vmatprep.mubr.bf16.mxu0 0
      %704 = vmatmul.mubr.bf16.gmra.mrb[0].mxu0 %v559
      %v705 = vpop.f32.mrb[0].mxu0
      %v706 = vadd.f32 0.0, %v705
      %v707 = vpop.f32.mrb[0].mxu0
      %v708 = vpop.f32.mrb[0].mxu0
      %v709 = vadd.f32 0.0, %v708
      %v710 = vpop.f32.mrb[0].mxu0
      %711 = vmatprep.mubr.bf16.mxu0 0
      %712 = vmatmul.mubr.bf16.gmra.mrb[0].mxu0 %v562
      %v713 = vpop.f32.mrb[0].mxu0
      %v714 = vadd.f32 0.0, %v713
      %v715 = vpop.f32.mrb[0].mxu0
      %v716 = vpop.f32.mrb[0].mxu0
      %v717 = vadd.f32 0.0, %v716
      %v718 = vpop.f32.mrb[0].mxu0
      %719 = vmatprep.mubr.bf16.mxu0 0
      %720 = vmatmul.mubr.bf16.gmra.mrb[0].mxu0 %v565
      %v721 = vpop.f32.mrb[0].mxu0
      %v722 = vadd.f32 0.0, %v721
      %v723 = vpop.f32.mrb[0].mxu0
      %v724 = vpop.f32.mrb[0].mxu0
      %v725 = vadd.f32 0.0, %v724
      %v726 = vpop.f32.mrb[0].mxu0
      %727 = vdwg.mxu0
      %v728 = vadd.f32 %v342, %v602
      %v729 = vadd.f32 %v343, %v605
      %v730 = vadd.f32 %v344, %v610
      %v731 = vadd.f32 %v345, %v613
      %v732 = vadd.f32 %v346, %v618
      %v733 = vadd.f32 %v347, %v621
      %v734 = vadd.f32 %v348, %v626
      %v735 = vadd.f32 %v349, %v629
      %v736 = vadd.f32 %v350, %v634
      %v737 = vadd.f32 %v351, %v637
      %v738 = vadd.f32 %v352, %v642
      %v739 = vadd.f32 %v353, %v645
      %v740 = vadd.f32 %v354, %v650
      %v741 = vadd.f32 %v355, %v653
      %v742 = vadd.f32 %v356, %v658
      %v743 = vadd.f32 %v357, %v661
      %v744 = vadd.f32 %v358, %v666
      %v745 = vadd.f32 %v359, %v669
      %v746 = vadd.f32 %v360, %v674
      %v747 = vadd.f32 %v361, %v677
      %v748 = vadd.f32 %v362, %v682
      %v749 = vadd.f32 %v363, %v685
      %v750 = vadd.f32 %v364, %v690
      %v751 = vadd.f32 %v365, %v693
      %v752 = vadd.f32 %v366, %v698
      %v753 = vadd.f32 %v367, %v701
      %v754 = vadd.f32 %v368, %v706
      %v755 = vadd.f32 %v369, %v709
      %v756 = vadd.f32 %v370, %v714
      %v757 = vadd.f32 %v371, %v717
      %v758 = vadd.f32 %v372, %v722
      %v759 = vadd.f32 %v373, %v725
      %vm760 = vcmask 23552
      %761 = vst.msk [vmem:[#allocation2] sm:$0xff] %vm760, %v728
      %762 = vst.msk [vmem:[#allocation2 + $0x8] sm:$0xff] %vm760, %v729
      %763 = vst.msk [vmem:[#allocation2 + $0x10] sm:$0xff] %vm760, %v730
      %764 = vst.msk [vmem:[#allocation2 + $0x18] sm:$0xff] %vm760, %v731
      %765 = vst.msk [vmem:[#allocation2 + $0x20] sm:$0xff] %vm760, %v732
      %766 = vst.msk [vmem:[#allocation2 + $0x28] sm:$0xff] %vm760, %v733
      %767 = vst.msk [vmem:[#allocation2 + $0x30] sm:$0xff] %vm760, %v734
      %768 = vst.msk [vmem:[#allocation2 + $0x38] sm:$0xff] %vm760, %v735
      %769 = vst.msk [vmem:[#allocation2 + $0x40] sm:$0xff] %vm760, %v736
      %770 = vst.msk [vmem:[#allocation2 + $0x48] sm:$0xff] %vm760, %v737
      %771 = vst.msk [vmem:[#allocation2 + $0x50] sm:$0xff] %vm760, %v738
      %772 = vst.msk [vmem:[#allocation2 + $0x58] sm:$0xff] %vm760, %v739
      %773 = vst.msk [vmem:[#allocation2 + $0x60] sm:$0xff] %vm760, %v740
      %774 = vst.msk [vmem:[#allocation2 + $0x68] sm:$0xff] %vm760, %v741
      %775 = vst.msk [vmem:[#allocation2 + $0x70] sm:$0xff] %vm760, %v742
      %776 = vst.msk [vmem:[#allocation2 + $0x78] sm:$0xff] %vm760, %v743
      %777 = vst.msk [vmem:[#allocation2 + $0x80] sm:$0xff] %vm760, %v744
      %778 = vst.msk [vmem:[#allocation2 + $0x88] sm:$0xff] %vm760, %v745
      %779 = vst.msk [vmem:[#allocation2 + $0x90] sm:$0xff] %vm760, %v746
      %780 = vst.msk [vmem:[#allocation2 + $0x98] sm:$0xff] %vm760, %v747
      %781 = vst.msk [vmem:[#allocation2 + $0xa0] sm:$0xff] %vm760, %v748
      %782 = vst.msk [vmem:[#allocation2 + $0xa8] sm:$0xff] %vm760, %v749
      %783 = vst.msk [vmem:[#allocation2 + $0xb0] sm:$0xff] %vm760, %v750
      %784 = vst.msk [vmem:[#allocation2 + $0xb8] sm:$0xff] %vm760, %v751
      %785 = vst.msk [vmem:[#allocation2 + $0xc0] sm:$0xff] %vm760, %v752
      %786 = vst.msk [vmem:[#allocation2 + $0xc8] sm:$0xff] %vm760, %v753
      %787 = vst.msk [vmem:[#allocation2 + $0xd0] sm:$0xff] %vm760, %v754
      %788 = vst.msk [vmem:[#allocation2 + $0xd8] sm:$0xff] %vm760, %v755
      %789 = vst.msk [vmem:[#allocation2 + $0xe0] sm:$0xff] %vm760, %v756
      %790 = vst.msk [vmem:[#allocation2 + $0xe8] sm:$0xff] %vm760, %v757
      %791 = vst.msk [vmem:[#allocation2 + $0xf0] sm:$0xff] %vm760, %v758
      %792 = vst.msk [vmem:[#allocation2 + $0xf8] sm:$0xff] %vm760, %v759
      // Predicated region
      $region37: #{_lambda_.19} parent=31 // pred_check
        %p793 = pneg %p305
      $region38: #{_lambda_.19} parent=31 // pred_check_branch
        %795 = sbr.rel (%p793) target = $region40
      $region39: #{_lambda_.19} parent=31 // pred_region
        %v796 = vld [vmem:[#allocation2] sm:$0xff]
        %v797 = vld [vmem:[#allocation2 + $0x8] sm:$0xff]
        %v798 = vld [vmem:[#allocation2 + $0x10] sm:$0xff]
        %v799 = vld [vmem:[#allocation2 + $0x18] sm:$0xff]
        %v800 = vld [vmem:[#allocation2 + $0x20] sm:$0xff]
        %v801 = vld [vmem:[#allocation2 + $0x28] sm:$0xff]
        %v802 = vld [vmem:[#allocation2 + $0x30] sm:$0xff]
        %v803 = vld [vmem:[#allocation2 + $0x38] sm:$0xff]
        %v804 = vld [vmem:[#allocation2 + $0x40] sm:$0xff]
        %v805 = vld [vmem:[#allocation2 + $0x48] sm:$0xff]
        %v806 = vld [vmem:[#allocation2 + $0x50] sm:$0xff]
        %v807 = vld [vmem:[#allocation2 + $0x58] sm:$0xff]
        %v808 = vld [vmem:[#allocation2 + $0x60] sm:$0xff]
        %v809 = vld [vmem:[#allocation2 + $0x68] sm:$0xff]
        %v810 = vld [vmem:[#allocation2 + $0x70] sm:$0xff]
        %v811 = vld [vmem:[#allocation2 + $0x78] sm:$0xff]
        %v812 = vld [vmem:[#allocation2 + $0x80] sm:$0xff]
        %v813 = vld [vmem:[#allocation2 + $0x88] sm:$0xff]
        %v814 = vld [vmem:[#allocation2 + $0x90] sm:$0xff]
        %v815 = vld [vmem:[#allocation2 + $0x98] sm:$0xff]
        %v816 = vld [vmem:[#allocation2 + $0xa0] sm:$0xff]
        %v817 = vld [vmem:[#allocation2 + $0xa8] sm:$0xff]
        %v818 = vld [vmem:[#allocation2 + $0xb0] sm:$0xff]
        %v819 = vld [vmem:[#allocation2 + $0xb8] sm:$0xff]
        %v820 = vld [vmem:[#allocation2 + $0xc0] sm:$0xff]
        %v821 = vld [vmem:[#allocation2 + $0xc8] sm:$0xff]
        %v822 = vld [vmem:[#allocation2 + $0xd0] sm:$0xff]
        %v823 = vld [vmem:[#allocation2 + $0xd8] sm:$0xff]
        %v824 = vld [vmem:[#allocation2 + $0xe0] sm:$0xff]
        %v825 = vld [vmem:[#allocation2 + $0xe8] sm:$0xff]
        %v826 = vld [vmem:[#allocation2 + $0xf0] sm:$0xff]
        %v827 = vld [vmem:[#allocation2 + $0xf8] sm:$0xff]
        %v828 = vld [vmem:[%s290] sm:$0x1]
        %v830 = vlaneseq
        %v831 = vshrl.u32 %v830, 7
        %v832 = vsub.s32 0, %v831
        %v833 = vrot.slane %v828, %v832
        %v835 = vadd.f32 %v796, %v833
        %v836 = vadd.f32 %v797, %v833
        %v837 = vadd.f32 %v798, %v833
        %v838 = vadd.f32 %v799, %v833
        %v839 = vadd.f32 %v800, %v833
        %v840 = vadd.f32 %v801, %v833
        %v841 = vadd.f32 %v802, %v833
        %v842 = vadd.f32 %v803, %v833
        %v843 = vadd.f32 %v804, %v833
        %v844 = vadd.f32 %v805, %v833
        %v845 = vadd.f32 %v806, %v833
        %v846 = vadd.f32 %v807, %v833
        %v847 = vadd.f32 %v808, %v833
        %v848 = vadd.f32 %v809, %v833
        %v849 = vadd.f32 %v810, %v833
        %v850 = vadd.f32 %v811, %v833
        %v851 = vadd.f32 %v812, %v833
        %v852 = vadd.f32 %v813, %v833
        %v853 = vadd.f32 %v814, %v833
        %v854 = vadd.f32 %v815, %v833
        %v855 = vadd.f32 %v816, %v833
        %v856 = vadd.f32 %v817, %v833
        %v857 = vadd.f32 %v818, %v833
        %v858 = vadd.f32 %v819, %v833
        %v859 = vadd.f32 %v820, %v833
        %v860 = vadd.f32 %v821, %v833
        %v861 = vadd.f32 %v822, %v833
        %v862 = vadd.f32 %v823, %v833
        %v863 = vadd.f32 %v824, %v833
        %v864 = vadd.f32 %v825, %v833
        %v865 = vadd.f32 %v826, %v833
        %v866 = vadd.f32 %v827, %v833
        %v867 = vtanh.pop %v835
        %v868 = vtanh.pop %v836
        %v869 = vtanh.pop %v837
        %v870 = vtanh.pop %v838
        %v871 = vtanh.pop %v839
        %v872 = vtanh.pop %v840
        %v873 = vtanh.pop %v841
        %v874 = vtanh.pop %v842
        %v875 = vtanh.pop %v843
        %v876 = vtanh.pop %v844
        %v877 = vtanh.pop %v845
        %v878 = vtanh.pop %v846
        %v879 = vtanh.pop %v847
        %v880 = vtanh.pop %v848
        %v881 = vtanh.pop %v849
        %v882 = vtanh.pop %v850
        %v883 = vtanh.pop %v851
        %v884 = vtanh.pop %v852
        %v885 = vtanh.pop %v853
        %v886 = vtanh.pop %v854
        %v887 = vtanh.pop %v855
        %v888 = vtanh.pop %v856
        %v889 = vtanh.pop %v857
        %v890 = vtanh.pop %v858
        %v891 = vtanh.pop %v859
        %v892 = vtanh.pop %v860
        %v893 = vtanh.pop %v861
        %v894 = vtanh.pop %v862
        %v895 = vtanh.pop %v863
        %v896 = vtanh.pop %v864
        %v897 = vtanh.pop %v865
        %v898 = vtanh.pop %v866
        %v899 = vmul.f32 %v867, 0.5
        %v900 = vmul.f32 %v868, 0.5
        %v901 = vmul.f32 %v869, 0.5
        %v902 = vmul.f32 %v870, 0.5
        %v903 = vmul.f32 %v871, 0.5
        %v904 = vmul.f32 %v872, 0.5
        %v905 = vmul.f32 %v873, 0.5
        %v906 = vmul.f32 %v874, 0.5
        %v907 = vmul.f32 %v875, 0.5
        %v908 = vmul.f32 %v876, 0.5
        %v909 = vmul.f32 %v877, 0.5
        %v910 = vmul.f32 %v878, 0.5
        %v911 = vmul.f32 %v879, 0.5
        %v912 = vmul.f32 %v880, 0.5
        %v913 = vmul.f32 %v881, 0.5
        %v914 = vmul.f32 %v882, 0.5
        %v915 = vmul.f32 %v883, 0.5
        %v916 = vmul.f32 %v884, 0.5
        %v917 = vmul.f32 %v885, 0.5
        %v918 = vmul.f32 %v886, 0.5
        %v919 = vmul.f32 %v887, 0.5
        %v920 = vmul.f32 %v888, 0.5
        %v921 = vmul.f32 %v889, 0.5
        %v922 = vmul.f32 %v890, 0.5
        %v923 = vmul.f32 %v891, 0.5
        %v924 = vmul.f32 %v892, 0.5
        %v925 = vmul.f32 %v893, 0.5
        %v926 = vmul.f32 %v894, 0.5
        %v927 = vmul.f32 %v895, 0.5
        %v928 = vmul.f32 %v896, 0.5
        %v929 = vmul.f32 %v897, 0.5
        %v930 = vmul.f32 %v898, 0.5
        %v931 = vadd.f32 %v899, 0.5
        %v932 = vadd.f32 %v900, 0.5
        %v933 = vadd.f32 %v901, 0.5
        %v934 = vadd.f32 %v902, 0.5
        %v935 = vadd.f32 %v903, 0.5
        %v936 = vadd.f32 %v904, 0.5
        %v937 = vadd.f32 %v905, 0.5
        %v938 = vadd.f32 %v906, 0.5
        %v939 = vadd.f32 %v907, 0.5
        %v940 = vadd.f32 %v908, 0.5
        %v941 = vadd.f32 %v909, 0.5
        %v942 = vadd.f32 %v910, 0.5
        %v943 = vadd.f32 %v911, 0.5
        %v944 = vadd.f32 %v912, 0.5
        %v945 = vadd.f32 %v913, 0.5
        %v946 = vadd.f32 %v914, 0.5
        %v947 = vadd.f32 %v915, 0.5
        %v948 = vadd.f32 %v916, 0.5
        %v949 = vadd.f32 %v917, 0.5
        %v950 = vadd.f32 %v918, 0.5
        %v951 = vadd.f32 %v919, 0.5
        %v952 = vadd.f32 %v920, 0.5
        %v953 = vadd.f32 %v921, 0.5
        %v954 = vadd.f32 %v922, 0.5
        %v955 = vadd.f32 %v923, 0.5
        %v956 = vadd.f32 %v924, 0.5
        %v957 = vadd.f32 %v925, 0.5
        %v958 = vadd.f32 %v926, 0.5
        %v959 = vadd.f32 %v927, 0.5
        %v960 = vadd.f32 %v928, 0.5
        %v961 = vadd.f32 %v929, 0.5
        %v962 = vadd.f32 %v930, 0.5
        %963 = vst.msk [vmem:[%s302] sm:$0xff] %vm760, %v931
        %964 = vst.msk [vmem:[%s302 + $0x8] sm:$0xff] %vm760, %v932
        %965 = vst.msk [vmem:[%s302 + $0x10] sm:$0xff] %vm760, %v933
        %966 = vst.msk [vmem:[%s302 + $0x18] sm:$0xff] %vm760, %v934
        %967 = vst.msk [vmem:[%s302 + $0x20] sm:$0xff] %vm760, %v935
        %968 = vst.msk [vmem:[%s302 + $0x28] sm:$0xff] %vm760, %v936
        %969 = vst.msk [vmem:[%s302 + $0x30] sm:$0xff] %vm760, %v937
        %970 = vst.msk [vmem:[%s302 + $0x38] sm:$0xff] %vm760, %v938
        %971 = vst.msk [vmem:[%s302 + $0x40] sm:$0xff] %vm760, %v939
        %972 = vst.msk [vmem:[%s302 + $0x48] sm:$0xff] %vm760, %v940
        %973 = vst.msk [vmem:[%s302 + $0x50] sm:$0xff] %vm760, %v941
        %974 = vst.msk [vmem:[%s302 + $0x58] sm:$0xff] %vm760, %v942
        %975 = vst.msk [vmem:[%s302 + $0x60] sm:$0xff] %vm760, %v943
        %976 = vst.msk [vmem:[%s302 + $0x68] sm:$0xff] %vm760, %v944
        %977 = vst.msk [vmem:[%s302 + $0x70] sm:$0xff] %vm760, %v945
        %978 = vst.msk [vmem:[%s302 + $0x78] sm:$0xff] %vm760, %v946
        %979 = vst.msk [vmem:[%s302 + $0x80] sm:$0xff] %vm760, %v947
        %980 = vst.msk [vmem:[%s302 + $0x88] sm:$0xff] %vm760, %v948
        %981 = vst.msk [vmem:[%s302 + $0x90] sm:$0xff] %vm760, %v949
        %982 = vst.msk [vmem:[%s302 + $0x98] sm:$0xff] %vm760, %v950
        %983 = vst.msk [vmem:[%s302 + $0xa0] sm:$0xff] %vm760, %v951
        %984 = vst.msk [vmem:[%s302 + $0xa8] sm:$0xff] %vm760, %v952
        %985 = vst.msk [vmem:[%s302 + $0xb0] sm:$0xff] %vm760, %v953
        %986 = vst.msk [vmem:[%s302 + $0xb8] sm:$0xff] %vm760, %v954
        %987 = vst.msk [vmem:[%s302 + $0xc0] sm:$0xff] %vm760, %v955
        %988 = vst.msk [vmem:[%s302 + $0xc8] sm:$0xff] %vm760, %v956
        %989 = vst.msk [vmem:[%s302 + $0xd0] sm:$0xff] %vm760, %v957
        %990 = vst.msk [vmem:[%s302 + $0xd8] sm:$0xff] %vm760, %v958
        %991 = vst.msk [vmem:[%s302 + $0xe0] sm:$0xff] %vm760, %v959
        %992 = vst.msk [vmem:[%s302 + $0xe8] sm:$0xff] %vm760, %v960
        %993 = vst.msk [vmem:[%s302 + $0xf0] sm:$0xff] %vm760, %v961
        %994 = vst.msk [vmem:[%s302 + $0xf8] sm:$0xff] %vm760, %v962
      $region40: #{_lambda_.19} parent=31 // pred_fallthru
        _
      %s995 = smul.u32 32, %s21
      %p996 = scmp.lt.s32.totalorder %s20, 3
      %s997 = scalar_select %p996, %s20, 3
      %p998 = scmp.lt.s32.totalorder %s995, 63
      %s999 = scalar_select %p998, %s995, 63
      %p1000 = scmp.lt.s32.totalorder %s22, 0
      %s1001 = scalar_select %p1000, %s22, 0
      %s1002 = sadd.s32 %s1001, %s999
      %s1003 = smul.addr %s997, 64
      %s1004 = sadd.s32 %s1002, %s1003
      %s1005 = smul.addr %s1004, 8
      %s1006 = scalar_lea.vmem %s3, %s1005
      // Predicated region
      $region41: #{_lambda_.19} parent=31 // pred_check
        %p1007 = pneg %p148
      $region42: #{_lambda_.19} parent=31 // pred_check_branch
        %1009 = sbr.rel (%p1007) target = $region44
      $region43: #{_lambda_.19} parent=31 // pred_region
        %s1010 = smul.u32 32, %s21
      $region44: #{_lambda_.19} parent=31 // pred_fallthru
        _
    $region32: #{_lambda_.19} parent=5 // pred_fallthru
      _
    %p1011 = scmp.le.s32.totalorder 2, %s9
    // Predicated region
    $region45: #{_lambda_.19} parent=5 // pred_check
      %p1012 = pneg %p1011
    $region46: #{_lambda_.19} parent=5 // pred_check_branch
      %1014 = sbr.rel (%p1012) target = $region48
    $region47: #{_lambda_.19} parent=5 // pred_region
      %s1015 = ssub.s32 %s9, 2
      // Predicated region
      $region49: #{_lambda_.19} parent=47 // pred_check
        %p1016 = pneg %p154
      $region50: #{_lambda_.19} parent=47 // pred_check_branch
        %1018 = sbr.rel (%p1016) target = $region52
      $region51: #{_lambda_.19} parent=47 // pred_region
        %s1019 = smul.u32 32, %s25
        %p1020 = scmp.lt.s32.totalorder %s24, 3
        %s1021 = scalar_select %p1020, %s24, 3
        %p1022 = scmp.lt.s32.totalorder %s1019, 63
        %s1023 = scalar_select %p1022, %s1019, 63
        %p1024 = scmp.lt.s32.totalorder %s26, 0
        %s1025 = scalar_select %p1024, %s26, 0
        %s1026 = sadd.s32 %s1025, %s1023
        %s1027 = smul.addr %s1021, 64
        %s1028 = sadd.s32 %s1026, %s1027
        %s1029 = smul.addr %s1028, 8
        %s1030 = scalar_lea.vmem %s3, %s1029
      $region52: #{_lambda_.19} parent=47 // pred_fallthru
        _
    $region48: #{_lambda_.19} parent=5 // pred_fallthru
      _
  $region6: #{_lambda_.19} parent=0 // loop_footer
    %s13 = sadd.s32 1, %s9
  $region7: #{_lambda_.19} parent=0 // loop_footer_branch
    %8 = sbr.rel target = $region3
  $region8: #{_lambda_.19} parent=0 // loop_exit
    _

</llo_original>
